<compile_context>
chip_gen: v7x
topology: tpu7x:2x2x1
jax: 0.10.0
libtpu: 0.0.40
codegen_flags: <defaults>
</compile_context>

<pallas_src>
import math
from functools import partial

import jax
import jax.numpy as jnp
from jax.experimental import pallas as pl
from jax.experimental.pallas import tpu as pltpu

# ----------------------- synthetic mini-CLIP config --------------------------
SEQ    = 8          # tokenizer.model_max_length (77 in real CLIP)
VOCAB  = 64
D1, H1 = 128, 2     # text_encoder      (CLIP-L : 768 / 12)   -- lane-dense stand-in
D2, H2 = 256, 4     # text_encoder_2    (bigG   : 1280 / 20)  -- lane-dense stand-in
PROJ   = 256        # text_encoder_2 projection dim
LAYERS = 2          # >= 2 so hidden_states[-2] is a real penultimate layer output
MLP_MULT = 4
EPS = 1e-5
BOS_ID = 1
EOS_ID = VOCAB - 1  # pad token == eos (CLIP)


# ----------------------------- Pallas kernel ----------------------------------
def _ln(x):
    """LayerNorm statistics in f32 (no affine)."""
    mu = jnp.mean(x, axis=-1, keepdims=True)
    var = jnp.mean((x - mu) ** 2, axis=-1, keepdims=True)
    return (x - mu) * jax.lax.rsqrt(var + EPS)


def _encoder_stack_kernel(num_heads, quick_gelu, with_head, *refs):
    """Whole CLIP text encoder stack: one grid step == one pre-LN transformer layer.

    The activation is carried across layers in `x_carry` (f32 VMEM scratch).
    Outputs: hidden_states[-2] (written at step n_layers-2) and — if with_head —
    pooled text_embeds (final LN + first-EOS gather + text_projection, fused into the
    last grid step).
    """
    if with_head:
        (x0_ref, mask_ref,
         ln1g_ref, ln1b_ref, wqkv_ref, bqkv_ref, wo_ref, bo_ref,
         ln2g_ref, ln2b_ref, w1_ref, b1_ref, w2_ref, b2_ref,
         flng_ref, flnb_ref, proj_ref, eos_ref,
         penult_ref, pooled_ref, x_carry) = refs
    else:
        (x0_ref, mask_ref,
         ln1g_ref, ln1b_ref, wqkv_ref, bqkv_ref, wo_ref, bo_ref,
         ln2g_ref, ln2b_ref, w1_ref, b1_ref, w2_ref, b2_ref,
         penult_ref, x_carry) = refs

    layer = pl.program_id(0)
    n_layers = pl.num_programs(0)

    @pl.when(layer == 0)
    def _():
        x_carry[...] = x0_ref[...]                       # init residual stream (f32)

    x = x_carry[...]                                     # (S, D) f32
    seq, d = x.shape
    hd = d // num_heads

    # --- LayerNorm 1 + fused QKV projection (one (D, 3D) bf16 MXU matmul) ---
    # 1/sqrt(head_dim) is folded into the Q output columns of w_qkv / b_qkv at init time.
    h = _ln(x) * ln1g_ref[...] + ln1b_ref[...]
    qkv = jnp.dot(h.astype(jnp.bfloat16), wqkv_ref[...],
                  preferred_element_type=jnp.float32) + bqkv_ref[...]    # (S, 3D) f32
    q = qkv[:, 0:d].astype(jnp.bfloat16)
    k = qkv[:, d:2 * d].astype(jnp.bfloat16)
    v = qkv[:, 2 * d:3 * d].astype(jnp.bfloat16)
    bias = mask_ref[...]                                 # (S, S) additive causal mask (hoisted)

    # --- causal MHA: per-head results stay in vregs, concatenated once ----------
    # (no VMEM scratch round-trip, no 64-lane masked partial stores)
    head_outs = []
    for hh in range(num_heads):
        sl = slice(hh * hd, (hh + 1) * hd)
        qh, kh, vh = q[:, sl], k[:, sl], v[:, sl]
        # NT matmul (contract last dims) avoids an explicit transpose.
        s = jax.lax.dot_general(qh, kh, (((1,), (1,)), ((), ())),
                                preferred_element_type=jnp.float32) + bias
        m = jnp.max(s, axis=-1, keepdims=True)
        p = jnp.exp(s - m)
        p = p * pl.reciprocal(jnp.sum(p, axis=-1, keepdims=True), approx=True)
        head_outs.append(jnp.dot(p.astype(jnp.bfloat16), vh,
                                 preferred_element_type=jnp.float32))
    attn = jnp.concatenate(head_outs, axis=-1).astype(jnp.bfloat16)      # (S, D) bf16, in vregs
    attn = jnp.dot(attn, wo_ref[...], preferred_element_type=jnp.float32) + bo_ref[...]
    x = x + attn

    # --- LayerNorm 2 + MLP ---
    h2 = _ln(x) * ln2g_ref[...] + ln2b_ref[...]
    f1 = jnp.dot(h2.astype(jnp.bfloat16), w1_ref[...],
                 preferred_element_type=jnp.float32) + b1_ref[...]
    if quick_gelu:
        f1 = f1 * jax.nn.sigmoid(1.702 * f1)             # text_encoder   (quick_gelu)
    else:
        # TODO(synk): real CLIP-bigG uses exact (erf) gelu; tanh-gelu maps to the EUP slot
        # (review-sanctioned optimization) and needs a numerics sign-off vs the checkpoint.
        f1 = jax.nn.gelu(f1, approximate=True)           # text_encoder_2
    f2 = jnp.dot(f1.astype(jnp.bfloat16), w2_ref[...],
                 preferred_element_type=jnp.float32) + b2_ref[...]
    x_new = x + f2
    x_carry[...] = x_new

    # hidden_states[-2] == output of layer (n_layers - 2), pre final-LN (clip_skip=None)
    @pl.when(layer == n_layers - 2)
    def _():
        penult_ref[...] = x_new

    if with_head:
        # Fused final LayerNorm + first-EOS pooling + text_projection on the last step.
        @pl.when(layer == n_layers - 1)
        def _():
            ln_f = _ln(x_new) * flng_ref[...] + flnb_ref[...]
            pooled = jnp.sum(ln_f * eos_ref[...], axis=0, keepdims=True)   # (1, D) one-hot gather
            pooled_ref[...] = jnp.dot(pooled.astype(jnp.bfloat16), proj_ref[...],
                                      preferred_element_type=jnp.float32)


# -------------------------- cost / VMEM accounting ----------------------------
def _cost_estimate(seq, d, dm, num_heads, layers, nproj):
    per_layer = (2 * seq * d * 3 * d        # fused QKV
                 + 2 * seq * seq * d        # q @ k^T over all heads
                 + 2 * seq * seq * d        # p @ v  over all heads
                 + 2 * seq * d * d          # Wo
                 + 2 * seq * d * dm + 2 * seq * dm * d)   # MLP
    flops = layers * per_layer + (2 * d * nproj if nproj else 0)
    trans = layers * (num_heads * seq * seq + seq * dm)   # softmax exp + gelu/sigmoid
    weight_bytes = layers * 2 * (d * 3 * d + d * d + 2 * d * dm)   # bf16 weight stream
    io_bytes = 4 * (2 * seq * d + seq * seq + seq) + 2 * d * nproj + 4 * nproj
    return pl.CostEstimate(flops=flops, transcendentals=trans,
                           bytes_accessed=weight_bytes + io_bytes)


def _vmem_limit_bytes(params, seq, d, dm, nproj):
    """Chip-agnostic VMEM budget derived from the actual per-layer weight slab."""
    def nb(x):
        return int(x.size) * x.dtype.itemsize
    names = ("ln1_g", "ln1_b", "w_qkv", "b_qkv", "w_o", "b_o",
             "ln2_g", "ln2_b", "w_1", "b_1", "w_2", "b_2")
    per_layer_slab = sum(nb(params[n]) for n in names) // LAYERS
    resident = 4 * (seq * d + seq * seq + seq + 2 * d) + 2 * d * nproj   # const blocks
    acts = 4 * seq * d * 4 + 4 * seq * dm                                # carry + temporaries
    limit = 2 * per_layer_slab + resident + acts + (8 << 20)             # dbl-buffered slab + headroom
    return int(min(96 << 20, max(32 << 20, limit)))


# --------------------------------- wrapper -------------------------------------
def encoder_stack(x0, causal_bias, eos_sel, params, *, num_heads, quick_gelu, with_head):
    """Run the whole encoder stack through a single gridded pallas_call."""
    seq, d = x0.shape
    dm = MLP_MULT * d
    nproj = params["text_projection"].shape[-1] if with_head else 0

    const2 = lambda l: (0, 0)            # same block every layer -> resident in VMEM
    layer3 = lambda l: (l, 0, 0)         # per-layer weight slab (double-buffered by Pallas)
    resident = pl.Buffered(1)            # constant blocks: single buffer, fetched once

    args = [x0, causal_bias,
            params["ln1_g"], params["ln1_b"], params["w_qkv"], params["b_qkv"],
            params["w_o"], params["b_o"], params["ln2_g"], params["ln2_b"],
            params["w_1"], params["b_1"], params["w_2"], params["b_2"]]
    in_specs = [
        pl.BlockSpec((seq, d), const2, pipeline_mode=resident),     # x0 (embeddings)
        pl.BlockSpec((seq, seq), const2, pipeline_mode=resident),   # causal additive mask
        pl.BlockSpec((None, 1, d), layer3),        # ln1 gamma
        pl.BlockSpec((None, 1, d), layer3),        # ln1 beta
        pl.BlockSpec((None, d, 3 * d), layer3),    # fused Wqkv (bf16)
        pl.BlockSpec((None, 1, 3 * d), layer3),    # fused bqkv
        pl.BlockSpec((None, d, d), layer3),        # Wo (bf16)
        pl.BlockSpec((None, 1, d), layer3),        # bo
        pl.BlockSpec((None, 1, d), layer3),        # ln2 gamma
        pl.BlockSpec((None, 1, d), layer3),        # ln2 beta
        pl.BlockSpec((None, d, dm), layer3),       # fc1 W (bf16)
        pl.BlockSpec((None, 1, dm), layer3),       # fc1 b
        pl.BlockSpec((None, dm, d), layer3),       # fc2 W (bf16)
        pl.BlockSpec((None, 1, d), layer3),        # fc2 b
    ]
    out_shape = [jax.ShapeDtypeStruct((seq, d), jnp.float32)]       # hidden_states[-2]
    out_specs = [pl.BlockSpec((seq, d), const2)]
    if with_head:
        args += [params["fln_g"], params["fln_b"], params["text_projection"], eos_sel]
        in_specs += [
            pl.BlockSpec((1, d), const2, pipeline_mode=resident),        # final LN gamma
            pl.BlockSpec((1, d), const2, pipeline_mode=resident),        # final LN beta
            pl.BlockSpec((d, nproj), const2, pipeline_mode=resident),    # text_projection (bf16)
            pl.BlockSpec((seq, 1), const2, pipeline_mode=resident),      # first-EOS one-hot selector
        ]
        out_shape.append(jax.ShapeDtypeStruct((1, nproj), jnp.float32))  # pooled text_embeds
        out_specs.append(pl.BlockSpec((1, nproj), const2))

    grid_spec = pltpu.PrefetchScalarGridSpec(
        num_scalar_prefetch=0,
        grid=(LAYERS,),
        in_specs=in_specs,
        out_specs=tuple(out_specs),
        scratch_shapes=[pltpu.VMEM((seq, d), jnp.float32)],   # residual-stream carry
    )
    fn = pl.pallas_call(
        partial(_encoder_stack_kernel, num_heads, quick_gelu, with_head),
        grid_spec=grid_spec,
        out_shape=tuple(out_shape),
        compiler_params=pltpu.CompilerParams(
            dimension_semantics=("arbitrary",),               # layer axis carries state
            vmem_limit_bytes=_vmem_limit_bytes(params, seq, d, dm, nproj),
        ),
        cost_estimate=_cost_estimate(seq, d, dm, num_heads, LAYERS, nproj),
    )
    return fn(*args)


# --------------------------- parameter construction --------------------------
def _init_encoder(key, d, num_heads, with_projection):
    dm = MLP_MULT * d
    hd = d // num_heads
    ks = jax.random.split(key, 8)
    sd = 0.02

    def w32(k, shape):
        return sd * jax.random.normal(k, shape, jnp.float32)

    # Fold the attention softmax scale 1/sqrt(head_dim) into the Q output columns of the
    # fused QKV weight & bias (one-time host transform -> no per-layer VPU multiply).
    qkv_colscale = jnp.concatenate([jnp.full((d,), 1.0 / math.sqrt(hd), jnp.float32),
                                    jnp.ones((2 * d,), jnp.float32)])
    # TODO(synk): on v5e/v6e, int8 weight quantization with per-channel dequant after the
    # f32 accumulate would halve the weight-streaming bound (not applicable to v7x's MXU).
    params = {
        "tok_emb": w32(ks[0], (VOCAB, d)),
        "pos_emb": w32(ks[1], (SEQ, d)),
        # stacked per-layer weights, leading layer axis
        "ln1_g": jnp.ones((LAYERS, 1, d), jnp.float32),
        "ln1_b": jnp.zeros((LAYERS, 1, d), jnp.float32),
        "w_qkv": (w32(ks[2], (LAYERS, d, 3 * d)) * qkv_colscale).astype(jnp.bfloat16),
        "b_qkv": jnp.zeros((LAYERS, 1, 3 * d), jnp.float32) * qkv_colscale,
        "w_o":   w32(ks[3], (LAYERS, d, d)).astype(jnp.bfloat16),
        "b_o":   jnp.zeros((LAYERS, 1, d), jnp.float32),
        "ln2_g": jnp.ones((LAYERS, 1, d), jnp.float32),
        "ln2_b": jnp.zeros((LAYERS, 1, d), jnp.float32),
        "w_1":   w32(ks[4], (LAYERS, d, dm)).astype(jnp.bfloat16),
        "b_1":   jnp.zeros((LAYERS, 1, dm), jnp.float32),
        "w_2":   w32(ks[5], (LAYERS, dm, d)).astype(jnp.bfloat16),
        "b_2":   jnp.zeros((LAYERS, 1, d), jnp.float32),
        # final LayerNorm
        "fln_g": jnp.ones((1, d), jnp.float32),
        "fln_b": jnp.zeros((1, d), jnp.float32),
    }
    if with_projection:
        params["text_projection"] = w32(ks[6], (d, PROJ)).astype(jnp.bfloat16)
    return params


# ------------------------------- glue / forward --------------------------------
def _causal_bias(seq):
    row = jnp.arange(seq)[:, None]
    col = jnp.arange(seq)[None, :]
    return jnp.where(col <= row, 0.0, -1e9).astype(jnp.float32)


def _embed(input_ids, params):
    # Embedding gather stays in JAX (token + position embeddings), f32 residual stream.
    return params["tok_emb"][input_ids] + params["pos_emb"]


@jax.jit
def _annotator_core(input_ids, enc1_params, enc2_params):
    # Whole post-tokenization forward under one jit: removes eager per-op dispatch overhead
    # and lets XLA schedule the two independent encoder pallas_calls concurrently (v7x: 2 TCs).
    causal_bias = _causal_bias(SEQ)
    # first-EOS selection via explicit == search (robust to vocab ordering)
    eos_idx = jnp.argmax((input_ids == EOS_ID).astype(jnp.int32))
    eos_sel = (jnp.arange(SEQ) == eos_idx).astype(jnp.float32)[:, None]   # (S, 1) one-hot

    # encoder 1 (CLIPTextModel, quick_gelu): only hidden_states[-2] is consumed
    (penult1,) = encoder_stack(_embed(input_ids, enc1_params), causal_bias, None,
                               enc1_params, num_heads=H1, quick_gelu=True, with_head=False)
    # encoder 2 (CLIPTextModelWithProjection, gelu): hidden_states[-2] + pooled text_embeds
    penult2, pooled2 = encoder_stack(_embed(input_ids, enc2_params), causal_bias, eos_sel,
                                     enc2_params, num_heads=H2, quick_gelu=False, with_head=True)

    # clip_skip=None -> hidden_states[-2]; the pooled output of the loop is encoder_2's
    prompt_embeds = jnp.concatenate([penult1, penult2], axis=-1)          # (S, D1+D2)
    pooled_prompt_embeds = pooled2[0]                                     # (PROJ,)
    return prompt_embeds, pooled_prompt_embeds


def annotator_forward(prompt, enc1_params, enc2_params):
    # TODO(synk): CLIPTokenizer has no Pallas/JAX equivalent; deterministic synthetic
    # token ids derived from the prompt string stand in for tokenization.
    content = [2 + (ord(c) % (VOCAB - 3)) for c in prompt][: SEQ - 2]
    ids = [BOS_ID] + content + [EOS_ID]
    ids = ids + [EOS_ID] * (SEQ - len(ids))                    # pad token == eos (CLIP)
    input_ids = jnp.asarray(ids, jnp.int32)                    # batch dim of 1 implicit
    return _annotator_core(input_ids, enc1_params, enc2_params)


# ----------------------------------- main -------------------------------------
if __name__ == "__main__":
    root = jax.random.PRNGKey(0)
    k1, k2 = jax.random.split(root)
    enc1_params = _init_encoder(k1, D1, H1, with_projection=False)
    enc2_params = _init_encoder(k2, D2, H2, with_projection=True)

    prompt = "a photo of a cat"
    prompt_embeds, pooled_prompt_embeds = annotator_forward(prompt, enc1_params, enc2_params)
    prompt_embeds = jax.block_until_ready(prompt_embeds)
    pooled_prompt_embeds = jax.block_until_ready(pooled_prompt_embeds)

    assert prompt_embeds.shape == (SEQ, D1 + D2), prompt_embeds.shape
    assert pooled_prompt_embeds.shape == (PROJ,), pooled_prompt_embeds.shape
    assert prompt_embeds.dtype == jnp.float32 and pooled_prompt_embeds.dtype == jnp.float32
    assert bool(jnp.all(jnp.isfinite(prompt_embeds))) and bool(jnp.all(jnp.isfinite(pooled_prompt_embeds)))
    print("KERNEL_OK")
</pallas_src>

<mosaic_0001>
module attributes {stable_mosaic.version = 11 : i64} {
  func.func @_encoder_stack_kernel(%arg0: i32, %arg1: memref<8x128xf32, #tpu.memory_space<vmem>>, %arg2: memref<8x8xf32, #tpu.memory_space<vmem>>, %arg3: memref<1x1x128xf32, #tpu.memory_space<vmem>>, %arg4: memref<1x1x128xf32, #tpu.memory_space<vmem>>, %arg5: memref<1x128x384xbf16, #tpu.memory_space<vmem>>, %arg6: memref<1x1x384xf32, #tpu.memory_space<vmem>>, %arg7: memref<1x128x128xbf16, #tpu.memory_space<vmem>>, %arg8: memref<1x1x128xf32, #tpu.memory_space<vmem>>, %arg9: memref<1x1x128xf32, #tpu.memory_space<vmem>>, %arg10: memref<1x1x128xf32, #tpu.memory_space<vmem>>, %arg11: memref<1x128x512xbf16, #tpu.memory_space<vmem>>, %arg12: memref<1x1x512xf32, #tpu.memory_space<vmem>>, %arg13: memref<1x512x128xbf16, #tpu.memory_space<vmem>>, %arg14: memref<1x1x128xf32, #tpu.memory_space<vmem>>, %arg15: memref<8x128xf32, #tpu.memory_space<vmem>>, %arg16: memref<8x128xf32, #tpu.memory_space<vmem>>) attributes {dimension_semantics = [#tpu.dimension_semantics<arbitrary>], iteration_bounds = array<i64: 2>, scalar_prefetch = 0 : i64, scratch_operands = 1 : i64, tpu.core_type = #tpu.core_type<tc>, window_params = [{pipeline_mode = #tpu.pipeline_mode<synchronous>, transform_indices = @transform_0, window_bounds = array<i64: 8, 128>}, {pipeline_mode = #tpu.pipeline_mode<synchronous>, transform_indices = @transform_1, window_bounds = array<i64: 8, 8>}, {transform_indices = @transform_2, window_bounds = array<i64: 1, 1, 128>}, {transform_indices = @transform_3, window_bounds = array<i64: 1, 1, 128>}, {transform_indices = @transform_4, window_bounds = array<i64: 1, 128, 384>}, {transform_indices = @transform_5, window_bounds = array<i64: 1, 1, 384>}, {transform_indices = @transform_6, window_bounds = array<i64: 1, 128, 128>}, {transform_indices = @transform_7, window_bounds = array<i64: 1, 1, 128>}, {transform_indices = @transform_8, window_bounds = array<i64: 1, 1, 128>}, {transform_indices = @transform_9, window_bounds = array<i64: 1, 1, 128>}, {transform_indices = @transform_10, window_bounds = array<i64: 1, 128, 512>}, {transform_indices = @transform_11, window_bounds = array<i64: 1, 1, 512>}, {transform_indices = @transform_12, window_bounds = array<i64: 1, 512, 128>}, {transform_indices = @transform_13, window_bounds = array<i64: 1, 1, 128>}, {pipeline_mode = #tpu.pipeline_mode<synchronous>, transform_indices = @transform_14, window_bounds = array<i64: 8, 128>}]} {
    %c0_i32 = arith.constant 0 : i32
    %0 = arith.cmpi eq, %arg0, %c0_i32 : i32
    %1 = arith.extui %0 : i1 to i32
    %c0_i32_0 = arith.constant 0 : i32
    %2 = arith.cmpi ne, %1, %c0_i32_0 : i32
    scf.if %2 {
      %c0_67 = arith.constant 0 : index
      %c0_68 = arith.constant 0 : index
      %144 = vector.load %arg1[%c0_67, %c0_68] : memref<8x128xf32, #tpu.memory_space<vmem>>, vector<8x128xf32>
      %c0_69 = arith.constant 0 : index
      %c0_70 = arith.constant 0 : index
      %145 = vector.load %arg16[%c0_69, %c0_70] : memref<8x128xf32, #tpu.memory_space<vmem>>, vector<8x128xf32>
      tpu.vector_store %arg16[%c0_69, %c0_70], %144 {strides = array<i32>} : memref<8x128xf32, #tpu.memory_space<vmem>>, vector<8x128xf32>,
    } else {
    }
    %c0 = arith.constant 0 : index
    %c0_1 = arith.constant 0 : index
    %3 = vector.load %arg16[%c0, %c0_1] : memref<8x128xf32, #tpu.memory_space<vmem>>, vector<8x128xf32>
    %cst = arith.constant dense<0.000000e+00> : vector<8xf32>
    %4 = vector.multi_reduction <add>, %3, %cst [1] : vector<8x128xf32> to vector<8xf32>
    %5 = vector.shape_cast %4 : vector<8xf32> to vector<8x1xf32>
    %cst_2 = arith.constant 1.280000e+02 : f32
    %6 = vector.broadcast %cst_2 : f32 to vector<8x1xf32>
    %7 = arith.divf %5, %6 : vector<8x1xf32>
    %8 = vector.broadcast %7 : vector<8x1xf32> to vector<8x128xf32>
    %9 = arith.subf %3, %8 : vector<8x128xf32>
    %10 = arith.mulf %9, %9 : vector<8x128xf32>
    %cst_3 = arith.constant dense<0.000000e+00> : vector<8xf32>
    %11 = vector.multi_reduction <add>, %10, %cst_3 [1] : vector<8x128xf32> to vector<8xf32>
    %12 = vector.shape_cast %11 : vector<8xf32> to vector<8x1xf32>
    %cst_4 = arith.constant 1.280000e+02 : f32
    %13 = vector.broadcast %cst_4 : f32 to vector<8x1xf32>
    %14 = arith.divf %12, %13 : vector<8x1xf32>
    %15 = vector.broadcast %7 : vector<8x1xf32> to vector<8x128xf32>
    %16 = arith.subf %3, %15 : vector<8x128xf32>
    %cst_5 = arith.constant 9.99999974E-6 : f32
    %17 = vector.broadcast %cst_5 : f32 to vector<8x1xf32>
    %18 = arith.addf %14, %17 : vector<8x1xf32>
    %19 = math.rsqrt %18 : vector<8x1xf32>
    %20 = vector.broadcast %19 : vector<8x1xf32> to vector<8x128xf32>
    %21 = arith.mulf %16, %20 : vector<8x128xf32>
    %c0_6 = arith.constant 0 : index
    %c0_7 = arith.constant 0 : index
    %c0_8 = arith.constant 0 : index
    %22 = vector.load %arg3[%c0_6, %c0_7, %c0_8] : memref<1x1x128xf32, #tpu.memory_space<vmem>>, vector<1x1x128xf32>
    %23 = vector.shape_cast %22 : vector<1x1x128xf32> to vector<1x128xf32>
    %24 = vector.broadcast %23 : vector<1x128xf32> to vector<8x128xf32>
    %25 = arith.mulf %21, %24 : vector<8x128xf32>
    %c0_9 = arith.constant 0 : index
    %c0_10 = arith.constant 0 : index
    %c0_11 = arith.constant 0 : index
    %26 = vector.load %arg4[%c0_9, %c0_10, %c0_11] : memref<1x1x128xf32, #tpu.memory_space<vmem>>, vector<1x1x128xf32>
    %27 = vector.shape_cast %26 : vector<1x1x128xf32> to vector<1x128xf32>
    %28 = vector.broadcast %27 : vector<1x128xf32> to vector<8x128xf32>
    %29 = arith.addf %25, %28 : vector<8x128xf32>
    %30 = arith.truncf %29 : vector<8x128xf32> to vector<8x128xbf16>
    %c0_12 = arith.constant 0 : index
    %c0_13 = arith.constant 0 : index
    %c0_14 = arith.constant 0 : index
    %31 = vector.load %arg5[%c0_12, %c0_13, %c0_14] : memref<1x128x384xbf16, #tpu.memory_space<vmem>>, vector<1x128x384xbf16>
    %32 = vector.shape_cast %31 : vector<1x128x384xbf16> to vector<128x384xbf16>
    %cst_15 = arith.constant dense<0.000000e+00> : vector<8x384xf32>
    %33 = tpu.matmul %30, %32, %cst_15 {dimension_numbers = #tpu.dot_dimension_numbers<[1], [0], [0], [1], [0, 0, 1, 1], [], []>} : vector<8x128xbf16>, vector<128x384xbf16>, vector<8x384xf32> -> vector<8x384xf32>
    %c0_16 = arith.constant 0 : index
    %c0_17 = arith.constant 0 : index
    %c0_18 = arith.constant 0 : index
    %34 = vector.load %arg6[%c0_16, %c0_17, %c0_18] : memref<1x1x384xf32, #tpu.memory_space<vmem>>, vector<1x1x384xf32>
    %35 = vector.shape_cast %34 : vector<1x1x384xf32> to vector<1x384xf32>
    %36 = vector.broadcast %35 : vector<1x384xf32> to vector<8x384xf32>
    %37 = arith.addf %33, %36 : vector<8x384xf32>
    %38 = vector.extract_strided_slice %37 {offsets = [0, 0], sizes = [8, 128], strides = [1, 1]} : vector<8x384xf32> to vector<8x128xf32>
    %39 = arith.truncf %38 : vector<8x128xf32> to vector<8x128xbf16>
    %40 = vector.extract_strided_slice %37 {offsets = [0, 128], sizes = [8, 128], strides = [1, 1]} : vector<8x384xf32> to vector<8x128xf32>
    %41 = arith.truncf %40 : vector<8x128xf32> to vector<8x128xbf16>
    %42 = vector.extract_strided_slice %37 {offsets = [0, 256], sizes = [8, 128], strides = [1, 1]} : vector<8x384xf32> to vector<8x128xf32>
    %43 = arith.truncf %42 : vector<8x128xf32> to vector<8x128xbf16>
    %c0_19 = arith.constant 0 : index
    %c0_20 = arith.constant 0 : index
    %44 = vector.load %arg2[%c0_19, %c0_20] : memref<8x8xf32, #tpu.memory_space<vmem>>, vector<8x8xf32>
    %45 = vector.extract_strided_slice %39 {offsets = [0, 0], sizes = [8, 64], strides = [1, 1]} : vector<8x128xbf16> to vector<8x64xbf16>
    %46 = vector.extract_strided_slice %41 {offsets = [0, 0], sizes = [8, 64], strides = [1, 1]} : vector<8x128xbf16> to vector<8x64xbf16>
    %47 = vector.extract_strided_slice %43 {offsets = [0, 0], sizes = [8, 64], strides = [1, 1]} : vector<8x128xbf16> to vector<8x64xbf16>
    %cst_21 = arith.constant dense<0.000000e+00> : vector<8x8xf32>
    %48 = tpu.matmul %45, %46, %cst_21 {dimension_numbers = #tpu.dot_dimension_numbers<[1], [1], [0], [0], [0, 0, 1, 0], [], []>} : vector<8x64xbf16>, vector<8x64xbf16>, vector<8x8xf32> -> vector<8x8xf32>
    %49 = arith.addf %48, %44 : vector<8x8xf32>
    %cst_22 = arith.constant dense<0xFF800000> : vector<8xf32>
    %50 = vector.multi_reduction <maximumf>, %49, %cst_22 [1] : vector<8x8xf32> to vector<8xf32>
    %51 = vector.shape_cast %50 : vector<8xf32> to vector<8x1xf32>
    %52 = vector.broadcast %51 : vector<8x1xf32> to vector<8x8xf32>
    %53 = arith.subf %49, %52 : vector<8x8xf32>
    %54 = math.exp %53 : vector<8x8xf32>
    %cst_23 = arith.constant dense<0.000000e+00> : vector<8xf32>
    %55 = vector.multi_reduction <add>, %54, %cst_23 [1] : vector<8x8xf32> to vector<8xf32>
    %56 = vector.shape_cast %55 : vector<8xf32> to vector<8x1xf32>
    %57 = tpu.reciprocal %56 {approx = true} : vector<8x1xf32> -> vector<8x1xf32>
    %58 = vector.broadcast %57 : vector<8x1xf32> to vector<8x8xf32>
    %59 = arith.mulf %54, %58 : vector<8x8xf32>
    %60 = arith.truncf %59 : vector<8x8xf32> to vector<8x8xbf16>
    %cst_24 = arith.constant dense<0.000000e+00> : vector<8x64xf32>
    %61 = tpu.matmul %60, %47, %cst_24 {dimension_numbers = #tpu.dot_dimension_numbers<[1], [0], [0], [1], [0, 0, 1, 1], [], []>} : vector<8x8xbf16>, vector<8x64xbf16>, vector<8x64xf32> -> vector<8x64xf32>
    %62 = vector.extract_strided_slice %39 {offsets = [0, 64], sizes = [8, 64], strides = [1, 1]} : vector<8x128xbf16> to vector<8x64xbf16>
    %63 = vector.extract_strided_slice %41 {offsets = [0, 64], sizes = [8, 64], strides = [1, 1]} : vector<8x128xbf16> to vector<8x64xbf16>
    %64 = vector.extract_strided_slice %43 {offsets = [0, 64], sizes = [8, 64], strides = [1, 1]} : vector<8x128xbf16> to vector<8x64xbf16>
    %cst_25 = arith.constant dense<0.000000e+00> : vector<8x8xf32>
    %65 = tpu.matmul %62, %63, %cst_25 {dimension_numbers = #tpu.dot_dimension_numbers<[1], [1], [0], [0], [0, 0, 1, 0], [], []>} : vector<8x64xbf16>, vector<8x64xbf16>, vector<8x8xf32> -> vector<8x8xf32>
    %66 = arith.addf %65, %44 : vector<8x8xf32>
    %cst_26 = arith.constant dense<0xFF800000> : vector<8xf32>
    %67 = vector.multi_reduction <maximumf>, %66, %cst_26 [1] : vector<8x8xf32> to vector<8xf32>
    %68 = vector.shape_cast %67 : vector<8xf32> to vector<8x1xf32>
    %69 = vector.broadcast %68 : vector<8x1xf32> to vector<8x8xf32>
    %70 = arith.subf %66, %69 : vector<8x8xf32>
    %71 = math.exp %70 : vector<8x8xf32>
    %cst_27 = arith.constant dense<0.000000e+00> : vector<8xf32>
    %72 = vector.multi_reduction <add>, %71, %cst_27 [1] : vector<8x8xf32> to vector<8xf32>
    %73 = vector.shape_cast %72 : vector<8xf32> to vector<8x1xf32>
    %74 = tpu.reciprocal %73 {approx = true} : vector<8x1xf32> -> vector<8x1xf32>
    %75 = vector.broadcast %74 : vector<8x1xf32> to vector<8x8xf32>
    %76 = arith.mulf %71, %75 : vector<8x8xf32>
    %77 = arith.truncf %76 : vector<8x8xf32> to vector<8x8xbf16>
    %cst_28 = arith.constant dense<0.000000e+00> : vector<8x64xf32>
    %78 = tpu.matmul %77, %64, %cst_28 {dimension_numbers = #tpu.dot_dimension_numbers<[1], [0], [0], [1], [0, 0, 1, 1], [], []>} : vector<8x8xbf16>, vector<8x64xbf16>, vector<8x64xf32> -> vector<8x64xf32>
    %79 = tpu.concatenate %61, %78 in 1 : vector<8x64xf32>, vector<8x64xf32> -> vector<8x128xf32>
    %80 = arith.truncf %79 : vector<8x128xf32> to vector<8x128xbf16>
    %c0_29 = arith.constant 0 : index
    %c0_30 = arith.constant 0 : index
    %c0_31 = arith.constant 0 : index
    %81 = vector.load %arg7[%c0_29, %c0_30, %c0_31] : memref<1x128x128xbf16, #tpu.memory_space<vmem>>, vector<1x128x128xbf16>
    %82 = vector.shape_cast %81 : vector<1x128x128xbf16> to vector<128x128xbf16>
    %cst_32 = arith.constant dense<0.000000e+00> : vector<8x128xf32>
    %83 = tpu.matmul %80, %82, %cst_32 {dimension_numbers = #tpu.dot_dimension_numbers<[1], [0], [0], [1], [0, 0, 1, 1], [], []>} : vector<8x128xbf16>, vector<128x128xbf16>, vector<8x128xf32> -> vector<8x128xf32>
    %c0_33 = arith.constant 0 : index
    %c0_34 = arith.constant 0 : index
    %c0_35 = arith.constant 0 : index
    %84 = vector.load %arg8[%c0_33, %c0_34, %c0_35] : memref<1x1x128xf32, #tpu.memory_space<vmem>>, vector<1x1x128xf32>
    %85 = vector.shape_cast %84 : vector<1x1x128xf32> to vector<1x128xf32>
    %86 = vector.broadcast %85 : vector<1x128xf32> to vector<8x128xf32>
    %87 = arith.addf %83, %86 : vector<8x128xf32>
    %88 = arith.addf %3, %87 : vector<8x128xf32>
    %cst_36 = arith.constant dense<0.000000e+00> : vector<8xf32>
    %89 = vector.multi_reduction <add>, %88, %cst_36 [1] : vector<8x128xf32> to vector<8xf32>
    %90 = vector.shape_cast %89 : vector<8xf32> to vector<8x1xf32>
    %cst_37 = arith.constant 1.280000e+02 : f32
    %91 = vector.broadcast %cst_37 : f32 to vector<8x1xf32>
    %92 = arith.divf %90, %91 : vector<8x1xf32>
    %93 = vector.broadcast %92 : vector<8x1xf32> to vector<8x128xf32>
    %94 = arith.subf %88, %93 : vector<8x128xf32>
    %95 = arith.mulf %94, %94 : vector<8x128xf32>
    %cst_38 = arith.constant dense<0.000000e+00> : vector<8xf32>
    %96 = vector.multi_reduction <add>, %95, %cst_38 [1] : vector<8x128xf32> to vector<8xf32>
    %97 = vector.shape_cast %96 : vector<8xf32> to vector<8x1xf32>
    %cst_39 = arith.constant 1.280000e+02 : f32
    %98 = vector.broadcast %cst_39 : f32 to vector<8x1xf32>
    %99 = arith.divf %97, %98 : vector<8x1xf32>
    %100 = vector.broadcast %92 : vector<8x1xf32> to vector<8x128xf32>
    %101 = arith.subf %88, %100 : vector<8x128xf32>
    %cst_40 = arith.constant 9.99999974E-6 : f32
    %102 = vector.broadcast %cst_40 : f32 to vector<8x1xf32>
    %103 = arith.addf %99, %102 : vector<8x1xf32>
    %104 = math.rsqrt %103 : vector<8x1xf32>
    %105 = vector.broadcast %104 : vector<8x1xf32> to vector<8x128xf32>
    %106 = arith.mulf %101, %105 : vector<8x128xf32>
    %c0_41 = arith.constant 0 : index
    %c0_42 = arith.constant 0 : index
    %c0_43 = arith.constant 0 : index
    %107 = vector.load %arg9[%c0_41, %c0_42, %c0_43] : memref<1x1x128xf32, #tpu.memory_space<vmem>>, vector<1x1x128xf32>
    %108 = vector.shape_cast %107 : vector<1x1x128xf32> to vector<1x128xf32>
    %109 = vector.broadcast %108 : vector<1x128xf32> to vector<8x128xf32>
    %110 = arith.mulf %106, %109 : vector<8x128xf32>
    %c0_44 = arith.constant 0 : index
    %c0_45 = arith.constant 0 : index
    %c0_46 = arith.constant 0 : index
    %111 = vector.load %arg10[%c0_44, %c0_45, %c0_46] : memref<1x1x128xf32, #tpu.memory_space<vmem>>, vector<1x1x128xf32>
    %112 = vector.shape_cast %111 : vector<1x1x128xf32> to vector<1x128xf32>
    %113 = vector.broadcast %112 : vector<1x128xf32> to vector<8x128xf32>
    %114 = arith.addf %110, %113 : vector<8x128xf32>
    %115 = arith.truncf %114 : vector<8x128xf32> to vector<8x128xbf16>
    %c0_47 = arith.constant 0 : index
    %c0_48 = arith.constant 0 : index
    %c0_49 = arith.constant 0 : index
    %116 = vector.load %arg11[%c0_47, %c0_48, %c0_49] : memref<1x128x512xbf16, #tpu.memory_space<vmem>>, vector<1x128x512xbf16>
    %117 = vector.shape_cast %116 : vector<1x128x512xbf16> to vector<128x512xbf16>
    %cst_50 = arith.constant dense<0.000000e+00> : vector<8x512xf32>
    %118 = tpu.matmul %115, %117, %cst_50 {dimension_numbers = #tpu.dot_dimension_numbers<[1], [0], [0], [1], [0, 0, 1, 1], [], []>} : vector<8x128xbf16>, vector<128x512xbf16>, vector<8x512xf32> -> vector<8x512xf32>
    %c0_51 = arith.constant 0 : index
    %c0_52 = arith.constant 0 : index
    %c0_53 = arith.constant 0 : index
    %119 = vector.load %arg12[%c0_51, %c0_52, %c0_53] : memref<1x1x512xf32, #tpu.memory_space<vmem>>, vector<1x1x512xf32>
    %120 = vector.shape_cast %119 : vector<1x1x512xf32> to vector<1x512xf32>
    %121 = vector.broadcast %120 : vector<1x512xf32> to vector<8x512xf32>
    %122 = arith.addf %118, %121 : vector<8x512xf32>
    %cst_54 = arith.constant 1.702000e+00 : f32
    %123 = vector.broadcast %cst_54 : f32 to vector<8x512xf32>
    %124 = arith.mulf %123, %122 : vector<8x512xf32>
    %125 = arith.negf %124 : vector<8x512xf32>
    %126 = math.exp %125 : vector<8x512xf32>
    %cst_55 = arith.constant 1.000000e+00 : f32
    %127 = vector.broadcast %cst_55 : f32 to vector<8x512xf32>
    %128 = arith.addf %127, %126 : vector<8x512xf32>
    %129 = arith.divf %127, %128 : vector<8x512xf32>
    %130 = arith.mulf %122, %129 : vector<8x512xf32>
    %131 = arith.truncf %130 : vector<8x512xf32> to vector<8x512xbf16>
    %c0_56 = arith.constant 0 : index
    %c0_57 = arith.constant 0 : index
    %c0_58 = arith.constant 0 : index
    %132 = vector.load %arg13[%c0_56, %c0_57, %c0_58] : memref<1x512x128xbf16, #tpu.memory_space<vmem>>, vector<1x512x128xbf16>
    %133 = vector.shape_cast %132 : vector<1x512x128xbf16> to vector<512x128xbf16>
    %cst_59 = arith.constant dense<0.000000e+00> : vector<8x128xf32>
    %134 = tpu.matmul %131, %133, %cst_59 {dimension_numbers = #tpu.dot_dimension_numbers<[1], [0], [0], [1], [0, 0, 1, 1], [], []>} : vector<8x512xbf16>, vector<512x128xbf16>, vector<8x128xf32> -> vector<8x128xf32>
    %c0_60 = arith.constant 0 : index
    %c0_61 = arith.constant 0 : index
    %c0_62 = arith.constant 0 : index
    %135 = vector.load %arg14[%c0_60, %c0_61, %c0_62] : memref<1x1x128xf32, #tpu.memory_space<vmem>>, vector<1x1x128xf32>
    %136 = vector.shape_cast %135 : vector<1x1x128xf32> to vector<1x128xf32>
    %137 = vector.broadcast %136 : vector<1x128xf32> to vector<8x128xf32>
    %138 = arith.addf %134, %137 : vector<8x128xf32>
    %139 = arith.addf %88, %138 : vector<8x128xf32>
    %c0_63 = arith.constant 0 : index
    %c0_64 = arith.constant 0 : index
    %140 = vector.load %arg16[%c0_63, %c0_64] : memref<8x128xf32, #tpu.memory_space<vmem>>, vector<8x128xf32>
    tpu.vector_store %arg16[%c0_63, %c0_64], %139 {strides = array<i32>} : memref<8x128xf32, #tpu.memory_space<vmem>>, vector<8x128xf32>,
    %c0_i32_65 = arith.constant 0 : i32
    %141 = arith.cmpi eq, %arg0, %c0_i32_65 : i32
    %142 = arith.extui %141 : i1 to i32
    %c0_i32_66 = arith.constant 0 : i32
    %143 = arith.cmpi ne, %142, %c0_i32_66 : i32
    scf.if %143 {
      %c0_67 = arith.constant 0 : index
      %c0_68 = arith.constant 0 : index
      %144 = vector.load %arg15[%c0_67, %c0_68] : memref<8x128xf32, #tpu.memory_space<vmem>>, vector<8x128xf32>
      tpu.vector_store %arg15[%c0_67, %c0_68], %139 {strides = array<i32>} : memref<8x128xf32, #tpu.memory_space<vmem>>, vector<8x128xf32>,
    } else {
    }
    return
  }
  func.func @transform_0(%arg0: i32) -> (i32, i32) {
    %c0_i32 = arith.constant 0 : i32
    %c0_i32_0 = arith.constant 0 : i32
    %c0_i32_1 = arith.constant 0 : i32
    return %c0_i32, %c0_i32_0 : i32, i32
  }
  func.func @transform_1(%arg0: i32) -> (i32, i32) {
    %c0_i32 = arith.constant 0 : i32
    %c0_i32_0 = arith.constant 0 : i32
    %c0_i32_1 = arith.constant 0 : i32
    return %c0_i32, %c0_i32_0 : i32, i32
  }
  func.func @transform_2(%arg0: i32) -> (i32, i32, i32) {
    %c0_i32 = arith.constant 0 : i32
    %c0_i32_0 = arith.constant 0 : i32
    %c0_i32_1 = arith.constant 0 : i32
    return %arg0, %c0_i32, %c0_i32_0 : i32, i32, i32
  }
  func.func @transform_3(%arg0: i32) -> (i32, i32, i32) {
    %c0_i32 = arith.constant 0 : i32
    %c0_i32_0 = arith.constant 0 : i32
    %c0_i32_1 = arith.constant 0 : i32
    return %arg0, %c0_i32, %c0_i32_0 : i32, i32, i32
  }
  func.func @transform_4(%arg0: i32) -> (i32, i32, i32) {
    %c0_i32 = arith.constant 0 : i32
    %c0_i32_0 = arith.constant 0 : i32
    %c0_i32_1 = arith.constant 0 : i32
    return %arg0, %c0_i32, %c0_i32_0 : i32, i32, i32
  }
  func.func @transform_5(%arg0: i32) -> (i32, i32, i32) {
    %c0_i32 = arith.constant 0 : i32
    %c0_i32_0 = arith.constant 0 : i32
    %c0_i32_1 = arith.constant 0 : i32
    return %arg0, %c0_i32, %c0_i32_0 : i32, i32, i32
  }
  func.func @transform_6(%arg0: i32) -> (i32, i32, i32) {
    %c0_i32 = arith.constant 0 : i32
    %c0_i32_0 = arith.constant 0 : i32
    %c0_i32_1 = arith.constant 0 : i32
    return %arg0, %c0_i32, %c0_i32_0 : i32, i32, i32
  }
  func.func @transform_7(%arg0: i32) -> (i32, i32, i32) {
    %c0_i32 = arith.constant 0 : i32
    %c0_i32_0 = arith.constant 0 : i32
    %c0_i32_1 = arith.constant 0 : i32
    return %arg0, %c0_i32, %c0_i32_0 : i32, i32, i32
  }
  func.func @transform_8(%arg0: i32) -> (i32, i32, i32) {
    %c0_i32 = arith.constant 0 : i32
    %c0_i32_0 = arith.constant 0 : i32
    %c0_i32_1 = arith.constant 0 : i32
    return %arg0, %c0_i32, %c0_i32_0 : i32, i32, i32
  }
  func.func @transform_9(%arg0: i32) -> (i32, i32, i32) {
    %c0_i32 = arith.constant 0 : i32
    %c0_i32_0 = arith.constant 0 : i32
    %c0_i32_1 = arith.constant 0 : i32
    return %arg0, %c0_i32, %c0_i32_0 : i32, i32, i32
  }
  func.func @transform_10(%arg0: i32) -> (i32, i32, i32) {
    %c0_i32 = arith.constant 0 : i32
    %c0_i32_0 = arith.constant 0 : i32
    %c0_i32_1 = arith.constant 0 : i32
    return %arg0, %c0_i32, %c0_i32_0 : i32, i32, i32
  }
  func.func @transform_11(%arg0: i32) -> (i32, i32, i32) {
    %c0_i32 = arith.constant 0 : i32
    %c0_i32_0 = arith.constant 0 : i32
    %c0_i32_1 = arith.constant 0 : i32
    return %arg0, %c0_i32, %c0_i32_0 : i32, i32, i32
  }
  func.func @transform_12(%arg0: i32) -> (i32, i32, i32) {
    %c0_i32 = arith.constant 0 : i32
    %c0_i32_0 = arith.constant 0 : i32
    %c0_i32_1 = arith.constant 0 : i32
    return %arg0, %c0_i32, %c0_i32_0 : i32, i32, i32
  }
  func.func @transform_13(%arg0: i32) -> (i32, i32, i32) {
    %c0_i32 = arith.constant 0 : i32
    %c0_i32_0 = arith.constant 0 : i32
    %c0_i32_1 = arith.constant 0 : i32
    return %arg0, %c0_i32, %c0_i32_0 : i32, i32, i32
  }
  func.func @transform_14(%arg0: i32) -> (i32, i32) {
    %c0_i32 = arith.constant 0 : i32
    %c0_i32_0 = arith.constant 0 : i32
    %c0_i32_1 = arith.constant 0 : i32
    return %c0_i32, %c0_i32_0 : i32, i32
  }
}

module attributes {stable_mosaic.version = 11 : i64} {
  func.func @_encoder_stack_kernel(%arg0: i32, %arg1: memref<8x256xf32, #tpu.memory_space<vmem>>, %arg2: memref<8x8xf32, #tpu.memory_space<vmem>>, %arg3: memref<1x1x256xf32, #tpu.memory_space<vmem>>, %arg4: memref<1x1x256xf32, #tpu.memory_space<vmem>>, %arg5: memref<1x256x768xbf16, #tpu.memory_space<vmem>>, %arg6: memref<1x1x768xf32, #tpu.memory_space<vmem>>, %arg7: memref<1x256x256xbf16, #tpu.memory_space<vmem>>, %arg8: memref<1x1x256xf32, #tpu.memory_space<vmem>>, %arg9: memref<1x1x256xf32, #tpu.memory_space<vmem>>, %arg10: memref<1x1x256xf32, #tpu.memory_space<vmem>>, %arg11: memref<1x256x1024xbf16, #tpu.memory_space<vmem>>, %arg12: memref<1x1x1024xf32, #tpu.memory_space<vmem>>, %arg13: memref<1x1024x256xbf16, #tpu.memory_space<vmem>>, %arg14: memref<1x1x256xf32, #tpu.memory_space<vmem>>, %arg15: memref<1x256xf32, #tpu.memory_space<vmem>>, %arg16: memref<1x256xf32, #tpu.memory_space<vmem>>, %arg17: memref<256x256xbf16, #tpu.memory_space<vmem>>, %arg18: memref<8x1xf32, #tpu.memory_space<vmem>>, %arg19: memref<8x256xf32, #tpu.memory_space<vmem>>, %arg20: memref<1x256xf32, #tpu.memory_space<vmem>>, %arg21: memref<8x256xf32, #tpu.memory_space<vmem>>) attributes {dimension_semantics = [#tpu.dimension_semantics<arbitrary>], iteration_bounds = array<i64: 2>, scalar_prefetch = 0 : i64, scratch_operands = 1 : i64, tpu.core_type = #tpu.core_type<tc>, window_params = [{pipeline_mode = #tpu.pipeline_mode<synchronous>, transform_indices = @transform_0, window_bounds = array<i64: 8, 256>}, {pipeline_mode = #tpu.pipeline_mode<synchronous>, transform_indices = @transform_1, window_bounds = array<i64: 8, 8>}, {transform_indices = @transform_2, window_bounds = array<i64: 1, 1, 256>}, {transform_indices = @transform_3, window_bounds = array<i64: 1, 1, 256>}, {transform_indices = @transform_4, window_bounds = array<i64: 1, 256, 768>}, {transform_indices = @transform_5, window_bounds = array<i64: 1, 1, 768>}, {transform_indices = @transform_6, window_bounds = array<i64: 1, 256, 256>}, {transform_indices = @transform_7, window_bounds = array<i64: 1, 1, 256>}, {transform_indices = @transform_8, window_bounds = array<i64: 1, 1, 256>}, {transform_indices = @transform_9, window_bounds = array<i64: 1, 1, 256>}, {transform_indices = @transform_10, window_bounds = array<i64: 1, 256, 1024>}, {transform_indices = @transform_11, window_bounds = array<i64: 1, 1, 1024>}, {transform_indices = @transform_12, window_bounds = array<i64: 1, 1024, 256>}, {transform_indices = @transform_13, window_bounds = array<i64: 1, 1, 256>}, {pipeline_mode = #tpu.pipeline_mode<synchronous>, transform_indices = @transform_14, window_bounds = array<i64: 1, 256>}, {pipeline_mode = #tpu.pipeline_mode<synchronous>, transform_indices = @transform_15, window_bounds = array<i64: 1, 256>}, {pipeline_mode = #tpu.pipeline_mode<synchronous>, transform_indices = @transform_16, window_bounds = array<i64: 256, 256>}, {pipeline_mode = #tpu.pipeline_mode<synchronous>, transform_indices = @transform_17, window_bounds = array<i64: 8, 1>}, {pipeline_mode = #tpu.pipeline_mode<synchronous>, transform_indices = @transform_18, window_bounds = array<i64: 8, 256>}, {pipeline_mode = #tpu.pipeline_mode<synchronous>, transform_indices = @transform_19, window_bounds = array<i64: 1, 256>}]} {
    %c0_i32 = arith.constant 0 : i32
    %0 = arith.cmpi eq, %arg0, %c0_i32 : i32
    %1 = arith.extui %0 : i1 to i32
    %c0_i32_0 = arith.constant 0 : i32
    %2 = arith.cmpi ne, %1, %c0_i32_0 : i32
    scf.if %2 {
      %c0_78 = arith.constant 0 : index
      %c0_79 = arith.constant 0 : index
      %186 = vector.load %arg1[%c0_78, %c0_79] : memref<8x256xf32, #tpu.memory_space<vmem>>, vector<8x256xf32>
      %c0_80 = arith.constant 0 : index
      %c0_81 = arith.constant 0 : index
      %187 = vector.load %arg21[%c0_80, %c0_81] : memref<8x256xf32, #tpu.memory_space<vmem>>, vector<8x256xf32>
      tpu.vector_store %arg21[%c0_80, %c0_81], %186 {strides = array<i32>} : memref<8x256xf32, #tpu.memory_space<vmem>>, vector<8x256xf32>,
    } else {
    }
    %c0 = arith.constant 0 : index
    %c0_1 = arith.constant 0 : index
    %3 = vector.load %arg21[%c0, %c0_1] : memref<8x256xf32, #tpu.memory_space<vmem>>, vector<8x256xf32>
    %cst = arith.constant dense<0.000000e+00> : vector<8xf32>
    %4 = vector.multi_reduction <add>, %3, %cst [1] : vector<8x256xf32> to vector<8xf32>
    %5 = vector.shape_cast %4 : vector<8xf32> to vector<8x1xf32>
    %cst_2 = arith.constant 2.560000e+02 : f32
    %6 = vector.broadcast %cst_2 : f32 to vector<8x1xf32>
    %7 = arith.divf %5, %6 : vector<8x1xf32>
    %8 = vector.broadcast %7 : vector<8x1xf32> to vector<8x256xf32>
    %9 = arith.subf %3, %8 : vector<8x256xf32>
    %10 = arith.mulf %9, %9 : vector<8x256xf32>
    %cst_3 = arith.constant dense<0.000000e+00> : vector<8xf32>
    %11 = vector.multi_reduction <add>, %10, %cst_3 [1] : vector<8x256xf32> to vector<8xf32>
    %12 = vector.shape_cast %11 : vector<8xf32> to vector<8x1xf32>
    %cst_4 = arith.constant 2.560000e+02 : f32
    %13 = vector.broadcast %cst_4 : f32 to vector<8x1xf32>
    %14 = arith.divf %12, %13 : vector<8x1xf32>
    %15 = vector.broadcast %7 : vector<8x1xf32> to vector<8x256xf32>
    %16 = arith.subf %3, %15 : vector<8x256xf32>
    %cst_5 = arith.constant 9.99999974E-6 : f32
    %17 = vector.broadcast %cst_5 : f32 to vector<8x1xf32>
    %18 = arith.addf %14, %17 : vector<8x1xf32>
    %19 = math.rsqrt %18 : vector<8x1xf32>
    %20 = vector.broadcast %19 : vector<8x1xf32> to vector<8x256xf32>
    %21 = arith.mulf %16, %20 : vector<8x256xf32>
    %c0_6 = arith.constant 0 : index
    %c0_7 = arith.constant 0 : index
    %c0_8 = arith.constant 0 : index
    %22 = vector.load %arg3[%c0_6, %c0_7, %c0_8] : memref<1x1x256xf32, #tpu.memory_space<vmem>>, vector<1x1x256xf32>
    %23 = vector.shape_cast %22 : vector<1x1x256xf32> to vector<1x256xf32>
    %24 = vector.broadcast %23 : vector<1x256xf32> to vector<8x256xf32>
    %25 = arith.mulf %21, %24 : vector<8x256xf32>
    %c0_9 = arith.constant 0 : index
    %c0_10 = arith.constant 0 : index
    %c0_11 = arith.constant 0 : index
    %26 = vector.load %arg4[%c0_9, %c0_10, %c0_11] : memref<1x1x256xf32, #tpu.memory_space<vmem>>, vector<1x1x256xf32>
    %27 = vector.shape_cast %26 : vector<1x1x256xf32> to vector<1x256xf32>
    %28 = vector.broadcast %27 : vector<1x256xf32> to vector<8x256xf32>
    %29 = arith.addf %25, %28 : vector<8x256xf32>
    %30 = arith.truncf %29 : vector<8x256xf32> to vector<8x256xbf16>
    %c0_12 = arith.constant 0 : index
    %c0_13 = arith.constant 0 : index
    %c0_14 = arith.constant 0 : index
    %31 = vector.load %arg5[%c0_12, %c0_13, %c0_14] : memref<1x256x768xbf16, #tpu.memory_space<vmem>>, vector<1x256x768xbf16>
    %32 = vector.shape_cast %31 : vector<1x256x768xbf16> to vector<256x768xbf16>
    %cst_15 = arith.constant dense<0.000000e+00> : vector<8x768xf32>
    %33 = tpu.matmul %30, %32, %cst_15 {dimension_numbers = #tpu.dot_dimension_numbers<[1], [0], [0], [1], [0, 0, 1, 1], [], []>} : vector<8x256xbf16>, vector<256x768xbf16>, vector<8x768xf32> -> vector<8x768xf32>
    %c0_16 = arith.constant 0 : index
    %c0_17 = arith.constant 0 : index
    %c0_18 = arith.constant 0 : index
    %34 = vector.load %arg6[%c0_16, %c0_17, %c0_18] : memref<1x1x768xf32, #tpu.memory_space<vmem>>, vector<1x1x768xf32>
    %35 = vector.shape_cast %34 : vector<1x1x768xf32> to vector<1x768xf32>
    %36 = vector.broadcast %35 : vector<1x768xf32> to vector<8x768xf32>
    %37 = arith.addf %33, %36 : vector<8x768xf32>
    %38 = vector.extract_strided_slice %37 {offsets = [0, 0], sizes = [8, 256], strides = [1, 1]} : vector<8x768xf32> to vector<8x256xf32>
    %39 = arith.truncf %38 : vector<8x256xf32> to vector<8x256xbf16>
    %40 = vector.extract_strided_slice %37 {offsets = [0, 256], sizes = [8, 256], strides = [1, 1]} : vector<8x768xf32> to vector<8x256xf32>
    %41 = arith.truncf %40 : vector<8x256xf32> to vector<8x256xbf16>
    %42 = vector.extract_strided_slice %37 {offsets = [0, 512], sizes = [8, 256], strides = [1, 1]} : vector<8x768xf32> to vector<8x256xf32>
    %43 = arith.truncf %42 : vector<8x256xf32> to vector<8x256xbf16>
    %c0_19 = arith.constant 0 : index
    %c0_20 = arith.constant 0 : index
    %44 = vector.load %arg2[%c0_19, %c0_20] : memref<8x8xf32, #tpu.memory_space<vmem>>, vector<8x8xf32>
    %45 = vector.extract_strided_slice %39 {offsets = [0, 0], sizes = [8, 64], strides = [1, 1]} : vector<8x256xbf16> to vector<8x64xbf16>
    %46 = vector.extract_strided_slice %41 {offsets = [0, 0], sizes = [8, 64], strides = [1, 1]} : vector<8x256xbf16> to vector<8x64xbf16>
    %47 = vector.extract_strided_slice %43 {offsets = [0, 0], sizes = [8, 64], strides = [1, 1]} : vector<8x256xbf16> to vector<8x64xbf16>
    %cst_21 = arith.constant dense<0.000000e+00> : vector<8x8xf32>
    %48 = tpu.matmul %45, %46, %cst_21 {dimension_numbers = #tpu.dot_dimension_numbers<[1], [1], [0], [0], [0, 0, 1, 0], [], []>} : vector<8x64xbf16>, vector<8x64xbf16>, vector<8x8xf32> -> vector<8x8xf32>
    %49 = arith.addf %48, %44 : vector<8x8xf32>
    %cst_22 = arith.constant dense<0xFF800000> : vector<8xf32>
    %50 = vector.multi_reduction <maximumf>, %49, %cst_22 [1] : vector<8x8xf32> to vector<8xf32>
    %51 = vector.shape_cast %50 : vector<8xf32> to vector<8x1xf32>
    %52 = vector.broadcast %51 : vector<8x1xf32> to vector<8x8xf32>
    %53 = arith.subf %49, %52 : vector<8x8xf32>
    %54 = math.exp %53 : vector<8x8xf32>
    %cst_23 = arith.constant dense<0.000000e+00> : vector<8xf32>
    %55 = vector.multi_reduction <add>, %54, %cst_23 [1] : vector<8x8xf32> to vector<8xf32>
    %56 = vector.shape_cast %55 : vector<8xf32> to vector<8x1xf32>
    %57 = tpu.reciprocal %56 {approx = true} : vector<8x1xf32> -> vector<8x1xf32>
    %58 = vector.broadcast %57 : vector<8x1xf32> to vector<8x8xf32>
    %59 = arith.mulf %54, %58 : vector<8x8xf32>
    %60 = arith.truncf %59 : vector<8x8xf32> to vector<8x8xbf16>
    %cst_24 = arith.constant dense<0.000000e+00> : vector<8x64xf32>
    %61 = tpu.matmul %60, %47, %cst_24 {dimension_numbers = #tpu.dot_dimension_numbers<[1], [0], [0], [1], [0, 0, 1, 1], [], []>} : vector<8x8xbf16>, vector<8x64xbf16>, vector<8x64xf32> -> vector<8x64xf32>
    %62 = vector.extract_strided_slice %39 {offsets = [0, 64], sizes = [8, 64], strides = [1, 1]} : vector<8x256xbf16> to vector<8x64xbf16>
    %63 = vector.extract_strided_slice %41 {offsets = [0, 64], sizes = [8, 64], strides = [1, 1]} : vector<8x256xbf16> to vector<8x64xbf16>
    %64 = vector.extract_strided_slice %43 {offsets = [0, 64], sizes = [8, 64], strides = [1, 1]} : vector<8x256xbf16> to vector<8x64xbf16>
    %cst_25 = arith.constant dense<0.000000e+00> : vector<8x8xf32>
    %65 = tpu.matmul %62, %63, %cst_25 {dimension_numbers = #tpu.dot_dimension_numbers<[1], [1], [0], [0], [0, 0, 1, 0], [], []>} : vector<8x64xbf16>, vector<8x64xbf16>, vector<8x8xf32> -> vector<8x8xf32>
    %66 = arith.addf %65, %44 : vector<8x8xf32>
    %cst_26 = arith.constant dense<0xFF800000> : vector<8xf32>
    %67 = vector.multi_reduction <maximumf>, %66, %cst_26 [1] : vector<8x8xf32> to vector<8xf32>
    %68 = vector.shape_cast %67 : vector<8xf32> to vector<8x1xf32>
    %69 = vector.broadcast %68 : vector<8x1xf32> to vector<8x8xf32>
    %70 = arith.subf %66, %69 : vector<8x8xf32>
    %71 = math.exp %70 : vector<8x8xf32>
    %cst_27 = arith.constant dense<0.000000e+00> : vector<8xf32>
    %72 = vector.multi_reduction <add>, %71, %cst_27 [1] : vector<8x8xf32> to vector<8xf32>
    %73 = vector.shape_cast %72 : vector<8xf32> to vector<8x1xf32>
    %74 = tpu.reciprocal %73 {approx = true} : vector<8x1xf32> -> vector<8x1xf32>
    %75 = vector.broadcast %74 : vector<8x1xf32> to vector<8x8xf32>
    %76 = arith.mulf %71, %75 : vector<8x8xf32>
    %77 = arith.truncf %76 : vector<8x8xf32> to vector<8x8xbf16>
    %cst_28 = arith.constant dense<0.000000e+00> : vector<8x64xf32>
    %78 = tpu.matmul %77, %64, %cst_28 {dimension_numbers = #tpu.dot_dimension_numbers<[1], [0], [0], [1], [0, 0, 1, 1], [], []>} : vector<8x8xbf16>, vector<8x64xbf16>, vector<8x64xf32> -> vector<8x64xf32>
    %79 = vector.extract_strided_slice %39 {offsets = [0, 128], sizes = [8, 64], strides = [1, 1]} : vector<8x256xbf16> to vector<8x64xbf16>
    %80 = vector.extract_strided_slice %41 {offsets = [0, 128], sizes = [8, 64], strides = [1, 1]} : vector<8x256xbf16> to vector<8x64xbf16>
    %81 = vector.extract_strided_slice %43 {offsets = [0, 128], sizes = [8, 64], strides = [1, 1]} : vector<8x256xbf16> to vector<8x64xbf16>
    %cst_29 = arith.constant dense<0.000000e+00> : vector<8x8xf32>
    %82 = tpu.matmul %79, %80, %cst_29 {dimension_numbers = #tpu.dot_dimension_numbers<[1], [1], [0], [0], [0, 0, 1, 0], [], []>} : vector<8x64xbf16>, vector<8x64xbf16>, vector<8x8xf32> -> vector<8x8xf32>
    %83 = arith.addf %82, %44 : vector<8x8xf32>
    %cst_30 = arith.constant dense<0xFF800000> : vector<8xf32>
    %84 = vector.multi_reduction <maximumf>, %83, %cst_30 [1] : vector<8x8xf32> to vector<8xf32>
    %85 = vector.shape_cast %84 : vector<8xf32> to vector<8x1xf32>
    %86 = vector.broadcast %85 : vector<8x1xf32> to vector<8x8xf32>
    %87 = arith.subf %83, %86 : vector<8x8xf32>
    %88 = math.exp %87 : vector<8x8xf32>
    %cst_31 = arith.constant dense<0.000000e+00> : vector<8xf32>
    %89 = vector.multi_reduction <add>, %88, %cst_31 [1] : vector<8x8xf32> to vector<8xf32>
    %90 = vector.shape_cast %89 : vector<8xf32> to vector<8x1xf32>
    %91 = tpu.reciprocal %90 {approx = true} : vector<8x1xf32> -> vector<8x1xf32>
    %92 = vector.broadcast %91 : vector<8x1xf32> to vector<8x8xf32>
    %93 = arith.mulf %88, %92 : vector<8x8xf32>
    %94 = arith.truncf %93 : vector<8x8xf32> to vector<8x8xbf16>
    %cst_32 = arith.constant dense<0.000000e+00> : vector<8x64xf32>
    %95 = tpu.matmul %94, %81, %cst_32 {dimension_numbers = #tpu.dot_dimension_numbers<[1], [0], [0], [1], [0, 0, 1, 1], [], []>} : vector<8x8xbf16>, vector<8x64xbf16>, vector<8x64xf32> -> vector<8x64xf32>
    %96 = vector.extract_strided_slice %39 {offsets = [0, 192], sizes = [8, 64], strides = [1, 1]} : vector<8x256xbf16> to vector<8x64xbf16>
    %97 = vector.extract_strided_slice %41 {offsets = [0, 192], sizes = [8, 64], strides = [1, 1]} : vector<8x256xbf16> to vector<8x64xbf16>
    %98 = vector.extract_strided_slice %43 {offsets = [0, 192], sizes = [8, 64], strides = [1, 1]} : vector<8x256xbf16> to vector<8x64xbf16>
    %cst_33 = arith.constant dense<0.000000e+00> : vector<8x8xf32>
    %99 = tpu.matmul %96, %97, %cst_33 {dimension_numbers = #tpu.dot_dimension_numbers<[1], [1], [0], [0], [0, 0, 1, 0], [], []>} : vector<8x64xbf16>, vector<8x64xbf16>, vector<8x8xf32> -> vector<8x8xf32>
    %100 = arith.addf %99, %44 : vector<8x8xf32>
    %cst_34 = arith.constant dense<0xFF800000> : vector<8xf32>
    %101 = vector.multi_reduction <maximumf>, %100, %cst_34 [1] : vector<8x8xf32> to vector<8xf32>
    %102 = vector.shape_cast %101 : vector<8xf32> to vector<8x1xf32>
    %103 = vector.broadcast %102 : vector<8x1xf32> to vector<8x8xf32>
    %104 = arith.subf %100, %103 : vector<8x8xf32>
    %105 = math.exp %104 : vector<8x8xf32>
    %cst_35 = arith.constant dense<0.000000e+00> : vector<8xf32>
    %106 = vector.multi_reduction <add>, %105, %cst_35 [1] : vector<8x8xf32> to vector<8xf32>
    %107 = vector.shape_cast %106 : vector<8xf32> to vector<8x1xf32>
    %108 = tpu.reciprocal %107 {approx = true} : vector<8x1xf32> -> vector<8x1xf32>
    %109 = vector.broadcast %108 : vector<8x1xf32> to vector<8x8xf32>
    %110 = arith.mulf %105, %109 : vector<8x8xf32>
    %111 = arith.truncf %110 : vector<8x8xf32> to vector<8x8xbf16>
    %cst_36 = arith.constant dense<0.000000e+00> : vector<8x64xf32>
    %112 = tpu.matmul %111, %98, %cst_36 {dimension_numbers = #tpu.dot_dimension_numbers<[1], [0], [0], [1], [0, 0, 1, 1], [], []>} : vector<8x8xbf16>, vector<8x64xbf16>, vector<8x64xf32> -> vector<8x64xf32>
    %113 = tpu.concatenate %61, %78, %95, %112 in 1 : vector<8x64xf32>, vector<8x64xf32>, vector<8x64xf32>, vector<8x64xf32> -> vector<8x256xf32>
    %114 = arith.truncf %113 : vector<8x256xf32> to vector<8x256xbf16>
    %c0_37 = arith.constant 0 : index
    %c0_38 = arith.constant 0 : index
    %c0_39 = arith.constant 0 : index
    %115 = vector.load %arg7[%c0_37, %c0_38, %c0_39] : memref<1x256x256xbf16, #tpu.memory_space<vmem>>, vector<1x256x256xbf16>
    %116 = vector.shape_cast %115 : vector<1x256x256xbf16> to vector<256x256xbf16>
    %cst_40 = arith.constant dense<0.000000e+00> : vector<8x256xf32>
    %117 = tpu.matmul %114, %116, %cst_40 {dimension_numbers = #tpu.dot_dimension_numbers<[1], [0], [0], [1], [0, 0, 1, 1], [], []>} : vector<8x256xbf16>, vector<256x256xbf16>, vector<8x256xf32> -> vector<8x256xf32>
    %c0_41 = arith.constant 0 : index
    %c0_42 = arith.constant 0 : index
    %c0_43 = arith.constant 0 : index
    %118 = vector.load %arg8[%c0_41, %c0_42, %c0_43] : memref<1x1x256xf32, #tpu.memory_space<vmem>>, vector<1x1x256xf32>
    %119 = vector.shape_cast %118 : vector<1x1x256xf32> to vector<1x256xf32>
    %120 = vector.broadcast %119 : vector<1x256xf32> to vector<8x256xf32>
    %121 = arith.addf %117, %120 : vector<8x256xf32>
    %122 = arith.addf %3, %121 : vector<8x256xf32>
    %cst_44 = arith.constant dense<0.000000e+00> : vector<8xf32>
    %123 = vector.multi_reduction <add>, %122, %cst_44 [1] : vector<8x256xf32> to vector<8xf32>
    %124 = vector.shape_cast %123 : vector<8xf32> to vector<8x1xf32>
    %cst_45 = arith.constant 2.560000e+02 : f32
    %125 = vector.broadcast %cst_45 : f32 to vector<8x1xf32>
    %126 = arith.divf %124, %125 : vector<8x1xf32>
    %127 = vector.broadcast %126 : vector<8x1xf32> to vector<8x256xf32>
    %128 = arith.subf %122, %127 : vector<8x256xf32>
    %129 = arith.mulf %128, %128 : vector<8x256xf32>
    %cst_46 = arith.constant dense<0.000000e+00> : vector<8xf32>
    %130 = vector.multi_reduction <add>, %129, %cst_46 [1] : vector<8x256xf32> to vector<8xf32>
    %131 = vector.shape_cast %130 : vector<8xf32> to vector<8x1xf32>
    %cst_47 = arith.constant 2.560000e+02 : f32
    %132 = vector.broadcast %cst_47 : f32 to vector<8x1xf32>
    %133 = arith.divf %131, %132 : vector<8x1xf32>
    %134 = vector.broadcast %126 : vector<8x1xf32> to vector<8x256xf32>
    %135 = arith.subf %122, %134 : vector<8x256xf32>
    %cst_48 = arith.constant 9.99999974E-6 : f32
    %136 = vector.broadcast %cst_48 : f32 to vector<8x1xf32>
    %137 = arith.addf %133, %136 : vector<8x1xf32>
    %138 = math.rsqrt %137 : vector<8x1xf32>
    %139 = vector.broadcast %138 : vector<8x1xf32> to vector<8x256xf32>
    %140 = arith.mulf %135, %139 : vector<8x256xf32>
    %c0_49 = arith.constant 0 : index
    %c0_50 = arith.constant 0 : index
    %c0_51 = arith.constant 0 : index
    %141 = vector.load %arg9[%c0_49, %c0_50, %c0_51] : memref<1x1x256xf32, #tpu.memory_space<vmem>>, vector<1x1x256xf32>
    %142 = vector.shape_cast %141 : vector<1x1x256xf32> to vector<1x256xf32>
    %143 = vector.broadcast %142 : vector<1x256xf32> to vector<8x256xf32>
    %144 = arith.mulf %140, %143 : vector<8x256xf32>
    %c0_52 = arith.constant 0 : index
    %c0_53 = arith.constant 0 : index
    %c0_54 = arith.constant 0 : index
    %145 = vector.load %arg10[%c0_52, %c0_53, %c0_54] : memref<1x1x256xf32, #tpu.memory_space<vmem>>, vector<1x1x256xf32>
    %146 = vector.shape_cast %145 : vector<1x1x256xf32> to vector<1x256xf32>
    %147 = vector.broadcast %146 : vector<1x256xf32> to vector<8x256xf32>
    %148 = arith.addf %144, %147 : vector<8x256xf32>
    %149 = arith.truncf %148 : vector<8x256xf32> to vector<8x256xbf16>
    %c0_55 = arith.constant 0 : index
    %c0_56 = arith.constant 0 : index
    %c0_57 = arith.constant 0 : index
    %150 = vector.load %arg11[%c0_55, %c0_56, %c0_57] : memref<1x256x1024xbf16, #tpu.memory_space<vmem>>, vector<1x256x1024xbf16>
    %151 = vector.shape_cast %150 : vector<1x256x1024xbf16> to vector<256x1024xbf16>
    %cst_58 = arith.constant dense<0.000000e+00> : vector<8x1024xf32>
    %152 = tpu.matmul %149, %151, %cst_58 {dimension_numbers = #tpu.dot_dimension_numbers<[1], [0], [0], [1], [0, 0, 1, 1], [], []>} : vector<8x256xbf16>, vector<256x1024xbf16>, vector<8x1024xf32> -> vector<8x1024xf32>
    %c0_59 = arith.constant 0 : index
    %c0_60 = arith.constant 0 : index
    %c0_61 = arith.constant 0 : index
    %153 = vector.load %arg12[%c0_59, %c0_60, %c0_61] : memref<1x1x1024xf32, #tpu.memory_space<vmem>>, vector<1x1x1024xf32>
    %154 = vector.shape_cast %153 : vector<1x1x1024xf32> to vector<1x1024xf32>
    %155 = vector.broadcast %154 : vector<1x1024xf32> to vector<8x1024xf32>
    %156 = arith.addf %152, %155 : vector<8x1024xf32>
    %157 = arith.mulf %156, %156 : vector<8x1024xf32>
    %158 = arith.mulf %156, %157 : vector<8x1024xf32>
    %cst_62 = arith.constant 4.471500e-02 : f32
    %159 = vector.broadcast %cst_62 : f32 to vector<8x1024xf32>
    %160 = arith.mulf %159, %158 : vector<8x1024xf32>
    %161 = arith.addf %156, %160 : vector<8x1024xf32>
    %cst_63 = arith.constant 0.797884583 : f32
    %162 = vector.broadcast %cst_63 : f32 to vector<8x1024xf32>
    %163 = arith.mulf %162, %161 : vector<8x1024xf32>
    %164 = math.tanh %163 : vector<8x1024xf32>
    %cst_64 = arith.constant 1.000000e+00 : f32
    %165 = vector.broadcast %cst_64 : f32 to vector<8x1024xf32>
    %166 = arith.addf %165, %164 : vector<8x1024xf32>
    %cst_65 = arith.constant 5.000000e-01 : f32
    %167 = vector.broadcast %cst_65 : f32 to vector<8x1024xf32>
    %168 = arith.mulf %167, %166 : vector<8x1024xf32>
    %169 = arith.mulf %156, %168 : vector<8x1024xf32>
    %170 = arith.truncf %169 : vector<8x1024xf32> to vector<8x1024xbf16>
    %c0_66 = arith.constant 0 : index
    %c0_67 = arith.constant 0 : index
    %c0_68 = arith.constant 0 : index
    %171 = vector.load %arg13[%c0_66, %c0_67, %c0_68] : memref<1x1024x256xbf16, #tpu.memory_space<vmem>>, vector<1x1024x256xbf16>
    %172 = vector.shape_cast %171 : vector<1x1024x256xbf16> to vector<1024x256xbf16>
    %cst_69 = arith.constant dense<0.000000e+00> : vector<8x256xf32>
    %173 = tpu.matmul %170, %172, %cst_69 {dimension_numbers = #tpu.dot_dimension_numbers<[1], [0], [0], [1], [0, 0, 1, 1], [], []>} : vector<8x1024xbf16>, vector<1024x256xbf16>, vector<8x256xf32> -> vector<8x256xf32>
    %c0_70 = arith.constant 0 : index
    %c0_71 = arith.constant 0 : index
    %c0_72 = arith.constant 0 : index
    %174 = vector.load %arg14[%c0_70, %c0_71, %c0_72] : memref<1x1x256xf32, #tpu.memory_space<vmem>>, vector<1x1x256xf32>
    %175 = vector.shape_cast %174 : vector<1x1x256xf32> to vector<1x256xf32>
    %176 = vector.broadcast %175 : vector<1x256xf32> to vector<8x256xf32>
    %177 = arith.addf %173, %176 : vector<8x256xf32>
    %178 = arith.addf %122, %177 : vector<8x256xf32>
    %c0_73 = arith.constant 0 : index
    %c0_74 = arith.constant 0 : index
    %179 = vector.load %arg21[%c0_73, %c0_74] : memref<8x256xf32, #tpu.memory_space<vmem>>, vector<8x256xf32>
    tpu.vector_store %arg21[%c0_73, %c0_74], %178 {strides = array<i32>} : memref<8x256xf32, #tpu.memory_space<vmem>>, vector<8x256xf32>,
    %c0_i32_75 = arith.constant 0 : i32
    %180 = arith.cmpi eq, %arg0, %c0_i32_75 : i32
    %181 = arith.extui %180 : i1 to i32
    %c0_i32_76 = arith.constant 0 : i32
    %182 = arith.cmpi ne, %181, %c0_i32_76 : i32
    scf.if %182 {
      %c0_78 = arith.constant 0 : index
      %c0_79 = arith.constant 0 : index
      %186 = vector.load %arg19[%c0_78, %c0_79] : memref<8x256xf32, #tpu.memory_space<vmem>>, vector<8x256xf32>
      tpu.vector_store %arg19[%c0_78, %c0_79], %178 {strides = array<i32>} : memref<8x256xf32, #tpu.memory_space<vmem>>, vector<8x256xf32>,
    } else {
    }
    %c1_i32 = arith.constant 1 : i32
    %183 = arith.cmpi eq, %arg0, %c1_i32 : i32
    %184 = arith.extui %183 : i1 to i32
    %c0_i32_77 = arith.constant 0 : i32
    %185 = arith.cmpi ne, %184, %c0_i32_77 : i32
    scf.if %185 {
      %cst_78 = arith.constant dense<0.000000e+00> : vector<8xf32>
      %186 = vector.multi_reduction <add>, %178, %cst_78 [1] : vector<8x256xf32> to vector<8xf32>
      %187 = vector.shape_cast %186 : vector<8xf32> to vector<8x1xf32>
      %cst_79 = arith.constant 2.560000e+02 : f32
      %188 = vector.broadcast %cst_79 : f32 to vector<8x1xf32>
      %189 = arith.divf %187, %188 : vector<8x1xf32>
      %190 = vector.broadcast %189 : vector<8x1xf32> to vector<8x256xf32>
      %191 = arith.subf %178, %190 : vector<8x256xf32>
      %192 = arith.mulf %191, %191 : vector<8x256xf32>
      %cst_80 = arith.constant dense<0.000000e+00> : vector<8xf32>
      %193 = vector.multi_reduction <add>, %192, %cst_80 [1] : vector<8x256xf32> to vector<8xf32>
      %194 = vector.shape_cast %193 : vector<8xf32> to vector<8x1xf32>
      %cst_81 = arith.constant 2.560000e+02 : f32
      %195 = vector.broadcast %cst_81 : f32 to vector<8x1xf32>
      %196 = arith.divf %194, %195 : vector<8x1xf32>
      %197 = vector.broadcast %189 : vector<8x1xf32> to vector<8x256xf32>
      %198 = arith.subf %178, %197 : vector<8x256xf32>
      %cst_82 = arith.constant 9.99999974E-6 : f32
      %199 = vector.broadcast %cst_82 : f32 to vector<8x1xf32>
      %200 = arith.addf %196, %199 : vector<8x1xf32>
      %201 = math.rsqrt %200 : vector<8x1xf32>
      %202 = vector.broadcast %201 : vector<8x1xf32> to vector<8x256xf32>
      %203 = arith.mulf %198, %202 : vector<8x256xf32>
      %c0_83 = arith.constant 0 : index
      %c0_84 = arith.constant 0 : index
      %204 = vector.load %arg15[%c0_83, %c0_84] : memref<1x256xf32, #tpu.memory_space<vmem>>, vector<1x256xf32>
      %205 = vector.broadcast %204 : vector<1x256xf32> to vector<8x256xf32>
      %206 = arith.mulf %203, %205 : vector<8x256xf32>
      %c0_85 = arith.constant 0 : index
      %c0_86 = arith.constant 0 : index
      %207 = vector.load %arg16[%c0_85, %c0_86] : memref<1x256xf32, #tpu.memory_space<vmem>>, vector<1x256xf32>
      %208 = vector.broadcast %207 : vector<1x256xf32> to vector<8x256xf32>
      %209 = arith.addf %206, %208 : vector<8x256xf32>
      %c0_87 = arith.constant 0 : index
      %c0_88 = arith.constant 0 : index
      %210 = vector.load %arg18[%c0_87, %c0_88] : memref<8x1xf32, #tpu.memory_space<vmem>>, vector<8x1xf32>
      %211 = vector.broadcast %210 : vector<8x1xf32> to vector<8x256xf32>
      %212 = arith.mulf %209, %211 : vector<8x256xf32>
      %cst_89 = arith.constant dense<0.000000e+00> : vector<256xf32>
      %213 = vector.multi_reduction <add>, %212, %cst_89 [0] : vector<8x256xf32> to vector<256xf32>
      %214 = vector.shape_cast %213 : vector<256xf32> to vector<1x256xf32>
      %215 = arith.truncf %214 : vector<1x256xf32> to vector<1x256xbf16>
      %c0_90 = arith.constant 0 : index
      %c0_91 = arith.constant 0 : index
      %216 = vector.load %arg17[%c0_90, %c0_91] : memref<256x256xbf16, #tpu.memory_space<vmem>>, vector<256x256xbf16>
      %cst_92 = arith.constant dense<0.000000e+00> : vector<1x256xf32>
      %217 = tpu.matmul %215, %216, %cst_92 {dimension_numbers = #tpu.dot_dimension_numbers<[1], [0], [0], [1], [0, 0, 1, 1], [], []>} : vector<1x256xbf16>, vector<256x256xbf16>, vector<1x256xf32> -> vector<1x256xf32>
      %c0_93 = arith.constant 0 : index
      %c0_94 = arith.constant 0 : index
      %218 = vector.load %arg20[%c0_93, %c0_94] : memref<1x256xf32, #tpu.memory_space<vmem>>, vector<1x256xf32>
      tpu.vector_store %arg20[%c0_93, %c0_94], %217 {strides = array<i32>} : memref<1x256xf32, #tpu.memory_space<vmem>>, vector<1x256xf32>,
    } else {
    }
    return
  }
  func.func @transform_0(%arg0: i32) -> (i32, i32) {
    %c0_i32 = arith.constant 0 : i32
    %c0_i32_0 = arith.constant 0 : i32
    %c0_i32_1 = arith.constant 0 : i32
    return %c0_i32, %c0_i32_0 : i32, i32
  }
  func.func @transform_1(%arg0: i32) -> (i32, i32) {
    %c0_i32 = arith.constant 0 : i32
    %c0_i32_0 = arith.constant 0 : i32
    %c0_i32_1 = arith.constant 0 : i32
    return %c0_i32, %c0_i32_0 : i32, i32
  }
  func.func @transform_2(%arg0: i32) -> (i32, i32, i32) {
    %c0_i32 = arith.constant 0 : i32
    %c0_i32_0 = arith.constant 0 : i32
    %c0_i32_1 = arith.constant 0 : i32
    return %arg0, %c0_i32, %c0_i32_0 : i32, i32, i32
  }
  func.func @transform_3(%arg0: i32) -> (i32, i32, i32) {
    %c0_i32 = arith.constant 0 : i32
    %c0_i32_0 = arith.constant 0 : i32
    %c0_i32_1 = arith.constant 0 : i32
    return %arg0, %c0_i32, %c0_i32_0 : i32, i32, i32
  }
  func.func @transform_4(%arg0: i32) -> (i32, i32, i32) {
    %c0_i32 = arith.constant 0 : i32
    %c0_i32_0 = arith.constant 0 : i32
    %c0_i32_1 = arith.constant 0 : i32
    return %arg0, %c0_i32, %c0_i32_0 : i32, i32, i32
  }
  func.func @transform_5(%arg0: i32) -> (i32, i32, i32) {
    %c0_i32 = arith.constant 0 : i32
    %c0_i32_0 = arith.constant 0 : i32
    %c0_i32_1 = arith.constant 0 : i32
    return %arg0, %c0_i32, %c0_i32_0 : i32, i32, i32
  }
  func.func @transform_6(%arg0: i32) -> (i32, i32, i32) {
    %c0_i32 = arith.constant 0 : i32
    %c0_i32_0 = arith.constant 0 : i32
    %c0_i32_1 = arith.constant 0 : i32
    return %arg0, %c0_i32, %c0_i32_0 : i32, i32, i32
  }
  func.func @transform_7(%arg0: i32) -> (i32, i32, i32) {
    %c0_i32 = arith.constant 0 : i32
    %c0_i32_0 = arith.constant 0 : i32
    %c0_i32_1 = arith.constant 0 : i32
    return %arg0, %c0_i32, %c0_i32_0 : i32, i32, i32
  }
  func.func @transform_8(%arg0: i32) -> (i32, i32, i32) {
    %c0_i32 = arith.constant 0 : i32
    %c0_i32_0 = arith.constant 0 : i32
    %c0_i32_1 = arith.constant 0 : i32
    return %arg0, %c0_i32, %c0_i32_0 : i32, i32, i32
  }
  func.func @transform_9(%arg0: i32) -> (i32, i32, i32) {
    %c0_i32 = arith.constant 0 : i32
    %c0_i32_0 = arith.constant 0 : i32
    %c0_i32_1 = arith.constant 0 : i32
    return %arg0, %c0_i32, %c0_i32_0 : i32, i32, i32
  }
  func.func @transform_10(%arg0: i32) -> (i32, i32, i32) {
    %c0_i32 = arith.constant 0 : i32
    %c0_i32_0 = arith.constant 0 : i32
    %c0_i32_1 = arith.constant 0 : i32
    return %arg0, %c0_i32, %c0_i32_0 : i32, i32, i32
  }
  func.func @transform_11(%arg0: i32) -> (i32, i32, i32) {
    %c0_i32 = arith.constant 0 : i32
    %c0_i32_0 = arith.constant 0 : i32
    %c0_i32_1 = arith.constant 0 : i32
    return %arg0, %c0_i32, %c0_i32_0 : i32, i32, i32
  }
  func.func @transform_12(%arg0: i32) -> (i32, i32, i32) {
    %c0_i32 = arith.constant 0 : i32
    %c0_i32_0 = arith.constant 0 : i32
    %c0_i32_1 = arith.constant 0 : i32
    return %arg0, %c0_i32, %c0_i32_0 : i32, i32, i32
  }
  func.func @transform_13(%arg0: i32) -> (i32, i32, i32) {
    %c0_i32 = arith.constant 0 : i32
    %c0_i32_0 = arith.constant 0 : i32
    %c0_i32_1 = arith.constant 0 : i32
    return %arg0, %c0_i32, %c0_i32_0 : i32, i32, i32
  }
  func.func @transform_14(%arg0: i32) -> (i32, i32) {
    %c0_i32 = arith.constant 0 : i32
    %c0_i32_0 = arith.constant 0 : i32
    %c0_i32_1 = arith.constant 0 : i32
    return %c0_i32, %c0_i32_0 : i32, i32
  }
  func.func @transform_15(%arg0: i32) -> (i32, i32) {
    %c0_i32 = arith.constant 0 : i32
    %c0_i32_0 = arith.constant 0 : i32
    %c0_i32_1 = arith.constant 0 : i32
    return %c0_i32, %c0_i32_0 : i32, i32
  }
  func.func @transform_16(%arg0: i32) -> (i32, i32) {
    %c0_i32 = arith.constant 0 : i32
    %c0_i32_0 = arith.constant 0 : i32
    %c0_i32_1 = arith.constant 0 : i32
    return %c0_i32, %c0_i32_0 : i32, i32
  }
  func.func @transform_17(%arg0: i32) -> (i32, i32) {
    %c0_i32 = arith.constant 0 : i32
    %c0_i32_0 = arith.constant 0 : i32
    %c0_i32_1 = arith.constant 0 : i32
    return %c0_i32, %c0_i32_0 : i32, i32
  }
  func.func @transform_18(%arg0: i32) -> (i32, i32) {
    %c0_i32 = arith.constant 0 : i32
    %c0_i32_0 = arith.constant 0 : i32
    %c0_i32_1 = arith.constant 0 : i32
    return %c0_i32, %c0_i32_0 : i32, i32
  }
  func.func @transform_19(%arg0: i32) -> (i32, i32) {
    %c0_i32 = arith.constant 0 : i32
    %c0_i32_0 = arith.constant 0 : i32
    %c0_i32_1 = arith.constant 0 : i32
    return %c0_i32, %c0_i32_0 : i32, i32
  }
}

</mosaic_0001>

<llo_original>
// kernel: _annotator_core.2
$region0: #{_annotator_core.2}
  #allocation0 [shape = 'u32[]', space=smem, size = 0x4, offset = 0x4, fixed_abs, tag = 'smem constant byte address 0x4 - core index']
  #allocation1 [shape = 'u32[144,128]{1,0:T(1,128)}', space=vmem, size = 0x12000, scoped, tag = 'internal scratch']
  #allocation2 [shape = 'f32[8,128]{1,0:T(8,128)}', space=vmem, size = 0x1000, scoped, tag = 'scratch operand']
  %s0 = inlined_call_operand.vmem [shape: f32[8,128], index: 0, kind: input, shape index: {}]
  %s1 = inlined_call_operand.vmem [shape: f32[8,8], index: 1, kind: input, shape index: {}]
  %s2 = inlined_call_operand.hbm [shape: f32[2,1,128], index: 2, kind: input, shape index: {}]
  %s3 = inlined_call_operand.hbm [shape: f32[2,1,128], index: 3, kind: input, shape index: {}]
  %s4 = inlined_call_operand.hbm [shape: bf16[2,128,384], index: 4, kind: input, shape index: {}]
  %s5 = inlined_call_operand.hbm [shape: f32[2,1,384], index: 5, kind: input, shape index: {}]
  %s6 = inlined_call_operand.hbm [shape: bf16[2,128,128], index: 6, kind: input, shape index: {}]
  %s7 = inlined_call_operand.hbm [shape: f32[2,1,128], index: 7, kind: input, shape index: {}]
  %s8 = inlined_call_operand.hbm [shape: f32[2,1,128], index: 8, kind: input, shape index: {}]
  %s9 = inlined_call_operand.hbm [shape: f32[2,1,128], index: 9, kind: input, shape index: {}]
  %s10 = inlined_call_operand.hbm [shape: bf16[2,128,512], index: 10, kind: input, shape index: {}]
  %s11 = inlined_call_operand.hbm [shape: f32[2,1,512], index: 11, kind: input, shape index: {}]
  %s12 = inlined_call_operand.hbm [shape: bf16[2,512,128], index: 12, kind: input, shape index: {}]
  %s13 = inlined_call_operand.hbm [shape: f32[2,1,128], index: 13, kind: input, shape index: {}]
  %s14 = inlined_call_operand.vmem [shape: f32[8,128], index: 14, kind: output, shape index: {}]
  %s15 = sld [smem:[#allocation0]]
  $region145: #{_annotator_core.2} parent=0
    _
  %s17 = ssub.s32 1, %s15
  %s18 = scalar_select 0, %s17, %s15
  $region1: #{_annotator_core.2} parent=0
    #allocation3 [shape = 'u8[1024]{0}', space=vmem, size = 0x400, scoped, tag = 'input window, operand 2']
    #allocation4 [shape = 's32[2]{0}', space=sflag, size = 0x8, scoped, tag = 'scoped memory for _annotator_core.2']
    #allocation5 [shape = 'u8[1024]{0}', space=vmem, size = 0x400, scoped, tag = 'input window, operand 3']
    #allocation6 [shape = 's32[2]{0}', space=sflag, size = 0x8, scoped, tag = 'scoped memory for _annotator_core.2']
    #allocation7 [shape = 'u8[196608]{0}', space=vmem, size = 0x30000, scoped, tag = 'input window, operand 4']
    #allocation8 [shape = 'u8[3072]{0}', space=vmem, size = 0xc00, scoped, tag = 'input window, operand 5']
    #allocation9 [shape = 's32[2]{0}', space=sflag, size = 0x8, scoped, tag = 'scoped memory for _annotator_core.2']
    #allocation10 [shape = 'u8[65536]{0}', space=vmem, size = 0x10000, scoped, tag = 'input window, operand 6']
    #allocation11 [shape = 'u8[1024]{0}', space=vmem, size = 0x400, scoped, tag = 'input window, operand 7']
    #allocation12 [shape = 's32[2]{0}', space=sflag, size = 0x8, scoped, tag = 'scoped memory for _annotator_core.2']
    #allocation13 [shape = 'u8[1024]{0}', space=vmem, size = 0x400, scoped, tag = 'input window, operand 8']
    #allocation14 [shape = 'u8[1024]{0}', space=vmem, size = 0x400, scoped, tag = 'input window, operand 9']
    #allocation15 [shape = 's32[2]{0}', space=sflag, size = 0x8, scoped, tag = 'scoped memory for _annotator_core.2']
    #allocation16 [shape = 'u8[262144]{0}', space=vmem, size = 0x40000, scoped, tag = 'input window, operand 10']
    #allocation17 [shape = 'u8[4096]{0}', space=vmem, size = 0x1000, scoped, tag = 'input window, operand 11']
    #allocation18 [shape = 's32[2]{0}', space=sflag, size = 0x8, scoped, tag = 'scoped memory for _annotator_core.2']
    #allocation19 [shape = 'u8[262144]{0}', space=vmem, size = 0x40000, scoped, tag = 'input window, operand 12']
    #allocation20 [shape = 'u8[1024]{0}', space=vmem, size = 0x400, scoped, tag = 'input window, operand 13']
    #allocation21 [shape = 's32[2]{0}', space=sflag, size = 0x8, scoped, tag = 'scoped memory for _annotator_core.2']
    %19 = vsyncpa [#allocation4], 0
    %s20 = scalar_lea.sflag [#allocation4], 1
    %21 = vsyncpa %s20, 0
    %22 = vsyncpa [#allocation6], 0
    %s23 = scalar_lea.sflag [#allocation6], 1
    %24 = vsyncpa %s23, 0
    %25 = vsyncpa [#allocation9], 0
    %s26 = scalar_lea.sflag [#allocation9], 1
    %27 = vsyncpa %s26, 0
    %28 = vsyncpa [#allocation12], 0
    %s29 = scalar_lea.sflag [#allocation12], 1
    %30 = vsyncpa %s29, 0
    %31 = vsyncpa [#allocation15], 0
    %s32 = scalar_lea.sflag [#allocation15], 1
    %33 = vsyncpa %s32, 0
    %34 = vsyncpa [#allocation18], 0
    %s35 = scalar_lea.sflag [#allocation18], 1
    %36 = vsyncpa %s35, 0
    %37 = vsyncpa [#allocation21], 0
    %s38 = scalar_lea.sflag [#allocation21], 1
    %39 = vsyncpa %s38, 0
    loop: start=0, step=1, limit=4
    $region2: #{_annotator_core.2} parent=1 // loop_pre_header
      _
    $region3: #{_annotator_core.2} parent=1 // loop_header
      %s41 = sphi 0, %s45
      %p42 = scmp.ge.s32.totalorder %s41, 4
      %s49 = sphi 0, %s49
      %s51 = sphi 0, %s49
      %s52 = sphi 0, %s51
      %s66 = sphi 0, %s52
      %s70 = sphi 0, %s70
      %s72 = sphi 0, %s70
      %s73 = sphi 0, %s72
      %s87 = sphi 0, %s73
      %s93 = sphi 0, %s95
      %s96 = sphi 0, %s93
      %s97 = sphi 0, %s96
      %s113 = sphi 0, %s97
      %s119 = sphi 0, %s121
      %s122 = sphi 0, %s119
      %s123 = sphi 0, %s122
      %s139 = sphi 0, %s123
      %s145 = sphi 0, %s147
      %s148 = sphi 0, %s145
      %s149 = sphi 0, %s148
      %s165 = sphi 0, %s149
      %s171 = sphi 0, %s173
      %s174 = sphi 0, %s171
      %s175 = sphi 0, %s174
      %s191 = sphi 0, %s175
      %s197 = sphi 0, %s199
      %s200 = sphi 0, %s197
      %s201 = sphi 0, %s200
      %s217 = sphi 0, %s201
      %s223 = sphi 0, %s225
      %s226 = sphi 0, %s223
      %s227 = sphi 0, %s226
      %s243 = sphi 0, %s227
      %s249 = sphi 0, %s251
      %s252 = sphi 0, %s249
      %s253 = sphi 0, %s252
      %s269 = sphi 0, %s253
      %s275 = sphi 0, %s277
      %s278 = sphi 0, %s275
      %s279 = sphi 0, %s278
      %s295 = sphi 0, %s279
      %s301 = sphi 0, %s303
      %s304 = sphi 0, %s301
      %s305 = sphi 0, %s304
      %s321 = sphi 0, %s305
      %s327 = sphi 0, %s329
      %s330 = sphi 0, %s327
      %s331 = sphi 0, %s330
      %s347 = sphi 0, %s331
      %s353 = sphi 0, %s355
      %s356 = sphi 0, %s353
      %s357 = sphi 0, %s356
      %s373 = sphi 0, %s357
      %s379 = sphi 0, %s381
      %s382 = sphi 0, %s379
      %s383 = sphi 0, %s382
      %s399 = sphi 0, %s383
      %s403 = sphi 0, %s403
      %s405 = sphi 0, %s403
      %s406 = sphi 0, %s405
      %s420 = sphi 0, %s406
    $region4: #{_annotator_core.2} parent=1 // loop_header_branch
      %44 = sbr.rel (%p42) target = $region8
    $region5: #{_annotator_core.2} parent=1 // loop_body
      %s46 = ssub.s32 %s41, 1
      %s47 = ssub.s32 %s41, 2
      %s48 = sadd.s32 %s41, 1
      %s50 = sadd.s32 %s49, 1
      %p53 = scmp.eq.s32.totalorder %s41, 1
      %p54 = scmp.ne.s32.totalorder %s49, %s51
      %p55 = scmp.eq.s32.totalorder %s41, 0
      %p56 = por %p54, %p55
      %p57 = scmp.ne.s32.totalorder %s49, %s51
      %p58 = scmp.eq.s32.totalorder %s46, 1
      %p59 = por %p57, %p58
      %p60 = scmp.ne.s32.totalorder %s51, %s52
      %p61 = scmp.eq.s32.totalorder %s46, 0
      %p62 = por %p60, %p61
      %p63 = scmp.ne.s32.totalorder %s51, %s52
      %p64 = scmp.eq.s32.totalorder %s47, 1
      %p65 = por %p63, %p64
      %p67 = scmp.ne.s32.totalorder %s52, %s66
      %p68 = scmp.eq.s32.totalorder %s47, 0
      %p69 = por %p67, %p68
      %s71 = sadd.s32 %s70, 1
      %p74 = scmp.eq.s32.totalorder %s41, 1
      %p75 = scmp.ne.s32.totalorder %s70, %s72
      %p76 = scmp.eq.s32.totalorder %s41, 0
      %p77 = por %p75, %p76
      %p78 = scmp.ne.s32.totalorder %s70, %s72
      %p79 = scmp.eq.s32.totalorder %s46, 1
      %p80 = por %p78, %p79
      %p81 = scmp.ne.s32.totalorder %s72, %s73
      %p82 = scmp.eq.s32.totalorder %s46, 0
      %p83 = por %p81, %p82
      %p84 = scmp.ne.s32.totalorder %s72, %s73
      %p85 = scmp.eq.s32.totalorder %s47, 1
      %p86 = por %p84, %p85
      %p88 = scmp.ne.s32.totalorder %s73, %s87
      %p89 = scmp.eq.s32.totalorder %s47, 0
      %p90 = por %p88, %p89
      %s91 = ssub.s32 %s41, %s48
      %p92 = scmp.eq.s32.totalorder %s91, 0
      %s94 = sadd.s32 %s93, 1
      %s95 = scalar_select %p92, %s93, %s94
      %p98 = pneg %p92
      %p99 = scmp.eq.s32.totalorder %s41, 1
      %p100 = por %p98, %p99
      %p101 = scmp.ne.s32.totalorder %s93, %s96
      %p102 = scmp.eq.s32.totalorder %s41, 0
      %p103 = por %p101, %p102
      %p104 = scmp.ne.s32.totalorder %s93, %s96
      %p105 = scmp.eq.s32.totalorder %s46, 1
      %p106 = por %p104, %p105
      %p107 = scmp.ne.s32.totalorder %s96, %s97
      %p108 = scmp.eq.s32.totalorder %s46, 0
      %p109 = por %p107, %p108
      %p110 = scmp.ne.s32.totalorder %s96, %s97
      %p111 = scmp.eq.s32.totalorder %s47, 1
      %p112 = por %p110, %p111
      %p114 = scmp.ne.s32.totalorder %s97, %s113
      %p115 = scmp.eq.s32.totalorder %s47, 0
      %p116 = por %p114, %p115
      %s117 = ssub.s32 %s41, %s48
      %p118 = scmp.eq.s32.totalorder %s117, 0
      %s120 = sadd.s32 %s119, 1
      %s121 = scalar_select %p118, %s119, %s120
      %p124 = pneg %p118
      %p125 = scmp.eq.s32.totalorder %s41, 1
      %p126 = por %p124, %p125
      %p127 = scmp.ne.s32.totalorder %s119, %s122
      %p128 = scmp.eq.s32.totalorder %s41, 0
      %p129 = por %p127, %p128
      %p130 = scmp.ne.s32.totalorder %s119, %s122
      %p131 = scmp.eq.s32.totalorder %s46, 1
      %p132 = por %p130, %p131
      %p133 = scmp.ne.s32.totalorder %s122, %s123
      %p134 = scmp.eq.s32.totalorder %s46, 0
      %p135 = por %p133, %p134
      %p136 = scmp.ne.s32.totalorder %s122, %s123
      %p137 = scmp.eq.s32.totalorder %s47, 1
      %p138 = por %p136, %p137
      %p140 = scmp.ne.s32.totalorder %s123, %s139
      %p141 = scmp.eq.s32.totalorder %s47, 0
      %p142 = por %p140, %p141
      %s143 = ssub.s32 %s41, %s48
      %p144 = scmp.eq.s32.totalorder %s143, 0
      %s146 = sadd.s32 %s145, 1
      %s147 = scalar_select %p144, %s145, %s146
      %p150 = pneg %p144
      %p151 = scmp.eq.s32.totalorder %s41, 1
      %p152 = por %p150, %p151
      %p153 = scmp.ne.s32.totalorder %s145, %s148
      %p154 = scmp.eq.s32.totalorder %s41, 0
      %p155 = por %p153, %p154
      %p156 = scmp.ne.s32.totalorder %s145, %s148
      %p157 = scmp.eq.s32.totalorder %s46, 1
      %p158 = por %p156, %p157
      %p159 = scmp.ne.s32.totalorder %s148, %s149
      %p160 = scmp.eq.s32.totalorder %s46, 0
      %p161 = por %p159, %p160
      %p162 = scmp.ne.s32.totalorder %s148, %s149
      %p163 = scmp.eq.s32.totalorder %s47, 1
      %p164 = por %p162, %p163
      %p166 = scmp.ne.s32.totalorder %s149, %s165
      %p167 = scmp.eq.s32.totalorder %s47, 0
      %p168 = por %p166, %p167
      %s169 = ssub.s32 %s41, %s48
      %p170 = scmp.eq.s32.totalorder %s169, 0
      %s172 = sadd.s32 %s171, 1
      %s173 = scalar_select %p170, %s171, %s172
      %p176 = pneg %p170
      %p177 = scmp.eq.s32.totalorder %s41, 1
      %p178 = por %p176, %p177
      %p179 = scmp.ne.s32.totalorder %s171, %s174
      %p180 = scmp.eq.s32.totalorder %s41, 0
      %p181 = por %p179, %p180
      %p182 = scmp.ne.s32.totalorder %s171, %s174
      %p183 = scmp.eq.s32.totalorder %s46, 1
      %p184 = por %p182, %p183
      %p185 = scmp.ne.s32.totalorder %s174, %s175
      %p186 = scmp.eq.s32.totalorder %s46, 0
      %p187 = por %p185, %p186
      %p188 = scmp.ne.s32.totalorder %s174, %s175
      %p189 = scmp.eq.s32.totalorder %s47, 1
      %p190 = por %p188, %p189
      %p192 = scmp.ne.s32.totalorder %s175, %s191
      %p193 = scmp.eq.s32.totalorder %s47, 0
      %p194 = por %p192, %p193
      %s195 = ssub.s32 %s41, %s48
      %p196 = scmp.eq.s32.totalorder %s195, 0
      %s198 = sadd.s32 %s197, 1
      %s199 = scalar_select %p196, %s197, %s198
      %p202 = pneg %p196
      %p203 = scmp.eq.s32.totalorder %s41, 1
      %p204 = por %p202, %p203
      %p205 = scmp.ne.s32.totalorder %s197, %s200
      %p206 = scmp.eq.s32.totalorder %s41, 0
      %p207 = por %p205, %p206
      %p208 = scmp.ne.s32.totalorder %s197, %s200
      %p209 = scmp.eq.s32.totalorder %s46, 1
      %p210 = por %p208, %p209
      %p211 = scmp.ne.s32.totalorder %s200, %s201
      %p212 = scmp.eq.s32.totalorder %s46, 0
      %p213 = por %p211, %p212
      %p214 = scmp.ne.s32.totalorder %s200, %s201
      %p215 = scmp.eq.s32.totalorder %s47, 1
      %p216 = por %p214, %p215
      %p218 = scmp.ne.s32.totalorder %s201, %s217
      %p219 = scmp.eq.s32.totalorder %s47, 0
      %p220 = por %p218, %p219
      %s221 = ssub.s32 %s41, %s48
      %p222 = scmp.eq.s32.totalorder %s221, 0
      %s224 = sadd.s32 %s223, 1
      %s225 = scalar_select %p222, %s223, %s224
      %p228 = pneg %p222
      %p229 = scmp.eq.s32.totalorder %s41, 1
      %p230 = por %p228, %p229
      %p231 = scmp.ne.s32.totalorder %s223, %s226
      %p232 = scmp.eq.s32.totalorder %s41, 0
      %p233 = por %p231, %p232
      %p234 = scmp.ne.s32.totalorder %s223, %s226
      %p235 = scmp.eq.s32.totalorder %s46, 1
      %p236 = por %p234, %p235
      %p237 = scmp.ne.s32.totalorder %s226, %s227
      %p238 = scmp.eq.s32.totalorder %s46, 0
      %p239 = por %p237, %p238
      %p240 = scmp.ne.s32.totalorder %s226, %s227
      %p241 = scmp.eq.s32.totalorder %s47, 1
      %p242 = por %p240, %p241
      %p244 = scmp.ne.s32.totalorder %s227, %s243
      %p245 = scmp.eq.s32.totalorder %s47, 0
      %p246 = por %p244, %p245
      %s247 = ssub.s32 %s41, %s48
      %p248 = scmp.eq.s32.totalorder %s247, 0
      %s250 = sadd.s32 %s249, 1
      %s251 = scalar_select %p248, %s249, %s250
      %p254 = pneg %p248
      %p255 = scmp.eq.s32.totalorder %s41, 1
      %p256 = por %p254, %p255
      %p257 = scmp.ne.s32.totalorder %s249, %s252
      %p258 = scmp.eq.s32.totalorder %s41, 0
      %p259 = por %p257, %p258
      %p260 = scmp.ne.s32.totalorder %s249, %s252
      %p261 = scmp.eq.s32.totalorder %s46, 1
      %p262 = por %p260, %p261
      %p263 = scmp.ne.s32.totalorder %s252, %s253
      %p264 = scmp.eq.s32.totalorder %s46, 0
      %p265 = por %p263, %p264
      %p266 = scmp.ne.s32.totalorder %s252, %s253
      %p267 = scmp.eq.s32.totalorder %s47, 1
      %p268 = por %p266, %p267
      %p270 = scmp.ne.s32.totalorder %s253, %s269
      %p271 = scmp.eq.s32.totalorder %s47, 0
      %p272 = por %p270, %p271
      %s273 = ssub.s32 %s41, %s48
      %p274 = scmp.eq.s32.totalorder %s273, 0
      %s276 = sadd.s32 %s275, 1
      %s277 = scalar_select %p274, %s275, %s276
      %p280 = pneg %p274
      %p281 = scmp.eq.s32.totalorder %s41, 1
      %p282 = por %p280, %p281
      %p283 = scmp.ne.s32.totalorder %s275, %s278
      %p284 = scmp.eq.s32.totalorder %s41, 0
      %p285 = por %p283, %p284
      %p286 = scmp.ne.s32.totalorder %s275, %s278
      %p287 = scmp.eq.s32.totalorder %s46, 1
      %p288 = por %p286, %p287
      %p289 = scmp.ne.s32.totalorder %s278, %s279
      %p290 = scmp.eq.s32.totalorder %s46, 0
      %p291 = por %p289, %p290
      %p292 = scmp.ne.s32.totalorder %s278, %s279
      %p293 = scmp.eq.s32.totalorder %s47, 1
      %p294 = por %p292, %p293
      %p296 = scmp.ne.s32.totalorder %s279, %s295
      %p297 = scmp.eq.s32.totalorder %s47, 0
      %p298 = por %p296, %p297
      %s299 = ssub.s32 %s41, %s48
      %p300 = scmp.eq.s32.totalorder %s299, 0
      %s302 = sadd.s32 %s301, 1
      %s303 = scalar_select %p300, %s301, %s302
      %p306 = pneg %p300
      %p307 = scmp.eq.s32.totalorder %s41, 1
      %p308 = por %p306, %p307
      %p309 = scmp.ne.s32.totalorder %s301, %s304
      %p310 = scmp.eq.s32.totalorder %s41, 0
      %p311 = por %p309, %p310
      %p312 = scmp.ne.s32.totalorder %s301, %s304
      %p313 = scmp.eq.s32.totalorder %s46, 1
      %p314 = por %p312, %p313
      %p315 = scmp.ne.s32.totalorder %s304, %s305
      %p316 = scmp.eq.s32.totalorder %s46, 0
      %p317 = por %p315, %p316
      %p318 = scmp.ne.s32.totalorder %s304, %s305
      %p319 = scmp.eq.s32.totalorder %s47, 1
      %p320 = por %p318, %p319
      %p322 = scmp.ne.s32.totalorder %s305, %s321
      %p323 = scmp.eq.s32.totalorder %s47, 0
      %p324 = por %p322, %p323
      %s325 = ssub.s32 %s41, %s48
      %p326 = scmp.eq.s32.totalorder %s325, 0
      %s328 = sadd.s32 %s327, 1
      %s329 = scalar_select %p326, %s327, %s328
      %p332 = pneg %p326
      %p333 = scmp.eq.s32.totalorder %s41, 1
      %p334 = por %p332, %p333
      %p335 = scmp.ne.s32.totalorder %s327, %s330
      %p336 = scmp.eq.s32.totalorder %s41, 0
      %p337 = por %p335, %p336
      %p338 = scmp.ne.s32.totalorder %s327, %s330
      %p339 = scmp.eq.s32.totalorder %s46, 1
      %p340 = por %p338, %p339
      %p341 = scmp.ne.s32.totalorder %s330, %s331
      %p342 = scmp.eq.s32.totalorder %s46, 0
      %p343 = por %p341, %p342
      %p344 = scmp.ne.s32.totalorder %s330, %s331
      %p345 = scmp.eq.s32.totalorder %s47, 1
      %p346 = por %p344, %p345
      %p348 = scmp.ne.s32.totalorder %s331, %s347
      %p349 = scmp.eq.s32.totalorder %s47, 0
      %p350 = por %p348, %p349
      %s351 = ssub.s32 %s41, %s48
      %p352 = scmp.eq.s32.totalorder %s351, 0
      %s354 = sadd.s32 %s353, 1
      %s355 = scalar_select %p352, %s353, %s354
      %p358 = pneg %p352
      %p359 = scmp.eq.s32.totalorder %s41, 1
      %p360 = por %p358, %p359
      %p361 = scmp.ne.s32.totalorder %s353, %s356
      %p362 = scmp.eq.s32.totalorder %s41, 0
      %p363 = por %p361, %p362
      %p364 = scmp.ne.s32.totalorder %s353, %s356
      %p365 = scmp.eq.s32.totalorder %s46, 1
      %p366 = por %p364, %p365
      %p367 = scmp.ne.s32.totalorder %s356, %s357
      %p368 = scmp.eq.s32.totalorder %s46, 0
      %p369 = por %p367, %p368
      %p370 = scmp.ne.s32.totalorder %s356, %s357
      %p371 = scmp.eq.s32.totalorder %s47, 1
      %p372 = por %p370, %p371
      %p374 = scmp.ne.s32.totalorder %s357, %s373
      %p375 = scmp.eq.s32.totalorder %s47, 0
      %p376 = por %p374, %p375
      %s377 = ssub.s32 %s41, %s48
      %p378 = scmp.eq.s32.totalorder %s377, 0
      %s380 = sadd.s32 %s379, 1
      %s381 = scalar_select %p378, %s379, %s380
      %p384 = pneg %p378
      %p385 = scmp.eq.s32.totalorder %s41, 1
      %p386 = por %p384, %p385
      %p387 = scmp.ne.s32.totalorder %s379, %s382
      %p388 = scmp.eq.s32.totalorder %s41, 0
      %p389 = por %p387, %p388
      %p390 = scmp.ne.s32.totalorder %s379, %s382
      %p391 = scmp.eq.s32.totalorder %s46, 1
      %p392 = por %p390, %p391
      %p393 = scmp.ne.s32.totalorder %s382, %s383
      %p394 = scmp.eq.s32.totalorder %s46, 0
      %p395 = por %p393, %p394
      %p396 = scmp.ne.s32.totalorder %s382, %s383
      %p397 = scmp.eq.s32.totalorder %s47, 1
      %p398 = por %p396, %p397
      %p400 = scmp.ne.s32.totalorder %s383, %s399
      %p401 = scmp.eq.s32.totalorder %s47, 0
      %p402 = por %p400, %p401
      %s404 = sadd.s32 %s403, 1
      %p407 = scmp.eq.s32.totalorder %s41, 1
      %p408 = scmp.ne.s32.totalorder %s403, %s405
      %p409 = scmp.eq.s32.totalorder %s41, 0
      %p410 = por %p408, %p409
      %p411 = scmp.ne.s32.totalorder %s403, %s405
      %p412 = scmp.eq.s32.totalorder %s46, 1
      %p413 = por %p411, %p412
      %p414 = scmp.ne.s32.totalorder %s405, %s406
      %p415 = scmp.eq.s32.totalorder %s46, 0
      %p416 = por %p414, %p415
      %p417 = scmp.ne.s32.totalorder %s405, %s406
      %p418 = scmp.eq.s32.totalorder %s47, 1
      %p419 = por %p417, %p418
      %p421 = scmp.ne.s32.totalorder %s406, %s420
      %p422 = scmp.eq.s32.totalorder %s47, 0
      %p423 = por %p421, %p422
      %p424 = scmp.le.s32.totalorder 1, %s41
      %p425 = scmp.lt.s32.totalorder %s41, 3
      %p426 = pnand %p424, %p425
      %p427 = pneg %p426
      // Predicated region
      $region9: #{_annotator_core.2} parent=5 // pred_check
        _
      $region10: #{_annotator_core.2} parent=5 // pred_check_branch
        %429 = sbr.rel (%p426) target = $region12
      $region11: #{_annotator_core.2} parent=5 // pred_region
        %s430 = ssub.s32 %s41, 1
        // Predicated region
        $region13: #{_annotator_core.2} parent=11 // pred_check
          %p431 = pneg %p62
        $region14: #{_annotator_core.2} parent=11 // pred_check_branch
          %433 = sbr.rel (%p431) target = $region16
        $region15: #{_annotator_core.2} parent=11 // pred_region
          _
        $region16: #{_annotator_core.2} parent=11 // pred_fallthru
          _
        // Predicated region
        $region17: #{_annotator_core.2} parent=11 // pred_check
          %p434 = pneg %p83
        $region18: #{_annotator_core.2} parent=11 // pred_check_branch
          %436 = sbr.rel (%p434) target = $region20
        $region19: #{_annotator_core.2} parent=11 // pred_region
          _
        $region20: #{_annotator_core.2} parent=11 // pred_fallthru
          _
      $region12: #{_annotator_core.2} parent=5 // pred_fallthru
        _
      %p437 = scmp.lt.s32.totalorder %s41, 2
      // Predicated region
      $region21: #{_annotator_core.2} parent=5 // pred_check
        %p438 = pneg %p437
      $region22: #{_annotator_core.2} parent=5 // pred_check_branch
        %440 = sbr.rel (%p438) target = $region24
      $region23: #{_annotator_core.2} parent=5 // pred_region
        // Predicated region
        $region25: #{_annotator_core.2} parent=23 // pred_check
          %p441 = pneg %p103
        $region26: #{_annotator_core.2} parent=23 // pred_check_branch
          %443 = sbr.rel (%p441) target = $region28
        $region27: #{_annotator_core.2} parent=23 // pred_region
          %s444 = sand.u32 %s93, 1
          %s445 = scalar_lea.sflag [#allocation4], %s444
          %s446 = sand.u32 %s93, 1
          %s447 = scalar_lea.vmem [#allocation3], %s446
          %s449 = ssub.s32 16, 16
          %450 = vsyncadd %s445, %s449
          %s451 = smul.addr %s41, 16
          %s452 = scalar_lea.hbm %s2, %s451
          %s454 = sshll.u32 %s447, 4
          %s455 = int_to_ptr.vmem [resolvable:$true] %s454
          %457 = dma.hbm_to_vmem [thread:$0]  %s452, 16, %s455, %s445
        $region28: #{_annotator_core.2} parent=23 // pred_fallthru
          _
        // Predicated region
        $region29: #{_annotator_core.2} parent=23 // pred_check
          %p458 = pneg %p129
        $region30: #{_annotator_core.2} parent=23 // pred_check_branch
          %460 = sbr.rel (%p458) target = $region32
        $region31: #{_annotator_core.2} parent=23 // pred_region
          %s461 = sand.u32 %s41, 1
          %s462 = scalar_lea.sflag [#allocation6], %s461
          %s463 = sand.u32 %s119, 1
          %s464 = scalar_lea.vmem [#allocation5], %s463
          %s466 = ssub.s32 16, 16
          %467 = vsyncadd %s462, %s466
          %s468 = smul.addr %s41, 16
          %s469 = scalar_lea.hbm %s3, %s468
          %s471 = sshll.u32 %s464, 4
          %s472 = int_to_ptr.vmem [resolvable:$true] %s471
          %474 = dma.hbm_to_vmem [thread:$0]  %s469, 16, %s472, %s462
        $region32: #{_annotator_core.2} parent=23 // pred_fallthru
          _
        // Predicated region
        $region33: #{_annotator_core.2} parent=23 // pred_check
          %p475 = pneg %p155
        $region34: #{_annotator_core.2} parent=23 // pred_check_branch
          %477 = sbr.rel (%p475) target = $region36
        $region35: #{_annotator_core.2} parent=23 // pred_region
          %s478 = sand.u32 %s41, 1
          %s479 = scalar_lea.sflag [#allocation6], %s478
          %s480 = sand.u32 %s145, 1
          %s481 = smul.addr %s480, 192
          %s482 = scalar_lea.vmem [#allocation7], %s481
          %s484 = ssub.s32 3072, 3072
          %485 = vsyncadd %s479, %s484
          %s486 = smul.addr %s41, 48
          %s487 = smul.addr %s486, 64
          %s488 = scalar_lea.hbm %s4, %s487
          %s489 = sshll.u32 %s482, 4
          %s490 = int_to_ptr.vmem [resolvable:$true] %s489
          %495 = dma.hbm_to_vmem [thread:$0]  %s488, 3072, %s490, %s479, 192, 192, 12
        $region36: #{_annotator_core.2} parent=23 // pred_fallthru
          _
        // Predicated region
        $region37: #{_annotator_core.2} parent=23 // pred_check
          %p496 = pneg %p181
        $region38: #{_annotator_core.2} parent=23 // pred_check_branch
          %498 = sbr.rel (%p496) target = $region40
        $region39: #{_annotator_core.2} parent=23 // pred_region
          %s499 = sand.u32 %s41, 1
          %s500 = scalar_lea.sflag [#allocation9], %s499
          %s501 = sand.u32 %s171, 1
          %s502 = smul.addr %s501, 3
          %s503 = scalar_lea.vmem [#allocation8], %s502
          %s505 = ssub.s32 48, 48
          %506 = vsyncadd %s500, %s505
          %s507 = smul.addr %s41, 3
          %s508 = smul.addr %s507, 16
          %s509 = scalar_lea.hbm %s5, %s508
          %s511 = sshll.u32 %s503, 4
          %s512 = int_to_ptr.vmem [resolvable:$true] %s511
          %514 = dma.hbm_to_vmem [thread:$0]  %s509, 48, %s512, %s500
        $region40: #{_annotator_core.2} parent=23 // pred_fallthru
          _
        // Predicated region
        $region41: #{_annotator_core.2} parent=23 // pred_check
          %p515 = pneg %p207
        $region42: #{_annotator_core.2} parent=23 // pred_check_branch
          %517 = sbr.rel (%p515) target = $region44
        $region43: #{_annotator_core.2} parent=23 // pred_region
          %s518 = sand.u32 %s41, 1
          %s519 = scalar_lea.sflag [#allocation9], %s518
          %s520 = sand.u32 %s197, 1
          %s521 = smul.addr %s520, 64
          %s522 = scalar_lea.vmem [#allocation10], %s521
          %s524 = ssub.s32 1024, 1024
          %525 = vsyncadd %s519, %s524
          %s526 = smul.addr %s41, 16
          %s527 = smul.addr %s526, 64
          %s528 = scalar_lea.hbm %s6, %s527
          %s529 = sshll.u32 %s522, 4
          %s530 = int_to_ptr.vmem [resolvable:$true] %s529
          %535 = dma.hbm_to_vmem [thread:$0]  %s528, 1024, %s530, %s519, 64, 64, 4
        $region44: #{_annotator_core.2} parent=23 // pred_fallthru
          _
        // Predicated region
        $region45: #{_annotator_core.2} parent=23 // pred_check
          %p536 = pneg %p233
        $region46: #{_annotator_core.2} parent=23 // pred_check_branch
          %538 = sbr.rel (%p536) target = $region48
        $region47: #{_annotator_core.2} parent=23 // pred_region
          %s539 = sand.u32 %s41, 1
          %s540 = scalar_lea.sflag [#allocation12], %s539
          %s541 = sand.u32 %s223, 1
          %s542 = scalar_lea.vmem [#allocation11], %s541
          %s544 = ssub.s32 16, 16
          %545 = vsyncadd %s540, %s544
          %s546 = smul.addr %s41, 16
          %s547 = scalar_lea.hbm %s7, %s546
          %s549 = sshll.u32 %s542, 4
          %s550 = int_to_ptr.vmem [resolvable:$true] %s549
          %552 = dma.hbm_to_vmem [thread:$0]  %s547, 16, %s550, %s540
        $region48: #{_annotator_core.2} parent=23 // pred_fallthru
          _
        // Predicated region
        $region49: #{_annotator_core.2} parent=23 // pred_check
          %p553 = pneg %p259
        $region50: #{_annotator_core.2} parent=23 // pred_check_branch
          %555 = sbr.rel (%p553) target = $region52
        $region51: #{_annotator_core.2} parent=23 // pred_region
          %s556 = sand.u32 %s41, 1
          %s557 = scalar_lea.sflag [#allocation12], %s556
          %s558 = sand.u32 %s249, 1
          %s559 = scalar_lea.vmem [#allocation13], %s558
          %s561 = ssub.s32 16, 16
          %562 = vsyncadd %s557, %s561
          %s563 = smul.addr %s41, 16
          %s564 = scalar_lea.hbm %s8, %s563
          %s566 = sshll.u32 %s559, 4
          %s567 = int_to_ptr.vmem [resolvable:$true] %s566
          %569 = dma.hbm_to_vmem [thread:$0]  %s564, 16, %s567, %s557
        $region52: #{_annotator_core.2} parent=23 // pred_fallthru
          _
        // Predicated region
        $region53: #{_annotator_core.2} parent=23 // pred_check
          %p570 = pneg %p285
        $region54: #{_annotator_core.2} parent=23 // pred_check_branch
          %572 = sbr.rel (%p570) target = $region56
        $region55: #{_annotator_core.2} parent=23 // pred_region
          %s573 = sand.u32 %s41, 1
          %s574 = scalar_lea.sflag [#allocation15], %s573
          %s575 = sand.u32 %s275, 1
          %s576 = scalar_lea.vmem [#allocation14], %s575
          %s578 = ssub.s32 16, 16
          %579 = vsyncadd %s574, %s578
          %s580 = smul.addr %s41, 16
          %s581 = scalar_lea.hbm %s9, %s580
          %s583 = sshll.u32 %s576, 4
          %s584 = int_to_ptr.vmem [resolvable:$true] %s583
          %586 = dma.hbm_to_vmem [thread:$0]  %s581, 16, %s584, %s574
        $region56: #{_annotator_core.2} parent=23 // pred_fallthru
          _
        // Predicated region
        $region57: #{_annotator_core.2} parent=23 // pred_check
          %p587 = pneg %p311
        $region58: #{_annotator_core.2} parent=23 // pred_check_branch
          %589 = sbr.rel (%p587) target = $region60
        $region59: #{_annotator_core.2} parent=23 // pred_region
          %s590 = sand.u32 %s41, 1
          %s591 = scalar_lea.sflag [#allocation15], %s590
          %s592 = sand.u32 %s301, 1
          %s593 = smul.addr %s592, 256
          %s594 = scalar_lea.vmem [#allocation16], %s593
          %s596 = ssub.s32 4096, 4096
          %597 = vsyncadd %s591, %s596
          %s598 = smul.addr %s41, 64
          %s599 = smul.addr %s598, 64
          %s600 = scalar_lea.hbm %s10, %s599
          %s601 = sshll.u32 %s594, 4
          %s602 = int_to_ptr.vmem [resolvable:$true] %s601
          %607 = dma.hbm_to_vmem [thread:$0]  %s600, 4096, %s602, %s591, 256, 256, 16
        $region60: #{_annotator_core.2} parent=23 // pred_fallthru
          _
        // Predicated region
        $region61: #{_annotator_core.2} parent=23 // pred_check
          %p608 = pneg %p337
        $region62: #{_annotator_core.2} parent=23 // pred_check_branch
          %610 = sbr.rel (%p608) target = $region64
        $region63: #{_annotator_core.2} parent=23 // pred_region
          %s611 = sand.u32 %s41, 1
          %s612 = scalar_lea.sflag [#allocation18], %s611
          %s613 = sand.u32 %s327, 1
          %s614 = smul.addr %s613, 4
          %s615 = scalar_lea.vmem [#allocation17], %s614
          %s617 = ssub.s32 64, 64
          %618 = vsyncadd %s612, %s617
          %s619 = smul.addr %s41, 4
          %s620 = smul.addr %s619, 16
          %s621 = scalar_lea.hbm %s11, %s620
          %s623 = sshll.u32 %s615, 4
          %s624 = int_to_ptr.vmem [resolvable:$true] %s623
          %626 = dma.hbm_to_vmem [thread:$0]  %s621, 64, %s624, %s612
        $region64: #{_annotator_core.2} parent=23 // pred_fallthru
          _
        // Predicated region
        $region65: #{_annotator_core.2} parent=23 // pred_check
          %p627 = pneg %p363
        $region66: #{_annotator_core.2} parent=23 // pred_check_branch
          %629 = sbr.rel (%p627) target = $region68
        $region67: #{_annotator_core.2} parent=23 // pred_region
          %s630 = sand.u32 %s41, 1
          %s631 = scalar_lea.sflag [#allocation18], %s630
          %s632 = sand.u32 %s353, 1
          %s633 = smul.addr %s632, 256
          %s634 = scalar_lea.vmem [#allocation19], %s633
          %s636 = ssub.s32 4096, 4096
          %637 = vsyncadd %s631, %s636
          %s638 = smul.addr %s41, 64
          %s639 = smul.addr %s638, 64
          %s640 = scalar_lea.hbm %s12, %s639
          %s641 = sshll.u32 %s634, 4
          %s642 = int_to_ptr.vmem [resolvable:$true] %s641
          %647 = dma.hbm_to_vmem [thread:$0]  %s640, 4096, %s642, %s631, 64, 64, 4
        $region68: #{_annotator_core.2} parent=23 // pred_fallthru
          _
        // Predicated region
        $region69: #{_annotator_core.2} parent=23 // pred_check
          %p648 = pneg %p389
        $region70: #{_annotator_core.2} parent=23 // pred_check_branch
          %650 = sbr.rel (%p648) target = $region72
        $region71: #{_annotator_core.2} parent=23 // pred_region
          %s651 = sand.u32 %s379, 1
          %s652 = scalar_lea.sflag [#allocation21], %s651
          %s653 = sand.u32 %s379, 1
          %s654 = scalar_lea.vmem [#allocation20], %s653
          %s656 = ssub.s32 16, 16
          %657 = vsyncadd %s652, %s656
          %s658 = smul.addr %s41, 16
          %s659 = scalar_lea.hbm %s13, %s658
          %s661 = sshll.u32 %s654, 4
          %s662 = int_to_ptr.vmem [resolvable:$true] %s661
          %664 = dma.hbm_to_vmem [thread:$0]  %s659, 16, %s662, %s652
        $region72: #{_annotator_core.2} parent=23 // pred_fallthru
          _
      $region24: #{_annotator_core.2} parent=5 // pred_fallthru
        _
      %p665 = scmp.le.s32.totalorder 1, %s41
      %p666 = scmp.lt.s32.totalorder %s41, 3
      %p667 = pnand %p665, %p666
      %p668 = pneg %p667
      // Predicated region
      $region73: #{_annotator_core.2} parent=5 // pred_check
        _
      $region74: #{_annotator_core.2} parent=5 // pred_check_branch
        %670 = sbr.rel (%p667) target = $region76
      $region75: #{_annotator_core.2} parent=5 // pred_region
        %s671 = ssub.s32 %s41, 1
        %s672 = sand.u32 %s96, 1
        %s673 = scalar_lea.sflag [#allocation4], %s672
        %s674 = sand.u32 %s96, 1
        %s675 = scalar_lea.vmem [#allocation3], %s674
        // Predicated region
        $region77: #{_annotator_core.2} parent=75 // pred_check
          %p676 = pneg %p109
        $region78: #{_annotator_core.2} parent=75 // pred_check_branch
          %678 = sbr.rel (%p676) target = $region80
        $region79: #{_annotator_core.2} parent=75 // pred_region
          %679 = dma.done %s673, 16
        $region80: #{_annotator_core.2} parent=75 // pred_fallthru
          _
        %s680 = sand.u32 %s46, 1
        %s681 = scalar_lea.sflag [#allocation6], %s680
        %s682 = sand.u32 %s122, 1
        %s683 = scalar_lea.vmem [#allocation5], %s682
        // Predicated region
        $region81: #{_annotator_core.2} parent=75 // pred_check
          %p684 = pneg %p135
        $region82: #{_annotator_core.2} parent=75 // pred_check_branch
          %686 = sbr.rel (%p684) target = $region84
        $region83: #{_annotator_core.2} parent=75 // pred_region
          %687 = dma.done %s681, 16
        $region84: #{_annotator_core.2} parent=75 // pred_fallthru
          _
        %s688 = sand.u32 %s46, 1
        %s689 = scalar_lea.sflag [#allocation6], %s688
        %s690 = sand.u32 %s148, 1
        %s691 = smul.addr %s690, 192
        %s692 = scalar_lea.vmem [#allocation7], %s691
        // Predicated region
        $region85: #{_annotator_core.2} parent=75 // pred_check
          %p693 = pneg %p161
        $region86: #{_annotator_core.2} parent=75 // pred_check_branch
          %695 = sbr.rel (%p693) target = $region88
        $region87: #{_annotator_core.2} parent=75 // pred_region
          %696 = dma.done %s689, 3072
        $region88: #{_annotator_core.2} parent=75 // pred_fallthru
          _
        %s697 = sand.u32 %s46, 1
        %s698 = scalar_lea.sflag [#allocation9], %s697
        %s699 = sand.u32 %s174, 1
        %s700 = smul.addr %s699, 3
        %s701 = scalar_lea.vmem [#allocation8], %s700
        // Predicated region
        $region89: #{_annotator_core.2} parent=75 // pred_check
          %p702 = pneg %p187
        $region90: #{_annotator_core.2} parent=75 // pred_check_branch
          %704 = sbr.rel (%p702) target = $region92
        $region91: #{_annotator_core.2} parent=75 // pred_region
          %705 = dma.done %s698, 48
        $region92: #{_annotator_core.2} parent=75 // pred_fallthru
          _
        %s706 = sand.u32 %s46, 1
        %s707 = scalar_lea.sflag [#allocation9], %s706
        %s708 = sand.u32 %s200, 1
        %s709 = smul.addr %s708, 64
        %s710 = scalar_lea.vmem [#allocation10], %s709
        // Predicated region
        $region93: #{_annotator_core.2} parent=75 // pred_check
          %p711 = pneg %p213
        $region94: #{_annotator_core.2} parent=75 // pred_check_branch
          %713 = sbr.rel (%p711) target = $region96
        $region95: #{_annotator_core.2} parent=75 // pred_region
          %714 = dma.done %s707, 1024
        $region96: #{_annotator_core.2} parent=75 // pred_fallthru
          _
        %s715 = sand.u32 %s46, 1
        %s716 = scalar_lea.sflag [#allocation12], %s715
        %s717 = sand.u32 %s226, 1
        %s718 = scalar_lea.vmem [#allocation11], %s717
        // Predicated region
        $region97: #{_annotator_core.2} parent=75 // pred_check
          %p719 = pneg %p239
        $region98: #{_annotator_core.2} parent=75 // pred_check_branch
          %721 = sbr.rel (%p719) target = $region100
        $region99: #{_annotator_core.2} parent=75 // pred_region
          %722 = dma.done %s716, 16
        $region100: #{_annotator_core.2} parent=75 // pred_fallthru
          _
        %s723 = sand.u32 %s46, 1
        %s724 = scalar_lea.sflag [#allocation12], %s723
        %s725 = sand.u32 %s252, 1
        %s726 = scalar_lea.vmem [#allocation13], %s725
        // Predicated region
        $region101: #{_annotator_core.2} parent=75 // pred_check
          %p727 = pneg %p265
        $region102: #{_annotator_core.2} parent=75 // pred_check_branch
          %729 = sbr.rel (%p727) target = $region104
        $region103: #{_annotator_core.2} parent=75 // pred_region
          %730 = dma.done %s724, 16
        $region104: #{_annotator_core.2} parent=75 // pred_fallthru
          _
        %s731 = sand.u32 %s46, 1
        %s732 = scalar_lea.sflag [#allocation15], %s731
        %s733 = sand.u32 %s278, 1
        %s734 = scalar_lea.vmem [#allocation14], %s733
        // Predicated region
        $region105: #{_annotator_core.2} parent=75 // pred_check
          %p735 = pneg %p291
        $region106: #{_annotator_core.2} parent=75 // pred_check_branch
          %737 = sbr.rel (%p735) target = $region108
        $region107: #{_annotator_core.2} parent=75 // pred_region
          %738 = dma.done %s732, 16
        $region108: #{_annotator_core.2} parent=75 // pred_fallthru
          _
        %s739 = sand.u32 %s46, 1
        %s740 = scalar_lea.sflag [#allocation15], %s739
        %s741 = sand.u32 %s304, 1
        %s742 = smul.addr %s741, 256
        %s743 = scalar_lea.vmem [#allocation16], %s742
        // Predicated region
        $region109: #{_annotator_core.2} parent=75 // pred_check
          %p744 = pneg %p317
        $region110: #{_annotator_core.2} parent=75 // pred_check_branch
          %746 = sbr.rel (%p744) target = $region112
        $region111: #{_annotator_core.2} parent=75 // pred_region
          %747 = dma.done %s740, 4096
        $region112: #{_annotator_core.2} parent=75 // pred_fallthru
          _
        %s748 = sand.u32 %s46, 1
        %s749 = scalar_lea.sflag [#allocation18], %s748
        %s750 = sand.u32 %s330, 1
        %s751 = smul.addr %s750, 4
        %s752 = scalar_lea.vmem [#allocation17], %s751
        // Predicated region
        $region113: #{_annotator_core.2} parent=75 // pred_check
          %p753 = pneg %p343
        $region114: #{_annotator_core.2} parent=75 // pred_check_branch
          %755 = sbr.rel (%p753) target = $region116
        $region115: #{_annotator_core.2} parent=75 // pred_region
          %756 = dma.done %s749, 64
        $region116: #{_annotator_core.2} parent=75 // pred_fallthru
          _
        %s757 = sand.u32 %s46, 1
        %s758 = scalar_lea.sflag [#allocation18], %s757
        %s759 = sand.u32 %s356, 1
        %s760 = smul.addr %s759, 256
        %s761 = scalar_lea.vmem [#allocation19], %s760
        // Predicated region
        $region117: #{_annotator_core.2} parent=75 // pred_check
          %p762 = pneg %p369
        $region118: #{_annotator_core.2} parent=75 // pred_check_branch
          %764 = sbr.rel (%p762) target = $region120
        $region119: #{_annotator_core.2} parent=75 // pred_region
          %765 = dma.done %s758, 4096
        $region120: #{_annotator_core.2} parent=75 // pred_fallthru
          _
        %s766 = sand.u32 %s382, 1
        %s767 = scalar_lea.sflag [#allocation21], %s766
        %s768 = sand.u32 %s382, 1
        %s769 = scalar_lea.vmem [#allocation20], %s768
        // Predicated region
        $region121: #{_annotator_core.2} parent=75 // pred_check
          %p770 = pneg %p395
        $region122: #{_annotator_core.2} parent=75 // pred_check_branch
          %772 = sbr.rel (%p770) target = $region124
        $region123: #{_annotator_core.2} parent=75 // pred_region
          %773 = dma.done %s767, 16
        $region124: #{_annotator_core.2} parent=75 // pred_fallthru
          _
        %p774 = pneg %p62
        %p775 = pneg %p59
        %p776 = pneg %p83
        %p777 = pneg %p80
        %s778 = sand.u32 %s96, 1
        %s779 = scalar_lea.sflag [#allocation4], %s778
        %s780 = sand.u32 %s96, 1
        %s781 = scalar_lea.vmem [#allocation3], %s780
        %p782 = pneg %p109
        %p783 = pneg %p106
        %s784 = sand.u32 %s46, 1
        %s785 = scalar_lea.sflag [#allocation6], %s784
        %s786 = sand.u32 %s122, 1
        %s787 = scalar_lea.vmem [#allocation5], %s786
        %p788 = pneg %p135
        %p789 = pneg %p132
        %s790 = sand.u32 %s46, 1
        %s791 = scalar_lea.sflag [#allocation6], %s790
        %s792 = sand.u32 %s148, 1
        %s793 = smul.addr %s792, 192
        %s794 = scalar_lea.vmem [#allocation7], %s793
        %p795 = pneg %p161
        %p796 = pneg %p158
        %s797 = sand.u32 %s46, 1
        %s798 = scalar_lea.sflag [#allocation9], %s797
        %s799 = sand.u32 %s174, 1
        %s800 = smul.addr %s799, 3
        %s801 = scalar_lea.vmem [#allocation8], %s800
        %p802 = pneg %p187
        %p803 = pneg %p184
        %s804 = sand.u32 %s46, 1
        %s805 = scalar_lea.sflag [#allocation9], %s804
        %s806 = sand.u32 %s200, 1
        %s807 = smul.addr %s806, 64
        %s808 = scalar_lea.vmem [#allocation10], %s807
        %p809 = pneg %p213
        %p810 = pneg %p210
        %s811 = sand.u32 %s46, 1
        %s812 = scalar_lea.sflag [#allocation12], %s811
        %s813 = sand.u32 %s226, 1
        %s814 = scalar_lea.vmem [#allocation11], %s813
        %p815 = pneg %p239
        %p816 = pneg %p236
        %s817 = sand.u32 %s46, 1
        %s818 = scalar_lea.sflag [#allocation12], %s817
        %s819 = sand.u32 %s252, 1
        %s820 = scalar_lea.vmem [#allocation13], %s819
        %p821 = pneg %p265
        %p822 = pneg %p262
        %s823 = sand.u32 %s46, 1
        %s824 = scalar_lea.sflag [#allocation15], %s823
        %s825 = sand.u32 %s278, 1
        %s826 = scalar_lea.vmem [#allocation14], %s825
        %p827 = pneg %p291
        %p828 = pneg %p288
        %s829 = sand.u32 %s46, 1
        %s830 = scalar_lea.sflag [#allocation15], %s829
        %s831 = sand.u32 %s304, 1
        %s832 = smul.addr %s831, 256
        %s833 = scalar_lea.vmem [#allocation16], %s832
        %p834 = pneg %p317
        %p835 = pneg %p314
        %s836 = sand.u32 %s46, 1
        %s837 = scalar_lea.sflag [#allocation18], %s836
        %s838 = sand.u32 %s330, 1
        %s839 = smul.addr %s838, 4
        %s840 = scalar_lea.vmem [#allocation17], %s839
        %p841 = pneg %p343
        %p842 = pneg %p340
        %s843 = sand.u32 %s46, 1
        %s844 = scalar_lea.sflag [#allocation18], %s843
        %s845 = sand.u32 %s356, 1
        %s846 = smul.addr %s845, 256
        %s847 = scalar_lea.vmem [#allocation19], %s846
        %p848 = pneg %p369
        %p849 = pneg %p366
        %s850 = sand.u32 %s382, 1
        %s851 = scalar_lea.sflag [#allocation21], %s850
        %s852 = sand.u32 %s382, 1
        %s853 = scalar_lea.vmem [#allocation20], %s852
        %p854 = pneg %p395
        %p855 = pneg %p392
        %p856 = pneg %p416
        %p857 = pneg %p413
        %p859 = scmp.eq.s32.totalorder %s46, 0
        // Predicated region
        $region125: #{_annotator_core.2} parent=75 // pred_check
          %p860 = pneg %p859
        $region126: #{_annotator_core.2} parent=75 // pred_check_branch
          %862 = sbr.rel (%p860) target = $region128
        $region127: #{_annotator_core.2} parent=75 // pred_region
          %v863 = vld [vmem:[%s0] sm:$0xff]
          %864 = vst [vmem:[#allocation2] sm:$0xff] %v863
        $region128: #{_annotator_core.2} parent=75 // pred_fallthru
          _
        %v865 = vld [vmem:[#allocation2] sm:$0xff]
        %866 = vadd.xlane.f32.xlu0 %v865
        %v867 = vpop.xlane.xlu0 %866
        %v868 = vrcp.pop 128.0
        %v869 = vmul.f32 %v867, %v868
        %v870 = vsub.f32 %v865, %v869
        %v871 = vmul.f32 %v870, %v870
        %872 = vadd.xlane.f32.xlu0 %v871
        %v873 = vpop.xlane.xlu0 %872
        %v874 = vmul.f32 %v873, %v868
        %v875 = vadd.f32 %v874, 1e-05
        %v876 = vrsqrt.pop %v875
        %v877 = vmul.f32 %v870, %v876
        %v878 = vld [vmem:[%s675] sm:$0x1]
        %v880 = vlaneseq
        %v881 = vshrl.u32 %v880, 7
        %v882 = vsub.s32 0, %v881
        %v883 = vrot.slane %v878, %v882
        %v885 = vmul.f32 %v877, %v883
        %v886 = vld [vmem:[%s683] sm:$0x1]
        %v888 = vlaneseq
        %v889 = vshrl.u32 %v888, 7
        %v890 = vsub.s32 0, %v889
        %v891 = vrot.slane %v886, %v890
        %v893 = vadd.f32 %v885, %v891
        %v894 = vpack.c.bf16 %v893, %v893
        %v895 = vld [vmem:[%s692] sm:$0xff]
        %v896 = vld [vmem:[%s692 + $0x8] sm:$0xf]
        %v897 = vld [vmem:[%s692 + $0xc] sm:$0xff]
        %v898 = vld [vmem:[%s692 + $0x14] sm:$0xf]
        %v899 = vld [vmem:[%s692 + $0x18] sm:$0xff]
        %v900 = vld [vmem:[%s692 + $0x20] sm:$0xf]
        %v901 = vld [vmem:[%s692 + $0x24] sm:$0xff]
        %v902 = vld [vmem:[%s692 + $0x2c] sm:$0xf]
        %v903 = vld [vmem:[%s692 + $0x30] sm:$0xff]
        %v904 = vld [vmem:[%s692 + $0x38] sm:$0xf]
        %v905 = vld [vmem:[%s692 + $0x3c] sm:$0xff]
        %v906 = vld [vmem:[%s692 + $0x44] sm:$0xf]
        %v907 = vld [vmem:[%s692 + $0x48] sm:$0xff]
        %v908 = vld [vmem:[%s692 + $0x50] sm:$0xf]
        %v909 = vld [vmem:[%s692 + $0x54] sm:$0xff]
        %v910 = vld [vmem:[%s692 + $0x5c] sm:$0xf]
        %v911 = vld [vmem:[%s692 + $0x60] sm:$0xff]
        %v912 = vld [vmem:[%s692 + $0x68] sm:$0xf]
        %v913 = vld [vmem:[%s692 + $0x6c] sm:$0xff]
        %v914 = vld [vmem:[%s692 + $0x74] sm:$0xf]
        %v915 = vld [vmem:[%s692 + $0x78] sm:$0xff]
        %v916 = vld [vmem:[%s692 + $0x80] sm:$0xf]
        %v917 = vld [vmem:[%s692 + $0x84] sm:$0xff]
        %v918 = vld [vmem:[%s692 + $0x8c] sm:$0xf]
        %v919 = vld [vmem:[%s692 + $0x90] sm:$0xff]
        %v920 = vld [vmem:[%s692 + $0x98] sm:$0xf]
        %v921 = vld [vmem:[%s692 + $0x9c] sm:$0xff]
        %v922 = vld [vmem:[%s692 + $0xa4] sm:$0xf]
        %v923 = vld [vmem:[%s692 + $0xa8] sm:$0xff]
        %v924 = vld [vmem:[%s692 + $0xb0] sm:$0xf]
        %v925 = vld [vmem:[%s692 + $0xb4] sm:$0xff]
        %v926 = vld [vmem:[%s692 + $0xbc] sm:$0xf]
        %v927 = vld [vmem:[%s701] sm:$0x7]
        %v929 = vlaneseq
        %v930 = vshrl.u32 %v929, 7
        %v931 = vsub.s32 0, %v930
        %v932 = vrot.slane %v927, %v931
        %v933 = vlaneseq
        %v934 = vshrl.u32 %v933, 7
        %v935 = vsub.s32 1, %v934
        %v936 = vrot.slane %v927, %v935
        %v937 = vlaneseq
        %v938 = vshrl.u32 %v937, 7
        %v939 = vsub.s32 2, %v938
        %v940 = vrot.slane %v927, %v939
        %v976 = vunpack.c.l.b16 %v895
        %v977 = vunpack.c.h.b16 %v895
        %v978 = vunpack.c.l.b16 %v896
        %v979 = vunpack.c.l.b16 %v897
        %v980 = vunpack.c.h.b16 %v897
        %v981 = vunpack.c.l.b16 %v898
        %v982 = vunpack.c.l.b16 %v899
        %v983 = vunpack.c.h.b16 %v899
        %v984 = vunpack.c.l.b16 %v900
        %v985 = vunpack.c.l.b16 %v901
        %v986 = vunpack.c.h.b16 %v901
        %v987 = vunpack.c.l.b16 %v902
        %v988 = vunpack.c.l.b16 %v903
        %v989 = vunpack.c.h.b16 %v903
        %v990 = vunpack.c.l.b16 %v904
        %v991 = vunpack.c.l.b16 %v905
        %v992 = vunpack.c.h.b16 %v905
        %v993 = vunpack.c.l.b16 %v906
        %v994 = vunpack.c.l.b16 %v907
        %v995 = vunpack.c.h.b16 %v907
        %v996 = vunpack.c.l.b16 %v908
        %v997 = vunpack.c.l.b16 %v909
        %v998 = vunpack.c.h.b16 %v909
        %v999 = vunpack.c.l.b16 %v910
        %v1000 = vunpack.c.l.b16 %v911
        %v1001 = vunpack.c.h.b16 %v911
        %v1002 = vunpack.c.l.b16 %v912
        %v1003 = vunpack.c.l.b16 %v913
        %v1004 = vunpack.c.h.b16 %v913
        %v1005 = vunpack.c.l.b16 %v914
        %v1006 = vunpack.c.l.b16 %v915
        %v1007 = vunpack.c.h.b16 %v915
        %v1008 = vunpack.c.l.b16 %v916
        %v1009 = vunpack.c.l.b16 %v917
        %v1010 = vunpack.c.h.b16 %v917
        %v1011 = vunpack.c.l.b16 %v918
        %v1012 = vunpack.c.l.b16 %v919
        %v1013 = vunpack.c.h.b16 %v919
        %v1014 = vunpack.c.l.b16 %v920
        %v1015 = vunpack.c.l.b16 %v921
        %v1016 = vunpack.c.h.b16 %v921
        %v1017 = vunpack.c.l.b16 %v922
        %v1018 = vunpack.c.l.b16 %v923
        %v1019 = vunpack.c.h.b16 %v923
        %v1020 = vunpack.c.l.b16 %v924
        %v1021 = vunpack.c.l.b16 %v925
        %v1022 = vunpack.c.h.b16 %v925
        %v1023 = vunpack.c.l.b16 %v926
        %v1024 = vpack.c.b16 %v979, %v976
        %v1025 = vpack.c.b16 %v980, %v977
        %v1026 = vpack.c.b16 %v981, %v978
        %v1027 = vpack.c.b16 %v985, %v982
        %v1028 = vpack.c.b16 %v986, %v983
        %v1029 = vpack.c.b16 %v987, %v984
        %v1030 = vpack.c.b16 %v991, %v988
        %v1031 = vpack.c.b16 %v992, %v989
        %v1032 = vpack.c.b16 %v993, %v990
        %v1033 = vpack.c.b16 %v997, %v994
        %v1034 = vpack.c.b16 %v998, %v995
        %v1035 = vpack.c.b16 %v999, %v996
        %v1036 = vpack.c.b16 %v1003, %v1000
        %v1037 = vpack.c.b16 %v1004, %v1001
        %v1038 = vpack.c.b16 %v1005, %v1002
        %v1039 = vpack.c.b16 %v1009, %v1006
        %v1040 = vpack.c.b16 %v1010, %v1007
        %v1041 = vpack.c.b16 %v1011, %v1008
        %v1042 = vpack.c.b16 %v1015, %v1012
        %v1043 = vpack.c.b16 %v1016, %v1013
        %v1044 = vpack.c.b16 %v1017, %v1014
        %v1045 = vpack.c.b16 %v1021, %v1018
        %v1046 = vpack.c.b16 %v1022, %v1019
        %v1047 = vpack.c.b16 %v1023, %v1020
        %1072 = vmatprep.subr.bf16.mxu0 %v1025
        %1073 = vmatpush1.bf16.msra.mxu0 %v1024
        %1074 = vmatprep.subr.bf16.mxu0 %v1028
        %1075 = vmatpush1.bf16.msra.mxu0 %v1027
        %1076 = vmatprep.subr.bf16.mxu0 %v1031
        %1077 = vmatpush1.bf16.msra.mxu0 %v1030
        %1078 = vmatprep.subr.bf16.mxu0 %v1034
        %1079 = vmatpush1.bf16.msra.mxu0 %v1033
        %1080 = vmatprep.subr.bf16.mxu0 %v1037
        %1081 = vmatpush1.bf16.msra.mxu0 %v1036
        %1082 = vmatprep.subr.bf16.mxu0 %v1040
        %1083 = vmatpush1.bf16.msra.mxu0 %v1039
        %1084 = vmatprep.subr.bf16.mxu0 %v1043
        %1085 = vmatpush1.bf16.msra.mxu0 %v1042
        %1086 = vmatprep.subr.bf16.mxu0 %v1046
        %1087 = vmatpush1.bf16.msra.mxu0 %v1045
        %1088 = vmatprep.subr.bf16.mxu0 0
        %1089 = vmatpush1.bf16.msra.mxu0 0
        %1090 = vmatprep.subr.bf16.mxu0 0
        %1091 = vmatpush1.bf16.msra.mxu0 0
        %1092 = vmatprep.subr.bf16.mxu0 0
        %1093 = vmatpush1.bf16.msra.mxu0 0
        %1094 = vmatprep.subr.bf16.mxu0 0
        %1095 = vmatpush1.bf16.msra.mxu0 0
        %1096 = vmatprep.subr.bf16.mxu0 0
        %1097 = vmatpush1.bf16.msra.mxu0 0
        %1098 = vmatprep.subr.bf16.mxu0 0
        %1099 = vmatpush1.bf16.msra.mxu0 0
        %1100 = vmatprep.subr.bf16.mxu0 0
        %1101 = vmatpush1.bf16.msra.mxu0 0
        %1102 = vmatprep.subr.bf16.mxu0 0
        %1103 = vmatpush1.bf16.msra.mxu0 0
        %1104 = vmatprep.mubr.bf16.mxu0 0
        %1105 = vmatmul.mubr.bf16.gmra.mrb[0].mxu0 %v894
        %v1106 = vpop.f32.mrb[0].mxu0
        %v1107 = vadd.f32 %v932, %v1106
        %v1108 = vpop.f32.mrb[0].mxu0
        %v1109 = vadd.f32 %v936, %v1108
        %v1110 = vpop.f32.mrb[0].mxu0
        %v1111 = vpop.f32.mrb[0].mxu0
        %1112 = vdwg.mxu0
        %1113 = vmatprep.subr.bf16.mxu0 0
        %1114 = vmatpush1.bf16.msra.mxu0 %v1026
        %1115 = vmatprep.subr.bf16.mxu0 0
        %1116 = vmatpush1.bf16.msra.mxu0 %v1029
        %1117 = vmatprep.subr.bf16.mxu0 0
        %1118 = vmatpush1.bf16.msra.mxu0 %v1032
        %1119 = vmatprep.subr.bf16.mxu0 0
        %1120 = vmatpush1.bf16.msra.mxu0 %v1035
        %1121 = vmatprep.subr.bf16.mxu0 0
        %1122 = vmatpush1.bf16.msra.mxu0 %v1038
        %1123 = vmatprep.subr.bf16.mxu0 0
        %1124 = vmatpush1.bf16.msra.mxu0 %v1041
        %1125 = vmatprep.subr.bf16.mxu0 0
        %1126 = vmatpush1.bf16.msra.mxu0 %v1044
        %1127 = vmatprep.subr.bf16.mxu0 0
        %1128 = vmatpush1.bf16.msra.mxu0 %v1047
        %1129 = vmatprep.subr.bf16.mxu0 0
        %1130 = vmatpush1.bf16.msra.mxu0 0
        %1131 = vmatprep.subr.bf16.mxu0 0
        %1132 = vmatpush1.bf16.msra.mxu0 0
        %1133 = vmatprep.subr.bf16.mxu0 0
        %1134 = vmatpush1.bf16.msra.mxu0 0
        %1135 = vmatprep.subr.bf16.mxu0 0
        %1136 = vmatpush1.bf16.msra.mxu0 0
        %1137 = vmatprep.subr.bf16.mxu0 0
        %1138 = vmatpush1.bf16.msra.mxu0 0
        %1139 = vmatprep.subr.bf16.mxu0 0
        %1140 = vmatpush1.bf16.msra.mxu0 0
        %1141 = vmatprep.subr.bf16.mxu0 0
        %1142 = vmatpush1.bf16.msra.mxu0 0
        %1143 = vmatprep.subr.bf16.mxu0 0
        %1144 = vmatpush1.bf16.msra.mxu0 0
        %1145 = vmatprep.mubr.bf16.mxu0 0
        %1146 = vmatmul.mubr.bf16.gmra.mrb[0].mxu0 %v894
        %v1147 = vpop.f32.mrb[0].mxu0
        %v1148 = vadd.f32 %v940, %v1147
        %v1149 = vpop.f32.mrb[0].mxu0
        %v1150 = vpop.f32.mrb[0].mxu0
        %v1151 = vpop.f32.mrb[0].mxu0
        %1152 = vdwg.mxu0
        %v1153 = vpack.c.bf16 %v1107, %v1107
        %v1154 = vpack.c.bf16 %v1109, %v1109
        %v1155 = vpack.c.bf16 %v1148, %v1148
        %v1156 = vld [vmem:[%s1] sm:$0xff]
        %vm1157 = vcmask 523264
        %v1159 = vsel %vm1157, %v1153, 0
        %v1162 = vsel %vm1157, %v1154, 0
        %1164 = vmatprep.subr.bf16.mxu0 0
        %1165 = vmatpush1.bf16.xpose.msra.mxu0 %v1162
        %1166 = vmatprep.subr.bf16.mxu0 0
        %1167 = vmatpush1.bf16.xpose.msra.mxu0 0
        %1168 = vmatprep.subr.bf16.mxu0 0
        %1169 = vmatpush1.bf16.xpose.msra.mxu0 0
        %1170 = vmatprep.subr.bf16.mxu0 0
        %1171 = vmatpush1.bf16.xpose.msra.mxu0 0
        %1172 = vmatprep.subr.bf16.mxu0 0
        %1173 = vmatpush1.bf16.xpose.msra.mxu0 0
        %1174 = vmatprep.subr.bf16.mxu0 0
        %1175 = vmatpush1.bf16.xpose.msra.mxu0 0
        %1176 = vmatprep.subr.bf16.mxu0 0
        %1177 = vmatpush1.bf16.xpose.msra.mxu0 0
        %1178 = vmatprep.subr.bf16.mxu0 0
        %1179 = vmatpush1.bf16.xpose.msra.mxu0 0
        %1180 = vmatprep.subr.bf16.mxu0 0
        %1181 = vmatpush1.bf16.xpose.msra.mxu0 0
        %1182 = vmatprep.subr.bf16.mxu0 0
        %1183 = vmatpush1.bf16.xpose.msra.mxu0 0
        %1184 = vmatprep.subr.bf16.mxu0 0
        %1185 = vmatpush1.bf16.xpose.msra.mxu0 0
        %1186 = vmatprep.subr.bf16.mxu0 0
        %1187 = vmatpush1.bf16.xpose.msra.mxu0 0
        %1188 = vmatprep.subr.bf16.mxu0 0
        %1189 = vmatpush1.bf16.xpose.msra.mxu0 0
        %1190 = vmatprep.subr.bf16.mxu0 0
        %1191 = vmatpush1.bf16.xpose.msra.mxu0 0
        %1192 = vmatprep.subr.bf16.mxu0 0
        %1193 = vmatpush1.bf16.xpose.msra.mxu0 0
        %1194 = vmatprep.subr.bf16.mxu0 0
        %1195 = vmatpush1.bf16.xpose.msra.mxu0 0
        %1196 = vmatprep.mubr.bf16.mxu0 0
        %1197 = vmatmul.mubr.bf16.gmra.mrb[0].mxu0 %v1159
        %v1198 = vpop.f32.mrb[0].mxu0
        %v1199 = vadd.f32 %v1156, %v1198
        %v1200 = vpop.f32.mrb[0].mxu0
        %v1201 = vpop.f32.mrb[0].mxu0
        %v1202 = vpop.f32.mrb[0].mxu0
        %1203 = vdwg.mxu0
        %vm1204 = vcmask 64512
        %v1205 = vsel %vm1204, %v1199, -inf
        %1206 = vmax.xlane.f32.xlu0 %v1205
        %v1207 = vpop.xlane.xlu0 %1206
        %v1208 = vsub.f32 %v1199, %v1207
        %v1209 = vmul.f32 %v1208, 1.442695
        %v1210 = vpow.pop %v1209
        %v1211 = vsel %vm1204, %v1210, 0.0
        %1212 = vadd.xlane.f32.xlu0 %v1211
        %v1213 = vpop.xlane.xlu0 %1212
        %v1214 = vrcp.pop %v1213
        %v1215 = vmul.f32 %v1210, %v1214
        %v1216 = vpack.c.bf16 %v1215, %v1215
        %v1218 = vsel %vm1204, %v1216, 0
        %vm1220 = vcmask 1043456
        %v1222 = vsel %vm1220, %v1155, 0
        %1224 = vmatprep.subr.bf16.mxu0 0
        %1225 = vmatpush1.bf16.msra.mxu0 %v1222
        %1226 = vmatprep.subr.bf16.mxu0 0
        %1227 = vmatpush1.bf16.msra.mxu0 0
        %1228 = vmatprep.subr.bf16.mxu0 0
        %1229 = vmatpush1.bf16.msra.mxu0 0
        %1230 = vmatprep.subr.bf16.mxu0 0
        %1231 = vmatpush1.bf16.msra.mxu0 0
        %1232 = vmatprep.subr.bf16.mxu0 0
        %1233 = vmatpush1.bf16.msra.mxu0 0
        %1234 = vmatprep.subr.bf16.mxu0 0
        %1235 = vmatpush1.bf16.msra.mxu0 0
        %1236 = vmatprep.subr.bf16.mxu0 0
        %1237 = vmatpush1.bf16.msra.mxu0 0
        %1238 = vmatprep.subr.bf16.mxu0 0
        %1239 = vmatpush1.bf16.msra.mxu0 0
        %1240 = vmatprep.subr.bf16.mxu0 0
        %1241 = vmatpush1.bf16.msra.mxu0 0
        %1242 = vmatprep.subr.bf16.mxu0 0
        %1243 = vmatpush1.bf16.msra.mxu0 0
        %1244 = vmatprep.subr.bf16.mxu0 0
        %1245 = vmatpush1.bf16.msra.mxu0 0
        %1246 = vmatprep.subr.bf16.mxu0 0
        %1247 = vmatpush1.bf16.msra.mxu0 0
        %1248 = vmatprep.subr.bf16.mxu0 0
        %1249 = vmatpush1.bf16.msra.mxu0 0
        %1250 = vmatprep.subr.bf16.mxu0 0
        %1251 = vmatpush1.bf16.msra.mxu0 0
        %1252 = vmatprep.subr.bf16.mxu0 0
        %1253 = vmatpush1.bf16.msra.mxu0 0
        %1254 = vmatprep.subr.bf16.mxu0 0
        %1255 = vmatpush1.bf16.msra.mxu0 0
        %1256 = vmatprep.mubr.bf16.mxu0 0
        %1257 = vmatmul.mubr.bf16.gmra.mrb[0].mxu0 %v1218
        %v1258 = vpop.f32.mrb[0].mxu0
        %v1259 = vadd.f32 0.0, %v1258
        %v1260 = vpop.f32.mrb[0].mxu0
        %v1261 = vpop.f32.mrb[0].mxu0
        %v1262 = vpop.f32.mrb[0].mxu0
        %1263 = vdwg.mxu0
        %1265 = vrot.lane.b32.xlu0 %v1153, 64
        %v1266 = vpop.permute.xlu0 %1265
        %1268 = vrot.lane.b32.xlu0 %v1154, 64
        %v1269 = vpop.permute.xlu0 %1268
        %v1271 = vsel %vm1157, %v1266, 0
        %v1274 = vsel %vm1157, %v1269, 0
        %1276 = vmatprep.subr.bf16.mxu0 0
        %1277 = vmatpush1.bf16.xpose.msra.mxu0 %v1274
        %1278 = vmatprep.subr.bf16.mxu0 0
        %1279 = vmatpush1.bf16.xpose.msra.mxu0 0
        %1280 = vmatprep.subr.bf16.mxu0 0
        %1281 = vmatpush1.bf16.xpose.msra.mxu0 0
        %1282 = vmatprep.subr.bf16.mxu0 0
        %1283 = vmatpush1.bf16.xpose.msra.mxu0 0
        %1284 = vmatprep.subr.bf16.mxu0 0
        %1285 = vmatpush1.bf16.xpose.msra.mxu0 0
        %1286 = vmatprep.subr.bf16.mxu0 0
        %1287 = vmatpush1.bf16.xpose.msra.mxu0 0
        %1288 = vmatprep.subr.bf16.mxu0 0
        %1289 = vmatpush1.bf16.xpose.msra.mxu0 0
        %1290 = vmatprep.subr.bf16.mxu0 0
        %1291 = vmatpush1.bf16.xpose.msra.mxu0 0
        %1292 = vmatprep.subr.bf16.mxu0 0
        %1293 = vmatpush1.bf16.xpose.msra.mxu0 0
        %1294 = vmatprep.subr.bf16.mxu0 0
        %1295 = vmatpush1.bf16.xpose.msra.mxu0 0
        %1296 = vmatprep.subr.bf16.mxu0 0
        %1297 = vmatpush1.bf16.xpose.msra.mxu0 0
        %1298 = vmatprep.subr.bf16.mxu0 0
        %1299 = vmatpush1.bf16.xpose.msra.mxu0 0
        %1300 = vmatprep.subr.bf16.mxu0 0
        %1301 = vmatpush1.bf16.xpose.msra.mxu0 0
        %1302 = vmatprep.subr.bf16.mxu0 0
        %1303 = vmatpush1.bf16.xpose.msra.mxu0 0
        %1304 = vmatprep.subr.bf16.mxu0 0
        %1305 = vmatpush1.bf16.xpose.msra.mxu0 0
        %1306 = vmatprep.subr.bf16.mxu0 0
        %1307 = vmatpush1.bf16.xpose.msra.mxu0 0
        %1308 = vmatprep.mubr.bf16.mxu0 0
        %1309 = vmatmul.mubr.bf16.gmra.mrb[0].mxu0 %v1271
        %v1310 = vpop.f32.mrb[0].mxu0
        %v1311 = vadd.f32 %v1156, %v1310
        %v1312 = vpop.f32.mrb[0].mxu0
        %v1313 = vpop.f32.mrb[0].mxu0
        %v1314 = vpop.f32.mrb[0].mxu0
        %1315 = vdwg.mxu0
        %v1316 = vsel %vm1204, %v1311, -inf
        %1317 = vmax.xlane.f32.xlu0 %v1316
        %v1318 = vpop.xlane.xlu0 %1317
        %v1319 = vsub.f32 %v1311, %v1318
        %v1320 = vmul.f32 %v1319, 1.442695
        %v1321 = vpow.pop %v1320
        %v1322 = vsel %vm1204, %v1321, 0.0
        %1323 = vadd.xlane.f32.xlu0 %v1322
        %v1324 = vpop.xlane.xlu0 %1323
        %v1325 = vrcp.pop %v1324
        %v1326 = vmul.f32 %v1321, %v1325
        %v1327 = vpack.c.bf16 %v1326, %v1326
        %1329 = vrot.lane.b32.xlu0 %v1155, 64
        %v1330 = vpop.permute.xlu0 %1329
        %v1332 = vsel %vm1204, %v1327, 0
        %v1335 = vsel %vm1220, %v1330, 0
        %1337 = vmatprep.subr.bf16.mxu0 0
        %1338 = vmatpush1.bf16.msra.mxu0 %v1335
        %1339 = vmatprep.subr.bf16.mxu0 0
        %1340 = vmatpush1.bf16.msra.mxu0 0
        %1341 = vmatprep.subr.bf16.mxu0 0
        %1342 = vmatpush1.bf16.msra.mxu0 0
        %1343 = vmatprep.subr.bf16.mxu0 0
        %1344 = vmatpush1.bf16.msra.mxu0 0
        %1345 = vmatprep.subr.bf16.mxu0 0
        %1346 = vmatpush1.bf16.msra.mxu0 0
        %1347 = vmatprep.subr.bf16.mxu0 0
        %1348 = vmatpush1.bf16.msra.mxu0 0
        %1349 = vmatprep.subr.bf16.mxu0 0
        %1350 = vmatpush1.bf16.msra.mxu0 0
        %1351 = vmatprep.subr.bf16.mxu0 0
        %1352 = vmatpush1.bf16.msra.mxu0 0
        %1353 = vmatprep.subr.bf16.mxu0 0
        %1354 = vmatpush1.bf16.msra.mxu0 0
        %1355 = vmatprep.subr.bf16.mxu0 0
        %1356 = vmatpush1.bf16.msra.mxu0 0
        %1357 = vmatprep.subr.bf16.mxu0 0
        %1358 = vmatpush1.bf16.msra.mxu0 0
        %1359 = vmatprep.subr.bf16.mxu0 0
        %1360 = vmatpush1.bf16.msra.mxu0 0
        %1361 = vmatprep.subr.bf16.mxu0 0
        %1362 = vmatpush1.bf16.msra.mxu0 0
        %1363 = vmatprep.subr.bf16.mxu0 0
        %1364 = vmatpush1.bf16.msra.mxu0 0
        %1365 = vmatprep.subr.bf16.mxu0 0
        %1366 = vmatpush1.bf16.msra.mxu0 0
        %1367 = vmatprep.subr.bf16.mxu0 0
        %1368 = vmatpush1.bf16.msra.mxu0 0
        %1369 = vmatprep.mubr.bf16.mxu0 0
        %1370 = vmatmul.mubr.bf16.gmra.mrb[0].mxu0 %v1332
        %v1371 = vpop.f32.mrb[0].mxu0
        %v1372 = vadd.f32 0.0, %v1371
        %v1373 = vpop.f32.mrb[0].mxu0
        %v1374 = vpop.f32.mrb[0].mxu0
        %v1375 = vpop.f32.mrb[0].mxu0
        %1376 = vdwg.mxu0
        %1378 = vrot.lane.b32.xlu0 %v1372, 64
        %v1379 = vpop.permute.xlu0 %1378
        %v1381 = vsel %vm1157, %v1259, %v1379
        %v1382 = vpack.c.bf16 %v1381, %v1381
        %v1383 = vld [vmem:[%s710] sm:$0xf]
        %v1384 = vld [vmem:[%s710 + $0x4] sm:$0xf]
        %v1385 = vld [vmem:[%s710 + $0x8] sm:$0xf]
        %v1386 = vld [vmem:[%s710 + $0xc] sm:$0xf]
        %v1387 = vld [vmem:[%s710 + $0x10] sm:$0xf]
        %v1388 = vld [vmem:[%s710 + $0x14] sm:$0xf]
        %v1389 = vld [vmem:[%s710 + $0x18] sm:$0xf]
        %v1390 = vld [vmem:[%s710 + $0x1c] sm:$0xf]
        %v1391 = vld [vmem:[%s710 + $0x20] sm:$0xf]
        %v1392 = vld [vmem:[%s710 + $0x24] sm:$0xf]
        %v1393 = vld [vmem:[%s710 + $0x28] sm:$0xf]
        %v1394 = vld [vmem:[%s710 + $0x2c] sm:$0xf]
        %v1395 = vld [vmem:[%s710 + $0x30] sm:$0xf]
        %v1396 = vld [vmem:[%s710 + $0x34] sm:$0xf]
        %v1397 = vld [vmem:[%s710 + $0x38] sm:$0xf]
        %v1398 = vld [vmem:[%s710 + $0x3c] sm:$0xf]
        %v1399 = vld [vmem:[%s718] sm:$0x1]
        %v1401 = vlaneseq
        %v1402 = vshrl.u32 %v1401, 7
        %v1403 = vsub.s32 0, %v1402
        %v1404 = vrot.slane %v1399, %v1403
        %v1422 = vunpack.c.l.b16 %v1383
        %v1423 = vunpack.c.l.b16 %v1384
        %v1424 = vunpack.c.l.b16 %v1385
        %v1425 = vunpack.c.l.b16 %v1386
        %v1426 = vunpack.c.l.b16 %v1387
        %v1427 = vunpack.c.l.b16 %v1388
        %v1428 = vunpack.c.l.b16 %v1389
        %v1429 = vunpack.c.l.b16 %v1390
        %v1430 = vunpack.c.l.b16 %v1391
        %v1431 = vunpack.c.l.b16 %v1392
        %v1432 = vunpack.c.l.b16 %v1393
        %v1433 = vunpack.c.l.b16 %v1394
        %v1434 = vunpack.c.l.b16 %v1395
        %v1435 = vunpack.c.l.b16 %v1396
        %v1436 = vunpack.c.l.b16 %v1397
        %v1437 = vunpack.c.l.b16 %v1398
        %v1438 = vpack.c.b16 %v1423, %v1422
        %v1439 = vpack.c.b16 %v1425, %v1424
        %v1440 = vpack.c.b16 %v1427, %v1426
        %v1441 = vpack.c.b16 %v1429, %v1428
        %v1442 = vpack.c.b16 %v1431, %v1430
        %v1443 = vpack.c.b16 %v1433, %v1432
        %v1444 = vpack.c.b16 %v1435, %v1434
        %v1445 = vpack.c.b16 %v1437, %v1436
        %1454 = vmatprep.subr.bf16.mxu0 0
        %1455 = vmatpush1.bf16.msra.mxu0 %v1438
        %1456 = vmatprep.subr.bf16.mxu0 0
        %1457 = vmatpush1.bf16.msra.mxu0 %v1439
        %1458 = vmatprep.subr.bf16.mxu0 0
        %1459 = vmatpush1.bf16.msra.mxu0 %v1440
        %1460 = vmatprep.subr.bf16.mxu0 0
        %1461 = vmatpush1.bf16.msra.mxu0 %v1441
        %1462 = vmatprep.subr.bf16.mxu0 0
        %1463 = vmatpush1.bf16.msra.mxu0 %v1442
        %1464 = vmatprep.subr.bf16.mxu0 0
        %1465 = vmatpush1.bf16.msra.mxu0 %v1443
        %1466 = vmatprep.subr.bf16.mxu0 0
        %1467 = vmatpush1.bf16.msra.mxu0 %v1444
        %1468 = vmatprep.subr.bf16.mxu0 0
        %1469 = vmatpush1.bf16.msra.mxu0 %v1445
        %1470 = vmatprep.subr.bf16.mxu0 0
        %1471 = vmatpush1.bf16.msra.mxu0 0
        %1472 = vmatprep.subr.bf16.mxu0 0
        %1473 = vmatpush1.bf16.msra.mxu0 0
        %1474 = vmatprep.subr.bf16.mxu0 0
        %1475 = vmatpush1.bf16.msra.mxu0 0
        %1476 = vmatprep.subr.bf16.mxu0 0
        %1477 = vmatpush1.bf16.msra.mxu0 0
        %1478 = vmatprep.subr.bf16.mxu0 0
        %1479 = vmatpush1.bf16.msra.mxu0 0
        %1480 = vmatprep.subr.bf16.mxu0 0
        %1481 = vmatpush1.bf16.msra.mxu0 0
        %1482 = vmatprep.subr.bf16.mxu0 0
        %1483 = vmatpush1.bf16.msra.mxu0 0
        %1484 = vmatprep.subr.bf16.mxu0 0
        %1485 = vmatpush1.bf16.msra.mxu0 0
        %1486 = vmatprep.mubr.bf16.mxu0 0
        %1487 = vmatmul.mubr.bf16.gmra.mrb[0].mxu0 %v1382
        %v1488 = vpop.f32.mrb[0].mxu0
        %v1489 = vadd.f32 %v1404, %v1488
        %v1490 = vpop.f32.mrb[0].mxu0
        %v1491 = vpop.f32.mrb[0].mxu0
        %v1492 = vpop.f32.mrb[0].mxu0
        %1493 = vdwg.mxu0
        %v1494 = vadd.f32 %v865, %v1489
        %1495 = vadd.xlane.f32.xlu0 %v1494
        %v1496 = vpop.xlane.xlu0 %1495
        %v1497 = vmul.f32 %v1496, %v868
        %v1498 = vsub.f32 %v1494, %v1497
        %v1499 = vmul.f32 %v1498, %v1498
        %1500 = vadd.xlane.f32.xlu0 %v1499
        %v1501 = vpop.xlane.xlu0 %1500
        %v1502 = vmul.f32 %v1501, %v868
        %v1503 = vadd.f32 %v1502, 1e-05
        %v1504 = vrsqrt.pop %v1503
        %v1505 = vmul.f32 %v1498, %v1504
        %v1506 = vld [vmem:[%s726] sm:$0x1]
        %v1508 = vlaneseq
        %v1509 = vshrl.u32 %v1508, 7
        %v1510 = vsub.s32 0, %v1509
        %v1511 = vrot.slane %v1506, %v1510
        %v1513 = vmul.f32 %v1505, %v1511
        %v1514 = vld [vmem:[%s734] sm:$0x1]
        %v1516 = vlaneseq
        %v1517 = vshrl.u32 %v1516, 7
        %v1518 = vsub.s32 0, %v1517
        %v1519 = vrot.slane %v1514, %v1518
        %v1521 = vadd.f32 %v1513, %v1519
        %v1522 = vpack.c.bf16 %v1521, %v1521
        %v1523 = vld [vmem:[%s743] sm:$0xff]
        %v1524 = vld [vmem:[%s743 + $0x8] sm:$0xff]
        %v1525 = vld [vmem:[%s743 + $0x10] sm:$0xff]
        %v1526 = vld [vmem:[%s743 + $0x18] sm:$0xff]
        %v1527 = vld [vmem:[%s743 + $0x20] sm:$0xff]
        %v1528 = vld [vmem:[%s743 + $0x28] sm:$0xff]
        %v1529 = vld [vmem:[%s743 + $0x30] sm:$0xff]
        %v1530 = vld [vmem:[%s743 + $0x38] sm:$0xff]
        %v1531 = vld [vmem:[%s743 + $0x40] sm:$0xff]
        %v1532 = vld [vmem:[%s743 + $0x48] sm:$0xff]
        %v1533 = vld [vmem:[%s743 + $0x50] sm:$0xff]
        %v1534 = vld [vmem:[%s743 + $0x58] sm:$0xff]
        %v1535 = vld [vmem:[%s743 + $0x60] sm:$0xff]
        %v1536 = vld [vmem:[%s743 + $0x68] sm:$0xff]
        %v1537 = vld [vmem:[%s743 + $0x70] sm:$0xff]
        %v1538 = vld [vmem:[%s743 + $0x78] sm:$0xff]
        %v1539 = vld [vmem:[%s743 + $0x80] sm:$0xff]
        %v1540 = vld [vmem:[%s743 + $0x88] sm:$0xff]
        %v1541 = vld [vmem:[%s743 + $0x90] sm:$0xff]
        %v1542 = vld [vmem:[%s743 + $0x98] sm:$0xff]
        %v1543 = vld [vmem:[%s743 + $0xa0] sm:$0xff]
        %v1544 = vld [vmem:[%s743 + $0xa8] sm:$0xff]
        %v1545 = vld [vmem:[%s743 + $0xb0] sm:$0xff]
        %v1546 = vld [vmem:[%s743 + $0xb8] sm:$0xff]
        %v1547 = vld [vmem:[%s743 + $0xc0] sm:$0xff]
        %v1548 = vld [vmem:[%s743 + $0xc8] sm:$0xff]
        %v1549 = vld [vmem:[%s743 + $0xd0] sm:$0xff]
        %v1550 = vld [vmem:[%s743 + $0xd8] sm:$0xff]
        %v1551 = vld [vmem:[%s743 + $0xe0] sm:$0xff]
        %v1552 = vld [vmem:[%s743 + $0xe8] sm:$0xff]
        %v1553 = vld [vmem:[%s743 + $0xf0] sm:$0xff]
        %v1554 = vld [vmem:[%s743 + $0xf8] sm:$0xff]
        %v1555 = vld [vmem:[%s752] sm:$0xf]
        %v1557 = vlaneseq
        %v1558 = vshrl.u32 %v1557, 7
        %v1559 = vsub.s32 0, %v1558
        %v1560 = vrot.slane %v1555, %v1559
        %v1561 = vlaneseq
        %v1562 = vshrl.u32 %v1561, 7
        %v1563 = vsub.s32 1, %v1562
        %v1564 = vrot.slane %v1555, %v1563
        %v1565 = vlaneseq
        %v1566 = vshrl.u32 %v1565, 7
        %v1567 = vsub.s32 2, %v1566
        %v1568 = vrot.slane %v1555, %v1567
        %v1569 = vlaneseq
        %v1570 = vshrl.u32 %v1569, 7
        %v1571 = vsub.s32 3, %v1570
        %v1572 = vrot.slane %v1555, %v1571
        %v1609 = vunpack.c.l.b16 %v1523
        %v1610 = vunpack.c.h.b16 %v1523
        %v1611 = vunpack.c.l.b16 %v1524
        %v1612 = vunpack.c.h.b16 %v1524
        %v1613 = vunpack.c.l.b16 %v1525
        %v1614 = vunpack.c.h.b16 %v1525
        %v1615 = vunpack.c.l.b16 %v1526
        %v1616 = vunpack.c.h.b16 %v1526
        %v1617 = vunpack.c.l.b16 %v1527
        %v1618 = vunpack.c.h.b16 %v1527
        %v1619 = vunpack.c.l.b16 %v1528
        %v1620 = vunpack.c.h.b16 %v1528
        %v1621 = vunpack.c.l.b16 %v1529
        %v1622 = vunpack.c.h.b16 %v1529
        %v1623 = vunpack.c.l.b16 %v1530
        %v1624 = vunpack.c.h.b16 %v1530
        %v1625 = vunpack.c.l.b16 %v1531
        %v1626 = vunpack.c.h.b16 %v1531
        %v1627 = vunpack.c.l.b16 %v1532
        %v1628 = vunpack.c.h.b16 %v1532
        %v1629 = vunpack.c.l.b16 %v1533
        %v1630 = vunpack.c.h.b16 %v1533
        %v1631 = vunpack.c.l.b16 %v1534
        %v1632 = vunpack.c.h.b16 %v1534
        %v1633 = vunpack.c.l.b16 %v1535
        %v1634 = vunpack.c.h.b16 %v1535
        %v1635 = vunpack.c.l.b16 %v1536
        %v1636 = vunpack.c.h.b16 %v1536
        %v1637 = vunpack.c.l.b16 %v1537
        %v1638 = vunpack.c.h.b16 %v1537
        %v1639 = vunpack.c.l.b16 %v1538
        %v1640 = vunpack.c.h.b16 %v1538
        %v1641 = vunpack.c.l.b16 %v1539
        %v1642 = vunpack.c.h.b16 %v1539
        %v1643 = vunpack.c.l.b16 %v1540
        %v1644 = vunpack.c.h.b16 %v1540
        %v1645 = vunpack.c.l.b16 %v1541
        %v1646 = vunpack.c.h.b16 %v1541
        %v1647 = vunpack.c.l.b16 %v1542
        %v1648 = vunpack.c.h.b16 %v1542
        %v1649 = vunpack.c.l.b16 %v1543
        %v1650 = vunpack.c.h.b16 %v1543
        %v1651 = vunpack.c.l.b16 %v1544
        %v1652 = vunpack.c.h.b16 %v1544
        %v1653 = vunpack.c.l.b16 %v1545
        %v1654 = vunpack.c.h.b16 %v1545
        %v1655 = vunpack.c.l.b16 %v1546
        %v1656 = vunpack.c.h.b16 %v1546
        %v1657 = vunpack.c.l.b16 %v1547
        %v1658 = vunpack.c.h.b16 %v1547
        %v1659 = vunpack.c.l.b16 %v1548
        %v1660 = vunpack.c.h.b16 %v1548
        %v1661 = vunpack.c.l.b16 %v1549
        %v1662 = vunpack.c.h.b16 %v1549
        %v1663 = vunpack.c.l.b16 %v1550
        %v1664 = vunpack.c.h.b16 %v1550
        %v1665 = vunpack.c.l.b16 %v1551
        %v1666 = vunpack.c.h.b16 %v1551
        %v1667 = vunpack.c.l.b16 %v1552
        %v1668 = vunpack.c.h.b16 %v1552
        %v1669 = vunpack.c.l.b16 %v1553
        %v1670 = vunpack.c.h.b16 %v1553
        %v1671 = vunpack.c.l.b16 %v1554
        %v1672 = vunpack.c.h.b16 %v1554
        %v1673 = vpack.c.b16 %v1613, %v1609
        %v1674 = vpack.c.b16 %v1614, %v1610
        %v1675 = vpack.c.b16 %v1615, %v1611
        %v1676 = vpack.c.b16 %v1616, %v1612
        %v1677 = vpack.c.b16 %v1621, %v1617
        %v1678 = vpack.c.b16 %v1622, %v1618
        %v1679 = vpack.c.b16 %v1623, %v1619
        %v1680 = vpack.c.b16 %v1624, %v1620
        %v1681 = vpack.c.b16 %v1629, %v1625
        %v1682 = vpack.c.b16 %v1630, %v1626
        %v1683 = vpack.c.b16 %v1631, %v1627
        %v1684 = vpack.c.b16 %v1632, %v1628
        %v1685 = vpack.c.b16 %v1637, %v1633
        %v1686 = vpack.c.b16 %v1638, %v1634
        %v1687 = vpack.c.b16 %v1639, %v1635
        %v1688 = vpack.c.b16 %v1640, %v1636
        %v1689 = vpack.c.b16 %v1645, %v1641
        %v1690 = vpack.c.b16 %v1646, %v1642
        %v1691 = vpack.c.b16 %v1647, %v1643
        %v1692 = vpack.c.b16 %v1648, %v1644
        %v1693 = vpack.c.b16 %v1653, %v1649
        %v1694 = vpack.c.b16 %v1654, %v1650
        %v1695 = vpack.c.b16 %v1655, %v1651
        %v1696 = vpack.c.b16 %v1656, %v1652
        %v1697 = vpack.c.b16 %v1661, %v1657
        %v1698 = vpack.c.b16 %v1662, %v1658
        %v1699 = vpack.c.b16 %v1663, %v1659
        %v1700 = vpack.c.b16 %v1664, %v1660
        %v1701 = vpack.c.b16 %v1669, %v1665
        %v1702 = vpack.c.b16 %v1670, %v1666
        %v1703 = vpack.c.b16 %v1671, %v1667
        %v1704 = vpack.c.b16 %v1672, %v1668
        %1737 = vmatprep.subr.bf16.mxu0 %v1674
        %1738 = vmatpush1.bf16.msra.mxu0 %v1673
        %1739 = vmatprep.subr.bf16.mxu0 %v1678
        %1740 = vmatpush1.bf16.msra.mxu0 %v1677
        %1741 = vmatprep.subr.bf16.mxu0 %v1682
        %1742 = vmatpush1.bf16.msra.mxu0 %v1681
        %1743 = vmatprep.subr.bf16.mxu0 %v1686
        %1744 = vmatpush1.bf16.msra.mxu0 %v1685
        %1745 = vmatprep.subr.bf16.mxu0 %v1690
        %1746 = vmatpush1.bf16.msra.mxu0 %v1689
        %1747 = vmatprep.subr.bf16.mxu0 %v1694
        %1748 = vmatpush1.bf16.msra.mxu0 %v1693
        %1749 = vmatprep.subr.bf16.mxu0 %v1698
        %1750 = vmatpush1.bf16.msra.mxu0 %v1697
        %1751 = vmatprep.subr.bf16.mxu0 %v1702
        %1752 = vmatpush1.bf16.msra.mxu0 %v1701
        %1753 = vmatprep.subr.bf16.mxu0 0
        %1754 = vmatpush1.bf16.msra.mxu0 0
        %1755 = vmatprep.subr.bf16.mxu0 0
        %1756 = vmatpush1.bf16.msra.mxu0 0
        %1757 = vmatprep.subr.bf16.mxu0 0
        %1758 = vmatpush1.bf16.msra.mxu0 0
        %1759 = vmatprep.subr.bf16.mxu0 0
        %1760 = vmatpush1.bf16.msra.mxu0 0
        %1761 = vmatprep.subr.bf16.mxu0 0
        %1762 = vmatpush1.bf16.msra.mxu0 0
        %1763 = vmatprep.subr.bf16.mxu0 0
        %1764 = vmatpush1.bf16.msra.mxu0 0
        %1765 = vmatprep.subr.bf16.mxu0 0
        %1766 = vmatpush1.bf16.msra.mxu0 0
        %1767 = vmatprep.subr.bf16.mxu0 0
        %1768 = vmatpush1.bf16.msra.mxu0 0
        %1769 = vmatprep.mubr.bf16.mxu0 0
        %1770 = vmatmul.mubr.bf16.gmra.mrb[0].mxu0 %v1522
        %v1771 = vpop.f32.mrb[0].mxu0
        %v1772 = vadd.f32 %v1560, %v1771
        %v1773 = vpop.f32.mrb[0].mxu0
        %v1774 = vadd.f32 %v1564, %v1773
        %v1775 = vpop.f32.mrb[0].mxu0
        %v1776 = vpop.f32.mrb[0].mxu0
        %1777 = vdwg.mxu0
        %1778 = vmatprep.subr.bf16.mxu0 %v1676
        %1779 = vmatpush1.bf16.msra.mxu0 %v1675
        %1780 = vmatprep.subr.bf16.mxu0 %v1680
        %1781 = vmatpush1.bf16.msra.mxu0 %v1679
        %1782 = vmatprep.subr.bf16.mxu0 %v1684
        %1783 = vmatpush1.bf16.msra.mxu0 %v1683
        %1784 = vmatprep.subr.bf16.mxu0 %v1688
        %1785 = vmatpush1.bf16.msra.mxu0 %v1687
        %1786 = vmatprep.subr.bf16.mxu0 %v1692
        %1787 = vmatpush1.bf16.msra.mxu0 %v1691
        %1788 = vmatprep.subr.bf16.mxu0 %v1696
        %1789 = vmatpush1.bf16.msra.mxu0 %v1695
        %1790 = vmatprep.subr.bf16.mxu0 %v1700
        %1791 = vmatpush1.bf16.msra.mxu0 %v1699
        %1792 = vmatprep.subr.bf16.mxu0 %v1704
        %1793 = vmatpush1.bf16.msra.mxu0 %v1703
        %1794 = vmatprep.subr.bf16.mxu0 0
        %1795 = vmatpush1.bf16.msra.mxu0 0
        %1796 = vmatprep.subr.bf16.mxu0 0
        %1797 = vmatpush1.bf16.msra.mxu0 0
        %1798 = vmatprep.subr.bf16.mxu0 0
        %1799 = vmatpush1.bf16.msra.mxu0 0
        %1800 = vmatprep.subr.bf16.mxu0 0
        %1801 = vmatpush1.bf16.msra.mxu0 0
        %1802 = vmatprep.subr.bf16.mxu0 0
        %1803 = vmatpush1.bf16.msra.mxu0 0
        %1804 = vmatprep.subr.bf16.mxu0 0
        %1805 = vmatpush1.bf16.msra.mxu0 0
        %1806 = vmatprep.subr.bf16.mxu0 0
        %1807 = vmatpush1.bf16.msra.mxu0 0
        %1808 = vmatprep.subr.bf16.mxu0 0
        %1809 = vmatpush1.bf16.msra.mxu0 0
        %1810 = vmatprep.mubr.bf16.mxu0 0
        %1811 = vmatmul.mubr.bf16.gmra.mrb[0].mxu0 %v1522
        %v1812 = vpop.f32.mrb[0].mxu0
        %v1813 = vadd.f32 %v1568, %v1812
        %v1814 = vpop.f32.mrb[0].mxu0
        %v1815 = vadd.f32 %v1572, %v1814
        %v1816 = vpop.f32.mrb[0].mxu0
        %v1817 = vpop.f32.mrb[0].mxu0
        %1818 = vdwg.mxu0
        %v1819 = vmul.f32 %v1772, 1.702
        %v1820 = vmul.f32 %v1774, 1.702
        %v1821 = vmul.f32 %v1813, 1.702
        %v1822 = vmul.f32 %v1815, 1.702
        %v1823 = vxor.u32 %v1819, 2147483648
        %v1824 = vxor.u32 %v1820, 2147483648
        %v1825 = vxor.u32 %v1821, 2147483648
        %v1826 = vxor.u32 %v1822, 2147483648
        %v1827 = vmul.f32 %v1823, 1.442695
        %v1828 = vpow.pop %v1827
        %v1829 = vmul.f32 %v1824, 1.442695
        %v1830 = vpow.pop %v1829
        %v1831 = vmul.f32 %v1825, 1.442695
        %v1832 = vpow.pop %v1831
        %v1833 = vmul.f32 %v1826, 1.442695
        %v1834 = vpow.pop %v1833
        %v1835 = vadd.f32 %v1828, 1.0
        %v1836 = vadd.f32 %v1830, 1.0
        %v1837 = vadd.f32 %v1832, 1.0
        %v1838 = vadd.f32 %v1834, 1.0
        %v1839 = vrcp.pop %v1835
        %v1840 = vmul.f32 1.0, %v1839
        %v1841 = vrcp.pop %v1836
        %v1842 = vmul.f32 1.0, %v1841
        %v1843 = vrcp.pop %v1837
        %v1844 = vmul.f32 1.0, %v1843
        %v1845 = vrcp.pop %v1838
        %v1846 = vmul.f32 1.0, %v1845
        %v1847 = vmul.f32 %v1772, %v1840
        %v1848 = vmul.f32 %v1774, %v1842
        %v1849 = vmul.f32 %v1813, %v1844
        %v1850 = vmul.f32 %v1815, %v1846
        %v1851 = vpack.c.bf16 %v1847, %v1847
        %v1852 = vpack.c.bf16 %v1848, %v1848
        %v1853 = vpack.c.bf16 %v1849, %v1849
        %v1854 = vpack.c.bf16 %v1850, %v1850
        %v1855 = vld [vmem:[%s761] sm:$0xf]
        %v1856 = vld [vmem:[%s761 + $0x4] sm:$0xf]
        %v1857 = vld [vmem:[%s761 + $0x8] sm:$0xf]
        %v1858 = vld [vmem:[%s761 + $0xc] sm:$0xf]
        %v1859 = vld [vmem:[%s761 + $0x10] sm:$0xf]
        %v1860 = vld [vmem:[%s761 + $0x14] sm:$0xf]
        %v1861 = vld [vmem:[%s761 + $0x18] sm:$0xf]
        %v1862 = vld [vmem:[%s761 + $0x1c] sm:$0xf]
        %v1863 = vld [vmem:[%s761 + $0x20] sm:$0xf]
        %v1864 = vld [vmem:[%s761 + $0x24] sm:$0xf]
        %v1865 = vld [vmem:[%s761 + $0x28] sm:$0xf]
        %v1866 = vld [vmem:[%s761 + $0x2c] sm:$0xf]
        %v1867 = vld [vmem:[%s761 + $0x30] sm:$0xf]
        %v1868 = vld [vmem:[%s761 + $0x34] sm:$0xf]
        %v1869 = vld [vmem:[%s761 + $0x38] sm:$0xf]
        %v1870 = vld [vmem:[%s761 + $0x3c] sm:$0xf]
        %v1871 = vld [vmem:[%s761 + $0x40] sm:$0xf]
        %v1872 = vld [vmem:[%s761 + $0x44] sm:$0xf]
        %v1873 = vld [vmem:[%s761 + $0x48] sm:$0xf]
        %v1874 = vld [vmem:[%s761 + $0x4c] sm:$0xf]
        %v1875 = vld [vmem:[%s761 + $0x50] sm:$0xf]
        %v1876 = vld [vmem:[%s761 + $0x54] sm:$0xf]
        %v1877 = vld [vmem:[%s761 + $0x58] sm:$0xf]
        %v1878 = vld [vmem:[%s761 + $0x5c] sm:$0xf]
        %v1879 = vld [vmem:[%s761 + $0x60] sm:$0xf]
        %v1880 = vld [vmem:[%s761 + $0x64] sm:$0xf]
        %v1881 = vld [vmem:[%s761 + $0x68] sm:$0xf]
        %v1882 = vld [vmem:[%s761 + $0x6c] sm:$0xf]
        %v1883 = vld [vmem:[%s761 + $0x70] sm:$0xf]
        %v1884 = vld [vmem:[%s761 + $0x74] sm:$0xf]
        %v1885 = vld [vmem:[%s761 + $0x78] sm:$0xf]
        %v1886 = vld [vmem:[%s761 + $0x7c] sm:$0xf]
        %v1887 = vld [vmem:[%s761 + $0x80] sm:$0xf]
        %v1888 = vld [vmem:[%s761 + $0x84] sm:$0xf]
        %v1889 = vld [vmem:[%s761 + $0x88] sm:$0xf]
        %v1890 = vld [vmem:[%s761 + $0x8c] sm:$0xf]
        %v1891 = vld [vmem:[%s761 + $0x90] sm:$0xf]
        %v1892 = vld [vmem:[%s761 + $0x94] sm:$0xf]
        %v1893 = vld [vmem:[%s761 + $0x98] sm:$0xf]
        %v1894 = vld [vmem:[%s761 + $0x9c] sm:$0xf]
        %v1895 = vld [vmem:[%s761 + $0xa0] sm:$0xf]
        %v1896 = vld [vmem:[%s761 + $0xa4] sm:$0xf]
        %v1897 = vld [vmem:[%s761 + $0xa8] sm:$0xf]
        %v1898 = vld [vmem:[%s761 + $0xac] sm:$0xf]
        %v1899 = vld [vmem:[%s761 + $0xb0] sm:$0xf]
        %v1900 = vld [vmem:[%s761 + $0xb4] sm:$0xf]
        %v1901 = vld [vmem:[%s761 + $0xb8] sm:$0xf]
        %v1902 = vld [vmem:[%s761 + $0xbc] sm:$0xf]
        %v1903 = vld [vmem:[%s761 + $0xc0] sm:$0xf]
        %v1904 = vld [vmem:[%s761 + $0xc4] sm:$0xf]
        %v1905 = vld [vmem:[%s761 + $0xc8] sm:$0xf]
        %v1906 = vld [vmem:[%s761 + $0xcc] sm:$0xf]
        %v1907 = vld [vmem:[%s761 + $0xd0] sm:$0xf]
        %v1908 = vld [vmem:[%s761 + $0xd4] sm:$0xf]
        %v1909 = vld [vmem:[%s761 + $0xd8] sm:$0xf]
        %v1910 = vld [vmem:[%s761 + $0xdc] sm:$0xf]
        %v1911 = vld [vmem:[%s761 + $0xe0] sm:$0xf]
        %v1912 = vld [vmem:[%s761 + $0xe4] sm:$0xf]
        %v1913 = vld [vmem:[%s761 + $0xe8] sm:$0xf]
        %v1914 = vld [vmem:[%s761 + $0xec] sm:$0xf]
        %v1915 = vld [vmem:[%s761 + $0xf0] sm:$0xf]
        %v1916 = vld [vmem:[%s761 + $0xf4] sm:$0xf]
        %v1917 = vld [vmem:[%s761 + $0xf8] sm:$0xf]
        %v1918 = vld [vmem:[%s761 + $0xfc] sm:$0xf]
        %v1919 = vld [vmem:[%s769] sm:$0x1]
        %v1921 = vlaneseq
        %v1922 = vshrl.u32 %v1921, 7
        %v1923 = vsub.s32 0, %v1922
        %v1924 = vrot.slane %v1919, %v1923
        %v1990 = vunpack.c.l.b16 %v1855
        %v1991 = vunpack.c.l.b16 %v1856
        %v1992 = vunpack.c.l.b16 %v1857
        %v1993 = vunpack.c.l.b16 %v1858
        %v1994 = vunpack.c.l.b16 %v1859
        %v1995 = vunpack.c.l.b16 %v1860
        %v1996 = vunpack.c.l.b16 %v1861
        %v1997 = vunpack.c.l.b16 %v1862
        %v1998 = vunpack.c.l.b16 %v1863
        %v1999 = vunpack.c.l.b16 %v1864
        %v2000 = vunpack.c.l.b16 %v1865
        %v2001 = vunpack.c.l.b16 %v1866
        %v2002 = vunpack.c.l.b16 %v1867
        %v2003 = vunpack.c.l.b16 %v1868
        %v2004 = vunpack.c.l.b16 %v1869
        %v2005 = vunpack.c.l.b16 %v1870
        %v2006 = vunpack.c.l.b16 %v1871
        %v2007 = vunpack.c.l.b16 %v1872
        %v2008 = vunpack.c.l.b16 %v1873
        %v2009 = vunpack.c.l.b16 %v1874
        %v2010 = vunpack.c.l.b16 %v1875
        %v2011 = vunpack.c.l.b16 %v1876
        %v2012 = vunpack.c.l.b16 %v1877
        %v2013 = vunpack.c.l.b16 %v1878
        %v2014 = vunpack.c.l.b16 %v1879
        %v2015 = vunpack.c.l.b16 %v1880
        %v2016 = vunpack.c.l.b16 %v1881
        %v2017 = vunpack.c.l.b16 %v1882
        %v2018 = vunpack.c.l.b16 %v1883
        %v2019 = vunpack.c.l.b16 %v1884
        %v2020 = vunpack.c.l.b16 %v1885
        %v2021 = vunpack.c.l.b16 %v1886
        %v2022 = vunpack.c.l.b16 %v1887
        %v2023 = vunpack.c.l.b16 %v1888
        %v2024 = vunpack.c.l.b16 %v1889
        %v2025 = vunpack.c.l.b16 %v1890
        %v2026 = vunpack.c.l.b16 %v1891
        %v2027 = vunpack.c.l.b16 %v1892
        %v2028 = vunpack.c.l.b16 %v1893
        %v2029 = vunpack.c.l.b16 %v1894
        %v2030 = vunpack.c.l.b16 %v1895
        %v2031 = vunpack.c.l.b16 %v1896
        %v2032 = vunpack.c.l.b16 %v1897
        %v2033 = vunpack.c.l.b16 %v1898
        %v2034 = vunpack.c.l.b16 %v1899
        %v2035 = vunpack.c.l.b16 %v1900
        %v2036 = vunpack.c.l.b16 %v1901
        %v2037 = vunpack.c.l.b16 %v1902
        %v2038 = vunpack.c.l.b16 %v1903
        %v2039 = vunpack.c.l.b16 %v1904
        %v2040 = vunpack.c.l.b16 %v1905
        %v2041 = vunpack.c.l.b16 %v1906
        %v2042 = vunpack.c.l.b16 %v1907
        %v2043 = vunpack.c.l.b16 %v1908
        %v2044 = vunpack.c.l.b16 %v1909
        %v2045 = vunpack.c.l.b16 %v1910
        %v2046 = vunpack.c.l.b16 %v1911
        %v2047 = vunpack.c.l.b16 %v1912
        %v2048 = vunpack.c.l.b16 %v1913
        %v2049 = vunpack.c.l.b16 %v1914
        %v2050 = vunpack.c.l.b16 %v1915
        %v2051 = vunpack.c.l.b16 %v1916
        %v2052 = vunpack.c.l.b16 %v1917
        %v2053 = vunpack.c.l.b16 %v1918
        %v2054 = vpack.c.b16 %v1991, %v1990
        %v2055 = vpack.c.b16 %v1993, %v1992
        %v2056 = vpack.c.b16 %v1995, %v1994
        %v2057 = vpack.c.b16 %v1997, %v1996
        %v2058 = vpack.c.b16 %v1999, %v1998
        %v2059 = vpack.c.b16 %v2001, %v2000
        %v2060 = vpack.c.b16 %v2003, %v2002
        %v2061 = vpack.c.b16 %v2005, %v2004
        %v2062 = vpack.c.b16 %v2007, %v2006
        %v2063 = vpack.c.b16 %v2009, %v2008
        %v2064 = vpack.c.b16 %v2011, %v2010
        %v2065 = vpack.c.b16 %v2013, %v2012
        %v2066 = vpack.c.b16 %v2015, %v2014
        %v2067 = vpack.c.b16 %v2017, %v2016
        %v2068 = vpack.c.b16 %v2019, %v2018
        %v2069 = vpack.c.b16 %v2021, %v2020
        %v2070 = vpack.c.b16 %v2023, %v2022
        %v2071 = vpack.c.b16 %v2025, %v2024
        %v2072 = vpack.c.b16 %v2027, %v2026
        %v2073 = vpack.c.b16 %v2029, %v2028
        %v2074 = vpack.c.b16 %v2031, %v2030
        %v2075 = vpack.c.b16 %v2033, %v2032
        %v2076 = vpack.c.b16 %v2035, %v2034
        %v2077 = vpack.c.b16 %v2037, %v2036
        %v2078 = vpack.c.b16 %v2039, %v2038
        %v2079 = vpack.c.b16 %v2041, %v2040
        %v2080 = vpack.c.b16 %v2043, %v2042
        %v2081 = vpack.c.b16 %v2045, %v2044
        %v2082 = vpack.c.b16 %v2047, %v2046
        %v2083 = vpack.c.b16 %v2049, %v2048
        %v2084 = vpack.c.b16 %v2051, %v2050
        %v2085 = vpack.c.b16 %v2053, %v2052
        %2118 = vmatprep.subr.bf16.mxu0 0
        %2119 = vmatpush1.bf16.msra.mxu0 %v2054
        %2120 = vmatprep.subr.bf16.mxu0 0
        %2121 = vmatpush1.bf16.msra.mxu0 %v2055
        %2122 = vmatprep.subr.bf16.mxu0 0
        %2123 = vmatpush1.bf16.msra.mxu0 %v2056
        %2124 = vmatprep.subr.bf16.mxu0 0
        %2125 = vmatpush1.bf16.msra.mxu0 %v2057
        %2126 = vmatprep.subr.bf16.mxu0 0
        %2127 = vmatpush1.bf16.msra.mxu0 %v2058
        %2128 = vmatprep.subr.bf16.mxu0 0
        %2129 = vmatpush1.bf16.msra.mxu0 %v2059
        %2130 = vmatprep.subr.bf16.mxu0 0
        %2131 = vmatpush1.bf16.msra.mxu0 %v2060
        %2132 = vmatprep.subr.bf16.mxu0 0
        %2133 = vmatpush1.bf16.msra.mxu0 %v2061
        %2134 = vmatprep.subr.bf16.mxu0 0
        %2135 = vmatpush1.bf16.msra.mxu0 %v2062
        %2136 = vmatprep.subr.bf16.mxu0 0
        %2137 = vmatpush1.bf16.msra.mxu0 %v2063
        %2138 = vmatprep.subr.bf16.mxu0 0
        %2139 = vmatpush1.bf16.msra.mxu0 %v2064
        %2140 = vmatprep.subr.bf16.mxu0 0
        %2141 = vmatpush1.bf16.msra.mxu0 %v2065
        %2142 = vmatprep.subr.bf16.mxu0 0
        %2143 = vmatpush1.bf16.msra.mxu0 %v2066
        %2144 = vmatprep.subr.bf16.mxu0 0
        %2145 = vmatpush1.bf16.msra.mxu0 %v2067
        %2146 = vmatprep.subr.bf16.mxu0 0
        %2147 = vmatpush1.bf16.msra.mxu0 %v2068
        %2148 = vmatprep.subr.bf16.mxu0 0
        %2149 = vmatpush1.bf16.msra.mxu0 %v2069
        %2150 = vmatprep.mubr.bf16.mxu0 %v1852
        %2151 = vmatmul.mubr.bf16.gmra.mrb[0].mxu0 %v1851
        %v2152 = vpop.f32.mrb[0].mxu0
        %v2153 = vadd.f32 %v1924, %v2152
        %v2154 = vpop.f32.mrb[0].mxu0
        %v2155 = vpop.f32.mrb[0].mxu0
        %v2156 = vpop.f32.mrb[0].mxu0
        %2157 = vdwg.mxu0
        %2158 = vmatprep.subr.bf16.mxu0 0
        %2159 = vmatpush1.bf16.msra.mxu0 %v2070
        %2160 = vmatprep.subr.bf16.mxu0 0
        %2161 = vmatpush1.bf16.msra.mxu0 %v2071
        %2162 = vmatprep.subr.bf16.mxu0 0
        %2163 = vmatpush1.bf16.msra.mxu0 %v2072
        %2164 = vmatprep.subr.bf16.mxu0 0
        %2165 = vmatpush1.bf16.msra.mxu0 %v2073
        %2166 = vmatprep.subr.bf16.mxu0 0
        %2167 = vmatpush1.bf16.msra.mxu0 %v2074
        %2168 = vmatprep.subr.bf16.mxu0 0
        %2169 = vmatpush1.bf16.msra.mxu0 %v2075
        %2170 = vmatprep.subr.bf16.mxu0 0
        %2171 = vmatpush1.bf16.msra.mxu0 %v2076
        %2172 = vmatprep.subr.bf16.mxu0 0
        %2173 = vmatpush1.bf16.msra.mxu0 %v2077
        %2174 = vmatprep.subr.bf16.mxu0 0
        %2175 = vmatpush1.bf16.msra.mxu0 %v2078
        %2176 = vmatprep.subr.bf16.mxu0 0
        %2177 = vmatpush1.bf16.msra.mxu0 %v2079
        %2178 = vmatprep.subr.bf16.mxu0 0
        %2179 = vmatpush1.bf16.msra.mxu0 %v2080
        %2180 = vmatprep.subr.bf16.mxu0 0
        %2181 = vmatpush1.bf16.msra.mxu0 %v2081
        %2182 = vmatprep.subr.bf16.mxu0 0
        %2183 = vmatpush1.bf16.msra.mxu0 %v2082
        %2184 = vmatprep.subr.bf16.mxu0 0
        %2185 = vmatpush1.bf16.msra.mxu0 %v2083
        %2186 = vmatprep.subr.bf16.mxu0 0
        %2187 = vmatpush1.bf16.msra.mxu0 %v2084
        %2188 = vmatprep.subr.bf16.mxu0 0
        %2189 = vmatpush1.bf16.msra.mxu0 %v2085
        %2190 = vmatprep.mubr.bf16.mxu0 %v1854
        %2191 = vmatmul.mubr.bf16.gmra.mrb[0].mxu0 %v1853
        %v2192 = vpop.f32.mrb[0].mxu0
        %v2193 = vadd.f32 %v2153, %v2192
        %v2194 = vpop.f32.mrb[0].mxu0
        %v2195 = vpop.f32.mrb[0].mxu0
        %v2196 = vpop.f32.mrb[0].mxu0
        %2197 = vdwg.mxu0
        %v2198 = vadd.f32 %v1494, %v2193
        %2199 = vst [vmem:[#allocation2] sm:$0xff] %v2198
        // Predicated region
        $region129: #{_annotator_core.2} parent=75 // pred_check
          %p2200 = pneg %p859
        $region130: #{_annotator_core.2} parent=75 // pred_check_branch
          %2202 = sbr.rel (%p2200) target = $region132
        $region131: #{_annotator_core.2} parent=75 // pred_region
          %2203 = vst [vmem:[%s14] sm:$0xff] %v2198
        $region132: #{_annotator_core.2} parent=75 // pred_fallthru
          _
        // Predicated region
        $region133: #{_annotator_core.2} parent=75 // pred_check
          %p2204 = pneg %p413
        $region134: #{_annotator_core.2} parent=75 // pred_check_branch
          %2206 = sbr.rel (%p2204) target = $region136
        $region135: #{_annotator_core.2} parent=75 // pred_region
          _
        $region136: #{_annotator_core.2} parent=75 // pred_fallthru
          _
        // Predicated region
        $region137: #{_annotator_core.2} parent=75 // pred_check
          %p2207 = pneg %p413
        $region138: #{_annotator_core.2} parent=75 // pred_check_branch
          %2209 = sbr.rel (%p2207) target = $region140
        $region139: #{_annotator_core.2} parent=75 // pred_region
          _
        $region140: #{_annotator_core.2} parent=75 // pred_fallthru
          _
      $region76: #{_annotator_core.2} parent=5 // pred_fallthru
        _
      %p2210 = scmp.le.s32.totalorder 2, %s41
      // Predicated region
      $region141: #{_annotator_core.2} parent=5 // pred_check
        %p2211 = pneg %p2210
      $region142: #{_annotator_core.2} parent=5 // pred_check_branch
        %2213 = sbr.rel (%p2211) target = $region144
      $region143: #{_annotator_core.2} parent=5 // pred_region
        %s2214 = ssub.s32 %s41, 2
      $region144: #{_annotator_core.2} parent=5 // pred_fallthru
        _
    $region6: #{_annotator_core.2} parent=1 // loop_footer
      %s45 = sadd.s32 1, %s41
    $region7: #{_annotator_core.2} parent=1 // loop_footer_branch
      %40 = sbr.rel target = $region3
    $region8: #{_annotator_core.2} parent=1 // loop_exit
      _
    %2215 = vsyncpa [#allocation4], 1
    %s2216 = scalar_lea.sflag [#allocation4], 1
    %2217 = vsyncpa %s2216, 1
    %2218 = vsyncpa [#allocation6], 1
    %s2219 = scalar_lea.sflag [#allocation6], 1
    %2220 = vsyncpa %s2219, 1
    %2221 = vsyncpa [#allocation9], 1
    %s2222 = scalar_lea.sflag [#allocation9], 1
    %2223 = vsyncpa %s2222, 1
    %2224 = vsyncpa [#allocation12], 1
    %s2225 = scalar_lea.sflag [#allocation12], 1
    %2226 = vsyncpa %s2225, 1
    %2227 = vsyncpa [#allocation15], 1
    %s2228 = scalar_lea.sflag [#allocation15], 1
    %2229 = vsyncpa %s2228, 1
    %2230 = vsyncpa [#allocation18], 1
    %s2231 = scalar_lea.sflag [#allocation18], 1
    %2232 = vsyncpa %s2231, 1
    %2233 = vsyncpa [#allocation21], 1
    %s2234 = scalar_lea.sflag [#allocation21], 1
    %2235 = vsyncpa %s2234, 1

// kernel: _annotator_core.3
$region0: #{_annotator_core.3}
  #allocation0 [shape = 'u32[]', space=smem, size = 0x4, offset = 0x4, fixed_abs, tag = 'smem constant byte address 0x4 - core index']
  #allocation1 [shape = 'u32[144,128]{1,0:T(1,128)}', space=vmem, size = 0x12000, scoped, tag = 'internal scratch']
  #allocation2 [shape = 'f32[8,256]{1,0:T(8,128)}', space=vmem, size = 0x2000, scoped, tag = 'scratch operand']
  %s0 = inlined_call_operand.vmem [shape: f32[8,256], index: 0, kind: input, shape index: {}]
  %s1 = inlined_call_operand.vmem [shape: f32[8,8], index: 1, kind: input, shape index: {}]
  %s2 = inlined_call_operand.vmem [shape: f32[2,1,256], index: 2, kind: input, shape index: {}]
  %s3 = inlined_call_operand.vmem [shape: f32[2,1,256], index: 3, kind: input, shape index: {}]
  %s4 = inlined_call_operand.vmem [shape: bf16[2,256,768], index: 4, kind: input, shape index: {}]
  %s5 = inlined_call_operand.vmem [shape: f32[2,1,768], index: 5, kind: input, shape index: {}]
  %s6 = inlined_call_operand.hbm [shape: bf16[2,256,256], index: 6, kind: input, shape index: {}]
  %s7 = inlined_call_operand.vmem [shape: f32[2,1,256], index: 7, kind: input, shape index: {}]
  %s8 = inlined_call_operand.vmem [shape: f32[2,1,256], index: 8, kind: input, shape index: {}]
  %s9 = inlined_call_operand.vmem [shape: f32[2,1,256], index: 9, kind: input, shape index: {}]
  %s10 = inlined_call_operand.hbm [shape: bf16[2,256,1024], index: 10, kind: input, shape index: {}]
  %s11 = inlined_call_operand.vmem [shape: f32[2,1,1024], index: 11, kind: input, shape index: {}]
  %s12 = inlined_call_operand.hbm [shape: bf16[2,1024,256], index: 12, kind: input, shape index: {}]
  %s13 = inlined_call_operand.vmem [shape: f32[2,1,256], index: 13, kind: input, shape index: {}]
  %s14 = inlined_call_operand.vmem [shape: f32[1,256], index: 14, kind: input, shape index: {}]
  %s15 = inlined_call_operand.vmem [shape: f32[1,256], index: 15, kind: input, shape index: {}]
  %s16 = inlined_call_operand.vmem [shape: bf16[256,256], index: 16, kind: input, shape index: {}]
  %s17 = inlined_call_operand.vmem [shape: f32[8,1], index: 17, kind: input, shape index: {}]
  %s18 = inlined_call_operand.vmem [shape: f32[8,256], index: 18, kind: output, shape index: {0}]
  %s19 = inlined_call_operand.hbm [shape: f32[1,256], index: 19, kind: output, shape index: {1}]
  %20 = xla_tuple %s18, %s19
  %s21 = sld [smem:[#allocation0]]
  $region137: #{_annotator_core.3} parent=0
    _
  %s23 = ssub.s32 1, %s21
  %s24 = scalar_select 0, %s23, %s21
  $region1: #{_annotator_core.3} parent=0
    #allocation3 [shape = 'u8[262144]{0}', space=vmem, size = 0x40000, scoped, tag = 'input window, operand 6']
    #allocation4 [shape = 's32[2]{0}', space=sflag, size = 0x8, scoped, tag = 'scoped memory for _annotator_core.3']
    #allocation5 [shape = 's32[2]{0}', space=sflag, size = 0x8, scoped, tag = 'scoped memory for _annotator_core.3']
    #allocation6 [shape = 'u8[1048576]{0}', space=vmem, size = 0x100000, scoped, tag = 'input window, operand 10']
    #allocation7 [shape = 's32[2]{0}', space=sflag, size = 0x8, scoped, tag = 'scoped memory for _annotator_core.3']
    #allocation8 [shape = 'u8[1048576]{0}', space=vmem, size = 0x100000, scoped, tag = 'input window, operand 12']
    #allocation9 [shape = 'u8[1024]{0}', space=vmem, size = 0x400, scoped, tag = 'output window, operand 1, single buffered']
    %25 = vsyncpa [#allocation4], 0
    %s26 = scalar_lea.sflag [#allocation4], 1
    %27 = vsyncpa %s26, 0
    %28 = vsyncpa [#allocation7], 0
    %s29 = scalar_lea.sflag [#allocation7], 1
    %30 = vsyncpa %s29, 0
    %31 = vsyncpa [#allocation5], 0
    loop: start=0, step=1, limit=4
    $region2: #{_annotator_core.3} parent=1 // loop_pre_header
      _
    $region3: #{_annotator_core.3} parent=1 // loop_header
      %s33 = sphi 0, %s37
      %p34 = scmp.ge.s32.totalorder %s33, 4
      %s41 = sphi 0, %s41
      %s43 = sphi 0, %s41
      %s44 = sphi 0, %s43
      %s58 = sphi 0, %s44
      %s62 = sphi 0, %s62
      %s64 = sphi 0, %s62
      %s65 = sphi 0, %s64
      %s79 = sphi 0, %s65
      %s85 = sphi 0, %s87
      %s88 = sphi 0, %s85
      %s89 = sphi 0, %s88
      %s105 = sphi 0, %s89
      %s111 = sphi 0, %s113
      %s114 = sphi 0, %s111
      %s115 = sphi 0, %s114
      %s131 = sphi 0, %s115
      %s137 = sphi 0, %s139
      %s140 = sphi 0, %s137
      %s141 = sphi 0, %s140
      %s157 = sphi 0, %s141
      %s163 = sphi 0, %s165
      %s166 = sphi 0, %s163
      %s167 = sphi 0, %s166
      %s183 = sphi 0, %s167
      %s189 = sphi 0, %s191
      %s192 = sphi 0, %s189
      %s193 = sphi 0, %s192
      %s209 = sphi 0, %s193
      %s215 = sphi 0, %s217
      %s218 = sphi 0, %s215
      %s219 = sphi 0, %s218
      %s235 = sphi 0, %s219
      %s241 = sphi 0, %s243
      %s244 = sphi 0, %s241
      %s245 = sphi 0, %s244
      %s261 = sphi 0, %s245
      %s267 = sphi 0, %s269
      %s270 = sphi 0, %s267
      %s271 = sphi 0, %s270
      %s287 = sphi 0, %s271
      %s293 = sphi 0, %s295
      %s296 = sphi 0, %s293
      %s297 = sphi 0, %s296
      %s313 = sphi 0, %s297
      %s319 = sphi 0, %s321
      %s322 = sphi 0, %s319
      %s323 = sphi 0, %s322
      %s339 = sphi 0, %s323
      %s345 = sphi 0, %s347
      %s348 = sphi 0, %s345
      %s349 = sphi 0, %s348
      %s365 = sphi 0, %s349
      %s371 = sphi 0, %s373
      %s374 = sphi 0, %s371
      %s375 = sphi 0, %s374
      %s391 = sphi 0, %s375
      %s395 = sphi 0, %s395
      %s397 = sphi 0, %s395
      %s398 = sphi 0, %s397
      %s412 = sphi 0, %s398
      %s416 = sphi 0, %s416
      %s418 = sphi 0, %s416
      %s419 = sphi 0, %s418
      %s433 = sphi 0, %s419
      %s437 = sphi 0, %s437
      %s439 = sphi 0, %s437
      %s440 = sphi 0, %s439
      %s454 = sphi 0, %s440
      %s458 = sphi 0, %s458
      %s460 = sphi 0, %s458
      %s461 = sphi 0, %s460
      %s475 = sphi 0, %s461
      %s479 = sphi 0, %s479
      %s481 = sphi 0, %s479
      %s482 = sphi 0, %s481
      %s496 = sphi 0, %s482
      %s500 = sphi 0, %s500
      %s502 = sphi 0, %s500
      %s503 = sphi 0, %s502
      %s517 = sphi 0, %s503
    $region4: #{_annotator_core.3} parent=1 // loop_header_branch
      %36 = sbr.rel (%p34) target = $region8
    $region5: #{_annotator_core.3} parent=1 // loop_body
      %s38 = ssub.s32 %s33, 1
      %s39 = ssub.s32 %s33, 2
      %s40 = sadd.s32 %s33, 1
      %s42 = sadd.s32 %s41, 1
      %p45 = scmp.eq.s32.totalorder %s33, 1
      %p46 = scmp.ne.s32.totalorder %s41, %s43
      %p47 = scmp.eq.s32.totalorder %s33, 0
      %p48 = por %p46, %p47
      %p49 = scmp.ne.s32.totalorder %s41, %s43
      %p50 = scmp.eq.s32.totalorder %s38, 1
      %p51 = por %p49, %p50
      %p52 = scmp.ne.s32.totalorder %s43, %s44
      %p53 = scmp.eq.s32.totalorder %s38, 0
      %p54 = por %p52, %p53
      %p55 = scmp.ne.s32.totalorder %s43, %s44
      %p56 = scmp.eq.s32.totalorder %s39, 1
      %p57 = por %p55, %p56
      %p59 = scmp.ne.s32.totalorder %s44, %s58
      %p60 = scmp.eq.s32.totalorder %s39, 0
      %p61 = por %p59, %p60
      %s63 = sadd.s32 %s62, 1
      %p66 = scmp.eq.s32.totalorder %s33, 1
      %p67 = scmp.ne.s32.totalorder %s62, %s64
      %p68 = scmp.eq.s32.totalorder %s33, 0
      %p69 = por %p67, %p68
      %p70 = scmp.ne.s32.totalorder %s62, %s64
      %p71 = scmp.eq.s32.totalorder %s38, 1
      %p72 = por %p70, %p71
      %p73 = scmp.ne.s32.totalorder %s64, %s65
      %p74 = scmp.eq.s32.totalorder %s38, 0
      %p75 = por %p73, %p74
      %p76 = scmp.ne.s32.totalorder %s64, %s65
      %p77 = scmp.eq.s32.totalorder %s39, 1
      %p78 = por %p76, %p77
      %p80 = scmp.ne.s32.totalorder %s65, %s79
      %p81 = scmp.eq.s32.totalorder %s39, 0
      %p82 = por %p80, %p81
      %s83 = ssub.s32 %s33, %s40
      %p84 = scmp.eq.s32.totalorder %s83, 0
      %s86 = sadd.s32 %s85, 1
      %s87 = scalar_select %p84, %s85, %s86
      %p90 = pneg %p84
      %p91 = scmp.eq.s32.totalorder %s33, 1
      %p92 = por %p90, %p91
      %p93 = scmp.ne.s32.totalorder %s85, %s88
      %p94 = scmp.eq.s32.totalorder %s33, 0
      %p95 = por %p93, %p94
      %p96 = scmp.ne.s32.totalorder %s85, %s88
      %p97 = scmp.eq.s32.totalorder %s38, 1
      %p98 = por %p96, %p97
      %p99 = scmp.ne.s32.totalorder %s88, %s89
      %p100 = scmp.eq.s32.totalorder %s38, 0
      %p101 = por %p99, %p100
      %p102 = scmp.ne.s32.totalorder %s88, %s89
      %p103 = scmp.eq.s32.totalorder %s39, 1
      %p104 = por %p102, %p103
      %p106 = scmp.ne.s32.totalorder %s89, %s105
      %p107 = scmp.eq.s32.totalorder %s39, 0
      %p108 = por %p106, %p107
      %s109 = ssub.s32 %s33, %s40
      %p110 = scmp.eq.s32.totalorder %s109, 0
      %s112 = sadd.s32 %s111, 1
      %s113 = scalar_select %p110, %s111, %s112
      %p116 = pneg %p110
      %p117 = scmp.eq.s32.totalorder %s33, 1
      %p118 = por %p116, %p117
      %p119 = scmp.ne.s32.totalorder %s111, %s114
      %p120 = scmp.eq.s32.totalorder %s33, 0
      %p121 = por %p119, %p120
      %p122 = scmp.ne.s32.totalorder %s111, %s114
      %p123 = scmp.eq.s32.totalorder %s38, 1
      %p124 = por %p122, %p123
      %p125 = scmp.ne.s32.totalorder %s114, %s115
      %p126 = scmp.eq.s32.totalorder %s38, 0
      %p127 = por %p125, %p126
      %p128 = scmp.ne.s32.totalorder %s114, %s115
      %p129 = scmp.eq.s32.totalorder %s39, 1
      %p130 = por %p128, %p129
      %p132 = scmp.ne.s32.totalorder %s115, %s131
      %p133 = scmp.eq.s32.totalorder %s39, 0
      %p134 = por %p132, %p133
      %s135 = ssub.s32 %s33, %s40
      %p136 = scmp.eq.s32.totalorder %s135, 0
      %s138 = sadd.s32 %s137, 1
      %s139 = scalar_select %p136, %s137, %s138
      %p142 = pneg %p136
      %p143 = scmp.eq.s32.totalorder %s33, 1
      %p144 = por %p142, %p143
      %p145 = scmp.ne.s32.totalorder %s137, %s140
      %p146 = scmp.eq.s32.totalorder %s33, 0
      %p147 = por %p145, %p146
      %p148 = scmp.ne.s32.totalorder %s137, %s140
      %p149 = scmp.eq.s32.totalorder %s38, 1
      %p150 = por %p148, %p149
      %p151 = scmp.ne.s32.totalorder %s140, %s141
      %p152 = scmp.eq.s32.totalorder %s38, 0
      %p153 = por %p151, %p152
      %p154 = scmp.ne.s32.totalorder %s140, %s141
      %p155 = scmp.eq.s32.totalorder %s39, 1
      %p156 = por %p154, %p155
      %p158 = scmp.ne.s32.totalorder %s141, %s157
      %p159 = scmp.eq.s32.totalorder %s39, 0
      %p160 = por %p158, %p159
      %s161 = ssub.s32 %s33, %s40
      %p162 = scmp.eq.s32.totalorder %s161, 0
      %s164 = sadd.s32 %s163, 1
      %s165 = scalar_select %p162, %s163, %s164
      %p168 = pneg %p162
      %p169 = scmp.eq.s32.totalorder %s33, 1
      %p170 = por %p168, %p169
      %p171 = scmp.ne.s32.totalorder %s163, %s166
      %p172 = scmp.eq.s32.totalorder %s33, 0
      %p173 = por %p171, %p172
      %p174 = scmp.ne.s32.totalorder %s163, %s166
      %p175 = scmp.eq.s32.totalorder %s38, 1
      %p176 = por %p174, %p175
      %p177 = scmp.ne.s32.totalorder %s166, %s167
      %p178 = scmp.eq.s32.totalorder %s38, 0
      %p179 = por %p177, %p178
      %p180 = scmp.ne.s32.totalorder %s166, %s167
      %p181 = scmp.eq.s32.totalorder %s39, 1
      %p182 = por %p180, %p181
      %p184 = scmp.ne.s32.totalorder %s167, %s183
      %p185 = scmp.eq.s32.totalorder %s39, 0
      %p186 = por %p184, %p185
      %s187 = ssub.s32 %s33, %s40
      %p188 = scmp.eq.s32.totalorder %s187, 0
      %s190 = sadd.s32 %s189, 1
      %s191 = scalar_select %p188, %s189, %s190
      %p194 = pneg %p188
      %p195 = scmp.eq.s32.totalorder %s33, 1
      %p196 = por %p194, %p195
      %p197 = scmp.ne.s32.totalorder %s189, %s192
      %p198 = scmp.eq.s32.totalorder %s33, 0
      %p199 = por %p197, %p198
      %p200 = scmp.ne.s32.totalorder %s189, %s192
      %p201 = scmp.eq.s32.totalorder %s38, 1
      %p202 = por %p200, %p201
      %p203 = scmp.ne.s32.totalorder %s192, %s193
      %p204 = scmp.eq.s32.totalorder %s38, 0
      %p205 = por %p203, %p204
      %p206 = scmp.ne.s32.totalorder %s192, %s193
      %p207 = scmp.eq.s32.totalorder %s39, 1
      %p208 = por %p206, %p207
      %p210 = scmp.ne.s32.totalorder %s193, %s209
      %p211 = scmp.eq.s32.totalorder %s39, 0
      %p212 = por %p210, %p211
      %s213 = ssub.s32 %s33, %s40
      %p214 = scmp.eq.s32.totalorder %s213, 0
      %s216 = sadd.s32 %s215, 1
      %s217 = scalar_select %p214, %s215, %s216
      %p220 = pneg %p214
      %p221 = scmp.eq.s32.totalorder %s33, 1
      %p222 = por %p220, %p221
      %p223 = scmp.ne.s32.totalorder %s215, %s218
      %p224 = scmp.eq.s32.totalorder %s33, 0
      %p225 = por %p223, %p224
      %p226 = scmp.ne.s32.totalorder %s215, %s218
      %p227 = scmp.eq.s32.totalorder %s38, 1
      %p228 = por %p226, %p227
      %p229 = scmp.ne.s32.totalorder %s218, %s219
      %p230 = scmp.eq.s32.totalorder %s38, 0
      %p231 = por %p229, %p230
      %p232 = scmp.ne.s32.totalorder %s218, %s219
      %p233 = scmp.eq.s32.totalorder %s39, 1
      %p234 = por %p232, %p233
      %p236 = scmp.ne.s32.totalorder %s219, %s235
      %p237 = scmp.eq.s32.totalorder %s39, 0
      %p238 = por %p236, %p237
      %s239 = ssub.s32 %s33, %s40
      %p240 = scmp.eq.s32.totalorder %s239, 0
      %s242 = sadd.s32 %s241, 1
      %s243 = scalar_select %p240, %s241, %s242
      %p246 = pneg %p240
      %p247 = scmp.eq.s32.totalorder %s33, 1
      %p248 = por %p246, %p247
      %p249 = scmp.ne.s32.totalorder %s241, %s244
      %p250 = scmp.eq.s32.totalorder %s33, 0
      %p251 = por %p249, %p250
      %p252 = scmp.ne.s32.totalorder %s241, %s244
      %p253 = scmp.eq.s32.totalorder %s38, 1
      %p254 = por %p252, %p253
      %p255 = scmp.ne.s32.totalorder %s244, %s245
      %p256 = scmp.eq.s32.totalorder %s38, 0
      %p257 = por %p255, %p256
      %p258 = scmp.ne.s32.totalorder %s244, %s245
      %p259 = scmp.eq.s32.totalorder %s39, 1
      %p260 = por %p258, %p259
      %p262 = scmp.ne.s32.totalorder %s245, %s261
      %p263 = scmp.eq.s32.totalorder %s39, 0
      %p264 = por %p262, %p263
      %s265 = ssub.s32 %s33, %s40
      %p266 = scmp.eq.s32.totalorder %s265, 0
      %s268 = sadd.s32 %s267, 1
      %s269 = scalar_select %p266, %s267, %s268
      %p272 = pneg %p266
      %p273 = scmp.eq.s32.totalorder %s33, 1
      %p274 = por %p272, %p273
      %p275 = scmp.ne.s32.totalorder %s267, %s270
      %p276 = scmp.eq.s32.totalorder %s33, 0
      %p277 = por %p275, %p276
      %p278 = scmp.ne.s32.totalorder %s267, %s270
      %p279 = scmp.eq.s32.totalorder %s38, 1
      %p280 = por %p278, %p279
      %p281 = scmp.ne.s32.totalorder %s270, %s271
      %p282 = scmp.eq.s32.totalorder %s38, 0
      %p283 = por %p281, %p282
      %p284 = scmp.ne.s32.totalorder %s270, %s271
      %p285 = scmp.eq.s32.totalorder %s39, 1
      %p286 = por %p284, %p285
      %p288 = scmp.ne.s32.totalorder %s271, %s287
      %p289 = scmp.eq.s32.totalorder %s39, 0
      %p290 = por %p288, %p289
      %s291 = ssub.s32 %s33, %s40
      %p292 = scmp.eq.s32.totalorder %s291, 0
      %s294 = sadd.s32 %s293, 1
      %s295 = scalar_select %p292, %s293, %s294
      %p298 = pneg %p292
      %p299 = scmp.eq.s32.totalorder %s33, 1
      %p300 = por %p298, %p299
      %p301 = scmp.ne.s32.totalorder %s293, %s296
      %p302 = scmp.eq.s32.totalorder %s33, 0
      %p303 = por %p301, %p302
      %p304 = scmp.ne.s32.totalorder %s293, %s296
      %p305 = scmp.eq.s32.totalorder %s38, 1
      %p306 = por %p304, %p305
      %p307 = scmp.ne.s32.totalorder %s296, %s297
      %p308 = scmp.eq.s32.totalorder %s38, 0
      %p309 = por %p307, %p308
      %p310 = scmp.ne.s32.totalorder %s296, %s297
      %p311 = scmp.eq.s32.totalorder %s39, 1
      %p312 = por %p310, %p311
      %p314 = scmp.ne.s32.totalorder %s297, %s313
      %p315 = scmp.eq.s32.totalorder %s39, 0
      %p316 = por %p314, %p315
      %s317 = ssub.s32 %s33, %s40
      %p318 = scmp.eq.s32.totalorder %s317, 0
      %s320 = sadd.s32 %s319, 1
      %s321 = scalar_select %p318, %s319, %s320
      %p324 = pneg %p318
      %p325 = scmp.eq.s32.totalorder %s33, 1
      %p326 = por %p324, %p325
      %p327 = scmp.ne.s32.totalorder %s319, %s322
      %p328 = scmp.eq.s32.totalorder %s33, 0
      %p329 = por %p327, %p328
      %p330 = scmp.ne.s32.totalorder %s319, %s322
      %p331 = scmp.eq.s32.totalorder %s38, 1
      %p332 = por %p330, %p331
      %p333 = scmp.ne.s32.totalorder %s322, %s323
      %p334 = scmp.eq.s32.totalorder %s38, 0
      %p335 = por %p333, %p334
      %p336 = scmp.ne.s32.totalorder %s322, %s323
      %p337 = scmp.eq.s32.totalorder %s39, 1
      %p338 = por %p336, %p337
      %p340 = scmp.ne.s32.totalorder %s323, %s339
      %p341 = scmp.eq.s32.totalorder %s39, 0
      %p342 = por %p340, %p341
      %s343 = ssub.s32 %s33, %s40
      %p344 = scmp.eq.s32.totalorder %s343, 0
      %s346 = sadd.s32 %s345, 1
      %s347 = scalar_select %p344, %s345, %s346
      %p350 = pneg %p344
      %p351 = scmp.eq.s32.totalorder %s33, 1
      %p352 = por %p350, %p351
      %p353 = scmp.ne.s32.totalorder %s345, %s348
      %p354 = scmp.eq.s32.totalorder %s33, 0
      %p355 = por %p353, %p354
      %p356 = scmp.ne.s32.totalorder %s345, %s348
      %p357 = scmp.eq.s32.totalorder %s38, 1
      %p358 = por %p356, %p357
      %p359 = scmp.ne.s32.totalorder %s348, %s349
      %p360 = scmp.eq.s32.totalorder %s38, 0
      %p361 = por %p359, %p360
      %p362 = scmp.ne.s32.totalorder %s348, %s349
      %p363 = scmp.eq.s32.totalorder %s39, 1
      %p364 = por %p362, %p363
      %p366 = scmp.ne.s32.totalorder %s349, %s365
      %p367 = scmp.eq.s32.totalorder %s39, 0
      %p368 = por %p366, %p367
      %s369 = ssub.s32 %s33, %s40
      %p370 = scmp.eq.s32.totalorder %s369, 0
      %s372 = sadd.s32 %s371, 1
      %s373 = scalar_select %p370, %s371, %s372
      %p376 = pneg %p370
      %p377 = scmp.eq.s32.totalorder %s33, 1
      %p378 = por %p376, %p377
      %p379 = scmp.ne.s32.totalorder %s371, %s374
      %p380 = scmp.eq.s32.totalorder %s33, 0
      %p381 = por %p379, %p380
      %p382 = scmp.ne.s32.totalorder %s371, %s374
      %p383 = scmp.eq.s32.totalorder %s38, 1
      %p384 = por %p382, %p383
      %p385 = scmp.ne.s32.totalorder %s374, %s375
      %p386 = scmp.eq.s32.totalorder %s38, 0
      %p387 = por %p385, %p386
      %p388 = scmp.ne.s32.totalorder %s374, %s375
      %p389 = scmp.eq.s32.totalorder %s39, 1
      %p390 = por %p388, %p389
      %p392 = scmp.ne.s32.totalorder %s375, %s391
      %p393 = scmp.eq.s32.totalorder %s39, 0
      %p394 = por %p392, %p393
      %s396 = sadd.s32 %s395, 1
      %p399 = scmp.eq.s32.totalorder %s33, 1
      %p400 = scmp.ne.s32.totalorder %s395, %s397
      %p401 = scmp.eq.s32.totalorder %s33, 0
      %p402 = por %p400, %p401
      %p403 = scmp.ne.s32.totalorder %s395, %s397
      %p404 = scmp.eq.s32.totalorder %s38, 1
      %p405 = por %p403, %p404
      %p406 = scmp.ne.s32.totalorder %s397, %s398
      %p407 = scmp.eq.s32.totalorder %s38, 0
      %p408 = por %p406, %p407
      %p409 = scmp.ne.s32.totalorder %s397, %s398
      %p410 = scmp.eq.s32.totalorder %s39, 1
      %p411 = por %p409, %p410
      %p413 = scmp.ne.s32.totalorder %s398, %s412
      %p414 = scmp.eq.s32.totalorder %s39, 0
      %p415 = por %p413, %p414
      %s417 = sadd.s32 %s416, 1
      %p420 = scmp.eq.s32.totalorder %s33, 1
      %p421 = scmp.ne.s32.totalorder %s416, %s418
      %p422 = scmp.eq.s32.totalorder %s33, 0
      %p423 = por %p421, %p422
      %p424 = scmp.ne.s32.totalorder %s416, %s418
      %p425 = scmp.eq.s32.totalorder %s38, 1
      %p426 = por %p424, %p425
      %p427 = scmp.ne.s32.totalorder %s418, %s419
      %p428 = scmp.eq.s32.totalorder %s38, 0
      %p429 = por %p427, %p428
      %p430 = scmp.ne.s32.totalorder %s418, %s419
      %p431 = scmp.eq.s32.totalorder %s39, 1
      %p432 = por %p430, %p431
      %p434 = scmp.ne.s32.totalorder %s419, %s433
      %p435 = scmp.eq.s32.totalorder %s39, 0
      %p436 = por %p434, %p435
      %s438 = sadd.s32 %s437, 1
      %p441 = scmp.eq.s32.totalorder %s33, 1
      %p442 = scmp.ne.s32.totalorder %s437, %s439
      %p443 = scmp.eq.s32.totalorder %s33, 0
      %p444 = por %p442, %p443
      %p445 = scmp.ne.s32.totalorder %s437, %s439
      %p446 = scmp.eq.s32.totalorder %s38, 1
      %p447 = por %p445, %p446
      %p448 = scmp.ne.s32.totalorder %s439, %s440
      %p449 = scmp.eq.s32.totalorder %s38, 0
      %p450 = por %p448, %p449
      %p451 = scmp.ne.s32.totalorder %s439, %s440
      %p452 = scmp.eq.s32.totalorder %s39, 1
      %p453 = por %p451, %p452
      %p455 = scmp.ne.s32.totalorder %s440, %s454
      %p456 = scmp.eq.s32.totalorder %s39, 0
      %p457 = por %p455, %p456
      %s459 = sadd.s32 %s458, 1
      %p462 = scmp.eq.s32.totalorder %s33, 1
      %p463 = scmp.ne.s32.totalorder %s458, %s460
      %p464 = scmp.eq.s32.totalorder %s33, 0
      %p465 = por %p463, %p464
      %p466 = scmp.ne.s32.totalorder %s458, %s460
      %p467 = scmp.eq.s32.totalorder %s38, 1
      %p468 = por %p466, %p467
      %p469 = scmp.ne.s32.totalorder %s460, %s461
      %p470 = scmp.eq.s32.totalorder %s38, 0
      %p471 = por %p469, %p470
      %p472 = scmp.ne.s32.totalorder %s460, %s461
      %p473 = scmp.eq.s32.totalorder %s39, 1
      %p474 = por %p472, %p473
      %p476 = scmp.ne.s32.totalorder %s461, %s475
      %p477 = scmp.eq.s32.totalorder %s39, 0
      %p478 = por %p476, %p477
      %s480 = sadd.s32 %s479, 1
      %p483 = scmp.eq.s32.totalorder %s33, 1
      %p484 = scmp.ne.s32.totalorder %s479, %s481
      %p485 = scmp.eq.s32.totalorder %s33, 0
      %p486 = por %p484, %p485
      %p487 = scmp.ne.s32.totalorder %s479, %s481
      %p488 = scmp.eq.s32.totalorder %s38, 1
      %p489 = por %p487, %p488
      %p490 = scmp.ne.s32.totalorder %s481, %s482
      %p491 = scmp.eq.s32.totalorder %s38, 0
      %p492 = por %p490, %p491
      %p493 = scmp.ne.s32.totalorder %s481, %s482
      %p494 = scmp.eq.s32.totalorder %s39, 1
      %p495 = por %p493, %p494
      %p497 = scmp.ne.s32.totalorder %s482, %s496
      %p498 = scmp.eq.s32.totalorder %s39, 0
      %p499 = por %p497, %p498
      %s501 = sadd.s32 %s500, 1
      %p504 = scmp.eq.s32.totalorder %s33, 1
      %p505 = scmp.ne.s32.totalorder %s500, %s502
      %p506 = scmp.eq.s32.totalorder %s33, 0
      %p507 = por %p505, %p506
      %p508 = scmp.ne.s32.totalorder %s500, %s502
      %p509 = scmp.eq.s32.totalorder %s38, 1
      %p510 = por %p508, %p509
      %p511 = scmp.ne.s32.totalorder %s502, %s503
      %p512 = scmp.eq.s32.totalorder %s38, 0
      %p513 = por %p511, %p512
      %p514 = scmp.ne.s32.totalorder %s502, %s503
      %p515 = scmp.eq.s32.totalorder %s39, 1
      %p516 = por %p514, %p515
      %p518 = scmp.ne.s32.totalorder %s503, %s517
      %p519 = scmp.eq.s32.totalorder %s39, 0
      %p520 = por %p518, %p519
      %p521 = scmp.le.s32.totalorder 1, %s33
      %p522 = scmp.lt.s32.totalorder %s33, 3
      %p523 = pnand %p521, %p522
      %p524 = pneg %p523
      // Predicated region
      $region9: #{_annotator_core.3} parent=5 // pred_check
        _
      $region10: #{_annotator_core.3} parent=5 // pred_check_branch
        %526 = sbr.rel (%p523) target = $region12
      $region11: #{_annotator_core.3} parent=5 // pred_region
        %s527 = ssub.s32 %s33, 1
        // Predicated region
        $region13: #{_annotator_core.3} parent=11 // pred_check
          %p528 = pneg %p54
        $region14: #{_annotator_core.3} parent=11 // pred_check_branch
          %530 = sbr.rel (%p528) target = $region16
        $region15: #{_annotator_core.3} parent=11 // pred_region
          _
        $region16: #{_annotator_core.3} parent=11 // pred_fallthru
          _
        // Predicated region
        $region17: #{_annotator_core.3} parent=11 // pred_check
          %p531 = pneg %p75
        $region18: #{_annotator_core.3} parent=11 // pred_check_branch
          %533 = sbr.rel (%p531) target = $region20
        $region19: #{_annotator_core.3} parent=11 // pred_region
          _
        $region20: #{_annotator_core.3} parent=11 // pred_fallthru
          _
        // Predicated region
        $region21: #{_annotator_core.3} parent=11 // pred_check
          %p534 = pneg %p408
        $region22: #{_annotator_core.3} parent=11 // pred_check_branch
          %536 = sbr.rel (%p534) target = $region24
        $region23: #{_annotator_core.3} parent=11 // pred_region
          _
        $region24: #{_annotator_core.3} parent=11 // pred_fallthru
          _
        // Predicated region
        $region25: #{_annotator_core.3} parent=11 // pred_check
          %p537 = pneg %p429
        $region26: #{_annotator_core.3} parent=11 // pred_check_branch
          %539 = sbr.rel (%p537) target = $region28
        $region27: #{_annotator_core.3} parent=11 // pred_region
          _
        $region28: #{_annotator_core.3} parent=11 // pred_fallthru
          _
        // Predicated region
        $region29: #{_annotator_core.3} parent=11 // pred_check
          %p540 = pneg %p450
        $region30: #{_annotator_core.3} parent=11 // pred_check_branch
          %542 = sbr.rel (%p540) target = $region32
        $region31: #{_annotator_core.3} parent=11 // pred_region
          _
        $region32: #{_annotator_core.3} parent=11 // pred_fallthru
          _
        // Predicated region
        $region33: #{_annotator_core.3} parent=11 // pred_check
          %p543 = pneg %p471
        $region34: #{_annotator_core.3} parent=11 // pred_check_branch
          %545 = sbr.rel (%p543) target = $region36
        $region35: #{_annotator_core.3} parent=11 // pred_region
          _
        $region36: #{_annotator_core.3} parent=11 // pred_fallthru
          _
      $region12: #{_annotator_core.3} parent=5 // pred_fallthru
        _
      %p546 = scmp.lt.s32.totalorder %s33, 2
      // Predicated region
      $region37: #{_annotator_core.3} parent=5 // pred_check
        %p547 = pneg %p546
      $region38: #{_annotator_core.3} parent=5 // pred_check_branch
        %549 = sbr.rel (%p547) target = $region40
      $region39: #{_annotator_core.3} parent=5 // pred_region
        // Predicated region
        $region41: #{_annotator_core.3} parent=39 // pred_check
          %p550 = pneg %p95
        $region42: #{_annotator_core.3} parent=39 // pred_check_branch
          %552 = sbr.rel (%p550) target = $region44
        $region43: #{_annotator_core.3} parent=39 // pred_region
          %p553 = scmp.lt.s32.totalorder %s33, 1
          %s554 = scalar_select %p553, %s33, 1
          %s555 = smul.addr %s554, 2
          %s556 = scalar_lea.vmem %s2, %s555
        $region44: #{_annotator_core.3} parent=39 // pred_fallthru
          _
        // Predicated region
        $region45: #{_annotator_core.3} parent=39 // pred_check
          %p557 = pneg %p121
        $region46: #{_annotator_core.3} parent=39 // pred_check_branch
          %559 = sbr.rel (%p557) target = $region48
        $region47: #{_annotator_core.3} parent=39 // pred_region
          %p560 = scmp.lt.s32.totalorder %s33, 1
          %s561 = scalar_select %p560, %s33, 1
          %s562 = smul.addr %s561, 2
          %s563 = scalar_lea.vmem %s3, %s562
        $region48: #{_annotator_core.3} parent=39 // pred_fallthru
          _
        // Predicated region
        $region49: #{_annotator_core.3} parent=39 // pred_check
          %p564 = pneg %p147
        $region50: #{_annotator_core.3} parent=39 // pred_check_branch
          %566 = sbr.rel (%p564) target = $region52
        $region51: #{_annotator_core.3} parent=39 // pred_region
          %p567 = scmp.lt.s32.totalorder %s33, 1
          %s568 = scalar_select %p567, %s33, 1
          %s569 = smul.addr %s568, 192
          %s570 = smul.addr %s569, 4
          %s571 = scalar_lea.vmem %s4, %s570
        $region52: #{_annotator_core.3} parent=39 // pred_fallthru
          _
        // Predicated region
        $region53: #{_annotator_core.3} parent=39 // pred_check
          %p572 = pneg %p173
        $region54: #{_annotator_core.3} parent=39 // pred_check_branch
          %574 = sbr.rel (%p572) target = $region56
        $region55: #{_annotator_core.3} parent=39 // pred_region
          %p575 = scmp.lt.s32.totalorder %s33, 1
          %s576 = scalar_select %p575, %s33, 1
          %s577 = smul.addr %s576, 6
          %s578 = scalar_lea.vmem %s5, %s577
        $region56: #{_annotator_core.3} parent=39 // pred_fallthru
          _
        // Predicated region
        $region57: #{_annotator_core.3} parent=39 // pred_check
          %p579 = pneg %p199
        $region58: #{_annotator_core.3} parent=39 // pred_check_branch
          %581 = sbr.rel (%p579) target = $region60
        $region59: #{_annotator_core.3} parent=39 // pred_region
          %s582 = sand.u32 %s189, 1
          %s583 = scalar_lea.sflag [#allocation4], %s582
          %s584 = sand.u32 %s189, 1
          %s585 = smul.addr %s584, 256
          %s586 = scalar_lea.vmem [#allocation3], %s585
          %s588 = ssub.s32 4096, 4096
          %589 = vsyncadd %s583, %s588
          %s590 = smul.addr %s33, 64
          %s591 = smul.addr %s590, 64
          %s592 = scalar_lea.hbm %s6, %s591
          %s593 = sshll.u32 %s586, 4
          %s594 = int_to_ptr.vmem [resolvable:$true] %s593
          %599 = dma.hbm_to_vmem [thread:$0]  %s592, 4096, %s594, %s583, 128, 128, 8
        $region60: #{_annotator_core.3} parent=39 // pred_fallthru
          _
        // Predicated region
        $region61: #{_annotator_core.3} parent=39 // pred_check
          %p600 = pneg %p225
        $region62: #{_annotator_core.3} parent=39 // pred_check_branch
          %602 = sbr.rel (%p600) target = $region64
        $region63: #{_annotator_core.3} parent=39 // pred_region
          %p603 = scmp.lt.s32.totalorder %s33, 1
          %s604 = scalar_select %p603, %s33, 1
          %s605 = smul.addr %s604, 2
          %s606 = scalar_lea.vmem %s7, %s605
        $region64: #{_annotator_core.3} parent=39 // pred_fallthru
          _
        // Predicated region
        $region65: #{_annotator_core.3} parent=39 // pred_check
          %p607 = pneg %p251
        $region66: #{_annotator_core.3} parent=39 // pred_check_branch
          %609 = sbr.rel (%p607) target = $region68
        $region67: #{_annotator_core.3} parent=39 // pred_region
          %p610 = scmp.lt.s32.totalorder %s33, 1
          %s611 = scalar_select %p610, %s33, 1
          %s612 = smul.addr %s611, 2
          %s613 = scalar_lea.vmem %s8, %s612
        $region68: #{_annotator_core.3} parent=39 // pred_fallthru
          _
        // Predicated region
        $region69: #{_annotator_core.3} parent=39 // pred_check
          %p614 = pneg %p277
        $region70: #{_annotator_core.3} parent=39 // pred_check_branch
          %616 = sbr.rel (%p614) target = $region72
        $region71: #{_annotator_core.3} parent=39 // pred_region
          %p617 = scmp.lt.s32.totalorder %s33, 1
          %s618 = scalar_select %p617, %s33, 1
          %s619 = smul.addr %s618, 2
          %s620 = scalar_lea.vmem %s9, %s619
        $region72: #{_annotator_core.3} parent=39 // pred_fallthru
          _
        // Predicated region
        $region73: #{_annotator_core.3} parent=39 // pred_check
          %p621 = pneg %p303
        $region74: #{_annotator_core.3} parent=39 // pred_check_branch
          %623 = sbr.rel (%p621) target = $region76
        $region75: #{_annotator_core.3} parent=39 // pred_region
          %s624 = sand.u32 %s33, 1
          %s625 = scalar_lea.sflag [#allocation7], %s624
          %s626 = sand.u32 %s293, 1
          %s627 = smul.addr %s626, 1024
          %s628 = scalar_lea.vmem [#allocation6], %s627
          %s630 = ssub.s32 16384, 16384
          %631 = vsyncadd %s625, %s630
          %s632 = smul.addr %s33, 256
          %s633 = smul.addr %s632, 64
          %s634 = scalar_lea.hbm %s10, %s633
          %s635 = sshll.u32 %s628, 4
          %s636 = int_to_ptr.vmem [resolvable:$true] %s635
          %641 = dma.hbm_to_vmem [thread:$0]  %s634, 16384, %s636, %s625, 512, 512, 32
        $region76: #{_annotator_core.3} parent=39 // pred_fallthru
          _
        // Predicated region
        $region77: #{_annotator_core.3} parent=39 // pred_check
          %p642 = pneg %p329
        $region78: #{_annotator_core.3} parent=39 // pred_check_branch
          %644 = sbr.rel (%p642) target = $region80
        $region79: #{_annotator_core.3} parent=39 // pred_region
          %p645 = scmp.lt.s32.totalorder %s33, 1
          %s646 = scalar_select %p645, %s33, 1
          %s647 = smul.addr %s646, 8
          %s648 = scalar_lea.vmem %s11, %s647
        $region80: #{_annotator_core.3} parent=39 // pred_fallthru
          _
        // Predicated region
        $region81: #{_annotator_core.3} parent=39 // pred_check
          %p649 = pneg %p355
        $region82: #{_annotator_core.3} parent=39 // pred_check_branch
          %651 = sbr.rel (%p649) target = $region84
        $region83: #{_annotator_core.3} parent=39 // pred_region
          %s652 = sand.u32 %s33, 1
          %s653 = scalar_lea.sflag [#allocation7], %s652
          %s654 = sand.u32 %s345, 1
          %s655 = smul.addr %s654, 1024
          %s656 = scalar_lea.vmem [#allocation8], %s655
          %s658 = ssub.s32 16384, 16384
          %659 = vsyncadd %s653, %s658
          %s660 = smul.addr %s33, 256
          %s661 = smul.addr %s660, 64
          %s662 = scalar_lea.hbm %s12, %s661
          %s663 = sshll.u32 %s656, 4
          %s664 = int_to_ptr.vmem [resolvable:$true] %s663
          %669 = dma.hbm_to_vmem [thread:$0]  %s662, 16384, %s664, %s653, 128, 128, 8
        $region84: #{_annotator_core.3} parent=39 // pred_fallthru
          _
        // Predicated region
        $region85: #{_annotator_core.3} parent=39 // pred_check
          %p670 = pneg %p381
        $region86: #{_annotator_core.3} parent=39 // pred_check_branch
          %672 = sbr.rel (%p670) target = $region88
        $region87: #{_annotator_core.3} parent=39 // pred_region
          %p673 = scmp.lt.s32.totalorder %s33, 1
          %s674 = scalar_select %p673, %s33, 1
          %s675 = smul.addr %s674, 2
          %s676 = scalar_lea.vmem %s13, %s675
        $region88: #{_annotator_core.3} parent=39 // pred_fallthru
          _
      $region40: #{_annotator_core.3} parent=5 // pred_fallthru
        _
      %p677 = scmp.le.s32.totalorder 1, %s33
      %p678 = scmp.lt.s32.totalorder %s33, 3
      %p679 = pnand %p677, %p678
      %p680 = pneg %p679
      // Predicated region
      $region89: #{_annotator_core.3} parent=5 // pred_check
        _
      $region90: #{_annotator_core.3} parent=5 // pred_check_branch
        %682 = sbr.rel (%p679) target = $region92
      $region91: #{_annotator_core.3} parent=5 // pred_region
        %s683 = ssub.s32 %s33, 1
        %s684 = sand.u32 %s192, 1
        %s685 = scalar_lea.sflag [#allocation4], %s684
        %s686 = sand.u32 %s192, 1
        %s687 = smul.addr %s686, 256
        %s688 = scalar_lea.vmem [#allocation3], %s687
        // Predicated region
        $region93: #{_annotator_core.3} parent=91 // pred_check
          %p689 = pneg %p205
        $region94: #{_annotator_core.3} parent=91 // pred_check_branch
          %691 = sbr.rel (%p689) target = $region96
        $region95: #{_annotator_core.3} parent=91 // pred_region
          %692 = dma.done %s685, 4096
        $region96: #{_annotator_core.3} parent=91 // pred_fallthru
          _
        %s693 = sand.u32 %s38, 1
        %s694 = scalar_lea.sflag [#allocation7], %s693
        %s695 = sand.u32 %s296, 1
        %s696 = smul.addr %s695, 1024
        %s697 = scalar_lea.vmem [#allocation6], %s696
        // Predicated region
        $region97: #{_annotator_core.3} parent=91 // pred_check
          %p698 = pneg %p309
        $region98: #{_annotator_core.3} parent=91 // pred_check_branch
          %700 = sbr.rel (%p698) target = $region100
        $region99: #{_annotator_core.3} parent=91 // pred_region
          %701 = dma.done %s694, 16384
        $region100: #{_annotator_core.3} parent=91 // pred_fallthru
          _
        %s702 = sand.u32 %s38, 1
        %s703 = scalar_lea.sflag [#allocation7], %s702
        %s704 = sand.u32 %s348, 1
        %s705 = smul.addr %s704, 1024
        %s706 = scalar_lea.vmem [#allocation8], %s705
        // Predicated region
        $region101: #{_annotator_core.3} parent=91 // pred_check
          %p707 = pneg %p361
        $region102: #{_annotator_core.3} parent=91 // pred_check_branch
          %709 = sbr.rel (%p707) target = $region104
        $region103: #{_annotator_core.3} parent=91 // pred_region
          %710 = dma.done %s703, 16384
        $region104: #{_annotator_core.3} parent=91 // pred_fallthru
          _
        %p711 = pneg %p54
        %p712 = pneg %p51
        %p713 = pneg %p75
        %p714 = pneg %p72
        %p715 = scmp.lt.s32.totalorder %s38, 1
        %s716 = scalar_select %p715, %s38, 1
        %s717 = smul.addr %s716, 2
        %s718 = scalar_lea.vmem %s2, %s717
        %p719 = pneg %p101
        %p720 = pneg %p98
        %p721 = scmp.lt.s32.totalorder %s38, 1
        %s722 = scalar_select %p721, %s38, 1
        %s723 = smul.addr %s722, 2
        %s724 = scalar_lea.vmem %s3, %s723
        %p725 = pneg %p127
        %p726 = pneg %p124
        %p727 = scmp.lt.s32.totalorder %s38, 1
        %s728 = scalar_select %p727, %s38, 1
        %s729 = smul.addr %s728, 192
        %s730 = smul.addr %s729, 4
        %s731 = scalar_lea.vmem %s4, %s730
        %p732 = pneg %p153
        %p733 = pneg %p150
        %p734 = scmp.lt.s32.totalorder %s38, 1
        %s735 = scalar_select %p734, %s38, 1
        %s736 = smul.addr %s735, 6
        %s737 = scalar_lea.vmem %s5, %s736
        %p738 = pneg %p179
        %p739 = pneg %p176
        %s740 = sand.u32 %s192, 1
        %s741 = scalar_lea.sflag [#allocation4], %s740
        %s742 = sand.u32 %s192, 1
        %s743 = smul.addr %s742, 256
        %s744 = scalar_lea.vmem [#allocation3], %s743
        %p745 = pneg %p205
        %p746 = pneg %p202
        %p747 = scmp.lt.s32.totalorder %s38, 1
        %s748 = scalar_select %p747, %s38, 1
        %s749 = smul.addr %s748, 2
        %s750 = scalar_lea.vmem %s7, %s749
        %p751 = pneg %p231
        %p752 = pneg %p228
        %p753 = scmp.lt.s32.totalorder %s38, 1
        %s754 = scalar_select %p753, %s38, 1
        %s755 = smul.addr %s754, 2
        %s756 = scalar_lea.vmem %s8, %s755
        %p757 = pneg %p257
        %p758 = pneg %p254
        %p759 = scmp.lt.s32.totalorder %s38, 1
        %s760 = scalar_select %p759, %s38, 1
        %s761 = smul.addr %s760, 2
        %s762 = scalar_lea.vmem %s9, %s761
        %p763 = pneg %p283
        %p764 = pneg %p280
        %s765 = sand.u32 %s38, 1
        %s766 = scalar_lea.sflag [#allocation7], %s765
        %s767 = sand.u32 %s296, 1
        %s768 = smul.addr %s767, 1024
        %s769 = scalar_lea.vmem [#allocation6], %s768
        %p770 = pneg %p309
        %p771 = pneg %p306
        %p772 = scmp.lt.s32.totalorder %s38, 1
        %s773 = scalar_select %p772, %s38, 1
        %s774 = smul.addr %s773, 8
        %s775 = scalar_lea.vmem %s11, %s774
        %p776 = pneg %p335
        %p777 = pneg %p332
        %s778 = sand.u32 %s38, 1
        %s779 = scalar_lea.sflag [#allocation7], %s778
        %s780 = sand.u32 %s348, 1
        %s781 = smul.addr %s780, 1024
        %s782 = scalar_lea.vmem [#allocation8], %s781
        %p783 = pneg %p361
        %p784 = pneg %p358
        %p785 = scmp.lt.s32.totalorder %s38, 1
        %s786 = scalar_select %p785, %s38, 1
        %s787 = smul.addr %s786, 2
        %s788 = scalar_lea.vmem %s13, %s787
        %p789 = pneg %p387
        %p790 = pneg %p384
        %p791 = pneg %p408
        %p792 = pneg %p405
        %p793 = pneg %p429
        %p794 = pneg %p426
        %p795 = pneg %p450
        %p796 = pneg %p447
        %p797 = pneg %p471
        %p798 = pneg %p468
        %p799 = pneg %p492
        %p800 = pneg %p489
        %p801 = pneg %p513
        %p802 = pneg %p510
        %p803 = scmp.lt.s32.totalorder %s38, 1
        %s804 = scalar_select %p803, %s38, 1
        %s805 = smul.addr %s804, 2
        %s806 = scalar_lea.vmem %s2, %s805
        %p807 = scmp.lt.s32.totalorder %s38, 1
        %s808 = scalar_select %p807, %s38, 1
        %s809 = smul.addr %s808, 2
        %s810 = scalar_lea.vmem %s3, %s809
        %p811 = scmp.lt.s32.totalorder %s38, 1
        %s812 = scalar_select %p811, %s38, 1
        %s813 = smul.addr %s812, 192
        %s814 = smul.addr %s813, 4
        %s815 = scalar_lea.vmem %s4, %s814
        %p816 = scmp.lt.s32.totalorder %s38, 1
        %s817 = scalar_select %p816, %s38, 1
        %s818 = smul.addr %s817, 6
        %s819 = scalar_lea.vmem %s5, %s818
        %p820 = scmp.lt.s32.totalorder %s38, 1
        %s821 = scalar_select %p820, %s38, 1
        %s822 = smul.addr %s821, 2
        %s823 = scalar_lea.vmem %s7, %s822
        %p824 = scmp.lt.s32.totalorder %s38, 1
        %s825 = scalar_select %p824, %s38, 1
        %s826 = smul.addr %s825, 2
        %s827 = scalar_lea.vmem %s8, %s826
        %p828 = scmp.lt.s32.totalorder %s38, 1
        %s829 = scalar_select %p828, %s38, 1
        %s830 = smul.addr %s829, 2
        %s831 = scalar_lea.vmem %s9, %s830
        %p832 = scmp.lt.s32.totalorder %s38, 1
        %s833 = scalar_select %p832, %s38, 1
        %s834 = smul.addr %s833, 8
        %s835 = scalar_lea.vmem %s11, %s834
        %p836 = scmp.lt.s32.totalorder %s38, 1
        %s837 = scalar_select %p836, %s38, 1
        %s838 = smul.addr %s837, 2
        %s839 = scalar_lea.vmem %s13, %s838
        %p841 = scmp.eq.s32.totalorder %s38, 0
        // Predicated region
        $region105: #{_annotator_core.3} parent=91 // pred_check
          %p842 = pneg %p841
        $region106: #{_annotator_core.3} parent=91 // pred_check_branch
          %844 = sbr.rel (%p842) target = $region108
        $region107: #{_annotator_core.3} parent=91 // pred_region
          %v845 = vld [vmem:[%s0] sm:$0xff]
          %v846 = vld [vmem:[%s0 + $0x8] sm:$0xff]
          %847 = vst [vmem:[#allocation2] sm:$0xff] %v845
          %848 = vst [vmem:[#allocation2 + $0x8] sm:$0xff] %v846
        $region108: #{_annotator_core.3} parent=91 // pred_fallthru
          _
        %v849 = vld [vmem:[#allocation2] sm:$0xff]
        %v850 = vld [vmem:[#allocation2 + $0x8] sm:$0xff]
        %v851 = vadd.f32 %v849, %v850
        %852 = vadd.xlane.f32.xlu0 %v851
        %v853 = vpop.xlane.xlu0 %852
        %v854 = vrcp.pop 256.0
        %v855 = vmul.f32 %v853, %v854
        %v856 = vsub.f32 %v849, %v855
        %v857 = vsub.f32 %v850, %v855
        %v858 = vmul.f32 %v856, %v856
        %v859 = vmul.f32 %v857, %v857
        %v860 = vadd.f32 %v858, %v859
        %861 = vadd.xlane.f32.xlu0 %v860
        %v862 = vpop.xlane.xlu0 %861
        %v863 = vmul.f32 %v862, %v854
        %v864 = vadd.f32 %v863, 1e-05
        %v865 = vrsqrt.pop %v864
        %v866 = vmul.f32 %v856, %v865
        %v867 = vmul.f32 %v857, %v865
        %v868 = vld [vmem:[%s806] sm:$0x3]
        %v870 = vlaneseq
        %v871 = vshrl.u32 %v870, 7
        %v872 = vsub.s32 0, %v871
        %v873 = vrot.slane %v868, %v872
        %v874 = vlaneseq
        %v875 = vshrl.u32 %v874, 7
        %v876 = vsub.s32 1, %v875
        %v877 = vrot.slane %v868, %v876
        %v880 = vmul.f32 %v866, %v873
        %v881 = vmul.f32 %v867, %v877
        %v882 = vld [vmem:[%s810] sm:$0x3]
        %v884 = vlaneseq
        %v885 = vshrl.u32 %v884, 7
        %v886 = vsub.s32 0, %v885
        %v887 = vrot.slane %v882, %v886
        %v888 = vlaneseq
        %v889 = vshrl.u32 %v888, 7
        %v890 = vsub.s32 1, %v889
        %v891 = vrot.slane %v882, %v890
        %v894 = vadd.f32 %v880, %v887
        %v895 = vadd.f32 %v881, %v891
        %v896 = vpack.c.bf16 %v894, %v894
        %v897 = vpack.c.bf16 %v895, %v895
        %v898 = vld [vmem:[%s815] sm:$0xff]
        %v899 = vld [vmem:[%s815 + $0x8] sm:$0xff]
        %v900 = vld [vmem:[%s815 + $0x10] sm:$0xff]
        %v901 = vld [vmem:[%s815 + $0x18] sm:$0xff]
        %v902 = vld [vmem:[%s815 + $0x20] sm:$0xff]
        %v903 = vld [vmem:[%s815 + $0x28] sm:$0xff]
        %v904 = vld [vmem:[%s815 + $0x30] sm:$0xff]
        %v905 = vld [vmem:[%s815 + $0x38] sm:$0xff]
        %v906 = vld [vmem:[%s815 + $0x40] sm:$0xff]
        %v907 = vld [vmem:[%s815 + $0x48] sm:$0xff]
        %v908 = vld [vmem:[%s815 + $0x50] sm:$0xff]
        %v909 = vld [vmem:[%s815 + $0x58] sm:$0xff]
        %v910 = vld [vmem:[%s815 + $0x60] sm:$0xff]
        %v911 = vld [vmem:[%s815 + $0x68] sm:$0xff]
        %v912 = vld [vmem:[%s815 + $0x70] sm:$0xff]
        %v913 = vld [vmem:[%s815 + $0x78] sm:$0xff]
        %v914 = vld [vmem:[%s815 + $0x80] sm:$0xff]
        %v915 = vld [vmem:[%s815 + $0x88] sm:$0xff]
        %v916 = vld [vmem:[%s815 + $0x90] sm:$0xff]
        %v917 = vld [vmem:[%s815 + $0x98] sm:$0xff]
        %v918 = vld [vmem:[%s815 + $0xa0] sm:$0xff]
        %v919 = vld [vmem:[%s815 + $0xa8] sm:$0xff]
        %v920 = vld [vmem:[%s815 + $0xb0] sm:$0xff]
        %v921 = vld [vmem:[%s815 + $0xb8] sm:$0xff]
        %v922 = vld [vmem:[%s815 + $0xc0] sm:$0xff]
        %v923 = vld [vmem:[%s815 + $0xc8] sm:$0xff]
        %v924 = vld [vmem:[%s815 + $0xd0] sm:$0xff]
        %v925 = vld [vmem:[%s815 + $0xd8] sm:$0xff]
        %v926 = vld [vmem:[%s815 + $0xe0] sm:$0xff]
        %v927 = vld [vmem:[%s815 + $0xe8] sm:$0xff]
        %v928 = vld [vmem:[%s815 + $0xf0] sm:$0xff]
        %v929 = vld [vmem:[%s815 + $0xf8] sm:$0xff]
        %v930 = vld [vmem:[%s815 + $0x100] sm:$0xff]
        %v931 = vld [vmem:[%s815 + $0x108] sm:$0xff]
        %v932 = vld [vmem:[%s815 + $0x110] sm:$0xff]
        %v933 = vld [vmem:[%s815 + $0x118] sm:$0xff]
        %v934 = vld [vmem:[%s815 + $0x120] sm:$0xff]
        %v935 = vld [vmem:[%s815 + $0x128] sm:$0xff]
        %v936 = vld [vmem:[%s815 + $0x130] sm:$0xff]
        %v937 = vld [vmem:[%s815 + $0x138] sm:$0xff]
        %v938 = vld [vmem:[%s815 + $0x140] sm:$0xff]
        %v939 = vld [vmem:[%s815 + $0x148] sm:$0xff]
        %v940 = vld [vmem:[%s815 + $0x150] sm:$0xff]
        %v941 = vld [vmem:[%s815 + $0x158] sm:$0xff]
        %v942 = vld [vmem:[%s815 + $0x160] sm:$0xff]
        %v943 = vld [vmem:[%s815 + $0x168] sm:$0xff]
        %v944 = vld [vmem:[%s815 + $0x170] sm:$0xff]
        %v945 = vld [vmem:[%s815 + $0x178] sm:$0xff]
        %v946 = vld [vmem:[%s815 + $0x180] sm:$0xff]
        %v947 = vld [vmem:[%s815 + $0x188] sm:$0xff]
        %v948 = vld [vmem:[%s815 + $0x190] sm:$0xff]
        %v949 = vld [vmem:[%s815 + $0x198] sm:$0xff]
        %v950 = vld [vmem:[%s815 + $0x1a0] sm:$0xff]
        %v951 = vld [vmem:[%s815 + $0x1a8] sm:$0xff]
        %v952 = vld [vmem:[%s815 + $0x1b0] sm:$0xff]
        %v953 = vld [vmem:[%s815 + $0x1b8] sm:$0xff]
        %v954 = vld [vmem:[%s815 + $0x1c0] sm:$0xff]
        %v955 = vld [vmem:[%s815 + $0x1c8] sm:$0xff]
        %v956 = vld [vmem:[%s815 + $0x1d0] sm:$0xff]
        %v957 = vld [vmem:[%s815 + $0x1d8] sm:$0xff]
        %v958 = vld [vmem:[%s815 + $0x1e0] sm:$0xff]
        %v959 = vld [vmem:[%s815 + $0x1e8] sm:$0xff]
        %v960 = vld [vmem:[%s815 + $0x1f0] sm:$0xff]
        %v961 = vld [vmem:[%s815 + $0x1f8] sm:$0xff]
        %v962 = vld [vmem:[%s815 + $0x200] sm:$0xff]
        %v963 = vld [vmem:[%s815 + $0x208] sm:$0xff]
        %v964 = vld [vmem:[%s815 + $0x210] sm:$0xff]
        %v965 = vld [vmem:[%s815 + $0x218] sm:$0xff]
        %v966 = vld [vmem:[%s815 + $0x220] sm:$0xff]
        %v967 = vld [vmem:[%s815 + $0x228] sm:$0xff]
        %v968 = vld [vmem:[%s815 + $0x230] sm:$0xff]
        %v969 = vld [vmem:[%s815 + $0x238] sm:$0xff]
        %v970 = vld [vmem:[%s815 + $0x240] sm:$0xff]
        %v971 = vld [vmem:[%s815 + $0x248] sm:$0xff]
        %v972 = vld [vmem:[%s815 + $0x250] sm:$0xff]
        %v973 = vld [vmem:[%s815 + $0x258] sm:$0xff]
        %v974 = vld [vmem:[%s815 + $0x260] sm:$0xff]
        %v975 = vld [vmem:[%s815 + $0x268] sm:$0xff]
        %v976 = vld [vmem:[%s815 + $0x270] sm:$0xff]
        %v977 = vld [vmem:[%s815 + $0x278] sm:$0xff]
        %v978 = vld [vmem:[%s815 + $0x280] sm:$0xff]
        %v979 = vld [vmem:[%s815 + $0x288] sm:$0xff]
        %v980 = vld [vmem:[%s815 + $0x290] sm:$0xff]
        %v981 = vld [vmem:[%s815 + $0x298] sm:$0xff]
        %v982 = vld [vmem:[%s815 + $0x2a0] sm:$0xff]
        %v983 = vld [vmem:[%s815 + $0x2a8] sm:$0xff]
        %v984 = vld [vmem:[%s815 + $0x2b0] sm:$0xff]
        %v985 = vld [vmem:[%s815 + $0x2b8] sm:$0xff]
        %v986 = vld [vmem:[%s815 + $0x2c0] sm:$0xff]
        %v987 = vld [vmem:[%s815 + $0x2c8] sm:$0xff]
        %v988 = vld [vmem:[%s815 + $0x2d0] sm:$0xff]
        %v989 = vld [vmem:[%s815 + $0x2d8] sm:$0xff]
        %v990 = vld [vmem:[%s815 + $0x2e0] sm:$0xff]
        %v991 = vld [vmem:[%s815 + $0x2e8] sm:$0xff]
        %v992 = vld [vmem:[%s815 + $0x2f0] sm:$0xff]
        %v993 = vld [vmem:[%s815 + $0x2f8] sm:$0xff]
        %v994 = vld [vmem:[%s819] sm:$0x3f]
        %v996 = vlaneseq
        %v997 = vshrl.u32 %v996, 7
        %v998 = vsub.s32 0, %v997
        %v999 = vrot.slane %v994, %v998
        %v1000 = vlaneseq
        %v1001 = vshrl.u32 %v1000, 7
        %v1002 = vsub.s32 1, %v1001
        %v1003 = vrot.slane %v994, %v1002
        %v1004 = vlaneseq
        %v1005 = vshrl.u32 %v1004, 7
        %v1006 = vsub.s32 2, %v1005
        %v1007 = vrot.slane %v994, %v1006
        %v1008 = vlaneseq
        %v1009 = vshrl.u32 %v1008, 7
        %v1010 = vsub.s32 3, %v1009
        %v1011 = vrot.slane %v994, %v1010
        %v1012 = vlaneseq
        %v1013 = vshrl.u32 %v1012, 7
        %v1014 = vsub.s32 4, %v1013
        %v1015 = vrot.slane %v994, %v1014
        %v1016 = vlaneseq
        %v1017 = vshrl.u32 %v1016, 7
        %v1018 = vsub.s32 5, %v1017
        %v1019 = vrot.slane %v994, %v1018
        %v1122 = vunpack.c.l.b16 %v898
        %v1123 = vunpack.c.h.b16 %v898
        %v1124 = vunpack.c.l.b16 %v899
        %v1125 = vunpack.c.h.b16 %v899
        %v1126 = vunpack.c.l.b16 %v900
        %v1127 = vunpack.c.h.b16 %v900
        %v1128 = vunpack.c.l.b16 %v901
        %v1129 = vunpack.c.h.b16 %v901
        %v1130 = vunpack.c.l.b16 %v902
        %v1131 = vunpack.c.h.b16 %v902
        %v1132 = vunpack.c.l.b16 %v903
        %v1133 = vunpack.c.h.b16 %v903
        %v1134 = vunpack.c.l.b16 %v904
        %v1135 = vunpack.c.h.b16 %v904
        %v1136 = vunpack.c.l.b16 %v905
        %v1137 = vunpack.c.h.b16 %v905
        %v1138 = vunpack.c.l.b16 %v906
        %v1139 = vunpack.c.h.b16 %v906
        %v1140 = vunpack.c.l.b16 %v907
        %v1141 = vunpack.c.h.b16 %v907
        %v1142 = vunpack.c.l.b16 %v908
        %v1143 = vunpack.c.h.b16 %v908
        %v1144 = vunpack.c.l.b16 %v909
        %v1145 = vunpack.c.h.b16 %v909
        %v1146 = vunpack.c.l.b16 %v910
        %v1147 = vunpack.c.h.b16 %v910
        %v1148 = vunpack.c.l.b16 %v911
        %v1149 = vunpack.c.h.b16 %v911
        %v1150 = vunpack.c.l.b16 %v912
        %v1151 = vunpack.c.h.b16 %v912
        %v1152 = vunpack.c.l.b16 %v913
        %v1153 = vunpack.c.h.b16 %v913
        %v1154 = vunpack.c.l.b16 %v914
        %v1155 = vunpack.c.h.b16 %v914
        %v1156 = vunpack.c.l.b16 %v915
        %v1157 = vunpack.c.h.b16 %v915
        %v1158 = vunpack.c.l.b16 %v916
        %v1159 = vunpack.c.h.b16 %v916
        %v1160 = vunpack.c.l.b16 %v917
        %v1161 = vunpack.c.h.b16 %v917
        %v1162 = vunpack.c.l.b16 %v918
        %v1163 = vunpack.c.h.b16 %v918
        %v1164 = vunpack.c.l.b16 %v919
        %v1165 = vunpack.c.h.b16 %v919
        %v1166 = vunpack.c.l.b16 %v920
        %v1167 = vunpack.c.h.b16 %v920
        %v1168 = vunpack.c.l.b16 %v921
        %v1169 = vunpack.c.h.b16 %v921
        %v1170 = vunpack.c.l.b16 %v922
        %v1171 = vunpack.c.h.b16 %v922
        %v1172 = vunpack.c.l.b16 %v923
        %v1173 = vunpack.c.h.b16 %v923
        %v1174 = vunpack.c.l.b16 %v924
        %v1175 = vunpack.c.h.b16 %v924
        %v1176 = vunpack.c.l.b16 %v925
        %v1177 = vunpack.c.h.b16 %v925
        %v1178 = vunpack.c.l.b16 %v926
        %v1179 = vunpack.c.h.b16 %v926
        %v1180 = vunpack.c.l.b16 %v927
        %v1181 = vunpack.c.h.b16 %v927
        %v1182 = vunpack.c.l.b16 %v928
        %v1183 = vunpack.c.h.b16 %v928
        %v1184 = vunpack.c.l.b16 %v929
        %v1185 = vunpack.c.h.b16 %v929
        %v1186 = vunpack.c.l.b16 %v930
        %v1187 = vunpack.c.h.b16 %v930
        %v1188 = vunpack.c.l.b16 %v931
        %v1189 = vunpack.c.h.b16 %v931
        %v1190 = vunpack.c.l.b16 %v932
        %v1191 = vunpack.c.h.b16 %v932
        %v1192 = vunpack.c.l.b16 %v933
        %v1193 = vunpack.c.h.b16 %v933
        %v1194 = vunpack.c.l.b16 %v934
        %v1195 = vunpack.c.h.b16 %v934
        %v1196 = vunpack.c.l.b16 %v935
        %v1197 = vunpack.c.h.b16 %v935
        %v1198 = vunpack.c.l.b16 %v936
        %v1199 = vunpack.c.h.b16 %v936
        %v1200 = vunpack.c.l.b16 %v937
        %v1201 = vunpack.c.h.b16 %v937
        %v1202 = vunpack.c.l.b16 %v938
        %v1203 = vunpack.c.h.b16 %v938
        %v1204 = vunpack.c.l.b16 %v939
        %v1205 = vunpack.c.h.b16 %v939
        %v1206 = vunpack.c.l.b16 %v940
        %v1207 = vunpack.c.h.b16 %v940
        %v1208 = vunpack.c.l.b16 %v941
        %v1209 = vunpack.c.h.b16 %v941
        %v1210 = vunpack.c.l.b16 %v942
        %v1211 = vunpack.c.h.b16 %v942
        %v1212 = vunpack.c.l.b16 %v943
        %v1213 = vunpack.c.h.b16 %v943
        %v1214 = vunpack.c.l.b16 %v944
        %v1215 = vunpack.c.h.b16 %v944
        %v1216 = vunpack.c.l.b16 %v945
        %v1217 = vunpack.c.h.b16 %v945
        %v1218 = vunpack.c.l.b16 %v946
        %v1219 = vunpack.c.h.b16 %v946
        %v1220 = vunpack.c.l.b16 %v947
        %v1221 = vunpack.c.h.b16 %v947
        %v1222 = vunpack.c.l.b16 %v948
        %v1223 = vunpack.c.h.b16 %v948
        %v1224 = vunpack.c.l.b16 %v949
        %v1225 = vunpack.c.h.b16 %v949
        %v1226 = vunpack.c.l.b16 %v950
        %v1227 = vunpack.c.h.b16 %v950
        %v1228 = vunpack.c.l.b16 %v951
        %v1229 = vunpack.c.h.b16 %v951
        %v1230 = vunpack.c.l.b16 %v952
        %v1231 = vunpack.c.h.b16 %v952
        %v1232 = vunpack.c.l.b16 %v953
        %v1233 = vunpack.c.h.b16 %v953
        %v1234 = vunpack.c.l.b16 %v954
        %v1235 = vunpack.c.h.b16 %v954
        %v1236 = vunpack.c.l.b16 %v955
        %v1237 = vunpack.c.h.b16 %v955
        %v1238 = vunpack.c.l.b16 %v956
        %v1239 = vunpack.c.h.b16 %v956
        %v1240 = vunpack.c.l.b16 %v957
        %v1241 = vunpack.c.h.b16 %v957
        %v1242 = vunpack.c.l.b16 %v958
        %v1243 = vunpack.c.h.b16 %v958
        %v1244 = vunpack.c.l.b16 %v959
        %v1245 = vunpack.c.h.b16 %v959
        %v1246 = vunpack.c.l.b16 %v960
        %v1247 = vunpack.c.h.b16 %v960
        %v1248 = vunpack.c.l.b16 %v961
        %v1249 = vunpack.c.h.b16 %v961
        %v1250 = vunpack.c.l.b16 %v962
        %v1251 = vunpack.c.h.b16 %v962
        %v1252 = vunpack.c.l.b16 %v963
        %v1253 = vunpack.c.h.b16 %v963
        %v1254 = vunpack.c.l.b16 %v964
        %v1255 = vunpack.c.h.b16 %v964
        %v1256 = vunpack.c.l.b16 %v965
        %v1257 = vunpack.c.h.b16 %v965
        %v1258 = vunpack.c.l.b16 %v966
        %v1259 = vunpack.c.h.b16 %v966
        %v1260 = vunpack.c.l.b16 %v967
        %v1261 = vunpack.c.h.b16 %v967
        %v1262 = vunpack.c.l.b16 %v968
        %v1263 = vunpack.c.h.b16 %v968
        %v1264 = vunpack.c.l.b16 %v969
        %v1265 = vunpack.c.h.b16 %v969
        %v1266 = vunpack.c.l.b16 %v970
        %v1267 = vunpack.c.h.b16 %v970
        %v1268 = vunpack.c.l.b16 %v971
        %v1269 = vunpack.c.h.b16 %v971
        %v1270 = vunpack.c.l.b16 %v972
        %v1271 = vunpack.c.h.b16 %v972
        %v1272 = vunpack.c.l.b16 %v973
        %v1273 = vunpack.c.h.b16 %v973
        %v1274 = vunpack.c.l.b16 %v974
        %v1275 = vunpack.c.h.b16 %v974
        %v1276 = vunpack.c.l.b16 %v975
        %v1277 = vunpack.c.h.b16 %v975
        %v1278 = vunpack.c.l.b16 %v976
        %v1279 = vunpack.c.h.b16 %v976
        %v1280 = vunpack.c.l.b16 %v977
        %v1281 = vunpack.c.h.b16 %v977
        %v1282 = vunpack.c.l.b16 %v978
        %v1283 = vunpack.c.h.b16 %v978
        %v1284 = vunpack.c.l.b16 %v979
        %v1285 = vunpack.c.h.b16 %v979
        %v1286 = vunpack.c.l.b16 %v980
        %v1287 = vunpack.c.h.b16 %v980
        %v1288 = vunpack.c.l.b16 %v981
        %v1289 = vunpack.c.h.b16 %v981
        %v1290 = vunpack.c.l.b16 %v982
        %v1291 = vunpack.c.h.b16 %v982
        %v1292 = vunpack.c.l.b16 %v983
        %v1293 = vunpack.c.h.b16 %v983
        %v1294 = vunpack.c.l.b16 %v984
        %v1295 = vunpack.c.h.b16 %v984
        %v1296 = vunpack.c.l.b16 %v985
        %v1297 = vunpack.c.h.b16 %v985
        %v1298 = vunpack.c.l.b16 %v986
        %v1299 = vunpack.c.h.b16 %v986
        %v1300 = vunpack.c.l.b16 %v987
        %v1301 = vunpack.c.h.b16 %v987
        %v1302 = vunpack.c.l.b16 %v988
        %v1303 = vunpack.c.h.b16 %v988
        %v1304 = vunpack.c.l.b16 %v989
        %v1305 = vunpack.c.h.b16 %v989
        %v1306 = vunpack.c.l.b16 %v990
        %v1307 = vunpack.c.h.b16 %v990
        %v1308 = vunpack.c.l.b16 %v991
        %v1309 = vunpack.c.h.b16 %v991
        %v1310 = vunpack.c.l.b16 %v992
        %v1311 = vunpack.c.h.b16 %v992
        %v1312 = vunpack.c.l.b16 %v993
        %v1313 = vunpack.c.h.b16 %v993
        %v1314 = vpack.c.b16 %v1128, %v1122
        %v1315 = vpack.c.b16 %v1129, %v1123
        %v1316 = vpack.c.b16 %v1130, %v1124
        %v1317 = vpack.c.b16 %v1131, %v1125
        %v1318 = vpack.c.b16 %v1132, %v1126
        %v1319 = vpack.c.b16 %v1133, %v1127
        %v1320 = vpack.c.b16 %v1140, %v1134
        %v1321 = vpack.c.b16 %v1141, %v1135
        %v1322 = vpack.c.b16 %v1142, %v1136
        %v1323 = vpack.c.b16 %v1143, %v1137
        %v1324 = vpack.c.b16 %v1144, %v1138
        %v1325 = vpack.c.b16 %v1145, %v1139
        %v1326 = vpack.c.b16 %v1152, %v1146
        %v1327 = vpack.c.b16 %v1153, %v1147
        %v1328 = vpack.c.b16 %v1154, %v1148
        %v1329 = vpack.c.b16 %v1155, %v1149
        %v1330 = vpack.c.b16 %v1156, %v1150
        %v1331 = vpack.c.b16 %v1157, %v1151
        %v1332 = vpack.c.b16 %v1164, %v1158
        %v1333 = vpack.c.b16 %v1165, %v1159
        %v1334 = vpack.c.b16 %v1166, %v1160
        %v1335 = vpack.c.b16 %v1167, %v1161
        %v1336 = vpack.c.b16 %v1168, %v1162
        %v1337 = vpack.c.b16 %v1169, %v1163
        %v1338 = vpack.c.b16 %v1176, %v1170
        %v1339 = vpack.c.b16 %v1177, %v1171
        %v1340 = vpack.c.b16 %v1178, %v1172
        %v1341 = vpack.c.b16 %v1179, %v1173
        %v1342 = vpack.c.b16 %v1180, %v1174
        %v1343 = vpack.c.b16 %v1181, %v1175
        %v1344 = vpack.c.b16 %v1188, %v1182
        %v1345 = vpack.c.b16 %v1189, %v1183
        %v1346 = vpack.c.b16 %v1190, %v1184
        %v1347 = vpack.c.b16 %v1191, %v1185
        %v1348 = vpack.c.b16 %v1192, %v1186
        %v1349 = vpack.c.b16 %v1193, %v1187
        %v1350 = vpack.c.b16 %v1200, %v1194
        %v1351 = vpack.c.b16 %v1201, %v1195
        %v1352 = vpack.c.b16 %v1202, %v1196
        %v1353 = vpack.c.b16 %v1203, %v1197
        %v1354 = vpack.c.b16 %v1204, %v1198
        %v1355 = vpack.c.b16 %v1205, %v1199
        %v1356 = vpack.c.b16 %v1212, %v1206
        %v1357 = vpack.c.b16 %v1213, %v1207
        %v1358 = vpack.c.b16 %v1214, %v1208
        %v1359 = vpack.c.b16 %v1215, %v1209
        %v1360 = vpack.c.b16 %v1216, %v1210
        %v1361 = vpack.c.b16 %v1217, %v1211
        %v1362 = vpack.c.b16 %v1224, %v1218
        %v1363 = vpack.c.b16 %v1225, %v1219
        %v1364 = vpack.c.b16 %v1226, %v1220
        %v1365 = vpack.c.b16 %v1227, %v1221
        %v1366 = vpack.c.b16 %v1228, %v1222
        %v1367 = vpack.c.b16 %v1229, %v1223
        %v1368 = vpack.c.b16 %v1236, %v1230
        %v1369 = vpack.c.b16 %v1237, %v1231
        %v1370 = vpack.c.b16 %v1238, %v1232
        %v1371 = vpack.c.b16 %v1239, %v1233
        %v1372 = vpack.c.b16 %v1240, %v1234
        %v1373 = vpack.c.b16 %v1241, %v1235
        %v1374 = vpack.c.b16 %v1248, %v1242
        %v1375 = vpack.c.b16 %v1249, %v1243
        %v1376 = vpack.c.b16 %v1250, %v1244
        %v1377 = vpack.c.b16 %v1251, %v1245
        %v1378 = vpack.c.b16 %v1252, %v1246
        %v1379 = vpack.c.b16 %v1253, %v1247
        %v1380 = vpack.c.b16 %v1260, %v1254
        %v1381 = vpack.c.b16 %v1261, %v1255
        %v1382 = vpack.c.b16 %v1262, %v1256
        %v1383 = vpack.c.b16 %v1263, %v1257
        %v1384 = vpack.c.b16 %v1264, %v1258
        %v1385 = vpack.c.b16 %v1265, %v1259
        %v1386 = vpack.c.b16 %v1272, %v1266
        %v1387 = vpack.c.b16 %v1273, %v1267
        %v1388 = vpack.c.b16 %v1274, %v1268
        %v1389 = vpack.c.b16 %v1275, %v1269
        %v1390 = vpack.c.b16 %v1276, %v1270
        %v1391 = vpack.c.b16 %v1277, %v1271
        %v1392 = vpack.c.b16 %v1284, %v1278
        %v1393 = vpack.c.b16 %v1285, %v1279
        %v1394 = vpack.c.b16 %v1286, %v1280
        %v1395 = vpack.c.b16 %v1287, %v1281
        %v1396 = vpack.c.b16 %v1288, %v1282
        %v1397 = vpack.c.b16 %v1289, %v1283
        %v1398 = vpack.c.b16 %v1296, %v1290
        %v1399 = vpack.c.b16 %v1297, %v1291
        %v1400 = vpack.c.b16 %v1298, %v1292
        %v1401 = vpack.c.b16 %v1299, %v1293
        %v1402 = vpack.c.b16 %v1300, %v1294
        %v1403 = vpack.c.b16 %v1301, %v1295
        %v1404 = vpack.c.b16 %v1308, %v1302
        %v1405 = vpack.c.b16 %v1309, %v1303
        %v1406 = vpack.c.b16 %v1310, %v1304
        %v1407 = vpack.c.b16 %v1311, %v1305
        %v1408 = vpack.c.b16 %v1312, %v1306
        %v1409 = vpack.c.b16 %v1313, %v1307
        %1506 = vmatprep.subr.bf16.mxu0 %v1315
        %1507 = vmatpush1.bf16.msra.mxu0 %v1314
        %1508 = vmatprep.subr.bf16.mxu0 %v1321
        %1509 = vmatpush1.bf16.msra.mxu0 %v1320
        %1510 = vmatprep.subr.bf16.mxu0 %v1327
        %1511 = vmatpush1.bf16.msra.mxu0 %v1326
        %1512 = vmatprep.subr.bf16.mxu0 %v1333
        %1513 = vmatpush1.bf16.msra.mxu0 %v1332
        %1514 = vmatprep.subr.bf16.mxu0 %v1339
        %1515 = vmatpush1.bf16.msra.mxu0 %v1338
        %1516 = vmatprep.subr.bf16.mxu0 %v1345
        %1517 = vmatpush1.bf16.msra.mxu0 %v1344
        %1518 = vmatprep.subr.bf16.mxu0 %v1351
        %1519 = vmatpush1.bf16.msra.mxu0 %v1350
        %1520 = vmatprep.subr.bf16.mxu0 %v1357
        %1521 = vmatpush1.bf16.msra.mxu0 %v1356
        %1522 = vmatprep.subr.bf16.mxu0 %v1363
        %1523 = vmatpush1.bf16.msra.mxu0 %v1362
        %1524 = vmatprep.subr.bf16.mxu0 %v1369
        %1525 = vmatpush1.bf16.msra.mxu0 %v1368
        %1526 = vmatprep.subr.bf16.mxu0 %v1375
        %1527 = vmatpush1.bf16.msra.mxu0 %v1374
        %1528 = vmatprep.subr.bf16.mxu0 %v1381
        %1529 = vmatpush1.bf16.msra.mxu0 %v1380
        %1530 = vmatprep.subr.bf16.mxu0 %v1387
        %1531 = vmatpush1.bf16.msra.mxu0 %v1386
        %1532 = vmatprep.subr.bf16.mxu0 %v1393
        %1533 = vmatpush1.bf16.msra.mxu0 %v1392
        %1534 = vmatprep.subr.bf16.mxu0 %v1399
        %1535 = vmatpush1.bf16.msra.mxu0 %v1398
        %1536 = vmatprep.subr.bf16.mxu0 %v1405
        %1537 = vmatpush1.bf16.msra.mxu0 %v1404
        %1538 = vmatprep.mubr.bf16.mxu0 %v897
        %1539 = vmatmul.mubr.bf16.gmra.mrb[0].mxu0 %v896
        %v1540 = vpop.f32.mrb[0].mxu0
        %v1541 = vadd.f32 %v999, %v1540
        %v1542 = vpop.f32.mrb[0].mxu0
        %v1543 = vadd.f32 %v1003, %v1542
        %v1544 = vpop.f32.mrb[0].mxu0
        %v1545 = vpop.f32.mrb[0].mxu0
        %1546 = vdwg.mxu0
        %1547 = vmatprep.subr.bf16.mxu0 %v1317
        %1548 = vmatpush1.bf16.msra.mxu0 %v1316
        %1549 = vmatprep.subr.bf16.mxu0 %v1323
        %1550 = vmatpush1.bf16.msra.mxu0 %v1322
        %1551 = vmatprep.subr.bf16.mxu0 %v1329
        %1552 = vmatpush1.bf16.msra.mxu0 %v1328
        %1553 = vmatprep.subr.bf16.mxu0 %v1335
        %1554 = vmatpush1.bf16.msra.mxu0 %v1334
        %1555 = vmatprep.subr.bf16.mxu0 %v1341
        %1556 = vmatpush1.bf16.msra.mxu0 %v1340
        %1557 = vmatprep.subr.bf16.mxu0 %v1347
        %1558 = vmatpush1.bf16.msra.mxu0 %v1346
        %1559 = vmatprep.subr.bf16.mxu0 %v1353
        %1560 = vmatpush1.bf16.msra.mxu0 %v1352
        %1561 = vmatprep.subr.bf16.mxu0 %v1359
        %1562 = vmatpush1.bf16.msra.mxu0 %v1358
        %1563 = vmatprep.subr.bf16.mxu0 %v1365
        %1564 = vmatpush1.bf16.msra.mxu0 %v1364
        %1565 = vmatprep.subr.bf16.mxu0 %v1371
        %1566 = vmatpush1.bf16.msra.mxu0 %v1370
        %1567 = vmatprep.subr.bf16.mxu0 %v1377
        %1568 = vmatpush1.bf16.msra.mxu0 %v1376
        %1569 = vmatprep.subr.bf16.mxu0 %v1383
        %1570 = vmatpush1.bf16.msra.mxu0 %v1382
        %1571 = vmatprep.subr.bf16.mxu0 %v1389
        %1572 = vmatpush1.bf16.msra.mxu0 %v1388
        %1573 = vmatprep.subr.bf16.mxu0 %v1395
        %1574 = vmatpush1.bf16.msra.mxu0 %v1394
        %1575 = vmatprep.subr.bf16.mxu0 %v1401
        %1576 = vmatpush1.bf16.msra.mxu0 %v1400
        %1577 = vmatprep.subr.bf16.mxu0 %v1407
        %1578 = vmatpush1.bf16.msra.mxu0 %v1406
        %1579 = vmatprep.mubr.bf16.mxu0 %v897
        %1580 = vmatmul.mubr.bf16.gmra.mrb[0].mxu0 %v896
        %v1581 = vpop.f32.mrb[0].mxu0
        %v1582 = vadd.f32 %v1007, %v1581
        %v1583 = vpop.f32.mrb[0].mxu0
        %v1584 = vadd.f32 %v1011, %v1583
        %v1585 = vpop.f32.mrb[0].mxu0
        %v1586 = vpop.f32.mrb[0].mxu0
        %1587 = vdwg.mxu0
        %1588 = vmatprep.subr.bf16.mxu0 %v1319
        %1589 = vmatpush1.bf16.msra.mxu0 %v1318
        %1590 = vmatprep.subr.bf16.mxu0 %v1325
        %1591 = vmatpush1.bf16.msra.mxu0 %v1324
        %1592 = vmatprep.subr.bf16.mxu0 %v1331
        %1593 = vmatpush1.bf16.msra.mxu0 %v1330
        %1594 = vmatprep.subr.bf16.mxu0 %v1337
        %1595 = vmatpush1.bf16.msra.mxu0 %v1336
        %1596 = vmatprep.subr.bf16.mxu0 %v1343
        %1597 = vmatpush1.bf16.msra.mxu0 %v1342
        %1598 = vmatprep.subr.bf16.mxu0 %v1349
        %1599 = vmatpush1.bf16.msra.mxu0 %v1348
        %1600 = vmatprep.subr.bf16.mxu0 %v1355
        %1601 = vmatpush1.bf16.msra.mxu0 %v1354
        %1602 = vmatprep.subr.bf16.mxu0 %v1361
        %1603 = vmatpush1.bf16.msra.mxu0 %v1360
        %1604 = vmatprep.subr.bf16.mxu0 %v1367
        %1605 = vmatpush1.bf16.msra.mxu0 %v1366
        %1606 = vmatprep.subr.bf16.mxu0 %v1373
        %1607 = vmatpush1.bf16.msra.mxu0 %v1372
        %1608 = vmatprep.subr.bf16.mxu0 %v1379
        %1609 = vmatpush1.bf16.msra.mxu0 %v1378
        %1610 = vmatprep.subr.bf16.mxu0 %v1385
        %1611 = vmatpush1.bf16.msra.mxu0 %v1384
        %1612 = vmatprep.subr.bf16.mxu0 %v1391
        %1613 = vmatpush1.bf16.msra.mxu0 %v1390
        %1614 = vmatprep.subr.bf16.mxu0 %v1397
        %1615 = vmatpush1.bf16.msra.mxu0 %v1396
        %1616 = vmatprep.subr.bf16.mxu0 %v1403
        %1617 = vmatpush1.bf16.msra.mxu0 %v1402
        %1618 = vmatprep.subr.bf16.mxu0 %v1409
        %1619 = vmatpush1.bf16.msra.mxu0 %v1408
        %1620 = vmatprep.mubr.bf16.mxu0 %v897
        %1621 = vmatmul.mubr.bf16.gmra.mrb[0].mxu0 %v896
        %v1622 = vpop.f32.mrb[0].mxu0
        %v1623 = vadd.f32 %v1015, %v1622
        %v1624 = vpop.f32.mrb[0].mxu0
        %v1625 = vadd.f32 %v1019, %v1624
        %v1626 = vpop.f32.mrb[0].mxu0
        %v1627 = vpop.f32.mrb[0].mxu0
        %1628 = vdwg.mxu0
        %v1629 = vpack.c.bf16 %v1541, %v1541
        %v1630 = vpack.c.bf16 %v1543, %v1543
        %v1631 = vpack.c.bf16 %v1582, %v1582
        %v1632 = vpack.c.bf16 %v1584, %v1584
        %v1633 = vpack.c.bf16 %v1623, %v1623
        %v1634 = vpack.c.bf16 %v1625, %v1625
        %v1635 = vld [vmem:[%s1] sm:$0xff]
        %vm1636 = vcmask 523264
        %v1638 = vsel %vm1636, %v1629, 0
        %v1641 = vsel %vm1636, %v1631, 0
        %1643 = vmatprep.subr.bf16.mxu0 0
        %1644 = vmatpush1.bf16.xpose.msra.mxu0 %v1641
        %1645 = vmatprep.subr.bf16.mxu0 0
        %1646 = vmatpush1.bf16.xpose.msra.mxu0 0
        %1647 = vmatprep.subr.bf16.mxu0 0
        %1648 = vmatpush1.bf16.xpose.msra.mxu0 0
        %1649 = vmatprep.subr.bf16.mxu0 0
        %1650 = vmatpush1.bf16.xpose.msra.mxu0 0
        %1651 = vmatprep.subr.bf16.mxu0 0
        %1652 = vmatpush1.bf16.xpose.msra.mxu0 0
        %1653 = vmatprep.subr.bf16.mxu0 0
        %1654 = vmatpush1.bf16.xpose.msra.mxu0 0
        %1655 = vmatprep.subr.bf16.mxu0 0
        %1656 = vmatpush1.bf16.xpose.msra.mxu0 0
        %1657 = vmatprep.subr.bf16.mxu0 0
        %1658 = vmatpush1.bf16.xpose.msra.mxu0 0
        %1659 = vmatprep.subr.bf16.mxu0 0
        %1660 = vmatpush1.bf16.xpose.msra.mxu0 0
        %1661 = vmatprep.subr.bf16.mxu0 0
        %1662 = vmatpush1.bf16.xpose.msra.mxu0 0
        %1663 = vmatprep.subr.bf16.mxu0 0
        %1664 = vmatpush1.bf16.xpose.msra.mxu0 0
        %1665 = vmatprep.subr.bf16.mxu0 0
        %1666 = vmatpush1.bf16.xpose.msra.mxu0 0
        %1667 = vmatprep.subr.bf16.mxu0 0
        %1668 = vmatpush1.bf16.xpose.msra.mxu0 0
        %1669 = vmatprep.subr.bf16.mxu0 0
        %1670 = vmatpush1.bf16.xpose.msra.mxu0 0
        %1671 = vmatprep.subr.bf16.mxu0 0
        %1672 = vmatpush1.bf16.xpose.msra.mxu0 0
        %1673 = vmatprep.subr.bf16.mxu0 0
        %1674 = vmatpush1.bf16.xpose.msra.mxu0 0
        %1675 = vmatprep.mubr.bf16.mxu0 0
        %1676 = vmatmul.mubr.bf16.gmra.mrb[0].mxu0 %v1638
        %v1677 = vpop.f32.mrb[0].mxu0
        %v1678 = vadd.f32 %v1635, %v1677
        %v1679 = vpop.f32.mrb[0].mxu0
        %v1680 = vpop.f32.mrb[0].mxu0
        %v1681 = vpop.f32.mrb[0].mxu0
        %1682 = vdwg.mxu0
        %vm1683 = vcmask 64512
        %v1684 = vsel %vm1683, %v1678, -inf
        %1685 = vmax.xlane.f32.xlu0 %v1684
        %v1686 = vpop.xlane.xlu0 %1685
        %v1687 = vsub.f32 %v1678, %v1686
        %v1688 = vmul.f32 %v1687, 1.442695
        %v1689 = vpow.pop %v1688
        %v1690 = vsel %vm1683, %v1689, 0.0
        %1691 = vadd.xlane.f32.xlu0 %v1690
        %v1692 = vpop.xlane.xlu0 %1691
        %v1693 = vrcp.pop %v1692
        %v1694 = vmul.f32 %v1689, %v1693
        %v1695 = vpack.c.bf16 %v1694, %v1694
        %v1697 = vsel %vm1683, %v1695, 0
        %vm1699 = vcmask 1043456
        %v1701 = vsel %vm1699, %v1633, 0
        %1703 = vmatprep.subr.bf16.mxu0 0
        %1704 = vmatpush1.bf16.msra.mxu0 %v1701
        %1705 = vmatprep.subr.bf16.mxu0 0
        %1706 = vmatpush1.bf16.msra.mxu0 0
        %1707 = vmatprep.subr.bf16.mxu0 0
        %1708 = vmatpush1.bf16.msra.mxu0 0
        %1709 = vmatprep.subr.bf16.mxu0 0
        %1710 = vmatpush1.bf16.msra.mxu0 0
        %1711 = vmatprep.subr.bf16.mxu0 0
        %1712 = vmatpush1.bf16.msra.mxu0 0
        %1713 = vmatprep.subr.bf16.mxu0 0
        %1714 = vmatpush1.bf16.msra.mxu0 0
        %1715 = vmatprep.subr.bf16.mxu0 0
        %1716 = vmatpush1.bf16.msra.mxu0 0
        %1717 = vmatprep.subr.bf16.mxu0 0
        %1718 = vmatpush1.bf16.msra.mxu0 0
        %1719 = vmatprep.subr.bf16.mxu0 0
        %1720 = vmatpush1.bf16.msra.mxu0 0
        %1721 = vmatprep.subr.bf16.mxu0 0
        %1722 = vmatpush1.bf16.msra.mxu0 0
        %1723 = vmatprep.subr.bf16.mxu0 0
        %1724 = vmatpush1.bf16.msra.mxu0 0
        %1725 = vmatprep.subr.bf16.mxu0 0
        %1726 = vmatpush1.bf16.msra.mxu0 0
        %1727 = vmatprep.subr.bf16.mxu0 0
        %1728 = vmatpush1.bf16.msra.mxu0 0
        %1729 = vmatprep.subr.bf16.mxu0 0
        %1730 = vmatpush1.bf16.msra.mxu0 0
        %1731 = vmatprep.subr.bf16.mxu0 0
        %1732 = vmatpush1.bf16.msra.mxu0 0
        %1733 = vmatprep.subr.bf16.mxu0 0
        %1734 = vmatpush1.bf16.msra.mxu0 0
        %1735 = vmatprep.mubr.bf16.mxu0 0
        %1736 = vmatmul.mubr.bf16.gmra.mrb[0].mxu0 %v1697
        %v1737 = vpop.f32.mrb[0].mxu0
        %v1738 = vadd.f32 0.0, %v1737
        %v1739 = vpop.f32.mrb[0].mxu0
        %v1740 = vpop.f32.mrb[0].mxu0
        %v1741 = vpop.f32.mrb[0].mxu0
        %1742 = vdwg.mxu0
        %1744 = vrot.lane.b32.xlu0 %v1629, 64
        %v1745 = vpop.permute.xlu0 %1744
        %1747 = vrot.lane.b32.xlu0 %v1631, 64
        %v1748 = vpop.permute.xlu0 %1747
        %v1750 = vsel %vm1636, %v1745, 0
        %v1753 = vsel %vm1636, %v1748, 0
        %1755 = vmatprep.subr.bf16.mxu0 0
        %1756 = vmatpush1.bf16.xpose.msra.mxu0 %v1753
        %1757 = vmatprep.subr.bf16.mxu0 0
        %1758 = vmatpush1.bf16.xpose.msra.mxu0 0
        %1759 = vmatprep.subr.bf16.mxu0 0
        %1760 = vmatpush1.bf16.xpose.msra.mxu0 0
        %1761 = vmatprep.subr.bf16.mxu0 0
        %1762 = vmatpush1.bf16.xpose.msra.mxu0 0
        %1763 = vmatprep.subr.bf16.mxu0 0
        %1764 = vmatpush1.bf16.xpose.msra.mxu0 0
        %1765 = vmatprep.subr.bf16.mxu0 0
        %1766 = vmatpush1.bf16.xpose.msra.mxu0 0
        %1767 = vmatprep.subr.bf16.mxu0 0
        %1768 = vmatpush1.bf16.xpose.msra.mxu0 0
        %1769 = vmatprep.subr.bf16.mxu0 0
        %1770 = vmatpush1.bf16.xpose.msra.mxu0 0
        %1771 = vmatprep.subr.bf16.mxu0 0
        %1772 = vmatpush1.bf16.xpose.msra.mxu0 0
        %1773 = vmatprep.subr.bf16.mxu0 0
        %1774 = vmatpush1.bf16.xpose.msra.mxu0 0
        %1775 = vmatprep.subr.bf16.mxu0 0
        %1776 = vmatpush1.bf16.xpose.msra.mxu0 0
        %1777 = vmatprep.subr.bf16.mxu0 0
        %1778 = vmatpush1.bf16.xpose.msra.mxu0 0
        %1779 = vmatprep.subr.bf16.mxu0 0
        %1780 = vmatpush1.bf16.xpose.msra.mxu0 0
        %1781 = vmatprep.subr.bf16.mxu0 0
        %1782 = vmatpush1.bf16.xpose.msra.mxu0 0
        %1783 = vmatprep.subr.bf16.mxu0 0
        %1784 = vmatpush1.bf16.xpose.msra.mxu0 0
        %1785 = vmatprep.subr.bf16.mxu0 0
        %1786 = vmatpush1.bf16.xpose.msra.mxu0 0
        %1787 = vmatprep.mubr.bf16.mxu0 0
        %1788 = vmatmul.mubr.bf16.gmra.mrb[0].mxu0 %v1750
        %v1789 = vpop.f32.mrb[0].mxu0
        %v1790 = vadd.f32 %v1635, %v1789
        %v1791 = vpop.f32.mrb[0].mxu0
        %v1792 = vpop.f32.mrb[0].mxu0
        %v1793 = vpop.f32.mrb[0].mxu0
        %1794 = vdwg.mxu0
        %v1795 = vsel %vm1683, %v1790, -inf
        %1796 = vmax.xlane.f32.xlu0 %v1795
        %v1797 = vpop.xlane.xlu0 %1796
        %v1798 = vsub.f32 %v1790, %v1797
        %v1799 = vmul.f32 %v1798, 1.442695
        %v1800 = vpow.pop %v1799
        %v1801 = vsel %vm1683, %v1800, 0.0
        %1802 = vadd.xlane.f32.xlu0 %v1801
        %v1803 = vpop.xlane.xlu0 %1802
        %v1804 = vrcp.pop %v1803
        %v1805 = vmul.f32 %v1800, %v1804
        %v1806 = vpack.c.bf16 %v1805, %v1805
        %1808 = vrot.lane.b32.xlu0 %v1633, 64
        %v1809 = vpop.permute.xlu0 %1808
        %v1811 = vsel %vm1683, %v1806, 0
        %v1814 = vsel %vm1699, %v1809, 0
        %1816 = vmatprep.subr.bf16.mxu0 0
        %1817 = vmatpush1.bf16.msra.mxu0 %v1814
        %1818 = vmatprep.subr.bf16.mxu0 0
        %1819 = vmatpush1.bf16.msra.mxu0 0
        %1820 = vmatprep.subr.bf16.mxu0 0
        %1821 = vmatpush1.bf16.msra.mxu0 0
        %1822 = vmatprep.subr.bf16.mxu0 0
        %1823 = vmatpush1.bf16.msra.mxu0 0
        %1824 = vmatprep.subr.bf16.mxu0 0
        %1825 = vmatpush1.bf16.msra.mxu0 0
        %1826 = vmatprep.subr.bf16.mxu0 0
        %1827 = vmatpush1.bf16.msra.mxu0 0
        %1828 = vmatprep.subr.bf16.mxu0 0
        %1829 = vmatpush1.bf16.msra.mxu0 0
        %1830 = vmatprep.subr.bf16.mxu0 0
        %1831 = vmatpush1.bf16.msra.mxu0 0
        %1832 = vmatprep.subr.bf16.mxu0 0
        %1833 = vmatpush1.bf16.msra.mxu0 0
        %1834 = vmatprep.subr.bf16.mxu0 0
        %1835 = vmatpush1.bf16.msra.mxu0 0
        %1836 = vmatprep.subr.bf16.mxu0 0
        %1837 = vmatpush1.bf16.msra.mxu0 0
        %1838 = vmatprep.subr.bf16.mxu0 0
        %1839 = vmatpush1.bf16.msra.mxu0 0
        %1840 = vmatprep.subr.bf16.mxu0 0
        %1841 = vmatpush1.bf16.msra.mxu0 0
        %1842 = vmatprep.subr.bf16.mxu0 0
        %1843 = vmatpush1.bf16.msra.mxu0 0
        %1844 = vmatprep.subr.bf16.mxu0 0
        %1845 = vmatpush1.bf16.msra.mxu0 0
        %1846 = vmatprep.subr.bf16.mxu0 0
        %1847 = vmatpush1.bf16.msra.mxu0 0
        %1848 = vmatprep.mubr.bf16.mxu0 0
        %1849 = vmatmul.mubr.bf16.gmra.mrb[0].mxu0 %v1811
        %v1850 = vpop.f32.mrb[0].mxu0
        %v1851 = vadd.f32 0.0, %v1850
        %v1852 = vpop.f32.mrb[0].mxu0
        %v1853 = vpop.f32.mrb[0].mxu0
        %v1854 = vpop.f32.mrb[0].mxu0
        %1855 = vdwg.mxu0
        %v1857 = vsel %vm1636, %v1630, 0
        %v1860 = vsel %vm1636, %v1632, 0
        %1862 = vmatprep.subr.bf16.mxu0 0
        %1863 = vmatpush1.bf16.xpose.msra.mxu0 %v1860
        %1864 = vmatprep.subr.bf16.mxu0 0
        %1865 = vmatpush1.bf16.xpose.msra.mxu0 0
        %1866 = vmatprep.subr.bf16.mxu0 0
        %1867 = vmatpush1.bf16.xpose.msra.mxu0 0
        %1868 = vmatprep.subr.bf16.mxu0 0
        %1869 = vmatpush1.bf16.xpose.msra.mxu0 0
        %1870 = vmatprep.subr.bf16.mxu0 0
        %1871 = vmatpush1.bf16.xpose.msra.mxu0 0
        %1872 = vmatprep.subr.bf16.mxu0 0
        %1873 = vmatpush1.bf16.xpose.msra.mxu0 0
        %1874 = vmatprep.subr.bf16.mxu0 0
        %1875 = vmatpush1.bf16.xpose.msra.mxu0 0
        %1876 = vmatprep.subr.bf16.mxu0 0
        %1877 = vmatpush1.bf16.xpose.msra.mxu0 0
        %1878 = vmatprep.subr.bf16.mxu0 0
        %1879 = vmatpush1.bf16.xpose.msra.mxu0 0
        %1880 = vmatprep.subr.bf16.mxu0 0
        %1881 = vmatpush1.bf16.xpose.msra.mxu0 0
        %1882 = vmatprep.subr.bf16.mxu0 0
        %1883 = vmatpush1.bf16.xpose.msra.mxu0 0
        %1884 = vmatprep.subr.bf16.mxu0 0
        %1885 = vmatpush1.bf16.xpose.msra.mxu0 0
        %1886 = vmatprep.subr.bf16.mxu0 0
        %1887 = vmatpush1.bf16.xpose.msra.mxu0 0
        %1888 = vmatprep.subr.bf16.mxu0 0
        %1889 = vmatpush1.bf16.xpose.msra.mxu0 0
        %1890 = vmatprep.subr.bf16.mxu0 0
        %1891 = vmatpush1.bf16.xpose.msra.mxu0 0
        %1892 = vmatprep.subr.bf16.mxu0 0
        %1893 = vmatpush1.bf16.xpose.msra.mxu0 0
        %1894 = vmatprep.mubr.bf16.mxu0 0
        %1895 = vmatmul.mubr.bf16.gmra.mrb[0].mxu0 %v1857
        %v1896 = vpop.f32.mrb[0].mxu0
        %v1897 = vadd.f32 %v1635, %v1896
        %v1898 = vpop.f32.mrb[0].mxu0
        %v1899 = vpop.f32.mrb[0].mxu0
        %v1900 = vpop.f32.mrb[0].mxu0
        %1901 = vdwg.mxu0
        %v1902 = vsel %vm1683, %v1897, -inf
        %1903 = vmax.xlane.f32.xlu0 %v1902
        %v1904 = vpop.xlane.xlu0 %1903
        %v1905 = vsub.f32 %v1897, %v1904
        %v1906 = vmul.f32 %v1905, 1.442695
        %v1907 = vpow.pop %v1906
        %v1908 = vsel %vm1683, %v1907, 0.0
        %1909 = vadd.xlane.f32.xlu0 %v1908
        %v1910 = vpop.xlane.xlu0 %1909
        %v1911 = vrcp.pop %v1910
        %v1912 = vmul.f32 %v1907, %v1911
        %v1913 = vpack.c.bf16 %v1912, %v1912
        %v1915 = vsel %vm1683, %v1913, 0
        %v1918 = vsel %vm1699, %v1634, 0
        %1920 = vmatprep.subr.bf16.mxu0 0
        %1921 = vmatpush1.bf16.msra.mxu0 %v1918
        %1922 = vmatprep.subr.bf16.mxu0 0
        %1923 = vmatpush1.bf16.msra.mxu0 0
        %1924 = vmatprep.subr.bf16.mxu0 0
        %1925 = vmatpush1.bf16.msra.mxu0 0
        %1926 = vmatprep.subr.bf16.mxu0 0
        %1927 = vmatpush1.bf16.msra.mxu0 0
        %1928 = vmatprep.subr.bf16.mxu0 0
        %1929 = vmatpush1.bf16.msra.mxu0 0
        %1930 = vmatprep.subr.bf16.mxu0 0
        %1931 = vmatpush1.bf16.msra.mxu0 0
        %1932 = vmatprep.subr.bf16.mxu0 0
        %1933 = vmatpush1.bf16.msra.mxu0 0
        %1934 = vmatprep.subr.bf16.mxu0 0
        %1935 = vmatpush1.bf16.msra.mxu0 0
        %1936 = vmatprep.subr.bf16.mxu0 0
        %1937 = vmatpush1.bf16.msra.mxu0 0
        %1938 = vmatprep.subr.bf16.mxu0 0
        %1939 = vmatpush1.bf16.msra.mxu0 0
        %1940 = vmatprep.subr.bf16.mxu0 0
        %1941 = vmatpush1.bf16.msra.mxu0 0
        %1942 = vmatprep.subr.bf16.mxu0 0
        %1943 = vmatpush1.bf16.msra.mxu0 0
        %1944 = vmatprep.subr.bf16.mxu0 0
        %1945 = vmatpush1.bf16.msra.mxu0 0
        %1946 = vmatprep.subr.bf16.mxu0 0
        %1947 = vmatpush1.bf16.msra.mxu0 0
        %1948 = vmatprep.subr.bf16.mxu0 0
        %1949 = vmatpush1.bf16.msra.mxu0 0
        %1950 = vmatprep.subr.bf16.mxu0 0
        %1951 = vmatpush1.bf16.msra.mxu0 0
        %1952 = vmatprep.mubr.bf16.mxu0 0
        %1953 = vmatmul.mubr.bf16.gmra.mrb[0].mxu0 %v1915
        %v1954 = vpop.f32.mrb[0].mxu0
        %v1955 = vadd.f32 0.0, %v1954
        %v1956 = vpop.f32.mrb[0].mxu0
        %v1957 = vpop.f32.mrb[0].mxu0
        %v1958 = vpop.f32.mrb[0].mxu0
        %1959 = vdwg.mxu0
        %1961 = vrot.lane.b32.xlu0 %v1630, 64
        %v1962 = vpop.permute.xlu0 %1961
        %1964 = vrot.lane.b32.xlu0 %v1632, 64
        %v1965 = vpop.permute.xlu0 %1964
        %v1967 = vsel %vm1636, %v1962, 0
        %v1970 = vsel %vm1636, %v1965, 0
        %1972 = vmatprep.subr.bf16.mxu0 0
        %1973 = vmatpush1.bf16.xpose.msra.mxu0 %v1970
        %1974 = vmatprep.subr.bf16.mxu0 0
        %1975 = vmatpush1.bf16.xpose.msra.mxu0 0
        %1976 = vmatprep.subr.bf16.mxu0 0
        %1977 = vmatpush1.bf16.xpose.msra.mxu0 0
        %1978 = vmatprep.subr.bf16.mxu0 0
        %1979 = vmatpush1.bf16.xpose.msra.mxu0 0
        %1980 = vmatprep.subr.bf16.mxu0 0
        %1981 = vmatpush1.bf16.xpose.msra.mxu0 0
        %1982 = vmatprep.subr.bf16.mxu0 0
        %1983 = vmatpush1.bf16.xpose.msra.mxu0 0
        %1984 = vmatprep.subr.bf16.mxu0 0
        %1985 = vmatpush1.bf16.xpose.msra.mxu0 0
        %1986 = vmatprep.subr.bf16.mxu0 0
        %1987 = vmatpush1.bf16.xpose.msra.mxu0 0
        %1988 = vmatprep.subr.bf16.mxu0 0
        %1989 = vmatpush1.bf16.xpose.msra.mxu0 0
        %1990 = vmatprep.subr.bf16.mxu0 0
        %1991 = vmatpush1.bf16.xpose.msra.mxu0 0
        %1992 = vmatprep.subr.bf16.mxu0 0
        %1993 = vmatpush1.bf16.xpose.msra.mxu0 0
        %1994 = vmatprep.subr.bf16.mxu0 0
        %1995 = vmatpush1.bf16.xpose.msra.mxu0 0
        %1996 = vmatprep.subr.bf16.mxu0 0
        %1997 = vmatpush1.bf16.xpose.msra.mxu0 0
        %1998 = vmatprep.subr.bf16.mxu0 0
        %1999 = vmatpush1.bf16.xpose.msra.mxu0 0
        %2000 = vmatprep.subr.bf16.mxu0 0
        %2001 = vmatpush1.bf16.xpose.msra.mxu0 0
        %2002 = vmatprep.subr.bf16.mxu0 0
        %2003 = vmatpush1.bf16.xpose.msra.mxu0 0
        %2004 = vmatprep.mubr.bf16.mxu0 0
        %2005 = vmatmul.mubr.bf16.gmra.mrb[0].mxu0 %v1967
        %v2006 = vpop.f32.mrb[0].mxu0
        %v2007 = vadd.f32 %v1635, %v2006
        %v2008 = vpop.f32.mrb[0].mxu0
        %v2009 = vpop.f32.mrb[0].mxu0
        %v2010 = vpop.f32.mrb[0].mxu0
        %2011 = vdwg.mxu0
        %v2012 = vsel %vm1683, %v2007, -inf
        %2013 = vmax.xlane.f32.xlu0 %v2012
        %v2014 = vpop.xlane.xlu0 %2013
        %v2015 = vsub.f32 %v2007, %v2014
        %v2016 = vmul.f32 %v2015, 1.442695
        %v2017 = vpow.pop %v2016
        %v2018 = vsel %vm1683, %v2017, 0.0
        %2019 = vadd.xlane.f32.xlu0 %v2018
        %v2020 = vpop.xlane.xlu0 %2019
        %v2021 = vrcp.pop %v2020
        %v2022 = vmul.f32 %v2017, %v2021
        %v2023 = vpack.c.bf16 %v2022, %v2022
        %2025 = vrot.lane.b32.xlu0 %v1634, 64
        %v2026 = vpop.permute.xlu0 %2025
        %v2028 = vsel %vm1683, %v2023, 0
        %v2031 = vsel %vm1699, %v2026, 0
        %2033 = vmatprep.subr.bf16.mxu0 0
        %2034 = vmatpush1.bf16.msra.mxu0 %v2031
        %2035 = vmatprep.subr.bf16.mxu0 0
        %2036 = vmatpush1.bf16.msra.mxu0 0
        %2037 = vmatprep.subr.bf16.mxu0 0
        %2038 = vmatpush1.bf16.msra.mxu0 0
        %2039 = vmatprep.subr.bf16.mxu0 0
        %2040 = vmatpush1.bf16.msra.mxu0 0
        %2041 = vmatprep.subr.bf16.mxu0 0
        %2042 = vmatpush1.bf16.msra.mxu0 0
        %2043 = vmatprep.subr.bf16.mxu0 0
        %2044 = vmatpush1.bf16.msra.mxu0 0
        %2045 = vmatprep.subr.bf16.mxu0 0
        %2046 = vmatpush1.bf16.msra.mxu0 0
        %2047 = vmatprep.subr.bf16.mxu0 0
        %2048 = vmatpush1.bf16.msra.mxu0 0
        %2049 = vmatprep.subr.bf16.mxu0 0
        %2050 = vmatpush1.bf16.msra.mxu0 0
        %2051 = vmatprep.subr.bf16.mxu0 0
        %2052 = vmatpush1.bf16.msra.mxu0 0
        %2053 = vmatprep.subr.bf16.mxu0 0
        %2054 = vmatpush1.bf16.msra.mxu0 0
        %2055 = vmatprep.subr.bf16.mxu0 0
        %2056 = vmatpush1.bf16.msra.mxu0 0
        %2057 = vmatprep.subr.bf16.mxu0 0
        %2058 = vmatpush1.bf16.msra.mxu0 0
        %2059 = vmatprep.subr.bf16.mxu0 0
        %2060 = vmatpush1.bf16.msra.mxu0 0
        %2061 = vmatprep.subr.bf16.mxu0 0
        %2062 = vmatpush1.bf16.msra.mxu0 0
        %2063 = vmatprep.subr.bf16.mxu0 0
        %2064 = vmatpush1.bf16.msra.mxu0 0
        %2065 = vmatprep.mubr.bf16.mxu0 0
        %2066 = vmatmul.mubr.bf16.gmra.mrb[0].mxu0 %v2028
        %v2067 = vpop.f32.mrb[0].mxu0
        %v2068 = vadd.f32 0.0, %v2067
        %v2069 = vpop.f32.mrb[0].mxu0
        %v2070 = vpop.f32.mrb[0].mxu0
        %v2071 = vpop.f32.mrb[0].mxu0
        %2072 = vdwg.mxu0
        %2074 = vrot.lane.b32.xlu0 %v1851, 64
        %v2075 = vpop.permute.xlu0 %2074
        %2078 = vrot.lane.b32.xlu0 %v2068, 64
        %v2079 = vpop.permute.xlu0 %2078
        %v2081 = vsel %vm1636, %v1738, %v2075
        %v2082 = vsel %vm1636, %v1955, %v2079
        %v2083 = vpack.c.bf16 %v2081, %v2081
        %v2084 = vpack.c.bf16 %v2082, %v2082
        %v2085 = vld [vmem:[%s688] sm:$0xff]
        %v2086 = vld [vmem:[%s688 + $0x8] sm:$0xff]
        %v2087 = vld [vmem:[%s688 + $0x10] sm:$0xff]
        %v2088 = vld [vmem:[%s688 + $0x18] sm:$0xff]
        %v2089 = vld [vmem:[%s688 + $0x20] sm:$0xff]
        %v2090 = vld [vmem:[%s688 + $0x28] sm:$0xff]
        %v2091 = vld [vmem:[%s688 + $0x30] sm:$0xff]
        %v2092 = vld [vmem:[%s688 + $0x38] sm:$0xff]
        %v2093 = vld [vmem:[%s688 + $0x40] sm:$0xff]
        %v2094 = vld [vmem:[%s688 + $0x48] sm:$0xff]
        %v2095 = vld [vmem:[%s688 + $0x50] sm:$0xff]
        %v2096 = vld [vmem:[%s688 + $0x58] sm:$0xff]
        %v2097 = vld [vmem:[%s688 + $0x60] sm:$0xff]
        %v2098 = vld [vmem:[%s688 + $0x68] sm:$0xff]
        %v2099 = vld [vmem:[%s688 + $0x70] sm:$0xff]
        %v2100 = vld [vmem:[%s688 + $0x78] sm:$0xff]
        %v2101 = vld [vmem:[%s688 + $0x80] sm:$0xff]
        %v2102 = vld [vmem:[%s688 + $0x88] sm:$0xff]
        %v2103 = vld [vmem:[%s688 + $0x90] sm:$0xff]
        %v2104 = vld [vmem:[%s688 + $0x98] sm:$0xff]
        %v2105 = vld [vmem:[%s688 + $0xa0] sm:$0xff]
        %v2106 = vld [vmem:[%s688 + $0xa8] sm:$0xff]
        %v2107 = vld [vmem:[%s688 + $0xb0] sm:$0xff]
        %v2108 = vld [vmem:[%s688 + $0xb8] sm:$0xff]
        %v2109 = vld [vmem:[%s688 + $0xc0] sm:$0xff]
        %v2110 = vld [vmem:[%s688 + $0xc8] sm:$0xff]
        %v2111 = vld [vmem:[%s688 + $0xd0] sm:$0xff]
        %v2112 = vld [vmem:[%s688 + $0xd8] sm:$0xff]
        %v2113 = vld [vmem:[%s688 + $0xe0] sm:$0xff]
        %v2114 = vld [vmem:[%s688 + $0xe8] sm:$0xff]
        %v2115 = vld [vmem:[%s688 + $0xf0] sm:$0xff]
        %v2116 = vld [vmem:[%s688 + $0xf8] sm:$0xff]
        %v2117 = vld [vmem:[%s823] sm:$0x3]
        %v2119 = vlaneseq
        %v2120 = vshrl.u32 %v2119, 7
        %v2121 = vsub.s32 0, %v2120
        %v2122 = vrot.slane %v2117, %v2121
        %v2123 = vlaneseq
        %v2124 = vshrl.u32 %v2123, 7
        %v2125 = vsub.s32 1, %v2124
        %v2126 = vrot.slane %v2117, %v2125
        %v2161 = vunpack.c.l.b16 %v2085
        %v2162 = vunpack.c.h.b16 %v2085
        %v2163 = vunpack.c.l.b16 %v2086
        %v2164 = vunpack.c.h.b16 %v2086
        %v2165 = vunpack.c.l.b16 %v2087
        %v2166 = vunpack.c.h.b16 %v2087
        %v2167 = vunpack.c.l.b16 %v2088
        %v2168 = vunpack.c.h.b16 %v2088
        %v2169 = vunpack.c.l.b16 %v2089
        %v2170 = vunpack.c.h.b16 %v2089
        %v2171 = vunpack.c.l.b16 %v2090
        %v2172 = vunpack.c.h.b16 %v2090
        %v2173 = vunpack.c.l.b16 %v2091
        %v2174 = vunpack.c.h.b16 %v2091
        %v2175 = vunpack.c.l.b16 %v2092
        %v2176 = vunpack.c.h.b16 %v2092
        %v2177 = vunpack.c.l.b16 %v2093
        %v2178 = vunpack.c.h.b16 %v2093
        %v2179 = vunpack.c.l.b16 %v2094
        %v2180 = vunpack.c.h.b16 %v2094
        %v2181 = vunpack.c.l.b16 %v2095
        %v2182 = vunpack.c.h.b16 %v2095
        %v2183 = vunpack.c.l.b16 %v2096
        %v2184 = vunpack.c.h.b16 %v2096
        %v2185 = vunpack.c.l.b16 %v2097
        %v2186 = vunpack.c.h.b16 %v2097
        %v2187 = vunpack.c.l.b16 %v2098
        %v2188 = vunpack.c.h.b16 %v2098
        %v2189 = vunpack.c.l.b16 %v2099
        %v2190 = vunpack.c.h.b16 %v2099
        %v2191 = vunpack.c.l.b16 %v2100
        %v2192 = vunpack.c.h.b16 %v2100
        %v2193 = vunpack.c.l.b16 %v2101
        %v2194 = vunpack.c.h.b16 %v2101
        %v2195 = vunpack.c.l.b16 %v2102
        %v2196 = vunpack.c.h.b16 %v2102
        %v2197 = vunpack.c.l.b16 %v2103
        %v2198 = vunpack.c.h.b16 %v2103
        %v2199 = vunpack.c.l.b16 %v2104
        %v2200 = vunpack.c.h.b16 %v2104
        %v2201 = vunpack.c.l.b16 %v2105
        %v2202 = vunpack.c.h.b16 %v2105
        %v2203 = vunpack.c.l.b16 %v2106
        %v2204 = vunpack.c.h.b16 %v2106
        %v2205 = vunpack.c.l.b16 %v2107
        %v2206 = vunpack.c.h.b16 %v2107
        %v2207 = vunpack.c.l.b16 %v2108
        %v2208 = vunpack.c.h.b16 %v2108
        %v2209 = vunpack.c.l.b16 %v2109
        %v2210 = vunpack.c.h.b16 %v2109
        %v2211 = vunpack.c.l.b16 %v2110
        %v2212 = vunpack.c.h.b16 %v2110
        %v2213 = vunpack.c.l.b16 %v2111
        %v2214 = vunpack.c.h.b16 %v2111
        %v2215 = vunpack.c.l.b16 %v2112
        %v2216 = vunpack.c.h.b16 %v2112
        %v2217 = vunpack.c.l.b16 %v2113
        %v2218 = vunpack.c.h.b16 %v2113
        %v2219 = vunpack.c.l.b16 %v2114
        %v2220 = vunpack.c.h.b16 %v2114
        %v2221 = vunpack.c.l.b16 %v2115
        %v2222 = vunpack.c.h.b16 %v2115
        %v2223 = vunpack.c.l.b16 %v2116
        %v2224 = vunpack.c.h.b16 %v2116
        %v2225 = vpack.c.b16 %v2163, %v2161
        %v2226 = vpack.c.b16 %v2164, %v2162
        %v2227 = vpack.c.b16 %v2167, %v2165
        %v2228 = vpack.c.b16 %v2168, %v2166
        %v2229 = vpack.c.b16 %v2171, %v2169
        %v2230 = vpack.c.b16 %v2172, %v2170
        %v2231 = vpack.c.b16 %v2175, %v2173
        %v2232 = vpack.c.b16 %v2176, %v2174
        %v2233 = vpack.c.b16 %v2179, %v2177
        %v2234 = vpack.c.b16 %v2180, %v2178
        %v2235 = vpack.c.b16 %v2183, %v2181
        %v2236 = vpack.c.b16 %v2184, %v2182
        %v2237 = vpack.c.b16 %v2187, %v2185
        %v2238 = vpack.c.b16 %v2188, %v2186
        %v2239 = vpack.c.b16 %v2191, %v2189
        %v2240 = vpack.c.b16 %v2192, %v2190
        %v2241 = vpack.c.b16 %v2195, %v2193
        %v2242 = vpack.c.b16 %v2196, %v2194
        %v2243 = vpack.c.b16 %v2199, %v2197
        %v2244 = vpack.c.b16 %v2200, %v2198
        %v2245 = vpack.c.b16 %v2203, %v2201
        %v2246 = vpack.c.b16 %v2204, %v2202
        %v2247 = vpack.c.b16 %v2207, %v2205
        %v2248 = vpack.c.b16 %v2208, %v2206
        %v2249 = vpack.c.b16 %v2211, %v2209
        %v2250 = vpack.c.b16 %v2212, %v2210
        %v2251 = vpack.c.b16 %v2215, %v2213
        %v2252 = vpack.c.b16 %v2216, %v2214
        %v2253 = vpack.c.b16 %v2219, %v2217
        %v2254 = vpack.c.b16 %v2220, %v2218
        %v2255 = vpack.c.b16 %v2223, %v2221
        %v2256 = vpack.c.b16 %v2224, %v2222
        %2289 = vmatprep.subr.bf16.mxu0 %v2226
        %2290 = vmatpush1.bf16.msra.mxu0 %v2225
        %2291 = vmatprep.subr.bf16.mxu0 %v2228
        %2292 = vmatpush1.bf16.msra.mxu0 %v2227
        %2293 = vmatprep.subr.bf16.mxu0 %v2230
        %2294 = vmatpush1.bf16.msra.mxu0 %v2229
        %2295 = vmatprep.subr.bf16.mxu0 %v2232
        %2296 = vmatpush1.bf16.msra.mxu0 %v2231
        %2297 = vmatprep.subr.bf16.mxu0 %v2234
        %2298 = vmatpush1.bf16.msra.mxu0 %v2233
        %2299 = vmatprep.subr.bf16.mxu0 %v2236
        %2300 = vmatpush1.bf16.msra.mxu0 %v2235
        %2301 = vmatprep.subr.bf16.mxu0 %v2238
        %2302 = vmatpush1.bf16.msra.mxu0 %v2237
        %2303 = vmatprep.subr.bf16.mxu0 %v2240
        %2304 = vmatpush1.bf16.msra.mxu0 %v2239
        %2305 = vmatprep.subr.bf16.mxu0 %v2242
        %2306 = vmatpush1.bf16.msra.mxu0 %v2241
        %2307 = vmatprep.subr.bf16.mxu0 %v2244
        %2308 = vmatpush1.bf16.msra.mxu0 %v2243
        %2309 = vmatprep.subr.bf16.mxu0 %v2246
        %2310 = vmatpush1.bf16.msra.mxu0 %v2245
        %2311 = vmatprep.subr.bf16.mxu0 %v2248
        %2312 = vmatpush1.bf16.msra.mxu0 %v2247
        %2313 = vmatprep.subr.bf16.mxu0 %v2250
        %2314 = vmatpush1.bf16.msra.mxu0 %v2249
        %2315 = vmatprep.subr.bf16.mxu0 %v2252
        %2316 = vmatpush1.bf16.msra.mxu0 %v2251
        %2317 = vmatprep.subr.bf16.mxu0 %v2254
        %2318 = vmatpush1.bf16.msra.mxu0 %v2253
        %2319 = vmatprep.subr.bf16.mxu0 %v2256
        %2320 = vmatpush1.bf16.msra.mxu0 %v2255
        %2321 = vmatprep.mubr.bf16.mxu0 %v2084
        %2322 = vmatmul.mubr.bf16.gmra.mrb[0].mxu0 %v2083
        %v2323 = vpop.f32.mrb[0].mxu0
        %v2324 = vadd.f32 %v2122, %v2323
        %v2325 = vpop.f32.mrb[0].mxu0
        %v2326 = vadd.f32 %v2126, %v2325
        %v2327 = vpop.f32.mrb[0].mxu0
        %v2328 = vpop.f32.mrb[0].mxu0
        %2329 = vdwg.mxu0
        %v2330 = vadd.f32 %v849, %v2324
        %v2331 = vadd.f32 %v850, %v2326
        %v2332 = vadd.f32 %v2330, %v2331
        %2333 = vadd.xlane.f32.xlu0 %v2332
        %v2334 = vpop.xlane.xlu0 %2333
        %v2335 = vmul.f32 %v2334, %v854
        %v2336 = vsub.f32 %v2330, %v2335
        %v2337 = vsub.f32 %v2331, %v2335
        %v2338 = vmul.f32 %v2336, %v2336
        %v2339 = vmul.f32 %v2337, %v2337
        %v2340 = vadd.f32 %v2338, %v2339
        %2341 = vadd.xlane.f32.xlu0 %v2340
        %v2342 = vpop.xlane.xlu0 %2341
        %v2343 = vmul.f32 %v2342, %v854
        %v2344 = vadd.f32 %v2343, 1e-05
        %v2345 = vrsqrt.pop %v2344
        %v2346 = vmul.f32 %v2336, %v2345
        %v2347 = vmul.f32 %v2337, %v2345
        %v2348 = vld [vmem:[%s827] sm:$0x3]
        %v2350 = vlaneseq
        %v2351 = vshrl.u32 %v2350, 7
        %v2352 = vsub.s32 0, %v2351
        %v2353 = vrot.slane %v2348, %v2352
        %v2354 = vlaneseq
        %v2355 = vshrl.u32 %v2354, 7
        %v2356 = vsub.s32 1, %v2355
        %v2357 = vrot.slane %v2348, %v2356
        %v2360 = vmul.f32 %v2346, %v2353
        %v2361 = vmul.f32 %v2347, %v2357
        %v2362 = vld [vmem:[%s831] sm:$0x3]
        %v2364 = vlaneseq
        %v2365 = vshrl.u32 %v2364, 7
        %v2366 = vsub.s32 0, %v2365
        %v2367 = vrot.slane %v2362, %v2366
        %v2368 = vlaneseq
        %v2369 = vshrl.u32 %v2368, 7
        %v2370 = vsub.s32 1, %v2369
        %v2371 = vrot.slane %v2362, %v2370
        %v2374 = vadd.f32 %v2360, %v2367
        %v2375 = vadd.f32 %v2361, %v2371
        %v2376 = vpack.c.bf16 %v2374, %v2374
        %v2377 = vpack.c.bf16 %v2375, %v2375
        %v2378 = vld [vmem:[%s697] sm:$0xff]
        %v2379 = vld [vmem:[%s697 + $0x8] sm:$0xff]
        %v2380 = vld [vmem:[%s697 + $0x10] sm:$0xff]
        %v2381 = vld [vmem:[%s697 + $0x18] sm:$0xff]
        %v2382 = vld [vmem:[%s697 + $0x20] sm:$0xff]
        %v2383 = vld [vmem:[%s697 + $0x28] sm:$0xff]
        %v2384 = vld [vmem:[%s697 + $0x30] sm:$0xff]
        %v2385 = vld [vmem:[%s697 + $0x38] sm:$0xff]
        %v2386 = vld [vmem:[%s697 + $0x40] sm:$0xff]
        %v2387 = vld [vmem:[%s697 + $0x48] sm:$0xff]
        %v2388 = vld [vmem:[%s697 + $0x50] sm:$0xff]
        %v2389 = vld [vmem:[%s697 + $0x58] sm:$0xff]
        %v2390 = vld [vmem:[%s697 + $0x60] sm:$0xff]
        %v2391 = vld [vmem:[%s697 + $0x68] sm:$0xff]
        %v2392 = vld [vmem:[%s697 + $0x70] sm:$0xff]
        %v2393 = vld [vmem:[%s697 + $0x78] sm:$0xff]
        %v2394 = vld [vmem:[%s697 + $0x80] sm:$0xff]
        %v2395 = vld [vmem:[%s697 + $0x88] sm:$0xff]
        %v2396 = vld [vmem:[%s697 + $0x90] sm:$0xff]
        %v2397 = vld [vmem:[%s697 + $0x98] sm:$0xff]
        %v2398 = vld [vmem:[%s697 + $0xa0] sm:$0xff]
        %v2399 = vld [vmem:[%s697 + $0xa8] sm:$0xff]
        %v2400 = vld [vmem:[%s697 + $0xb0] sm:$0xff]
        %v2401 = vld [vmem:[%s697 + $0xb8] sm:$0xff]
        %v2402 = vld [vmem:[%s697 + $0xc0] sm:$0xff]
        %v2403 = vld [vmem:[%s697 + $0xc8] sm:$0xff]
        %v2404 = vld [vmem:[%s697 + $0xd0] sm:$0xff]
        %v2405 = vld [vmem:[%s697 + $0xd8] sm:$0xff]
        %v2406 = vld [vmem:[%s697 + $0xe0] sm:$0xff]
        %v2407 = vld [vmem:[%s697 + $0xe8] sm:$0xff]
        %v2408 = vld [vmem:[%s697 + $0xf0] sm:$0xff]
        %v2409 = vld [vmem:[%s697 + $0xf8] sm:$0xff]
        %v2410 = vld [vmem:[%s697 + $0x100] sm:$0xff]
        %v2411 = vld [vmem:[%s697 + $0x108] sm:$0xff]
        %v2412 = vld [vmem:[%s697 + $0x110] sm:$0xff]
        %v2413 = vld [vmem:[%s697 + $0x118] sm:$0xff]
        %v2414 = vld [vmem:[%s697 + $0x120] sm:$0xff]
        %v2415 = vld [vmem:[%s697 + $0x128] sm:$0xff]
        %v2416 = vld [vmem:[%s697 + $0x130] sm:$0xff]
        %v2417 = vld [vmem:[%s697 + $0x138] sm:$0xff]
        %v2418 = vld [vmem:[%s697 + $0x140] sm:$0xff]
        %v2419 = vld [vmem:[%s697 + $0x148] sm:$0xff]
        %v2420 = vld [vmem:[%s697 + $0x150] sm:$0xff]
        %v2421 = vld [vmem:[%s697 + $0x158] sm:$0xff]
        %v2422 = vld [vmem:[%s697 + $0x160] sm:$0xff]
        %v2423 = vld [vmem:[%s697 + $0x168] sm:$0xff]
        %v2424 = vld [vmem:[%s697 + $0x170] sm:$0xff]
        %v2425 = vld [vmem:[%s697 + $0x178] sm:$0xff]
        %v2426 = vld [vmem:[%s697 + $0x180] sm:$0xff]
        %v2427 = vld [vmem:[%s697 + $0x188] sm:$0xff]
        %v2428 = vld [vmem:[%s697 + $0x190] sm:$0xff]
        %v2429 = vld [vmem:[%s697 + $0x198] sm:$0xff]
        %v2430 = vld [vmem:[%s697 + $0x1a0] sm:$0xff]
        %v2431 = vld [vmem:[%s697 + $0x1a8] sm:$0xff]
        %v2432 = vld [vmem:[%s697 + $0x1b0] sm:$0xff]
        %v2433 = vld [vmem:[%s697 + $0x1b8] sm:$0xff]
        %v2434 = vld [vmem:[%s697 + $0x1c0] sm:$0xff]
        %v2435 = vld [vmem:[%s697 + $0x1c8] sm:$0xff]
        %v2436 = vld [vmem:[%s697 + $0x1d0] sm:$0xff]
        %v2437 = vld [vmem:[%s697 + $0x1d8] sm:$0xff]
        %v2438 = vld [vmem:[%s697 + $0x1e0] sm:$0xff]
        %v2439 = vld [vmem:[%s697 + $0x1e8] sm:$0xff]
        %v2440 = vld [vmem:[%s697 + $0x1f0] sm:$0xff]
        %v2441 = vld [vmem:[%s697 + $0x1f8] sm:$0xff]
        %v2442 = vld [vmem:[%s697 + $0x200] sm:$0xff]
        %v2443 = vld [vmem:[%s697 + $0x208] sm:$0xff]
        %v2444 = vld [vmem:[%s697 + $0x210] sm:$0xff]
        %v2445 = vld [vmem:[%s697 + $0x218] sm:$0xff]
        %v2446 = vld [vmem:[%s697 + $0x220] sm:$0xff]
        %v2447 = vld [vmem:[%s697 + $0x228] sm:$0xff]
        %v2448 = vld [vmem:[%s697 + $0x230] sm:$0xff]
        %v2449 = vld [vmem:[%s697 + $0x238] sm:$0xff]
        %v2450 = vld [vmem:[%s697 + $0x240] sm:$0xff]
        %v2451 = vld [vmem:[%s697 + $0x248] sm:$0xff]
        %v2452 = vld [vmem:[%s697 + $0x250] sm:$0xff]
        %v2453 = vld [vmem:[%s697 + $0x258] sm:$0xff]
        %v2454 = vld [vmem:[%s697 + $0x260] sm:$0xff]
        %v2455 = vld [vmem:[%s697 + $0x268] sm:$0xff]
        %v2456 = vld [vmem:[%s697 + $0x270] sm:$0xff]
        %v2457 = vld [vmem:[%s697 + $0x278] sm:$0xff]
        %v2458 = vld [vmem:[%s697 + $0x280] sm:$0xff]
        %v2459 = vld [vmem:[%s697 + $0x288] sm:$0xff]
        %v2460 = vld [vmem:[%s697 + $0x290] sm:$0xff]
        %v2461 = vld [vmem:[%s697 + $0x298] sm:$0xff]
        %v2462 = vld [vmem:[%s697 + $0x2a0] sm:$0xff]
        %v2463 = vld [vmem:[%s697 + $0x2a8] sm:$0xff]
        %v2464 = vld [vmem:[%s697 + $0x2b0] sm:$0xff]
        %v2465 = vld [vmem:[%s697 + $0x2b8] sm:$0xff]
        %v2466 = vld [vmem:[%s697 + $0x2c0] sm:$0xff]
        %v2467 = vld [vmem:[%s697 + $0x2c8] sm:$0xff]
        %v2468 = vld [vmem:[%s697 + $0x2d0] sm:$0xff]
        %v2469 = vld [vmem:[%s697 + $0x2d8] sm:$0xff]
        %v2470 = vld [vmem:[%s697 + $0x2e0] sm:$0xff]
        %v2471 = vld [vmem:[%s697 + $0x2e8] sm:$0xff]
        %v2472 = vld [vmem:[%s697 + $0x2f0] sm:$0xff]
        %v2473 = vld [vmem:[%s697 + $0x2f8] sm:$0xff]
        %v2474 = vld [vmem:[%s697 + $0x300] sm:$0xff]
        %v2475 = vld [vmem:[%s697 + $0x308] sm:$0xff]
        %v2476 = vld [vmem:[%s697 + $0x310] sm:$0xff]
        %v2477 = vld [vmem:[%s697 + $0x318] sm:$0xff]
        %v2478 = vld [vmem:[%s697 + $0x320] sm:$0xff]
        %v2479 = vld [vmem:[%s697 + $0x328] sm:$0xff]
        %v2480 = vld [vmem:[%s697 + $0x330] sm:$0xff]
        %v2481 = vld [vmem:[%s697 + $0x338] sm:$0xff]
        %v2482 = vld [vmem:[%s697 + $0x340] sm:$0xff]
        %v2483 = vld [vmem:[%s697 + $0x348] sm:$0xff]
        %v2484 = vld [vmem:[%s697 + $0x350] sm:$0xff]
        %v2485 = vld [vmem:[%s697 + $0x358] sm:$0xff]
        %v2486 = vld [vmem:[%s697 + $0x360] sm:$0xff]
        %v2487 = vld [vmem:[%s697 + $0x368] sm:$0xff]
        %v2488 = vld [vmem:[%s697 + $0x370] sm:$0xff]
        %v2489 = vld [vmem:[%s697 + $0x378] sm:$0xff]
        %v2490 = vld [vmem:[%s697 + $0x380] sm:$0xff]
        %v2491 = vld [vmem:[%s697 + $0x388] sm:$0xff]
        %v2492 = vld [vmem:[%s697 + $0x390] sm:$0xff]
        %v2493 = vld [vmem:[%s697 + $0x398] sm:$0xff]
        %v2494 = vld [vmem:[%s697 + $0x3a0] sm:$0xff]
        %v2495 = vld [vmem:[%s697 + $0x3a8] sm:$0xff]
        %v2496 = vld [vmem:[%s697 + $0x3b0] sm:$0xff]
        %v2497 = vld [vmem:[%s697 + $0x3b8] sm:$0xff]
        %v2498 = vld [vmem:[%s697 + $0x3c0] sm:$0xff]
        %v2499 = vld [vmem:[%s697 + $0x3c8] sm:$0xff]
        %v2500 = vld [vmem:[%s697 + $0x3d0] sm:$0xff]
        %v2501 = vld [vmem:[%s697 + $0x3d8] sm:$0xff]
        %v2502 = vld [vmem:[%s697 + $0x3e0] sm:$0xff]
        %v2503 = vld [vmem:[%s697 + $0x3e8] sm:$0xff]
        %v2504 = vld [vmem:[%s697 + $0x3f0] sm:$0xff]
        %v2505 = vld [vmem:[%s697 + $0x3f8] sm:$0xff]
        %v2506 = vld [vmem:[%s835] sm:$0xff]
        %v2508 = vlaneseq
        %v2509 = vshrl.u32 %v2508, 7
        %v2510 = vsub.s32 0, %v2509
        %v2511 = vrot.slane %v2506, %v2510
        %v2512 = vlaneseq
        %v2513 = vshrl.u32 %v2512, 7
        %v2514 = vsub.s32 1, %v2513
        %v2515 = vrot.slane %v2506, %v2514
        %v2516 = vlaneseq
        %v2517 = vshrl.u32 %v2516, 7
        %v2518 = vsub.s32 2, %v2517
        %v2519 = vrot.slane %v2506, %v2518
        %v2520 = vlaneseq
        %v2521 = vshrl.u32 %v2520, 7
        %v2522 = vsub.s32 3, %v2521
        %v2523 = vrot.slane %v2506, %v2522
        %v2524 = vlaneseq
        %v2525 = vshrl.u32 %v2524, 7
        %v2526 = vsub.s32 4, %v2525
        %v2527 = vrot.slane %v2506, %v2526
        %v2528 = vlaneseq
        %v2529 = vshrl.u32 %v2528, 7
        %v2530 = vsub.s32 5, %v2529
        %v2531 = vrot.slane %v2506, %v2530
        %v2532 = vlaneseq
        %v2533 = vshrl.u32 %v2532, 7
        %v2534 = vsub.s32 6, %v2533
        %v2535 = vrot.slane %v2506, %v2534
        %v2536 = vlaneseq
        %v2537 = vshrl.u32 %v2536, 7
        %v2538 = vsub.s32 7, %v2537
        %v2539 = vrot.slane %v2506, %v2538
        %v2676 = vunpack.c.l.b16 %v2378
        %v2677 = vunpack.c.h.b16 %v2378
        %v2678 = vunpack.c.l.b16 %v2379
        %v2679 = vunpack.c.h.b16 %v2379
        %v2680 = vunpack.c.l.b16 %v2380
        %v2681 = vunpack.c.h.b16 %v2380
        %v2682 = vunpack.c.l.b16 %v2381
        %v2683 = vunpack.c.h.b16 %v2381
        %v2684 = vunpack.c.l.b16 %v2382
        %v2685 = vunpack.c.h.b16 %v2382
        %v2686 = vunpack.c.l.b16 %v2383
        %v2687 = vunpack.c.h.b16 %v2383
        %v2688 = vunpack.c.l.b16 %v2384
        %v2689 = vunpack.c.h.b16 %v2384
        %v2690 = vunpack.c.l.b16 %v2385
        %v2691 = vunpack.c.h.b16 %v2385
        %v2692 = vunpack.c.l.b16 %v2386
        %v2693 = vunpack.c.h.b16 %v2386
        %v2694 = vunpack.c.l.b16 %v2387
        %v2695 = vunpack.c.h.b16 %v2387
        %v2696 = vunpack.c.l.b16 %v2388
        %v2697 = vunpack.c.h.b16 %v2388
        %v2698 = vunpack.c.l.b16 %v2389
        %v2699 = vunpack.c.h.b16 %v2389
        %v2700 = vunpack.c.l.b16 %v2390
        %v2701 = vunpack.c.h.b16 %v2390
        %v2702 = vunpack.c.l.b16 %v2391
        %v2703 = vunpack.c.h.b16 %v2391
        %v2704 = vunpack.c.l.b16 %v2392
        %v2705 = vunpack.c.h.b16 %v2392
        %v2706 = vunpack.c.l.b16 %v2393
        %v2707 = vunpack.c.h.b16 %v2393
        %v2708 = vunpack.c.l.b16 %v2394
        %v2709 = vunpack.c.h.b16 %v2394
        %v2710 = vunpack.c.l.b16 %v2395
        %v2711 = vunpack.c.h.b16 %v2395
        %v2712 = vunpack.c.l.b16 %v2396
        %v2713 = vunpack.c.h.b16 %v2396
        %v2714 = vunpack.c.l.b16 %v2397
        %v2715 = vunpack.c.h.b16 %v2397
        %v2716 = vunpack.c.l.b16 %v2398
        %v2717 = vunpack.c.h.b16 %v2398
        %v2718 = vunpack.c.l.b16 %v2399
        %v2719 = vunpack.c.h.b16 %v2399
        %v2720 = vunpack.c.l.b16 %v2400
        %v2721 = vunpack.c.h.b16 %v2400
        %v2722 = vunpack.c.l.b16 %v2401
        %v2723 = vunpack.c.h.b16 %v2401
        %v2724 = vunpack.c.l.b16 %v2402
        %v2725 = vunpack.c.h.b16 %v2402
        %v2726 = vunpack.c.l.b16 %v2403
        %v2727 = vunpack.c.h.b16 %v2403
        %v2728 = vunpack.c.l.b16 %v2404
        %v2729 = vunpack.c.h.b16 %v2404
        %v2730 = vunpack.c.l.b16 %v2405
        %v2731 = vunpack.c.h.b16 %v2405
        %v2732 = vunpack.c.l.b16 %v2406
        %v2733 = vunpack.c.h.b16 %v2406
        %v2734 = vunpack.c.l.b16 %v2407
        %v2735 = vunpack.c.h.b16 %v2407
        %v2736 = vunpack.c.l.b16 %v2408
        %v2737 = vunpack.c.h.b16 %v2408
        %v2738 = vunpack.c.l.b16 %v2409
        %v2739 = vunpack.c.h.b16 %v2409
        %v2740 = vunpack.c.l.b16 %v2410
        %v2741 = vunpack.c.h.b16 %v2410
        %v2742 = vunpack.c.l.b16 %v2411
        %v2743 = vunpack.c.h.b16 %v2411
        %v2744 = vunpack.c.l.b16 %v2412
        %v2745 = vunpack.c.h.b16 %v2412
        %v2746 = vunpack.c.l.b16 %v2413
        %v2747 = vunpack.c.h.b16 %v2413
        %v2748 = vunpack.c.l.b16 %v2414
        %v2749 = vunpack.c.h.b16 %v2414
        %v2750 = vunpack.c.l.b16 %v2415
        %v2751 = vunpack.c.h.b16 %v2415
        %v2752 = vunpack.c.l.b16 %v2416
        %v2753 = vunpack.c.h.b16 %v2416
        %v2754 = vunpack.c.l.b16 %v2417
        %v2755 = vunpack.c.h.b16 %v2417
        %v2756 = vunpack.c.l.b16 %v2418
        %v2757 = vunpack.c.h.b16 %v2418
        %v2758 = vunpack.c.l.b16 %v2419
        %v2759 = vunpack.c.h.b16 %v2419
        %v2760 = vunpack.c.l.b16 %v2420
        %v2761 = vunpack.c.h.b16 %v2420
        %v2762 = vunpack.c.l.b16 %v2421
        %v2763 = vunpack.c.h.b16 %v2421
        %v2764 = vunpack.c.l.b16 %v2422
        %v2765 = vunpack.c.h.b16 %v2422
        %v2766 = vunpack.c.l.b16 %v2423
        %v2767 = vunpack.c.h.b16 %v2423
        %v2768 = vunpack.c.l.b16 %v2424
        %v2769 = vunpack.c.h.b16 %v2424
        %v2770 = vunpack.c.l.b16 %v2425
        %v2771 = vunpack.c.h.b16 %v2425
        %v2772 = vunpack.c.l.b16 %v2426
        %v2773 = vunpack.c.h.b16 %v2426
        %v2774 = vunpack.c.l.b16 %v2427
        %v2775 = vunpack.c.h.b16 %v2427
        %v2776 = vunpack.c.l.b16 %v2428
        %v2777 = vunpack.c.h.b16 %v2428
        %v2778 = vunpack.c.l.b16 %v2429
        %v2779 = vunpack.c.h.b16 %v2429
        %v2780 = vunpack.c.l.b16 %v2430
        %v2781 = vunpack.c.h.b16 %v2430
        %v2782 = vunpack.c.l.b16 %v2431
        %v2783 = vunpack.c.h.b16 %v2431
        %v2784 = vunpack.c.l.b16 %v2432
        %v2785 = vunpack.c.h.b16 %v2432
        %v2786 = vunpack.c.l.b16 %v2433
        %v2787 = vunpack.c.h.b16 %v2433
        %v2788 = vunpack.c.l.b16 %v2434
        %v2789 = vunpack.c.h.b16 %v2434
        %v2790 = vunpack.c.l.b16 %v2435
        %v2791 = vunpack.c.h.b16 %v2435
        %v2792 = vunpack.c.l.b16 %v2436
        %v2793 = vunpack.c.h.b16 %v2436
        %v2794 = vunpack.c.l.b16 %v2437
        %v2795 = vunpack.c.h.b16 %v2437
        %v2796 = vunpack.c.l.b16 %v2438
        %v2797 = vunpack.c.h.b16 %v2438
        %v2798 = vunpack.c.l.b16 %v2439
        %v2799 = vunpack.c.h.b16 %v2439
        %v2800 = vunpack.c.l.b16 %v2440
        %v2801 = vunpack.c.h.b16 %v2440
        %v2802 = vunpack.c.l.b16 %v2441
        %v2803 = vunpack.c.h.b16 %v2441
        %v2804 = vunpack.c.l.b16 %v2442
        %v2805 = vunpack.c.h.b16 %v2442
        %v2806 = vunpack.c.l.b16 %v2443
        %v2807 = vunpack.c.h.b16 %v2443
        %v2808 = vunpack.c.l.b16 %v2444
        %v2809 = vunpack.c.h.b16 %v2444
        %v2810 = vunpack.c.l.b16 %v2445
        %v2811 = vunpack.c.h.b16 %v2445
        %v2812 = vunpack.c.l.b16 %v2446
        %v2813 = vunpack.c.h.b16 %v2446
        %v2814 = vunpack.c.l.b16 %v2447
        %v2815 = vunpack.c.h.b16 %v2447
        %v2816 = vunpack.c.l.b16 %v2448
        %v2817 = vunpack.c.h.b16 %v2448
        %v2818 = vunpack.c.l.b16 %v2449
        %v2819 = vunpack.c.h.b16 %v2449
        %v2820 = vunpack.c.l.b16 %v2450
        %v2821 = vunpack.c.h.b16 %v2450
        %v2822 = vunpack.c.l.b16 %v2451
        %v2823 = vunpack.c.h.b16 %v2451
        %v2824 = vunpack.c.l.b16 %v2452
        %v2825 = vunpack.c.h.b16 %v2452
        %v2826 = vunpack.c.l.b16 %v2453
        %v2827 = vunpack.c.h.b16 %v2453
        %v2828 = vunpack.c.l.b16 %v2454
        %v2829 = vunpack.c.h.b16 %v2454
        %v2830 = vunpack.c.l.b16 %v2455
        %v2831 = vunpack.c.h.b16 %v2455
        %v2832 = vunpack.c.l.b16 %v2456
        %v2833 = vunpack.c.h.b16 %v2456
        %v2834 = vunpack.c.l.b16 %v2457
        %v2835 = vunpack.c.h.b16 %v2457
        %v2836 = vunpack.c.l.b16 %v2458
        %v2837 = vunpack.c.h.b16 %v2458
        %v2838 = vunpack.c.l.b16 %v2459
        %v2839 = vunpack.c.h.b16 %v2459
        %v2840 = vunpack.c.l.b16 %v2460
        %v2841 = vunpack.c.h.b16 %v2460
        %v2842 = vunpack.c.l.b16 %v2461
        %v2843 = vunpack.c.h.b16 %v2461
        %v2844 = vunpack.c.l.b16 %v2462
        %v2845 = vunpack.c.h.b16 %v2462
        %v2846 = vunpack.c.l.b16 %v2463
        %v2847 = vunpack.c.h.b16 %v2463
        %v2848 = vunpack.c.l.b16 %v2464
        %v2849 = vunpack.c.h.b16 %v2464
        %v2850 = vunpack.c.l.b16 %v2465
        %v2851 = vunpack.c.h.b16 %v2465
        %v2852 = vunpack.c.l.b16 %v2466
        %v2853 = vunpack.c.h.b16 %v2466
        %v2854 = vunpack.c.l.b16 %v2467
        %v2855 = vunpack.c.h.b16 %v2467
        %v2856 = vunpack.c.l.b16 %v2468
        %v2857 = vunpack.c.h.b16 %v2468
        %v2858 = vunpack.c.l.b16 %v2469
        %v2859 = vunpack.c.h.b16 %v2469
        %v2860 = vunpack.c.l.b16 %v2470
        %v2861 = vunpack.c.h.b16 %v2470
        %v2862 = vunpack.c.l.b16 %v2471
        %v2863 = vunpack.c.h.b16 %v2471
        %v2864 = vunpack.c.l.b16 %v2472
        %v2865 = vunpack.c.h.b16 %v2472
        %v2866 = vunpack.c.l.b16 %v2473
        %v2867 = vunpack.c.h.b16 %v2473
        %v2868 = vunpack.c.l.b16 %v2474
        %v2869 = vunpack.c.h.b16 %v2474
        %v2870 = vunpack.c.l.b16 %v2475
        %v2871 = vunpack.c.h.b16 %v2475
        %v2872 = vunpack.c.l.b16 %v2476
        %v2873 = vunpack.c.h.b16 %v2476
        %v2874 = vunpack.c.l.b16 %v2477
        %v2875 = vunpack.c.h.b16 %v2477
        %v2876 = vunpack.c.l.b16 %v2478
        %v2877 = vunpack.c.h.b16 %v2478
        %v2878 = vunpack.c.l.b16 %v2479
        %v2879 = vunpack.c.h.b16 %v2479
        %v2880 = vunpack.c.l.b16 %v2480
        %v2881 = vunpack.c.h.b16 %v2480
        %v2882 = vunpack.c.l.b16 %v2481
        %v2883 = vunpack.c.h.b16 %v2481
        %v2884 = vunpack.c.l.b16 %v2482
        %v2885 = vunpack.c.h.b16 %v2482
        %v2886 = vunpack.c.l.b16 %v2483
        %v2887 = vunpack.c.h.b16 %v2483
        %v2888 = vunpack.c.l.b16 %v2484
        %v2889 = vunpack.c.h.b16 %v2484
        %v2890 = vunpack.c.l.b16 %v2485
        %v2891 = vunpack.c.h.b16 %v2485
        %v2892 = vunpack.c.l.b16 %v2486
        %v2893 = vunpack.c.h.b16 %v2486
        %v2894 = vunpack.c.l.b16 %v2487
        %v2895 = vunpack.c.h.b16 %v2487
        %v2896 = vunpack.c.l.b16 %v2488
        %v2897 = vunpack.c.h.b16 %v2488
        %v2898 = vunpack.c.l.b16 %v2489
        %v2899 = vunpack.c.h.b16 %v2489
        %v2900 = vunpack.c.l.b16 %v2490
        %v2901 = vunpack.c.h.b16 %v2490
        %v2902 = vunpack.c.l.b16 %v2491
        %v2903 = vunpack.c.h.b16 %v2491
        %v2904 = vunpack.c.l.b16 %v2492
        %v2905 = vunpack.c.h.b16 %v2492
        %v2906 = vunpack.c.l.b16 %v2493
        %v2907 = vunpack.c.h.b16 %v2493
        %v2908 = vunpack.c.l.b16 %v2494
        %v2909 = vunpack.c.h.b16 %v2494
        %v2910 = vunpack.c.l.b16 %v2495
        %v2911 = vunpack.c.h.b16 %v2495
        %v2912 = vunpack.c.l.b16 %v2496
        %v2913 = vunpack.c.h.b16 %v2496
        %v2914 = vunpack.c.l.b16 %v2497
        %v2915 = vunpack.c.h.b16 %v2497
        %v2916 = vunpack.c.l.b16 %v2498
        %v2917 = vunpack.c.h.b16 %v2498
        %v2918 = vunpack.c.l.b16 %v2499
        %v2919 = vunpack.c.h.b16 %v2499
        %v2920 = vunpack.c.l.b16 %v2500
        %v2921 = vunpack.c.h.b16 %v2500
        %v2922 = vunpack.c.l.b16 %v2501
        %v2923 = vunpack.c.h.b16 %v2501
        %v2924 = vunpack.c.l.b16 %v2502
        %v2925 = vunpack.c.h.b16 %v2502
        %v2926 = vunpack.c.l.b16 %v2503
        %v2927 = vunpack.c.h.b16 %v2503
        %v2928 = vunpack.c.l.b16 %v2504
        %v2929 = vunpack.c.h.b16 %v2504
        %v2930 = vunpack.c.l.b16 %v2505
        %v2931 = vunpack.c.h.b16 %v2505
        %v2932 = vpack.c.b16 %v2684, %v2676
        %v2933 = vpack.c.b16 %v2685, %v2677
        %v2934 = vpack.c.b16 %v2686, %v2678
        %v2935 = vpack.c.b16 %v2687, %v2679
        %v2936 = vpack.c.b16 %v2688, %v2680
        %v2937 = vpack.c.b16 %v2689, %v2681
        %v2938 = vpack.c.b16 %v2690, %v2682
        %v2939 = vpack.c.b16 %v2691, %v2683
        %v2940 = vpack.c.b16 %v2700, %v2692
        %v2941 = vpack.c.b16 %v2701, %v2693
        %v2942 = vpack.c.b16 %v2702, %v2694
        %v2943 = vpack.c.b16 %v2703, %v2695
        %v2944 = vpack.c.b16 %v2704, %v2696
        %v2945 = vpack.c.b16 %v2705, %v2697
        %v2946 = vpack.c.b16 %v2706, %v2698
        %v2947 = vpack.c.b16 %v2707, %v2699
        %v2948 = vpack.c.b16 %v2716, %v2708
        %v2949 = vpack.c.b16 %v2717, %v2709
        %v2950 = vpack.c.b16 %v2718, %v2710
        %v2951 = vpack.c.b16 %v2719, %v2711
        %v2952 = vpack.c.b16 %v2720, %v2712
        %v2953 = vpack.c.b16 %v2721, %v2713
        %v2954 = vpack.c.b16 %v2722, %v2714
        %v2955 = vpack.c.b16 %v2723, %v2715
        %v2956 = vpack.c.b16 %v2732, %v2724
        %v2957 = vpack.c.b16 %v2733, %v2725
        %v2958 = vpack.c.b16 %v2734, %v2726
        %v2959 = vpack.c.b16 %v2735, %v2727
        %v2960 = vpack.c.b16 %v2736, %v2728
        %v2961 = vpack.c.b16 %v2737, %v2729
        %v2962 = vpack.c.b16 %v2738, %v2730
        %v2963 = vpack.c.b16 %v2739, %v2731
        %v2964 = vpack.c.b16 %v2748, %v2740
        %v2965 = vpack.c.b16 %v2749, %v2741
        %v2966 = vpack.c.b16 %v2750, %v2742
        %v2967 = vpack.c.b16 %v2751, %v2743
        %v2968 = vpack.c.b16 %v2752, %v2744
        %v2969 = vpack.c.b16 %v2753, %v2745
        %v2970 = vpack.c.b16 %v2754, %v2746
        %v2971 = vpack.c.b16 %v2755, %v2747
        %v2972 = vpack.c.b16 %v2764, %v2756
        %v2973 = vpack.c.b16 %v2765, %v2757
        %v2974 = vpack.c.b16 %v2766, %v2758
        %v2975 = vpack.c.b16 %v2767, %v2759
        %v2976 = vpack.c.b16 %v2768, %v2760
        %v2977 = vpack.c.b16 %v2769, %v2761
        %v2978 = vpack.c.b16 %v2770, %v2762
        %v2979 = vpack.c.b16 %v2771, %v2763
        %v2980 = vpack.c.b16 %v2780, %v2772
        %v2981 = vpack.c.b16 %v2781, %v2773
        %v2982 = vpack.c.b16 %v2782, %v2774
        %v2983 = vpack.c.b16 %v2783, %v2775
        %v2984 = vpack.c.b16 %v2784, %v2776
        %v2985 = vpack.c.b16 %v2785, %v2777
        %v2986 = vpack.c.b16 %v2786, %v2778
        %v2987 = vpack.c.b16 %v2787, %v2779
        %v2988 = vpack.c.b16 %v2796, %v2788
        %v2989 = vpack.c.b16 %v2797, %v2789
        %v2990 = vpack.c.b16 %v2798, %v2790
        %v2991 = vpack.c.b16 %v2799, %v2791
        %v2992 = vpack.c.b16 %v2800, %v2792
        %v2993 = vpack.c.b16 %v2801, %v2793
        %v2994 = vpack.c.b16 %v2802, %v2794
        %v2995 = vpack.c.b16 %v2803, %v2795
        %v2996 = vpack.c.b16 %v2812, %v2804
        %v2997 = vpack.c.b16 %v2813, %v2805
        %v2998 = vpack.c.b16 %v2814, %v2806
        %v2999 = vpack.c.b16 %v2815, %v2807
        %v3000 = vpack.c.b16 %v2816, %v2808
        %v3001 = vpack.c.b16 %v2817, %v2809
        %v3002 = vpack.c.b16 %v2818, %v2810
        %v3003 = vpack.c.b16 %v2819, %v2811
        %v3004 = vpack.c.b16 %v2828, %v2820
        %v3005 = vpack.c.b16 %v2829, %v2821
        %v3006 = vpack.c.b16 %v2830, %v2822
        %v3007 = vpack.c.b16 %v2831, %v2823
        %v3008 = vpack.c.b16 %v2832, %v2824
        %v3009 = vpack.c.b16 %v2833, %v2825
        %v3010 = vpack.c.b16 %v2834, %v2826
        %v3011 = vpack.c.b16 %v2835, %v2827
        %v3012 = vpack.c.b16 %v2844, %v2836
        %v3013 = vpack.c.b16 %v2845, %v2837
        %v3014 = vpack.c.b16 %v2846, %v2838
        %v3015 = vpack.c.b16 %v2847, %v2839
        %v3016 = vpack.c.b16 %v2848, %v2840
        %v3017 = vpack.c.b16 %v2849, %v2841
        %v3018 = vpack.c.b16 %v2850, %v2842
        %v3019 = vpack.c.b16 %v2851, %v2843
        %v3020 = vpack.c.b16 %v2860, %v2852
        %v3021 = vpack.c.b16 %v2861, %v2853
        %v3022 = vpack.c.b16 %v2862, %v2854
        %v3023 = vpack.c.b16 %v2863, %v2855
        %v3024 = vpack.c.b16 %v2864, %v2856
        %v3025 = vpack.c.b16 %v2865, %v2857
        %v3026 = vpack.c.b16 %v2866, %v2858
        %v3027 = vpack.c.b16 %v2867, %v2859
        %v3028 = vpack.c.b16 %v2876, %v2868
        %v3029 = vpack.c.b16 %v2877, %v2869
        %v3030 = vpack.c.b16 %v2878, %v2870
        %v3031 = vpack.c.b16 %v2879, %v2871
        %v3032 = vpack.c.b16 %v2880, %v2872
        %v3033 = vpack.c.b16 %v2881, %v2873
        %v3034 = vpack.c.b16 %v2882, %v2874
        %v3035 = vpack.c.b16 %v2883, %v2875
        %v3036 = vpack.c.b16 %v2892, %v2884
        %v3037 = vpack.c.b16 %v2893, %v2885
        %v3038 = vpack.c.b16 %v2894, %v2886
        %v3039 = vpack.c.b16 %v2895, %v2887
        %v3040 = vpack.c.b16 %v2896, %v2888
        %v3041 = vpack.c.b16 %v2897, %v2889
        %v3042 = vpack.c.b16 %v2898, %v2890
        %v3043 = vpack.c.b16 %v2899, %v2891
        %v3044 = vpack.c.b16 %v2908, %v2900
        %v3045 = vpack.c.b16 %v2909, %v2901
        %v3046 = vpack.c.b16 %v2910, %v2902
        %v3047 = vpack.c.b16 %v2911, %v2903
        %v3048 = vpack.c.b16 %v2912, %v2904
        %v3049 = vpack.c.b16 %v2913, %v2905
        %v3050 = vpack.c.b16 %v2914, %v2906
        %v3051 = vpack.c.b16 %v2915, %v2907
        %v3052 = vpack.c.b16 %v2924, %v2916
        %v3053 = vpack.c.b16 %v2925, %v2917
        %v3054 = vpack.c.b16 %v2926, %v2918
        %v3055 = vpack.c.b16 %v2927, %v2919
        %v3056 = vpack.c.b16 %v2928, %v2920
        %v3057 = vpack.c.b16 %v2929, %v2921
        %v3058 = vpack.c.b16 %v2930, %v2922
        %v3059 = vpack.c.b16 %v2931, %v2923
        %3188 = vmatprep.subr.bf16.mxu0 %v2933
        %3189 = vmatpush1.bf16.msra.mxu0 %v2932
        %3190 = vmatprep.subr.bf16.mxu0 %v2941
        %3191 = vmatpush1.bf16.msra.mxu0 %v2940
        %3192 = vmatprep.subr.bf16.mxu0 %v2949
        %3193 = vmatpush1.bf16.msra.mxu0 %v2948
        %3194 = vmatprep.subr.bf16.mxu0 %v2957
        %3195 = vmatpush1.bf16.msra.mxu0 %v2956
        %3196 = vmatprep.subr.bf16.mxu0 %v2965
        %3197 = vmatpush1.bf16.msra.mxu0 %v2964
        %3198 = vmatprep.subr.bf16.mxu0 %v2973
        %3199 = vmatpush1.bf16.msra.mxu0 %v2972
        %3200 = vmatprep.subr.bf16.mxu0 %v2981
        %3201 = vmatpush1.bf16.msra.mxu0 %v2980
        %3202 = vmatprep.subr.bf16.mxu0 %v2989
        %3203 = vmatpush1.bf16.msra.mxu0 %v2988
        %3204 = vmatprep.subr.bf16.mxu0 %v2997
        %3205 = vmatpush1.bf16.msra.mxu0 %v2996
        %3206 = vmatprep.subr.bf16.mxu0 %v3005
        %3207 = vmatpush1.bf16.msra.mxu0 %v3004
        %3208 = vmatprep.subr.bf16.mxu0 %v3013
        %3209 = vmatpush1.bf16.msra.mxu0 %v3012
        %3210 = vmatprep.subr.bf16.mxu0 %v3021
        %3211 = vmatpush1.bf16.msra.mxu0 %v3020
        %3212 = vmatprep.subr.bf16.mxu0 %v3029
        %3213 = vmatpush1.bf16.msra.mxu0 %v3028
        %3214 = vmatprep.subr.bf16.mxu0 %v3037
        %3215 = vmatpush1.bf16.msra.mxu0 %v3036
        %3216 = vmatprep.subr.bf16.mxu0 %v3045
        %3217 = vmatpush1.bf16.msra.mxu0 %v3044
        %3218 = vmatprep.subr.bf16.mxu0 %v3053
        %3219 = vmatpush1.bf16.msra.mxu0 %v3052
        %3220 = vmatprep.mubr.bf16.mxu0 %v2377
        %3221 = vmatmul.mubr.bf16.gmra.mrb[0].mxu0 %v2376
        %v3222 = vpop.f32.mrb[0].mxu0
        %v3223 = vadd.f32 %v2511, %v3222
        %v3224 = vpop.f32.mrb[0].mxu0
        %v3225 = vadd.f32 %v2515, %v3224
        %v3226 = vpop.f32.mrb[0].mxu0
        %v3227 = vpop.f32.mrb[0].mxu0
        %3228 = vdwg.mxu0
        %3229 = vmatprep.subr.bf16.mxu0 %v2935
        %3230 = vmatpush1.bf16.msra.mxu0 %v2934
        %3231 = vmatprep.subr.bf16.mxu0 %v2943
        %3232 = vmatpush1.bf16.msra.mxu0 %v2942
        %3233 = vmatprep.subr.bf16.mxu0 %v2951
        %3234 = vmatpush1.bf16.msra.mxu0 %v2950
        %3235 = vmatprep.subr.bf16.mxu0 %v2959
        %3236 = vmatpush1.bf16.msra.mxu0 %v2958
        %3237 = vmatprep.subr.bf16.mxu0 %v2967
        %3238 = vmatpush1.bf16.msra.mxu0 %v2966
        %3239 = vmatprep.subr.bf16.mxu0 %v2975
        %3240 = vmatpush1.bf16.msra.mxu0 %v2974
        %3241 = vmatprep.subr.bf16.mxu0 %v2983
        %3242 = vmatpush1.bf16.msra.mxu0 %v2982
        %3243 = vmatprep.subr.bf16.mxu0 %v2991
        %3244 = vmatpush1.bf16.msra.mxu0 %v2990
        %3245 = vmatprep.subr.bf16.mxu0 %v2999
        %3246 = vmatpush1.bf16.msra.mxu0 %v2998
        %3247 = vmatprep.subr.bf16.mxu0 %v3007
        %3248 = vmatpush1.bf16.msra.mxu0 %v3006
        %3249 = vmatprep.subr.bf16.mxu0 %v3015
        %3250 = vmatpush1.bf16.msra.mxu0 %v3014
        %3251 = vmatprep.subr.bf16.mxu0 %v3023
        %3252 = vmatpush1.bf16.msra.mxu0 %v3022
        %3253 = vmatprep.subr.bf16.mxu0 %v3031
        %3254 = vmatpush1.bf16.msra.mxu0 %v3030
        %3255 = vmatprep.subr.bf16.mxu0 %v3039
        %3256 = vmatpush1.bf16.msra.mxu0 %v3038
        %3257 = vmatprep.subr.bf16.mxu0 %v3047
        %3258 = vmatpush1.bf16.msra.mxu0 %v3046
        %3259 = vmatprep.subr.bf16.mxu0 %v3055
        %3260 = vmatpush1.bf16.msra.mxu0 %v3054
        %3261 = vmatprep.mubr.bf16.mxu0 %v2377
        %3262 = vmatmul.mubr.bf16.gmra.mrb[0].mxu0 %v2376
        %v3263 = vpop.f32.mrb[0].mxu0
        %v3264 = vadd.f32 %v2519, %v3263
        %v3265 = vpop.f32.mrb[0].mxu0
        %v3266 = vadd.f32 %v2523, %v3265
        %v3267 = vpop.f32.mrb[0].mxu0
        %v3268 = vpop.f32.mrb[0].mxu0
        %3269 = vdwg.mxu0
        %3270 = vmatprep.subr.bf16.mxu0 %v2937
        %3271 = vmatpush1.bf16.msra.mxu0 %v2936
        %3272 = vmatprep.subr.bf16.mxu0 %v2945
        %3273 = vmatpush1.bf16.msra.mxu0 %v2944
        %3274 = vmatprep.subr.bf16.mxu0 %v2953
        %3275 = vmatpush1.bf16.msra.mxu0 %v2952
        %3276 = vmatprep.subr.bf16.mxu0 %v2961
        %3277 = vmatpush1.bf16.msra.mxu0 %v2960
        %3278 = vmatprep.subr.bf16.mxu0 %v2969
        %3279 = vmatpush1.bf16.msra.mxu0 %v2968
        %3280 = vmatprep.subr.bf16.mxu0 %v2977
        %3281 = vmatpush1.bf16.msra.mxu0 %v2976
        %3282 = vmatprep.subr.bf16.mxu0 %v2985
        %3283 = vmatpush1.bf16.msra.mxu0 %v2984
        %3284 = vmatprep.subr.bf16.mxu0 %v2993
        %3285 = vmatpush1.bf16.msra.mxu0 %v2992
        %3286 = vmatprep.subr.bf16.mxu0 %v3001
        %3287 = vmatpush1.bf16.msra.mxu0 %v3000
        %3288 = vmatprep.subr.bf16.mxu0 %v3009
        %3289 = vmatpush1.bf16.msra.mxu0 %v3008
        %3290 = vmatprep.subr.bf16.mxu0 %v3017
        %3291 = vmatpush1.bf16.msra.mxu0 %v3016
        %3292 = vmatprep.subr.bf16.mxu0 %v3025
        %3293 = vmatpush1.bf16.msra.mxu0 %v3024
        %3294 = vmatprep.subr.bf16.mxu0 %v3033
        %3295 = vmatpush1.bf16.msra.mxu0 %v3032
        %3296 = vmatprep.subr.bf16.mxu0 %v3041
        %3297 = vmatpush1.bf16.msra.mxu0 %v3040
        %3298 = vmatprep.subr.bf16.mxu0 %v3049
        %3299 = vmatpush1.bf16.msra.mxu0 %v3048
        %3300 = vmatprep.subr.bf16.mxu0 %v3057
        %3301 = vmatpush1.bf16.msra.mxu0 %v3056
        %3302 = vmatprep.mubr.bf16.mxu0 %v2377
        %3303 = vmatmul.mubr.bf16.gmra.mrb[0].mxu0 %v2376
        %v3304 = vpop.f32.mrb[0].mxu0
        %v3305 = vadd.f32 %v2527, %v3304
        %v3306 = vpop.f32.mrb[0].mxu0
        %v3307 = vadd.f32 %v2531, %v3306
        %v3308 = vpop.f32.mrb[0].mxu0
        %v3309 = vpop.f32.mrb[0].mxu0
        %3310 = vdwg.mxu0
        %3311 = vmatprep.subr.bf16.mxu0 %v2939
        %3312 = vmatpush1.bf16.msra.mxu0 %v2938
        %3313 = vmatprep.subr.bf16.mxu0 %v2947
        %3314 = vmatpush1.bf16.msra.mxu0 %v2946
        %3315 = vmatprep.subr.bf16.mxu0 %v2955
        %3316 = vmatpush1.bf16.msra.mxu0 %v2954
        %3317 = vmatprep.subr.bf16.mxu0 %v2963
        %3318 = vmatpush1.bf16.msra.mxu0 %v2962
        %3319 = vmatprep.subr.bf16.mxu0 %v2971
        %3320 = vmatpush1.bf16.msra.mxu0 %v2970
        %3321 = vmatprep.subr.bf16.mxu0 %v2979
        %3322 = vmatpush1.bf16.msra.mxu0 %v2978
        %3323 = vmatprep.subr.bf16.mxu0 %v2987
        %3324 = vmatpush1.bf16.msra.mxu0 %v2986
        %3325 = vmatprep.subr.bf16.mxu0 %v2995
        %3326 = vmatpush1.bf16.msra.mxu0 %v2994
        %3327 = vmatprep.subr.bf16.mxu0 %v3003
        %3328 = vmatpush1.bf16.msra.mxu0 %v3002
        %3329 = vmatprep.subr.bf16.mxu0 %v3011
        %3330 = vmatpush1.bf16.msra.mxu0 %v3010
        %3331 = vmatprep.subr.bf16.mxu0 %v3019
        %3332 = vmatpush1.bf16.msra.mxu0 %v3018
        %3333 = vmatprep.subr.bf16.mxu0 %v3027
        %3334 = vmatpush1.bf16.msra.mxu0 %v3026
        %3335 = vmatprep.subr.bf16.mxu0 %v3035
        %3336 = vmatpush1.bf16.msra.mxu0 %v3034
        %3337 = vmatprep.subr.bf16.mxu0 %v3043
        %3338 = vmatpush1.bf16.msra.mxu0 %v3042
        %3339 = vmatprep.subr.bf16.mxu0 %v3051
        %3340 = vmatpush1.bf16.msra.mxu0 %v3050
        %3341 = vmatprep.subr.bf16.mxu0 %v3059
        %3342 = vmatpush1.bf16.msra.mxu0 %v3058
        %3343 = vmatprep.mubr.bf16.mxu0 %v2377
        %3344 = vmatmul.mubr.bf16.gmra.mrb[0].mxu0 %v2376
        %v3345 = vpop.f32.mrb[0].mxu0
        %v3346 = vadd.f32 %v2535, %v3345
        %v3347 = vpop.f32.mrb[0].mxu0
        %v3348 = vadd.f32 %v2539, %v3347
        %v3349 = vpop.f32.mrb[0].mxu0
        %v3350 = vpop.f32.mrb[0].mxu0
        %3351 = vdwg.mxu0
        %v3352 = vmul.f32 %v3223, %v3223
        %v3353 = vmul.f32 %v3225, %v3225
        %v3354 = vmul.f32 %v3264, %v3264
        %v3355 = vmul.f32 %v3266, %v3266
        %v3356 = vmul.f32 %v3305, %v3305
        %v3357 = vmul.f32 %v3307, %v3307
        %v3358 = vmul.f32 %v3346, %v3346
        %v3359 = vmul.f32 %v3348, %v3348
        %v3360 = vmul.f32 %v3223, %v3352
        %v3361 = vmul.f32 %v3225, %v3353
        %v3362 = vmul.f32 %v3264, %v3354
        %v3363 = vmul.f32 %v3266, %v3355
        %v3364 = vmul.f32 %v3305, %v3356
        %v3365 = vmul.f32 %v3307, %v3357
        %v3366 = vmul.f32 %v3346, %v3358
        %v3367 = vmul.f32 %v3348, %v3359
        %v3368 = vmul.f32 %v3360, 0.044715
        %v3369 = vmul.f32 %v3361, 0.044715
        %v3370 = vmul.f32 %v3362, 0.044715
        %v3371 = vmul.f32 %v3363, 0.044715
        %v3372 = vmul.f32 %v3364, 0.044715
        %v3373 = vmul.f32 %v3365, 0.044715
        %v3374 = vmul.f32 %v3366, 0.044715
        %v3375 = vmul.f32 %v3367, 0.044715
        %v3376 = vadd.f32 %v3223, %v3368
        %v3377 = vadd.f32 %v3225, %v3369
        %v3378 = vadd.f32 %v3264, %v3370
        %v3379 = vadd.f32 %v3266, %v3371
        %v3380 = vadd.f32 %v3305, %v3372
        %v3381 = vadd.f32 %v3307, %v3373
        %v3382 = vadd.f32 %v3346, %v3374
        %v3383 = vadd.f32 %v3348, %v3375
        %v3384 = vmul.f32 %v3376, 0.7978846
        %v3385 = vmul.f32 %v3377, 0.7978846
        %v3386 = vmul.f32 %v3378, 0.7978846
        %v3387 = vmul.f32 %v3379, 0.7978846
        %v3388 = vmul.f32 %v3380, 0.7978846
        %v3389 = vmul.f32 %v3381, 0.7978846
        %v3390 = vmul.f32 %v3382, 0.7978846
        %v3391 = vmul.f32 %v3383, 0.7978846
        %v3392 = vtanh.pop %v3384
        %v3393 = vtanh.pop %v3385
        %v3394 = vtanh.pop %v3386
        %v3395 = vtanh.pop %v3387
        %v3396 = vtanh.pop %v3388
        %v3397 = vtanh.pop %v3389
        %v3398 = vtanh.pop %v3390
        %v3399 = vtanh.pop %v3391
        %v3400 = vadd.f32 %v3392, 1.0
        %v3401 = vadd.f32 %v3393, 1.0
        %v3402 = vadd.f32 %v3394, 1.0
        %v3403 = vadd.f32 %v3395, 1.0
        %v3404 = vadd.f32 %v3396, 1.0
        %v3405 = vadd.f32 %v3397, 1.0
        %v3406 = vadd.f32 %v3398, 1.0
        %v3407 = vadd.f32 %v3399, 1.0
        %v3408 = vmul.f32 %v3400, 0.5
        %v3409 = vmul.f32 %v3401, 0.5
        %v3410 = vmul.f32 %v3402, 0.5
        %v3411 = vmul.f32 %v3403, 0.5
        %v3412 = vmul.f32 %v3404, 0.5
        %v3413 = vmul.f32 %v3405, 0.5
        %v3414 = vmul.f32 %v3406, 0.5
        %v3415 = vmul.f32 %v3407, 0.5
        %v3416 = vmul.f32 %v3223, %v3408
        %v3417 = vmul.f32 %v3225, %v3409
        %v3418 = vmul.f32 %v3264, %v3410
        %v3419 = vmul.f32 %v3266, %v3411
        %v3420 = vmul.f32 %v3305, %v3412
        %v3421 = vmul.f32 %v3307, %v3413
        %v3422 = vmul.f32 %v3346, %v3414
        %v3423 = vmul.f32 %v3348, %v3415
        %v3424 = vpack.c.bf16 %v3416, %v3416
        %v3425 = vpack.c.bf16 %v3417, %v3417
        %v3426 = vpack.c.bf16 %v3418, %v3418
        %v3427 = vpack.c.bf16 %v3419, %v3419
        %v3428 = vpack.c.bf16 %v3420, %v3420
        %v3429 = vpack.c.bf16 %v3421, %v3421
        %v3430 = vpack.c.bf16 %v3422, %v3422
        %v3431 = vpack.c.bf16 %v3423, %v3423
        %v3432 = vld [vmem:[%s706] sm:$0xff]
        %v3433 = vld [vmem:[%s706 + $0x8] sm:$0xff]
        %v3434 = vld [vmem:[%s706 + $0x10] sm:$0xff]
        %v3435 = vld [vmem:[%s706 + $0x18] sm:$0xff]
        %v3436 = vld [vmem:[%s706 + $0x20] sm:$0xff]
        %v3437 = vld [vmem:[%s706 + $0x28] sm:$0xff]
        %v3438 = vld [vmem:[%s706 + $0x30] sm:$0xff]
        %v3439 = vld [vmem:[%s706 + $0x38] sm:$0xff]
        %v3440 = vld [vmem:[%s706 + $0x40] sm:$0xff]
        %v3441 = vld [vmem:[%s706 + $0x48] sm:$0xff]
        %v3442 = vld [vmem:[%s706 + $0x50] sm:$0xff]
        %v3443 = vld [vmem:[%s706 + $0x58] sm:$0xff]
        %v3444 = vld [vmem:[%s706 + $0x60] sm:$0xff]
        %v3445 = vld [vmem:[%s706 + $0x68] sm:$0xff]
        %v3446 = vld [vmem:[%s706 + $0x70] sm:$0xff]
        %v3447 = vld [vmem:[%s706 + $0x78] sm:$0xff]
        %v3448 = vld [vmem:[%s706 + $0x80] sm:$0xff]
        %v3449 = vld [vmem:[%s706 + $0x88] sm:$0xff]
        %v3450 = vld [vmem:[%s706 + $0x90] sm:$0xff]
        %v3451 = vld [vmem:[%s706 + $0x98] sm:$0xff]
        %v3452 = vld [vmem:[%s706 + $0xa0] sm:$0xff]
        %v3453 = vld [vmem:[%s706 + $0xa8] sm:$0xff]
        %v3454 = vld [vmem:[%s706 + $0xb0] sm:$0xff]
        %v3455 = vld [vmem:[%s706 + $0xb8] sm:$0xff]
        %v3456 = vld [vmem:[%s706 + $0xc0] sm:$0xff]
        %v3457 = vld [vmem:[%s706 + $0xc8] sm:$0xff]
        %v3458 = vld [vmem:[%s706 + $0xd0] sm:$0xff]
        %v3459 = vld [vmem:[%s706 + $0xd8] sm:$0xff]
        %v3460 = vld [vmem:[%s706 + $0xe0] sm:$0xff]
        %v3461 = vld [vmem:[%s706 + $0xe8] sm:$0xff]
        %v3462 = vld [vmem:[%s706 + $0xf0] sm:$0xff]
        %v3463 = vld [vmem:[%s706 + $0xf8] sm:$0xff]
        %v3464 = vld [vmem:[%s706 + $0x100] sm:$0xff]
        %v3465 = vld [vmem:[%s706 + $0x108] sm:$0xff]
        %v3466 = vld [vmem:[%s706 + $0x110] sm:$0xff]
        %v3467 = vld [vmem:[%s706 + $0x118] sm:$0xff]
        %v3468 = vld [vmem:[%s706 + $0x120] sm:$0xff]
        %v3469 = vld [vmem:[%s706 + $0x128] sm:$0xff]
        %v3470 = vld [vmem:[%s706 + $0x130] sm:$0xff]
        %v3471 = vld [vmem:[%s706 + $0x138] sm:$0xff]
        %v3472 = vld [vmem:[%s706 + $0x140] sm:$0xff]
        %v3473 = vld [vmem:[%s706 + $0x148] sm:$0xff]
        %v3474 = vld [vmem:[%s706 + $0x150] sm:$0xff]
        %v3475 = vld [vmem:[%s706 + $0x158] sm:$0xff]
        %v3476 = vld [vmem:[%s706 + $0x160] sm:$0xff]
        %v3477 = vld [vmem:[%s706 + $0x168] sm:$0xff]
        %v3478 = vld [vmem:[%s706 + $0x170] sm:$0xff]
        %v3479 = vld [vmem:[%s706 + $0x178] sm:$0xff]
        %v3480 = vld [vmem:[%s706 + $0x180] sm:$0xff]
        %v3481 = vld [vmem:[%s706 + $0x188] sm:$0xff]
        %v3482 = vld [vmem:[%s706 + $0x190] sm:$0xff]
        %v3483 = vld [vmem:[%s706 + $0x198] sm:$0xff]
        %v3484 = vld [vmem:[%s706 + $0x1a0] sm:$0xff]
        %v3485 = vld [vmem:[%s706 + $0x1a8] sm:$0xff]
        %v3486 = vld [vmem:[%s706 + $0x1b0] sm:$0xff]
        %v3487 = vld [vmem:[%s706 + $0x1b8] sm:$0xff]
        %v3488 = vld [vmem:[%s706 + $0x1c0] sm:$0xff]
        %v3489 = vld [vmem:[%s706 + $0x1c8] sm:$0xff]
        %v3490 = vld [vmem:[%s706 + $0x1d0] sm:$0xff]
        %v3491 = vld [vmem:[%s706 + $0x1d8] sm:$0xff]
        %v3492 = vld [vmem:[%s706 + $0x1e0] sm:$0xff]
        %v3493 = vld [vmem:[%s706 + $0x1e8] sm:$0xff]
        %v3494 = vld [vmem:[%s706 + $0x1f0] sm:$0xff]
        %v3495 = vld [vmem:[%s706 + $0x1f8] sm:$0xff]
        %v3496 = vld [vmem:[%s706 + $0x200] sm:$0xff]
        %v3497 = vld [vmem:[%s706 + $0x208] sm:$0xff]
        %v3498 = vld [vmem:[%s706 + $0x210] sm:$0xff]
        %v3499 = vld [vmem:[%s706 + $0x218] sm:$0xff]
        %v3500 = vld [vmem:[%s706 + $0x220] sm:$0xff]
        %v3501 = vld [vmem:[%s706 + $0x228] sm:$0xff]
        %v3502 = vld [vmem:[%s706 + $0x230] sm:$0xff]
        %v3503 = vld [vmem:[%s706 + $0x238] sm:$0xff]
        %v3504 = vld [vmem:[%s706 + $0x240] sm:$0xff]
        %v3505 = vld [vmem:[%s706 + $0x248] sm:$0xff]
        %v3506 = vld [vmem:[%s706 + $0x250] sm:$0xff]
        %v3507 = vld [vmem:[%s706 + $0x258] sm:$0xff]
        %v3508 = vld [vmem:[%s706 + $0x260] sm:$0xff]
        %v3509 = vld [vmem:[%s706 + $0x268] sm:$0xff]
        %v3510 = vld [vmem:[%s706 + $0x270] sm:$0xff]
        %v3511 = vld [vmem:[%s706 + $0x278] sm:$0xff]
        %v3512 = vld [vmem:[%s706 + $0x280] sm:$0xff]
        %v3513 = vld [vmem:[%s706 + $0x288] sm:$0xff]
        %v3514 = vld [vmem:[%s706 + $0x290] sm:$0xff]
        %v3515 = vld [vmem:[%s706 + $0x298] sm:$0xff]
        %v3516 = vld [vmem:[%s706 + $0x2a0] sm:$0xff]
        %v3517 = vld [vmem:[%s706 + $0x2a8] sm:$0xff]
        %v3518 = vld [vmem:[%s706 + $0x2b0] sm:$0xff]
        %v3519 = vld [vmem:[%s706 + $0x2b8] sm:$0xff]
        %v3520 = vld [vmem:[%s706 + $0x2c0] sm:$0xff]
        %v3521 = vld [vmem:[%s706 + $0x2c8] sm:$0xff]
        %v3522 = vld [vmem:[%s706 + $0x2d0] sm:$0xff]
        %v3523 = vld [vmem:[%s706 + $0x2d8] sm:$0xff]
        %v3524 = vld [vmem:[%s706 + $0x2e0] sm:$0xff]
        %v3525 = vld [vmem:[%s706 + $0x2e8] sm:$0xff]
        %v3526 = vld [vmem:[%s706 + $0x2f0] sm:$0xff]
        %v3527 = vld [vmem:[%s706 + $0x2f8] sm:$0xff]
        %v3528 = vld [vmem:[%s706 + $0x300] sm:$0xff]
        %v3529 = vld [vmem:[%s706 + $0x308] sm:$0xff]
        %v3530 = vld [vmem:[%s706 + $0x310] sm:$0xff]
        %v3531 = vld [vmem:[%s706 + $0x318] sm:$0xff]
        %v3532 = vld [vmem:[%s706 + $0x320] sm:$0xff]
        %v3533 = vld [vmem:[%s706 + $0x328] sm:$0xff]
        %v3534 = vld [vmem:[%s706 + $0x330] sm:$0xff]
        %v3535 = vld [vmem:[%s706 + $0x338] sm:$0xff]
        %v3536 = vld [vmem:[%s706 + $0x340] sm:$0xff]
        %v3537 = vld [vmem:[%s706 + $0x348] sm:$0xff]
        %v3538 = vld [vmem:[%s706 + $0x350] sm:$0xff]
        %v3539 = vld [vmem:[%s706 + $0x358] sm:$0xff]
        %v3540 = vld [vmem:[%s706 + $0x360] sm:$0xff]
        %v3541 = vld [vmem:[%s706 + $0x368] sm:$0xff]
        %v3542 = vld [vmem:[%s706 + $0x370] sm:$0xff]
        %v3543 = vld [vmem:[%s706 + $0x378] sm:$0xff]
        %v3544 = vld [vmem:[%s706 + $0x380] sm:$0xff]
        %v3545 = vld [vmem:[%s706 + $0x388] sm:$0xff]
        %v3546 = vld [vmem:[%s706 + $0x390] sm:$0xff]
        %v3547 = vld [vmem:[%s706 + $0x398] sm:$0xff]
        %v3548 = vld [vmem:[%s706 + $0x3a0] sm:$0xff]
        %v3549 = vld [vmem:[%s706 + $0x3a8] sm:$0xff]
        %v3550 = vld [vmem:[%s706 + $0x3b0] sm:$0xff]
        %v3551 = vld [vmem:[%s706 + $0x3b8] sm:$0xff]
        %v3552 = vld [vmem:[%s706 + $0x3c0] sm:$0xff]
        %v3553 = vld [vmem:[%s706 + $0x3c8] sm:$0xff]
        %v3554 = vld [vmem:[%s706 + $0x3d0] sm:$0xff]
        %v3555 = vld [vmem:[%s706 + $0x3d8] sm:$0xff]
        %v3556 = vld [vmem:[%s706 + $0x3e0] sm:$0xff]
        %v3557 = vld [vmem:[%s706 + $0x3e8] sm:$0xff]
        %v3558 = vld [vmem:[%s706 + $0x3f0] sm:$0xff]
        %v3559 = vld [vmem:[%s706 + $0x3f8] sm:$0xff]
        %v3560 = vld [vmem:[%s839] sm:$0x3]
        %v3562 = vlaneseq
        %v3563 = vshrl.u32 %v3562, 7
        %v3564 = vsub.s32 0, %v3563
        %v3565 = vrot.slane %v3560, %v3564
        %v3566 = vlaneseq
        %v3567 = vshrl.u32 %v3566, 7
        %v3568 = vsub.s32 1, %v3567
        %v3569 = vrot.slane %v3560, %v3568
        %v3700 = vunpack.c.l.b16 %v3432
        %v3701 = vunpack.c.h.b16 %v3432
        %v3702 = vunpack.c.l.b16 %v3433
        %v3703 = vunpack.c.h.b16 %v3433
        %v3704 = vunpack.c.l.b16 %v3434
        %v3705 = vunpack.c.h.b16 %v3434
        %v3706 = vunpack.c.l.b16 %v3435
        %v3707 = vunpack.c.h.b16 %v3435
        %v3708 = vunpack.c.l.b16 %v3436
        %v3709 = vunpack.c.h.b16 %v3436
        %v3710 = vunpack.c.l.b16 %v3437
        %v3711 = vunpack.c.h.b16 %v3437
        %v3712 = vunpack.c.l.b16 %v3438
        %v3713 = vunpack.c.h.b16 %v3438
        %v3714 = vunpack.c.l.b16 %v3439
        %v3715 = vunpack.c.h.b16 %v3439
        %v3716 = vunpack.c.l.b16 %v3440
        %v3717 = vunpack.c.h.b16 %v3440
        %v3718 = vunpack.c.l.b16 %v3441
        %v3719 = vunpack.c.h.b16 %v3441
        %v3720 = vunpack.c.l.b16 %v3442
        %v3721 = vunpack.c.h.b16 %v3442
        %v3722 = vunpack.c.l.b16 %v3443
        %v3723 = vunpack.c.h.b16 %v3443
        %v3724 = vunpack.c.l.b16 %v3444
        %v3725 = vunpack.c.h.b16 %v3444
        %v3726 = vunpack.c.l.b16 %v3445
        %v3727 = vunpack.c.h.b16 %v3445
        %v3728 = vunpack.c.l.b16 %v3446
        %v3729 = vunpack.c.h.b16 %v3446
        %v3730 = vunpack.c.l.b16 %v3447
        %v3731 = vunpack.c.h.b16 %v3447
        %v3732 = vunpack.c.l.b16 %v3448
        %v3733 = vunpack.c.h.b16 %v3448
        %v3734 = vunpack.c.l.b16 %v3449
        %v3735 = vunpack.c.h.b16 %v3449
        %v3736 = vunpack.c.l.b16 %v3450
        %v3737 = vunpack.c.h.b16 %v3450
        %v3738 = vunpack.c.l.b16 %v3451
        %v3739 = vunpack.c.h.b16 %v3451
        %v3740 = vunpack.c.l.b16 %v3452
        %v3741 = vunpack.c.h.b16 %v3452
        %v3742 = vunpack.c.l.b16 %v3453
        %v3743 = vunpack.c.h.b16 %v3453
        %v3744 = vunpack.c.l.b16 %v3454
        %v3745 = vunpack.c.h.b16 %v3454
        %v3746 = vunpack.c.l.b16 %v3455
        %v3747 = vunpack.c.h.b16 %v3455
        %v3748 = vunpack.c.l.b16 %v3456
        %v3749 = vunpack.c.h.b16 %v3456
        %v3750 = vunpack.c.l.b16 %v3457
        %v3751 = vunpack.c.h.b16 %v3457
        %v3752 = vunpack.c.l.b16 %v3458
        %v3753 = vunpack.c.h.b16 %v3458
        %v3754 = vunpack.c.l.b16 %v3459
        %v3755 = vunpack.c.h.b16 %v3459
        %v3756 = vunpack.c.l.b16 %v3460
        %v3757 = vunpack.c.h.b16 %v3460
        %v3758 = vunpack.c.l.b16 %v3461
        %v3759 = vunpack.c.h.b16 %v3461
        %v3760 = vunpack.c.l.b16 %v3462
        %v3761 = vunpack.c.h.b16 %v3462
        %v3762 = vunpack.c.l.b16 %v3463
        %v3763 = vunpack.c.h.b16 %v3463
        %v3764 = vunpack.c.l.b16 %v3464
        %v3765 = vunpack.c.h.b16 %v3464
        %v3766 = vunpack.c.l.b16 %v3465
        %v3767 = vunpack.c.h.b16 %v3465
        %v3768 = vunpack.c.l.b16 %v3466
        %v3769 = vunpack.c.h.b16 %v3466
        %v3770 = vunpack.c.l.b16 %v3467
        %v3771 = vunpack.c.h.b16 %v3467
        %v3772 = vunpack.c.l.b16 %v3468
        %v3773 = vunpack.c.h.b16 %v3468
        %v3774 = vunpack.c.l.b16 %v3469
        %v3775 = vunpack.c.h.b16 %v3469
        %v3776 = vunpack.c.l.b16 %v3470
        %v3777 = vunpack.c.h.b16 %v3470
        %v3778 = vunpack.c.l.b16 %v3471
        %v3779 = vunpack.c.h.b16 %v3471
        %v3780 = vunpack.c.l.b16 %v3472
        %v3781 = vunpack.c.h.b16 %v3472
        %v3782 = vunpack.c.l.b16 %v3473
        %v3783 = vunpack.c.h.b16 %v3473
        %v3784 = vunpack.c.l.b16 %v3474
        %v3785 = vunpack.c.h.b16 %v3474
        %v3786 = vunpack.c.l.b16 %v3475
        %v3787 = vunpack.c.h.b16 %v3475
        %v3788 = vunpack.c.l.b16 %v3476
        %v3789 = vunpack.c.h.b16 %v3476
        %v3790 = vunpack.c.l.b16 %v3477
        %v3791 = vunpack.c.h.b16 %v3477
        %v3792 = vunpack.c.l.b16 %v3478
        %v3793 = vunpack.c.h.b16 %v3478
        %v3794 = vunpack.c.l.b16 %v3479
        %v3795 = vunpack.c.h.b16 %v3479
        %v3796 = vunpack.c.l.b16 %v3480
        %v3797 = vunpack.c.h.b16 %v3480
        %v3798 = vunpack.c.l.b16 %v3481
        %v3799 = vunpack.c.h.b16 %v3481
        %v3800 = vunpack.c.l.b16 %v3482
        %v3801 = vunpack.c.h.b16 %v3482
        %v3802 = vunpack.c.l.b16 %v3483
        %v3803 = vunpack.c.h.b16 %v3483
        %v3804 = vunpack.c.l.b16 %v3484
        %v3805 = vunpack.c.h.b16 %v3484
        %v3806 = vunpack.c.l.b16 %v3485
        %v3807 = vunpack.c.h.b16 %v3485
        %v3808 = vunpack.c.l.b16 %v3486
        %v3809 = vunpack.c.h.b16 %v3486
        %v3810 = vunpack.c.l.b16 %v3487
        %v3811 = vunpack.c.h.b16 %v3487
        %v3812 = vunpack.c.l.b16 %v3488
        %v3813 = vunpack.c.h.b16 %v3488
        %v3814 = vunpack.c.l.b16 %v3489
        %v3815 = vunpack.c.h.b16 %v3489
        %v3816 = vunpack.c.l.b16 %v3490
        %v3817 = vunpack.c.h.b16 %v3490
        %v3818 = vunpack.c.l.b16 %v3491
        %v3819 = vunpack.c.h.b16 %v3491
        %v3820 = vunpack.c.l.b16 %v3492
        %v3821 = vunpack.c.h.b16 %v3492
        %v3822 = vunpack.c.l.b16 %v3493
        %v3823 = vunpack.c.h.b16 %v3493
        %v3824 = vunpack.c.l.b16 %v3494
        %v3825 = vunpack.c.h.b16 %v3494
        %v3826 = vunpack.c.l.b16 %v3495
        %v3827 = vunpack.c.h.b16 %v3495
        %v3828 = vunpack.c.l.b16 %v3496
        %v3829 = vunpack.c.h.b16 %v3496
        %v3830 = vunpack.c.l.b16 %v3497
        %v3831 = vunpack.c.h.b16 %v3497
        %v3832 = vunpack.c.l.b16 %v3498
        %v3833 = vunpack.c.h.b16 %v3498
        %v3834 = vunpack.c.l.b16 %v3499
        %v3835 = vunpack.c.h.b16 %v3499
        %v3836 = vunpack.c.l.b16 %v3500
        %v3837 = vunpack.c.h.b16 %v3500
        %v3838 = vunpack.c.l.b16 %v3501
        %v3839 = vunpack.c.h.b16 %v3501
        %v3840 = vunpack.c.l.b16 %v3502
        %v3841 = vunpack.c.h.b16 %v3502
        %v3842 = vunpack.c.l.b16 %v3503
        %v3843 = vunpack.c.h.b16 %v3503
        %v3844 = vunpack.c.l.b16 %v3504
        %v3845 = vunpack.c.h.b16 %v3504
        %v3846 = vunpack.c.l.b16 %v3505
        %v3847 = vunpack.c.h.b16 %v3505
        %v3848 = vunpack.c.l.b16 %v3506
        %v3849 = vunpack.c.h.b16 %v3506
        %v3850 = vunpack.c.l.b16 %v3507
        %v3851 = vunpack.c.h.b16 %v3507
        %v3852 = vunpack.c.l.b16 %v3508
        %v3853 = vunpack.c.h.b16 %v3508
        %v3854 = vunpack.c.l.b16 %v3509
        %v3855 = vunpack.c.h.b16 %v3509
        %v3856 = vunpack.c.l.b16 %v3510
        %v3857 = vunpack.c.h.b16 %v3510
        %v3858 = vunpack.c.l.b16 %v3511
        %v3859 = vunpack.c.h.b16 %v3511
        %v3860 = vunpack.c.l.b16 %v3512
        %v3861 = vunpack.c.h.b16 %v3512
        %v3862 = vunpack.c.l.b16 %v3513
        %v3863 = vunpack.c.h.b16 %v3513
        %v3864 = vunpack.c.l.b16 %v3514
        %v3865 = vunpack.c.h.b16 %v3514
        %v3866 = vunpack.c.l.b16 %v3515
        %v3867 = vunpack.c.h.b16 %v3515
        %v3868 = vunpack.c.l.b16 %v3516
        %v3869 = vunpack.c.h.b16 %v3516
        %v3870 = vunpack.c.l.b16 %v3517
        %v3871 = vunpack.c.h.b16 %v3517
        %v3872 = vunpack.c.l.b16 %v3518
        %v3873 = vunpack.c.h.b16 %v3518
        %v3874 = vunpack.c.l.b16 %v3519
        %v3875 = vunpack.c.h.b16 %v3519
        %v3876 = vunpack.c.l.b16 %v3520
        %v3877 = vunpack.c.h.b16 %v3520
        %v3878 = vunpack.c.l.b16 %v3521
        %v3879 = vunpack.c.h.b16 %v3521
        %v3880 = vunpack.c.l.b16 %v3522
        %v3881 = vunpack.c.h.b16 %v3522
        %v3882 = vunpack.c.l.b16 %v3523
        %v3883 = vunpack.c.h.b16 %v3523
        %v3884 = vunpack.c.l.b16 %v3524
        %v3885 = vunpack.c.h.b16 %v3524
        %v3886 = vunpack.c.l.b16 %v3525
        %v3887 = vunpack.c.h.b16 %v3525
        %v3888 = vunpack.c.l.b16 %v3526
        %v3889 = vunpack.c.h.b16 %v3526
        %v3890 = vunpack.c.l.b16 %v3527
        %v3891 = vunpack.c.h.b16 %v3527
        %v3892 = vunpack.c.l.b16 %v3528
        %v3893 = vunpack.c.h.b16 %v3528
        %v3894 = vunpack.c.l.b16 %v3529
        %v3895 = vunpack.c.h.b16 %v3529
        %v3896 = vunpack.c.l.b16 %v3530
        %v3897 = vunpack.c.h.b16 %v3530
        %v3898 = vunpack.c.l.b16 %v3531
        %v3899 = vunpack.c.h.b16 %v3531
        %v3900 = vunpack.c.l.b16 %v3532
        %v3901 = vunpack.c.h.b16 %v3532
        %v3902 = vunpack.c.l.b16 %v3533
        %v3903 = vunpack.c.h.b16 %v3533
        %v3904 = vunpack.c.l.b16 %v3534
        %v3905 = vunpack.c.h.b16 %v3534
        %v3906 = vunpack.c.l.b16 %v3535
        %v3907 = vunpack.c.h.b16 %v3535
        %v3908 = vunpack.c.l.b16 %v3536
        %v3909 = vunpack.c.h.b16 %v3536
        %v3910 = vunpack.c.l.b16 %v3537
        %v3911 = vunpack.c.h.b16 %v3537
        %v3912 = vunpack.c.l.b16 %v3538
        %v3913 = vunpack.c.h.b16 %v3538
        %v3914 = vunpack.c.l.b16 %v3539
        %v3915 = vunpack.c.h.b16 %v3539
        %v3916 = vunpack.c.l.b16 %v3540
        %v3917 = vunpack.c.h.b16 %v3540
        %v3918 = vunpack.c.l.b16 %v3541
        %v3919 = vunpack.c.h.b16 %v3541
        %v3920 = vunpack.c.l.b16 %v3542
        %v3921 = vunpack.c.h.b16 %v3542
        %v3922 = vunpack.c.l.b16 %v3543
        %v3923 = vunpack.c.h.b16 %v3543
        %v3924 = vunpack.c.l.b16 %v3544
        %v3925 = vunpack.c.h.b16 %v3544
        %v3926 = vunpack.c.l.b16 %v3545
        %v3927 = vunpack.c.h.b16 %v3545
        %v3928 = vunpack.c.l.b16 %v3546
        %v3929 = vunpack.c.h.b16 %v3546
        %v3930 = vunpack.c.l.b16 %v3547
        %v3931 = vunpack.c.h.b16 %v3547
        %v3932 = vunpack.c.l.b16 %v3548
        %v3933 = vunpack.c.h.b16 %v3548
        %v3934 = vunpack.c.l.b16 %v3549
        %v3935 = vunpack.c.h.b16 %v3549
        %v3936 = vunpack.c.l.b16 %v3550
        %v3937 = vunpack.c.h.b16 %v3550
        %v3938 = vunpack.c.l.b16 %v3551
        %v3939 = vunpack.c.h.b16 %v3551
        %v3940 = vunpack.c.l.b16 %v3552
        %v3941 = vunpack.c.h.b16 %v3552
        %v3942 = vunpack.c.l.b16 %v3553
        %v3943 = vunpack.c.h.b16 %v3553
        %v3944 = vunpack.c.l.b16 %v3554
        %v3945 = vunpack.c.h.b16 %v3554
        %v3946 = vunpack.c.l.b16 %v3555
        %v3947 = vunpack.c.h.b16 %v3555
        %v3948 = vunpack.c.l.b16 %v3556
        %v3949 = vunpack.c.h.b16 %v3556
        %v3950 = vunpack.c.l.b16 %v3557
        %v3951 = vunpack.c.h.b16 %v3557
        %v3952 = vunpack.c.l.b16 %v3558
        %v3953 = vunpack.c.h.b16 %v3558
        %v3954 = vunpack.c.l.b16 %v3559
        %v3955 = vunpack.c.h.b16 %v3559
        %v3956 = vpack.c.b16 %v3702, %v3700
        %v3957 = vpack.c.b16 %v3703, %v3701
        %v3958 = vpack.c.b16 %v3706, %v3704
        %v3959 = vpack.c.b16 %v3707, %v3705
        %v3960 = vpack.c.b16 %v3710, %v3708
        %v3961 = vpack.c.b16 %v3711, %v3709
        %v3962 = vpack.c.b16 %v3714, %v3712
        %v3963 = vpack.c.b16 %v3715, %v3713
        %v3964 = vpack.c.b16 %v3718, %v3716
        %v3965 = vpack.c.b16 %v3719, %v3717
        %v3966 = vpack.c.b16 %v3722, %v3720
        %v3967 = vpack.c.b16 %v3723, %v3721
        %v3968 = vpack.c.b16 %v3726, %v3724
        %v3969 = vpack.c.b16 %v3727, %v3725
        %v3970 = vpack.c.b16 %v3730, %v3728
        %v3971 = vpack.c.b16 %v3731, %v3729
        %v3972 = vpack.c.b16 %v3734, %v3732
        %v3973 = vpack.c.b16 %v3735, %v3733
        %v3974 = vpack.c.b16 %v3738, %v3736
        %v3975 = vpack.c.b16 %v3739, %v3737
        %v3976 = vpack.c.b16 %v3742, %v3740
        %v3977 = vpack.c.b16 %v3743, %v3741
        %v3978 = vpack.c.b16 %v3746, %v3744
        %v3979 = vpack.c.b16 %v3747, %v3745
        %v3980 = vpack.c.b16 %v3750, %v3748
        %v3981 = vpack.c.b16 %v3751, %v3749
        %v3982 = vpack.c.b16 %v3754, %v3752
        %v3983 = vpack.c.b16 %v3755, %v3753
        %v3984 = vpack.c.b16 %v3758, %v3756
        %v3985 = vpack.c.b16 %v3759, %v3757
        %v3986 = vpack.c.b16 %v3762, %v3760
        %v3987 = vpack.c.b16 %v3763, %v3761
        %v3988 = vpack.c.b16 %v3766, %v3764
        %v3989 = vpack.c.b16 %v3767, %v3765
        %v3990 = vpack.c.b16 %v3770, %v3768
        %v3991 = vpack.c.b16 %v3771, %v3769
        %v3992 = vpack.c.b16 %v3774, %v3772
        %v3993 = vpack.c.b16 %v3775, %v3773
        %v3994 = vpack.c.b16 %v3778, %v3776
        %v3995 = vpack.c.b16 %v3779, %v3777
        %v3996 = vpack.c.b16 %v3782, %v3780
        %v3997 = vpack.c.b16 %v3783, %v3781
        %v3998 = vpack.c.b16 %v3786, %v3784
        %v3999 = vpack.c.b16 %v3787, %v3785
        %v4000 = vpack.c.b16 %v3790, %v3788
        %v4001 = vpack.c.b16 %v3791, %v3789
        %v4002 = vpack.c.b16 %v3794, %v3792
        %v4003 = vpack.c.b16 %v3795, %v3793
        %v4004 = vpack.c.b16 %v3798, %v3796
        %v4005 = vpack.c.b16 %v3799, %v3797
        %v4006 = vpack.c.b16 %v3802, %v3800
        %v4007 = vpack.c.b16 %v3803, %v3801
        %v4008 = vpack.c.b16 %v3806, %v3804
        %v4009 = vpack.c.b16 %v3807, %v3805
        %v4010 = vpack.c.b16 %v3810, %v3808
        %v4011 = vpack.c.b16 %v3811, %v3809
        %v4012 = vpack.c.b16 %v3814, %v3812
        %v4013 = vpack.c.b16 %v3815, %v3813
        %v4014 = vpack.c.b16 %v3818, %v3816
        %v4015 = vpack.c.b16 %v3819, %v3817
        %v4016 = vpack.c.b16 %v3822, %v3820
        %v4017 = vpack.c.b16 %v3823, %v3821
        %v4018 = vpack.c.b16 %v3826, %v3824
        %v4019 = vpack.c.b16 %v3827, %v3825
        %v4020 = vpack.c.b16 %v3830, %v3828
        %v4021 = vpack.c.b16 %v3831, %v3829
        %v4022 = vpack.c.b16 %v3834, %v3832
        %v4023 = vpack.c.b16 %v3835, %v3833
        %v4024 = vpack.c.b16 %v3838, %v3836
        %v4025 = vpack.c.b16 %v3839, %v3837
        %v4026 = vpack.c.b16 %v3842, %v3840
        %v4027 = vpack.c.b16 %v3843, %v3841
        %v4028 = vpack.c.b16 %v3846, %v3844
        %v4029 = vpack.c.b16 %v3847, %v3845
        %v4030 = vpack.c.b16 %v3850, %v3848
        %v4031 = vpack.c.b16 %v3851, %v3849
        %v4032 = vpack.c.b16 %v3854, %v3852
        %v4033 = vpack.c.b16 %v3855, %v3853
        %v4034 = vpack.c.b16 %v3858, %v3856
        %v4035 = vpack.c.b16 %v3859, %v3857
        %v4036 = vpack.c.b16 %v3862, %v3860
        %v4037 = vpack.c.b16 %v3863, %v3861
        %v4038 = vpack.c.b16 %v3866, %v3864
        %v4039 = vpack.c.b16 %v3867, %v3865
        %v4040 = vpack.c.b16 %v3870, %v3868
        %v4041 = vpack.c.b16 %v3871, %v3869
        %v4042 = vpack.c.b16 %v3874, %v3872
        %v4043 = vpack.c.b16 %v3875, %v3873
        %v4044 = vpack.c.b16 %v3878, %v3876
        %v4045 = vpack.c.b16 %v3879, %v3877
        %v4046 = vpack.c.b16 %v3882, %v3880
        %v4047 = vpack.c.b16 %v3883, %v3881
        %v4048 = vpack.c.b16 %v3886, %v3884
        %v4049 = vpack.c.b16 %v3887, %v3885
        %v4050 = vpack.c.b16 %v3890, %v3888
        %v4051 = vpack.c.b16 %v3891, %v3889
        %v4052 = vpack.c.b16 %v3894, %v3892
        %v4053 = vpack.c.b16 %v3895, %v3893
        %v4054 = vpack.c.b16 %v3898, %v3896
        %v4055 = vpack.c.b16 %v3899, %v3897
        %v4056 = vpack.c.b16 %v3902, %v3900
        %v4057 = vpack.c.b16 %v3903, %v3901
        %v4058 = vpack.c.b16 %v3906, %v3904
        %v4059 = vpack.c.b16 %v3907, %v3905
        %v4060 = vpack.c.b16 %v3910, %v3908
        %v4061 = vpack.c.b16 %v3911, %v3909
        %v4062 = vpack.c.b16 %v3914, %v3912
        %v4063 = vpack.c.b16 %v3915, %v3913
        %v4064 = vpack.c.b16 %v3918, %v3916
        %v4065 = vpack.c.b16 %v3919, %v3917
        %v4066 = vpack.c.b16 %v3922, %v3920
        %v4067 = vpack.c.b16 %v3923, %v3921
        %v4068 = vpack.c.b16 %v3926, %v3924
        %v4069 = vpack.c.b16 %v3927, %v3925
        %v4070 = vpack.c.b16 %v3930, %v3928
        %v4071 = vpack.c.b16 %v3931, %v3929
        %v4072 = vpack.c.b16 %v3934, %v3932
        %v4073 = vpack.c.b16 %v3935, %v3933
        %v4074 = vpack.c.b16 %v3938, %v3936
        %v4075 = vpack.c.b16 %v3939, %v3937
        %v4076 = vpack.c.b16 %v3942, %v3940
        %v4077 = vpack.c.b16 %v3943, %v3941
        %v4078 = vpack.c.b16 %v3946, %v3944
        %v4079 = vpack.c.b16 %v3947, %v3945
        %v4080 = vpack.c.b16 %v3950, %v3948
        %v4081 = vpack.c.b16 %v3951, %v3949
        %v4082 = vpack.c.b16 %v3954, %v3952
        %v4083 = vpack.c.b16 %v3955, %v3953
        %4212 = vmatprep.subr.bf16.mxu0 %v3957
        %4213 = vmatpush1.bf16.msra.mxu0 %v3956
        %4214 = vmatprep.subr.bf16.mxu0 %v3959
        %4215 = vmatpush1.bf16.msra.mxu0 %v3958
        %4216 = vmatprep.subr.bf16.mxu0 %v3961
        %4217 = vmatpush1.bf16.msra.mxu0 %v3960
        %4218 = vmatprep.subr.bf16.mxu0 %v3963
        %4219 = vmatpush1.bf16.msra.mxu0 %v3962
        %4220 = vmatprep.subr.bf16.mxu0 %v3965
        %4221 = vmatpush1.bf16.msra.mxu0 %v3964
        %4222 = vmatprep.subr.bf16.mxu0 %v3967
        %4223 = vmatpush1.bf16.msra.mxu0 %v3966
        %4224 = vmatprep.subr.bf16.mxu0 %v3969
        %4225 = vmatpush1.bf16.msra.mxu0 %v3968
        %4226 = vmatprep.subr.bf16.mxu0 %v3971
        %4227 = vmatpush1.bf16.msra.mxu0 %v3970
        %4228 = vmatprep.subr.bf16.mxu0 %v3973
        %4229 = vmatpush1.bf16.msra.mxu0 %v3972
        %4230 = vmatprep.subr.bf16.mxu0 %v3975
        %4231 = vmatpush1.bf16.msra.mxu0 %v3974
        %4232 = vmatprep.subr.bf16.mxu0 %v3977
        %4233 = vmatpush1.bf16.msra.mxu0 %v3976
        %4234 = vmatprep.subr.bf16.mxu0 %v3979
        %4235 = vmatpush1.bf16.msra.mxu0 %v3978
        %4236 = vmatprep.subr.bf16.mxu0 %v3981
        %4237 = vmatpush1.bf16.msra.mxu0 %v3980
        %4238 = vmatprep.subr.bf16.mxu0 %v3983
        %4239 = vmatpush1.bf16.msra.mxu0 %v3982
        %4240 = vmatprep.subr.bf16.mxu0 %v3985
        %4241 = vmatpush1.bf16.msra.mxu0 %v3984
        %4242 = vmatprep.subr.bf16.mxu0 %v3987
        %4243 = vmatpush1.bf16.msra.mxu0 %v3986
        %4244 = vmatprep.mubr.bf16.mxu0 %v3425
        %4245 = vmatmul.mubr.bf16.gmra.mrb[0].mxu0 %v3424
        %v4246 = vpop.f32.mrb[0].mxu0
        %v4247 = vadd.f32 %v3565, %v4246
        %v4248 = vpop.f32.mrb[0].mxu0
        %v4249 = vadd.f32 %v3569, %v4248
        %v4250 = vpop.f32.mrb[0].mxu0
        %v4251 = vpop.f32.mrb[0].mxu0
        %4252 = vdwg.mxu0
        %4253 = vmatprep.subr.bf16.mxu0 %v3989
        %4254 = vmatpush1.bf16.msra.mxu0 %v3988
        %4255 = vmatprep.subr.bf16.mxu0 %v3991
        %4256 = vmatpush1.bf16.msra.mxu0 %v3990
        %4257 = vmatprep.subr.bf16.mxu0 %v3993
        %4258 = vmatpush1.bf16.msra.mxu0 %v3992
        %4259 = vmatprep.subr.bf16.mxu0 %v3995
        %4260 = vmatpush1.bf16.msra.mxu0 %v3994
        %4261 = vmatprep.subr.bf16.mxu0 %v3997
        %4262 = vmatpush1.bf16.msra.mxu0 %v3996
        %4263 = vmatprep.subr.bf16.mxu0 %v3999
        %4264 = vmatpush1.bf16.msra.mxu0 %v3998
        %4265 = vmatprep.subr.bf16.mxu0 %v4001
        %4266 = vmatpush1.bf16.msra.mxu0 %v4000
        %4267 = vmatprep.subr.bf16.mxu0 %v4003
        %4268 = vmatpush1.bf16.msra.mxu0 %v4002
        %4269 = vmatprep.subr.bf16.mxu0 %v4005
        %4270 = vmatpush1.bf16.msra.mxu0 %v4004
        %4271 = vmatprep.subr.bf16.mxu0 %v4007
        %4272 = vmatpush1.bf16.msra.mxu0 %v4006
        %4273 = vmatprep.subr.bf16.mxu0 %v4009
        %4274 = vmatpush1.bf16.msra.mxu0 %v4008
        %4275 = vmatprep.subr.bf16.mxu0 %v4011
        %4276 = vmatpush1.bf16.msra.mxu0 %v4010
        %4277 = vmatprep.subr.bf16.mxu0 %v4013
        %4278 = vmatpush1.bf16.msra.mxu0 %v4012
        %4279 = vmatprep.subr.bf16.mxu0 %v4015
        %4280 = vmatpush1.bf16.msra.mxu0 %v4014
        %4281 = vmatprep.subr.bf16.mxu0 %v4017
        %4282 = vmatpush1.bf16.msra.mxu0 %v4016
        %4283 = vmatprep.subr.bf16.mxu0 %v4019
        %4284 = vmatpush1.bf16.msra.mxu0 %v4018
        %4285 = vmatprep.mubr.bf16.mxu0 %v3427
        %4286 = vmatmul.mubr.bf16.gmra.mrb[0].mxu0 %v3426
        %v4287 = vpop.f32.mrb[0].mxu0
        %v4288 = vadd.f32 %v4247, %v4287
        %v4289 = vpop.f32.mrb[0].mxu0
        %v4290 = vadd.f32 %v4249, %v4289
        %v4291 = vpop.f32.mrb[0].mxu0
        %v4292 = vpop.f32.mrb[0].mxu0
        %4293 = vdwg.mxu0
        %4294 = vmatprep.subr.bf16.mxu0 %v4021
        %4295 = vmatpush1.bf16.msra.mxu0 %v4020
        %4296 = vmatprep.subr.bf16.mxu0 %v4023
        %4297 = vmatpush1.bf16.msra.mxu0 %v4022
        %4298 = vmatprep.subr.bf16.mxu0 %v4025
        %4299 = vmatpush1.bf16.msra.mxu0 %v4024
        %4300 = vmatprep.subr.bf16.mxu0 %v4027
        %4301 = vmatpush1.bf16.msra.mxu0 %v4026
        %4302 = vmatprep.subr.bf16.mxu0 %v4029
        %4303 = vmatpush1.bf16.msra.mxu0 %v4028
        %4304 = vmatprep.subr.bf16.mxu0 %v4031
        %4305 = vmatpush1.bf16.msra.mxu0 %v4030
        %4306 = vmatprep.subr.bf16.mxu0 %v4033
        %4307 = vmatpush1.bf16.msra.mxu0 %v4032
        %4308 = vmatprep.subr.bf16.mxu0 %v4035
        %4309 = vmatpush1.bf16.msra.mxu0 %v4034
        %4310 = vmatprep.subr.bf16.mxu0 %v4037
        %4311 = vmatpush1.bf16.msra.mxu0 %v4036
        %4312 = vmatprep.subr.bf16.mxu0 %v4039
        %4313 = vmatpush1.bf16.msra.mxu0 %v4038
        %4314 = vmatprep.subr.bf16.mxu0 %v4041
        %4315 = vmatpush1.bf16.msra.mxu0 %v4040
        %4316 = vmatprep.subr.bf16.mxu0 %v4043
        %4317 = vmatpush1.bf16.msra.mxu0 %v4042
        %4318 = vmatprep.subr.bf16.mxu0 %v4045
        %4319 = vmatpush1.bf16.msra.mxu0 %v4044
        %4320 = vmatprep.subr.bf16.mxu0 %v4047
        %4321 = vmatpush1.bf16.msra.mxu0 %v4046
        %4322 = vmatprep.subr.bf16.mxu0 %v4049
        %4323 = vmatpush1.bf16.msra.mxu0 %v4048
        %4324 = vmatprep.subr.bf16.mxu0 %v4051
        %4325 = vmatpush1.bf16.msra.mxu0 %v4050
        %4326 = vmatprep.mubr.bf16.mxu0 %v3429
        %4327 = vmatmul.mubr.bf16.gmra.mrb[0].mxu0 %v3428
        %v4328 = vpop.f32.mrb[0].mxu0
        %v4329 = vadd.f32 %v4288, %v4328
        %v4330 = vpop.f32.mrb[0].mxu0
        %v4331 = vadd.f32 %v4290, %v4330
        %v4332 = vpop.f32.mrb[0].mxu0
        %v4333 = vpop.f32.mrb[0].mxu0
        %4334 = vdwg.mxu0
        %4335 = vmatprep.subr.bf16.mxu0 %v4053
        %4336 = vmatpush1.bf16.msra.mxu0 %v4052
        %4337 = vmatprep.subr.bf16.mxu0 %v4055
        %4338 = vmatpush1.bf16.msra.mxu0 %v4054
        %4339 = vmatprep.subr.bf16.mxu0 %v4057
        %4340 = vmatpush1.bf16.msra.mxu0 %v4056
        %4341 = vmatprep.subr.bf16.mxu0 %v4059
        %4342 = vmatpush1.bf16.msra.mxu0 %v4058
        %4343 = vmatprep.subr.bf16.mxu0 %v4061
        %4344 = vmatpush1.bf16.msra.mxu0 %v4060
        %4345 = vmatprep.subr.bf16.mxu0 %v4063
        %4346 = vmatpush1.bf16.msra.mxu0 %v4062
        %4347 = vmatprep.subr.bf16.mxu0 %v4065
        %4348 = vmatpush1.bf16.msra.mxu0 %v4064
        %4349 = vmatprep.subr.bf16.mxu0 %v4067
        %4350 = vmatpush1.bf16.msra.mxu0 %v4066
        %4351 = vmatprep.subr.bf16.mxu0 %v4069
        %4352 = vmatpush1.bf16.msra.mxu0 %v4068
        %4353 = vmatprep.subr.bf16.mxu0 %v4071
        %4354 = vmatpush1.bf16.msra.mxu0 %v4070
        %4355 = vmatprep.subr.bf16.mxu0 %v4073
        %4356 = vmatpush1.bf16.msra.mxu0 %v4072
        %4357 = vmatprep.subr.bf16.mxu0 %v4075
        %4358 = vmatpush1.bf16.msra.mxu0 %v4074
        %4359 = vmatprep.subr.bf16.mxu0 %v4077
        %4360 = vmatpush1.bf16.msra.mxu0 %v4076
        %4361 = vmatprep.subr.bf16.mxu0 %v4079
        %4362 = vmatpush1.bf16.msra.mxu0 %v4078
        %4363 = vmatprep.subr.bf16.mxu0 %v4081
        %4364 = vmatpush1.bf16.msra.mxu0 %v4080
        %4365 = vmatprep.subr.bf16.mxu0 %v4083
        %4366 = vmatpush1.bf16.msra.mxu0 %v4082
        %4367 = vmatprep.mubr.bf16.mxu0 %v3431
        %4368 = vmatmul.mubr.bf16.gmra.mrb[0].mxu0 %v3430
        %v4369 = vpop.f32.mrb[0].mxu0
        %v4370 = vadd.f32 %v4329, %v4369
        %v4371 = vpop.f32.mrb[0].mxu0
        %v4372 = vadd.f32 %v4331, %v4371
        %v4373 = vpop.f32.mrb[0].mxu0
        %v4374 = vpop.f32.mrb[0].mxu0
        %4375 = vdwg.mxu0
        %v4376 = vadd.f32 %v2330, %v4370
        %v4377 = vadd.f32 %v2331, %v4372
        %4378 = vst [vmem:[#allocation2] sm:$0xff] %v4376
        %4379 = vst [vmem:[#allocation2 + $0x8] sm:$0xff] %v4377
        // Predicated region
        $region109: #{_annotator_core.3} parent=91 // pred_check
          %p4380 = pneg %p841
        $region110: #{_annotator_core.3} parent=91 // pred_check_branch
          %4382 = sbr.rel (%p4380) target = $region112
        $region111: #{_annotator_core.3} parent=91 // pred_region
          %4383 = vst [vmem:[%s18] sm:$0xff] %v4376
          %4384 = vst [vmem:[%s18 + $0x8] sm:$0xff] %v4377
        $region112: #{_annotator_core.3} parent=91 // pred_fallthru
          _
        %p4385 = scmp.eq.s32.totalorder %s38, 1
        // Predicated region
        $region113: #{_annotator_core.3} parent=91 // pred_check
          %p4386 = pneg %p4385
        $region114: #{_annotator_core.3} parent=91 // pred_check_branch
          %4388 = sbr.rel (%p4386) target = $region116
        $region115: #{_annotator_core.3} parent=91 // pred_region
          %v4389 = vadd.f32 %v4376, %v4377
          %4390 = vadd.xlane.f32.xlu0 %v4389
          %v4391 = vpop.xlane.xlu0 %4390
          %v4392 = vmul.f32 %v4391, %v854
          %v4393 = vsub.f32 %v4376, %v4392
          %v4394 = vsub.f32 %v4377, %v4392
          %v4395 = vmul.f32 %v4393, %v4393
          %v4396 = vmul.f32 %v4394, %v4394
          %v4397 = vadd.f32 %v4395, %v4396
          %4398 = vadd.xlane.f32.xlu0 %v4397
          %v4399 = vpop.xlane.xlu0 %4398
          %v4400 = vmul.f32 %v4399, %v854
          %v4401 = vadd.f32 %v4400, 1e-05
          %v4402 = vrsqrt.pop %v4401
          %v4403 = vmul.f32 %v4393, %v4402
          %v4404 = vmul.f32 %v4394, %v4402
          %v4405 = vld [vmem:[%s14] sm:$0x3]
          %v4407 = vlaneseq
          %v4408 = vshrl.u32 %v4407, 7
          %v4409 = vsub.s32 0, %v4408
          %v4410 = vrot.slane %v4405, %v4409
          %v4411 = vlaneseq
          %v4412 = vshrl.u32 %v4411, 7
          %v4413 = vsub.s32 1, %v4412
          %v4414 = vrot.slane %v4405, %v4413
          %v4417 = vmul.f32 %v4403, %v4410
          %v4418 = vmul.f32 %v4404, %v4414
          %v4419 = vld [vmem:[%s15] sm:$0x3]
          %v4421 = vlaneseq
          %v4422 = vshrl.u32 %v4421, 7
          %v4423 = vsub.s32 0, %v4422
          %v4424 = vrot.slane %v4419, %v4423
          %v4425 = vlaneseq
          %v4426 = vshrl.u32 %v4425, 7
          %v4427 = vsub.s32 1, %v4426
          %v4428 = vrot.slane %v4419, %v4427
          %v4431 = vadd.f32 %v4417, %v4424
          %v4432 = vadd.f32 %v4418, %v4428
          %v4433 = vld [vmem:[%s17] sm:$0xff]
          %4435 = vset.pattern.permute.xlu0 0
          %4436 = vperm.xlu0 %4435, %v4433
          %v4437 = vpop.permute.xlu0 %4436
          %v4439 = vmul.f32 %v4431, %v4437
          %v4440 = vmul.f32 %v4432, %v4437
          %v4441 = vrot.slane %v4439, 4
          %v4442 = vadd.f32 %v4439, %v4441
          %v4443 = vrot.slane %v4442, 2
          %v4444 = vadd.f32 %v4442, %v4443
          %v4445 = vrot.slane %v4444, 1
          %v4446 = vadd.f32 %v4444, %v4445
          %v4447 = vrot.slane %v4440, 4
          %v4448 = vadd.f32 %v4440, %v4447
          %v4449 = vrot.slane %v4448, 2
          %v4450 = vadd.f32 %v4448, %v4449
          %v4451 = vrot.slane %v4450, 1
          %v4452 = vadd.f32 %v4450, %v4451
          %v4453 = vpack.c.bf16 %v4446, %v4446
          %v4454 = vpack.c.bf16 %v4452, %v4452
          %v4455 = vld [vmem:[%s16] sm:$0xff]
          %v4456 = vld [vmem:[%s16 + $0x8] sm:$0xff]
          %v4457 = vld [vmem:[%s16 + $0x10] sm:$0xff]
          %v4458 = vld [vmem:[%s16 + $0x18] sm:$0xff]
          %v4459 = vld [vmem:[%s16 + $0x20] sm:$0xff]
          %v4460 = vld [vmem:[%s16 + $0x28] sm:$0xff]
          %v4461 = vld [vmem:[%s16 + $0x30] sm:$0xff]
          %v4462 = vld [vmem:[%s16 + $0x38] sm:$0xff]
          %v4463 = vld [vmem:[%s16 + $0x40] sm:$0xff]
          %v4464 = vld [vmem:[%s16 + $0x48] sm:$0xff]
          %v4465 = vld [vmem:[%s16 + $0x50] sm:$0xff]
          %v4466 = vld [vmem:[%s16 + $0x58] sm:$0xff]
          %v4467 = vld [vmem:[%s16 + $0x60] sm:$0xff]
          %v4468 = vld [vmem:[%s16 + $0x68] sm:$0xff]
          %v4469 = vld [vmem:[%s16 + $0x70] sm:$0xff]
          %v4470 = vld [vmem:[%s16 + $0x78] sm:$0xff]
          %v4471 = vld [vmem:[%s16 + $0x80] sm:$0xff]
          %v4472 = vld [vmem:[%s16 + $0x88] sm:$0xff]
          %v4473 = vld [vmem:[%s16 + $0x90] sm:$0xff]
          %v4474 = vld [vmem:[%s16 + $0x98] sm:$0xff]
          %v4475 = vld [vmem:[%s16 + $0xa0] sm:$0xff]
          %v4476 = vld [vmem:[%s16 + $0xa8] sm:$0xff]
          %v4477 = vld [vmem:[%s16 + $0xb0] sm:$0xff]
          %v4478 = vld [vmem:[%s16 + $0xb8] sm:$0xff]
          %v4479 = vld [vmem:[%s16 + $0xc0] sm:$0xff]
          %v4480 = vld [vmem:[%s16 + $0xc8] sm:$0xff]
          %v4481 = vld [vmem:[%s16 + $0xd0] sm:$0xff]
          %v4482 = vld [vmem:[%s16 + $0xd8] sm:$0xff]
          %v4483 = vld [vmem:[%s16 + $0xe0] sm:$0xff]
          %v4484 = vld [vmem:[%s16 + $0xe8] sm:$0xff]
          %v4485 = vld [vmem:[%s16 + $0xf0] sm:$0xff]
          %v4486 = vld [vmem:[%s16 + $0xf8] sm:$0xff]
          %v4519 = vunpack.c.l.b16 %v4455
          %v4520 = vunpack.c.h.b16 %v4455
          %v4521 = vunpack.c.l.b16 %v4456
          %v4522 = vunpack.c.h.b16 %v4456
          %v4523 = vunpack.c.l.b16 %v4457
          %v4524 = vunpack.c.h.b16 %v4457
          %v4525 = vunpack.c.l.b16 %v4458
          %v4526 = vunpack.c.h.b16 %v4458
          %v4527 = vunpack.c.l.b16 %v4459
          %v4528 = vunpack.c.h.b16 %v4459
          %v4529 = vunpack.c.l.b16 %v4460
          %v4530 = vunpack.c.h.b16 %v4460
          %v4531 = vunpack.c.l.b16 %v4461
          %v4532 = vunpack.c.h.b16 %v4461
          %v4533 = vunpack.c.l.b16 %v4462
          %v4534 = vunpack.c.h.b16 %v4462
          %v4535 = vunpack.c.l.b16 %v4463
          %v4536 = vunpack.c.h.b16 %v4463
          %v4537 = vunpack.c.l.b16 %v4464
          %v4538 = vunpack.c.h.b16 %v4464
          %v4539 = vunpack.c.l.b16 %v4465
          %v4540 = vunpack.c.h.b16 %v4465
          %v4541 = vunpack.c.l.b16 %v4466
          %v4542 = vunpack.c.h.b16 %v4466
          %v4543 = vunpack.c.l.b16 %v4467
          %v4544 = vunpack.c.h.b16 %v4467
          %v4545 = vunpack.c.l.b16 %v4468
          %v4546 = vunpack.c.h.b16 %v4468
          %v4547 = vunpack.c.l.b16 %v4469
          %v4548 = vunpack.c.h.b16 %v4469
          %v4549 = vunpack.c.l.b16 %v4470
          %v4550 = vunpack.c.h.b16 %v4470
          %v4551 = vunpack.c.l.b16 %v4471
          %v4552 = vunpack.c.h.b16 %v4471
          %v4553 = vunpack.c.l.b16 %v4472
          %v4554 = vunpack.c.h.b16 %v4472
          %v4555 = vunpack.c.l.b16 %v4473
          %v4556 = vunpack.c.h.b16 %v4473
          %v4557 = vunpack.c.l.b16 %v4474
          %v4558 = vunpack.c.h.b16 %v4474
          %v4559 = vunpack.c.l.b16 %v4475
          %v4560 = vunpack.c.h.b16 %v4475
          %v4561 = vunpack.c.l.b16 %v4476
          %v4562 = vunpack.c.h.b16 %v4476
          %v4563 = vunpack.c.l.b16 %v4477
          %v4564 = vunpack.c.h.b16 %v4477
          %v4565 = vunpack.c.l.b16 %v4478
          %v4566 = vunpack.c.h.b16 %v4478
          %v4567 = vunpack.c.l.b16 %v4479
          %v4568 = vunpack.c.h.b16 %v4479
          %v4569 = vunpack.c.l.b16 %v4480
          %v4570 = vunpack.c.h.b16 %v4480
          %v4571 = vunpack.c.l.b16 %v4481
          %v4572 = vunpack.c.h.b16 %v4481
          %v4573 = vunpack.c.l.b16 %v4482
          %v4574 = vunpack.c.h.b16 %v4482
          %v4575 = vunpack.c.l.b16 %v4483
          %v4576 = vunpack.c.h.b16 %v4483
          %v4577 = vunpack.c.l.b16 %v4484
          %v4578 = vunpack.c.h.b16 %v4484
          %v4579 = vunpack.c.l.b16 %v4485
          %v4580 = vunpack.c.h.b16 %v4485
          %v4581 = vunpack.c.l.b16 %v4486
          %v4582 = vunpack.c.h.b16 %v4486
          %v4583 = vpack.c.b16 %v4521, %v4519
          %v4584 = vpack.c.b16 %v4522, %v4520
          %v4585 = vpack.c.b16 %v4525, %v4523
          %v4586 = vpack.c.b16 %v4526, %v4524
          %v4587 = vpack.c.b16 %v4529, %v4527
          %v4588 = vpack.c.b16 %v4530, %v4528
          %v4589 = vpack.c.b16 %v4533, %v4531
          %v4590 = vpack.c.b16 %v4534, %v4532
          %v4591 = vpack.c.b16 %v4537, %v4535
          %v4592 = vpack.c.b16 %v4538, %v4536
          %v4593 = vpack.c.b16 %v4541, %v4539
          %v4594 = vpack.c.b16 %v4542, %v4540
          %v4595 = vpack.c.b16 %v4545, %v4543
          %v4596 = vpack.c.b16 %v4546, %v4544
          %v4597 = vpack.c.b16 %v4549, %v4547
          %v4598 = vpack.c.b16 %v4550, %v4548
          %v4599 = vpack.c.b16 %v4553, %v4551
          %v4600 = vpack.c.b16 %v4554, %v4552
          %v4601 = vpack.c.b16 %v4557, %v4555
          %v4602 = vpack.c.b16 %v4558, %v4556
          %v4603 = vpack.c.b16 %v4561, %v4559
          %v4604 = vpack.c.b16 %v4562, %v4560
          %v4605 = vpack.c.b16 %v4565, %v4563
          %v4606 = vpack.c.b16 %v4566, %v4564
          %v4607 = vpack.c.b16 %v4569, %v4567
          %v4608 = vpack.c.b16 %v4570, %v4568
          %v4609 = vpack.c.b16 %v4573, %v4571
          %v4610 = vpack.c.b16 %v4574, %v4572
          %v4611 = vpack.c.b16 %v4577, %v4575
          %v4612 = vpack.c.b16 %v4578, %v4576
          %v4613 = vpack.c.b16 %v4581, %v4579
          %v4614 = vpack.c.b16 %v4582, %v4580
          %4647 = vmatprep.subr.bf16.mxu0 %v4584
          %4648 = vmatpush1.bf16.msra.mxu0 %v4583
          %4649 = vmatprep.subr.bf16.mxu0 %v4586
          %4650 = vmatpush1.bf16.msra.mxu0 %v4585
          %4651 = vmatprep.subr.bf16.mxu0 %v4588
          %4652 = vmatpush1.bf16.msra.mxu0 %v4587
          %4653 = vmatprep.subr.bf16.mxu0 %v4590
          %4654 = vmatpush1.bf16.msra.mxu0 %v4589
          %4655 = vmatprep.subr.bf16.mxu0 %v4592
          %4656 = vmatpush1.bf16.msra.mxu0 %v4591
          %4657 = vmatprep.subr.bf16.mxu0 %v4594
          %4658 = vmatpush1.bf16.msra.mxu0 %v4593
          %4659 = vmatprep.subr.bf16.mxu0 %v4596
          %4660 = vmatpush1.bf16.msra.mxu0 %v4595
          %4661 = vmatprep.subr.bf16.mxu0 %v4598
          %4662 = vmatpush1.bf16.msra.mxu0 %v4597
          %4663 = vmatprep.subr.bf16.mxu0 %v4600
          %4664 = vmatpush1.bf16.msra.mxu0 %v4599
          %4665 = vmatprep.subr.bf16.mxu0 %v4602
          %4666 = vmatpush1.bf16.msra.mxu0 %v4601
          %4667 = vmatprep.subr.bf16.mxu0 %v4604
          %4668 = vmatpush1.bf16.msra.mxu0 %v4603
          %4669 = vmatprep.subr.bf16.mxu0 %v4606
          %4670 = vmatpush1.bf16.msra.mxu0 %v4605
          %4671 = vmatprep.subr.bf16.mxu0 %v4608
          %4672 = vmatpush1.bf16.msra.mxu0 %v4607
          %4673 = vmatprep.subr.bf16.mxu0 %v4610
          %4674 = vmatpush1.bf16.msra.mxu0 %v4609
          %4675 = vmatprep.subr.bf16.mxu0 %v4612
          %4676 = vmatpush1.bf16.msra.mxu0 %v4611
          %4677 = vmatprep.subr.bf16.mxu0 %v4614
          %4678 = vmatpush1.bf16.msra.mxu0 %v4613
          %4679 = vmatprep.mubr.bf16.mxu0 %v4454
          %4680 = vmatmul.mubr.bf16.gmra.mrb[0].mxu0 %v4453
          %v4681 = vpop.f32.mrb[0].mxu0
          %v4682 = vadd.f32 0.0, %v4681
          %v4683 = vpop.f32.mrb[0].mxu0
          %v4684 = vadd.f32 0.0, %v4683
          %v4685 = vpop.f32.mrb[0].mxu0
          %v4686 = vpop.f32.mrb[0].mxu0
          %4687 = vdwg.mxu0
          %v4690 = vcombine.low %v4682, %v4684
          %v4692 = vunpack.c.l.s4 1966171168
          %v4693 = vunpack.c.0.s8 %v4692
          %v4694 = vlaneseq
          %v4695 = vshrl.u32 %v4694, 7
          %v4696 = vsub.s32 %v4693, %v4695
          %v4697 = vrot.slane %v4690, %v4696
          %v4699 = vunpack.c.l.s4 1966171168
          %v4700 = vunpack.c.0.s8 %v4699
          %v4701 = vlaneseq
          %v4702 = vshrl.u32 %v4701, 7
          %v4703 = vsub.s32 %v4700, %v4702
          %v4704 = vrot.slane %v4697, %v4703
          %v4706 = vlaneseq
          %vm4707 = vcmp.ge.s32.totalorder %v4706, 0
          %vm4708 = vcmp.lt.s32.totalorder %v4706, 256
          %vm4709 = vmand %vm4707, %vm4708
          %4710 = vst.msk [vmem:[#allocation9] sm:$0x3] %vm4709, %v4704
        $region116: #{_annotator_core.3} parent=91 // pred_fallthru
          _
        // Predicated region
        $region117: #{_annotator_core.3} parent=91 // pred_check
          %p4711 = pneg %p489
        $region118: #{_annotator_core.3} parent=91 // pred_check_branch
          %4713 = sbr.rel (%p4711) target = $region120
        $region119: #{_annotator_core.3} parent=91 // pred_region
          _
        $region120: #{_annotator_core.3} parent=91 // pred_fallthru
          _
        // Predicated region
        $region121: #{_annotator_core.3} parent=91 // pred_check
          %p4714 = pneg %p510
        $region122: #{_annotator_core.3} parent=91 // pred_check_branch
          %4716 = sbr.rel (%p4714) target = $region124
        $region123: #{_annotator_core.3} parent=91 // pred_region
          %s4718 = ssub.s32 32, 32
          %4719 = vsyncadd [#allocation5], %s4718
          %s4721 = sshll.u32 [#allocation9], 4
          %s4722 = int_to_ptr.vmem [resolvable:$true] %s4721
          %4724 = dma.vmem_to_hbm [thread:$0]  %s4722, 32, %s19, [#allocation5]
        $region124: #{_annotator_core.3} parent=91 // pred_fallthru
          _
        // Predicated region
        $region125: #{_annotator_core.3} parent=91 // pred_check
          %p4725 = pneg %p489
        $region126: #{_annotator_core.3} parent=91 // pred_check_branch
          %4727 = sbr.rel (%p4725) target = $region128
        $region127: #{_annotator_core.3} parent=91 // pred_region
          _
        $region128: #{_annotator_core.3} parent=91 // pred_fallthru
          _
        // Predicated region
        $region129: #{_annotator_core.3} parent=91 // pred_check
          %p4728 = pneg %p510
        $region130: #{_annotator_core.3} parent=91 // pred_check_branch
          %4730 = sbr.rel (%p4728) target = $region132
        $region131: #{_annotator_core.3} parent=91 // pred_region
          %4731 = dma.done [#allocation5], 32
        $region132: #{_annotator_core.3} parent=91 // pred_fallthru
          _
      $region92: #{_annotator_core.3} parent=5 // pred_fallthru
        _
      %p4732 = scmp.le.s32.totalorder 2, %s33
      // Predicated region
      $region133: #{_annotator_core.3} parent=5 // pred_check
        %p4733 = pneg %p4732
      $region134: #{_annotator_core.3} parent=5 // pred_check_branch
        %4735 = sbr.rel (%p4733) target = $region136
      $region135: #{_annotator_core.3} parent=5 // pred_region
        %s4736 = ssub.s32 %s33, 2
      $region136: #{_annotator_core.3} parent=5 // pred_fallthru
        _
    $region6: #{_annotator_core.3} parent=1 // loop_footer
      %s37 = sadd.s32 1, %s33
    $region7: #{_annotator_core.3} parent=1 // loop_footer_branch
      %32 = sbr.rel target = $region3
    $region8: #{_annotator_core.3} parent=1 // loop_exit
      _
    %4737 = vsyncpa [#allocation4], 1
    %s4738 = scalar_lea.sflag [#allocation4], 1
    %4739 = vsyncpa %s4738, 1
    %4740 = vsyncpa [#allocation7], 1
    %s4741 = scalar_lea.sflag [#allocation7], 1
    %4742 = vsyncpa %s4741, 1
    %4743 = vsyncpa [#allocation5], 1
    %s4744 = scalar_lea.sflag [#allocation5], 1
    %4745 = vsyncpa %s4744, 1

</llo_original>
